<compile_context>
chip_gen: v5e
topology: v5e:2x2
jax: 0.10.0
libtpu: 0.0.40
codegen_flags: <defaults>
</compile_context>

<pallas_src>
import jax
import jax.numpy as jnp
from jax.experimental import pallas as pl
from jax.experimental.pallas import tpu as pltpu


def _basic_block_kernel(x_ref, w1_ref, s1_ref, b1_ref,
                        w2_ref, s2_ref, b2_ref, o_ref, pad_ref):
    # Per grid step (one batch element):
    #   x_ref  : (1, H, W, C)       bf16 input (NHWC) -- single HBM stream
    #   w*_ref : (3, 3, C, C)       bf16 conv weights (HWIO)
    #   s*/b*  : (1, C)             fp32 fused BN scale / bias
    #   o_ref  : (1, H, W, C)       fp32 output
    #   pad_ref: (H+2, W+2, C)      bf16 VMEM scratch: shared zero-padded buffer
    H, W, C = o_ref.shape[1], o_ref.shape[2], o_ref.shape[3]

    x = x_ref[0]                                     # (H, W, C) bf16

    # Zero the padded scratch ONCE per step; its border stays zero for both
    # convs because the interior stores below never touch it.
    pad_ref[...] = jnp.zeros(pad_ref.shape, pad_ref.dtype)
    pad_ref[1:H + 1, 1:W + 1, :] = x

    # ---- conv1 (3x3, pad=1, stride=1): 9 shifted bf16 MXU matmuls, fp32 acc ----
    acc1 = jnp.zeros((H * W, C), jnp.float32)
    for kh in range(3):
        for kw in range(3):
            patch = pad_ref[kh:kh + H, kw:kw + W, :].reshape(H * W, C)
            acc1 += jnp.dot(patch, w1_ref[kh, kw],
                            preferred_element_type=jnp.float32)

    # fused BN1 (inference) + ReLU, in fp32
    out1 = jnp.maximum(acc1 * s1_ref[...] + b1_ref[...], 0.0)

    # Reuse the same padded scratch for conv2: overwrite interior with out1
    # (cast to bf16 for the MXU); border is still zero from the fill above.
    pad_ref[1:H + 1, 1:W + 1, :] = out1.reshape(H, W, C).astype(pad_ref.dtype)

    # ---- conv2 (3x3, pad=1, stride=1) ----
    acc2 = jnp.zeros((H * W, C), jnp.float32)
    for kh in range(3):
        for kw in range(3):
            patch = pad_ref[kh:kh + H, kw:kw + W, :].reshape(H * W, C)
            acc2 += jnp.dot(patch, w2_ref[kh, kw],
                            preferred_element_type=jnp.float32)

    # fused BN2 (inference)
    out2 = acc2 * s2_ref[...] + b2_ref[...]

    # ---- residual add (identity = same VMEM block as conv1 input) + ReLU ----
    identity = x.reshape(H * W, C).astype(jnp.float32)
    out = jnp.maximum(out2 + identity, 0.0)
    o_ref[...] = out.reshape(1, H, W, C).astype(o_ref.dtype)


def basic_block_forward(x_nchw, params, eps=1e-5):
    """x_nchw: (N, C, H, W) float32.  Returns (N, C, H, W) float32."""
    N, C, H, W = x_nchw.shape
    Cout = params["w1"].shape[0]
    assert Cout == C, "downsample=None requires inplanes == planes"

    # Fuse BN (inference mode) into per-channel scale / bias (fp32).
    s1 = params["gamma1"] / jnp.sqrt(params["var1"] + eps)
    b1 = params["beta1"] - params["mean1"] * s1
    s2 = params["gamma2"] / jnp.sqrt(params["var2"] + eps)
    b2 = params["beta2"] - params["mean2"] * s2

    # PyTorch conv weights OIHW -> HWIO, bf16 MXU operands.
    w1_k = jnp.transpose(params["w1"], (2, 3, 1, 0)).astype(jnp.bfloat16)
    w2_k = jnp.transpose(params["w2"], (2, 3, 1, 0)).astype(jnp.bfloat16)

    # NCHW -> NHWC, bf16 activations (single stream; padding happens in-kernel).
    x_nhwc = jnp.transpose(x_nchw, (0, 2, 3, 1)).astype(jnp.bfloat16)

    out_nhwc = pl.pallas_call(
        _basic_block_kernel,
        out_shape=jax.ShapeDtypeStruct((N, H, W, Cout), jnp.float32),
        grid=(N,),
        in_specs=[
            pl.BlockSpec((1, H, W, C), lambda n: (n, 0, 0, 0)),
            pl.BlockSpec((3, 3, C, Cout), lambda n: (0, 0, 0, 0)),
            pl.BlockSpec((1, Cout), lambda n: (0, 0)),
            pl.BlockSpec((1, Cout), lambda n: (0, 0)),
            pl.BlockSpec((3, 3, Cout, Cout), lambda n: (0, 0, 0, 0)),
            pl.BlockSpec((1, Cout), lambda n: (0, 0)),
            pl.BlockSpec((1, Cout), lambda n: (0, 0)),
        ],
        out_specs=pl.BlockSpec((1, H, W, Cout), lambda n: (n, 0, 0, 0)),
        scratch_shapes=[pltpu.VMEM((H + 2, W + 2, Cout), jnp.bfloat16)],
        compiler_params=pltpu.CompilerParams(dimension_semantics=("parallel",)),
    )(x_nhwc, w1_k, s1.reshape(1, -1), b1.reshape(1, -1),
      w2_k, s2.reshape(1, -1), b2.reshape(1, -1))

    return jnp.transpose(out_nhwc, (0, 3, 1, 2))


def _reference(x, params, eps=1e-5):
    """Pure-JAX reference (NCHW, PyTorch eval-mode semantics), mirroring the
    kernel's mixed precision: conv operands rounded to bf16, fp32 accumulation,
    fp32 BN / residual / output."""
    def q(t):  # bf16 round-trip quantization
        return t.astype(jnp.bfloat16).astype(jnp.float32)

    def conv(x, w):
        return jax.lax.conv_general_dilated(
            q(x), q(w), window_strides=(1, 1), padding=((1, 1), (1, 1)),
            dimension_numbers=("NCHW", "OIHW", "NCHW"))

    def bn(x, g, b, m, v):
        g, b, m, v = (t[None, :, None, None] for t in (g, b, m, v))
        return (x - m) / jnp.sqrt(v + eps) * g + b

    out = jax.nn.relu(bn(conv(x, params["w1"]), params["gamma1"],
                         params["beta1"], params["mean1"], params["var1"]))
    out = bn(conv(out, params["w2"]), params["gamma2"],
             params["beta2"], params["mean2"], params["var2"])
    return jax.nn.relu(out + q(x))


def make_params(key, inplanes, planes):
    ks = jax.random.split(key, 8)
    return {
        "w1": jax.random.normal(ks[0], (planes, inplanes, 3, 3), jnp.float32) * 0.1,
        "gamma1": 1.0 + 0.1 * jax.random.normal(ks[1], (planes,), jnp.float32),
        "beta1": 0.05 * jax.random.normal(ks[2], (planes,), jnp.float32),
        "mean1": 0.1 * jax.random.normal(ks[3], (planes,), jnp.float32),
        "var1": jnp.abs(jax.random.normal(ks[4], (planes,), jnp.float32)) + 0.5,
        "w2": jax.random.normal(ks[5], (planes, planes, 3, 3), jnp.float32) * 0.1,
        "gamma2": 1.0 + 0.1 * jax.random.normal(ks[6], (planes,), jnp.float32),
        "beta2": 0.05 * jax.random.normal(ks[7], (planes,), jnp.float32),
        "mean2": 0.1 * jax.random.normal(ks[3], (planes,), jnp.float32) + 0.02,
        "var2": jnp.abs(jax.random.normal(ks[4], (planes,), jnp.float32)) + 0.7,
    }


if __name__ == "__main__":
    key = jax.random.PRNGKey(0)
    k_x, k_p = jax.random.split(key)

    N, C, H, W = 2, 4, 16, 16          # inplanes = planes = 4, stride = 1
    x = jax.random.normal(k_x, (N, C, H, W), jnp.float32)
    params = make_params(k_p, C, C)

    out = basic_block_forward(x, params)
    out = jax.block_until_ready(out)

    ref = _reference(x, params)
    assert out.shape == (N, C, H, W)
    assert jnp.allclose(out, ref, atol=1e-3, rtol=1e-3), \
        float(jnp.max(jnp.abs(out - ref)))

    print("KERNEL_OK")
</pallas_src>

<mosaic_0001>
module attributes {stable_mosaic.version = 11 : i64} {
  func.func @_basic_block_kernel(%arg0: i32, %arg1: memref<1x16x16x4xbf16, #tpu.memory_space<vmem>>, %arg2: memref<3x3x4x4xbf16, #tpu.memory_space<vmem>>, %arg3: memref<1x4xf32, #tpu.memory_space<vmem>>, %arg4: memref<1x4xf32, #tpu.memory_space<vmem>>, %arg5: memref<3x3x4x4xbf16, #tpu.memory_space<vmem>>, %arg6: memref<1x4xf32, #tpu.memory_space<vmem>>, %arg7: memref<1x4xf32, #tpu.memory_space<vmem>>, %arg8: memref<1x16x16x4xf32, #tpu.memory_space<vmem>>, %arg9: memref<18x18x4xbf16, #tpu.memory_space<vmem>>) attributes {dimension_semantics = [#tpu.dimension_semantics<parallel>], iteration_bounds = array<i64: 2>, scalar_prefetch = 0 : i64, scratch_operands = 1 : i64, tpu.core_type = #tpu.core_type<tc>, window_params = [{transform_indices = @transform_0, window_bounds = array<i64: 1, 16, 16, 4>}, {pipeline_mode = #tpu.pipeline_mode<synchronous>, transform_indices = @transform_1, window_bounds = array<i64: 3, 3, 4, 4>}, {pipeline_mode = #tpu.pipeline_mode<synchronous>, transform_indices = @transform_2, window_bounds = array<i64: 1, 4>}, {pipeline_mode = #tpu.pipeline_mode<synchronous>, transform_indices = @transform_3, window_bounds = array<i64: 1, 4>}, {pipeline_mode = #tpu.pipeline_mode<synchronous>, transform_indices = @transform_4, window_bounds = array<i64: 3, 3, 4, 4>}, {pipeline_mode = #tpu.pipeline_mode<synchronous>, transform_indices = @transform_5, window_bounds = array<i64: 1, 4>}, {pipeline_mode = #tpu.pipeline_mode<synchronous>, transform_indices = @transform_6, window_bounds = array<i64: 1, 4>}, {transform_indices = @transform_7, window_bounds = array<i64: 1, 16, 16, 4>}]} {
    %c0 = arith.constant 0 : index
    %c0_0 = arith.constant 0 : index
    %c0_1 = arith.constant 0 : index
    %c0_2 = arith.constant 0 : index
    %0 = vector.load %arg1[%c0, %c0_0, %c0_1, %c0_2] : memref<1x16x16x4xbf16, #tpu.memory_space<vmem>>, vector<1x16x16x4xbf16>
    %1 = vector.shape_cast %0 : vector<1x16x16x4xbf16> to vector<16x16x4xbf16>
    %cst = arith.constant 0.000000e+00 : bf16
    %2 = vector.broadcast %cst : bf16 to vector<18x18x4xbf16>
    %c0_3 = arith.constant 0 : index
    %c0_4 = arith.constant 0 : index
    %c0_5 = arith.constant 0 : index
    %3 = vector.load %arg9[%c0_3, %c0_4, %c0_5] : memref<18x18x4xbf16, #tpu.memory_space<vmem>>, vector<18x18x4xbf16>
    tpu.vector_store %arg9[%c0_3, %c0_4, %c0_5], %2 {strides = array<i32>} : memref<18x18x4xbf16, #tpu.memory_space<vmem>>, vector<18x18x4xbf16>,
    %c1 = arith.constant 1 : index
    %c1_6 = arith.constant 1 : index
    %c0_7 = arith.constant 0 : index
    %4 = vector.load %arg9[%c1, %c1_6, %c0_7] : memref<18x18x4xbf16, #tpu.memory_space<vmem>>, vector<16x16x4xbf16>
    tpu.vector_store %arg9[%c1, %c1_6, %c0_7], %1 {strides = array<i32>} : memref<18x18x4xbf16, #tpu.memory_space<vmem>>, vector<16x16x4xbf16>,
    %cst_8 = arith.constant 0.000000e+00 : f32
    %5 = vector.broadcast %cst_8 : f32 to vector<256x4xf32>
    %c0_9 = arith.constant 0 : index
    %c0_10 = arith.constant 0 : index
    %c0_11 = arith.constant 0 : index
    %6 = vector.load %arg9[%c0_9, %c0_10, %c0_11] : memref<18x18x4xbf16, #tpu.memory_space<vmem>>, vector<16x16x4xbf16>
    %7 = vector.shape_cast %6 : vector<16x16x4xbf16> to vector<256x4xbf16>
    %c0_12 = arith.constant 0 : index
    %c0_13 = arith.constant 0 : index
    %c0_14 = arith.constant 0 : index
    %c0_15 = arith.constant 0 : index
    %8 = vector.load %arg2[%c0_12, %c0_13, %c0_14, %c0_15] : memref<3x3x4x4xbf16, #tpu.memory_space<vmem>>, vector<1x1x4x4xbf16>
    %9 = vector.shape_cast %8 : vector<1x1x4x4xbf16> to vector<4x4xbf16>
    %cst_16 = arith.constant dense<0.000000e+00> : vector<256x4xf32>
    %10 = tpu.matmul %7, %9, %cst_16 {dimension_numbers = #tpu.dot_dimension_numbers<[1], [0], [0], [1], [0, 0, 1, 1], [], []>} : vector<256x4xbf16>, vector<4x4xbf16>, vector<256x4xf32> -> vector<256x4xf32>
    %11 = arith.addf %5, %10 : vector<256x4xf32>
    %c0_17 = arith.constant 0 : index
    %c1_18 = arith.constant 1 : index
    %c0_19 = arith.constant 0 : index
    %12 = vector.load %arg9[%c0_17, %c1_18, %c0_19] : memref<18x18x4xbf16, #tpu.memory_space<vmem>>, vector<16x16x4xbf16>
    %13 = vector.shape_cast %12 : vector<16x16x4xbf16> to vector<256x4xbf16>
    %c0_20 = arith.constant 0 : index
    %c1_21 = arith.constant 1 : index
    %c0_22 = arith.constant 0 : index
    %c0_23 = arith.constant 0 : index
    %14 = vector.load %arg2[%c0_20, %c1_21, %c0_22, %c0_23] : memref<3x3x4x4xbf16, #tpu.memory_space<vmem>>, vector<1x1x4x4xbf16>
    %15 = vector.shape_cast %14 : vector<1x1x4x4xbf16> to vector<4x4xbf16>
    %cst_24 = arith.constant dense<0.000000e+00> : vector<256x4xf32>
    %16 = tpu.matmul %13, %15, %cst_24 {dimension_numbers = #tpu.dot_dimension_numbers<[1], [0], [0], [1], [0, 0, 1, 1], [], []>} : vector<256x4xbf16>, vector<4x4xbf16>, vector<256x4xf32> -> vector<256x4xf32>
    %17 = arith.addf %11, %16 : vector<256x4xf32>
    %c0_25 = arith.constant 0 : index
    %c2 = arith.constant 2 : index
    %c0_26 = arith.constant 0 : index
    %18 = vector.load %arg9[%c0_25, %c2, %c0_26] : memref<18x18x4xbf16, #tpu.memory_space<vmem>>, vector<16x16x4xbf16>
    %19 = vector.shape_cast %18 : vector<16x16x4xbf16> to vector<256x4xbf16>
    %c0_27 = arith.constant 0 : index
    %c2_28 = arith.constant 2 : index
    %c0_29 = arith.constant 0 : index
    %c0_30 = arith.constant 0 : index
    %20 = vector.load %arg2[%c0_27, %c2_28, %c0_29, %c0_30] : memref<3x3x4x4xbf16, #tpu.memory_space<vmem>>, vector<1x1x4x4xbf16>
    %21 = vector.shape_cast %20 : vector<1x1x4x4xbf16> to vector<4x4xbf16>
    %cst_31 = arith.constant dense<0.000000e+00> : vector<256x4xf32>
    %22 = tpu.matmul %19, %21, %cst_31 {dimension_numbers = #tpu.dot_dimension_numbers<[1], [0], [0], [1], [0, 0, 1, 1], [], []>} : vector<256x4xbf16>, vector<4x4xbf16>, vector<256x4xf32> -> vector<256x4xf32>
    %23 = arith.addf %17, %22 : vector<256x4xf32>
    %c1_32 = arith.constant 1 : index
    %c0_33 = arith.constant 0 : index
    %c0_34 = arith.constant 0 : index
    %24 = vector.load %arg9[%c1_32, %c0_33, %c0_34] : memref<18x18x4xbf16, #tpu.memory_space<vmem>>, vector<16x16x4xbf16>
    %25 = vector.shape_cast %24 : vector<16x16x4xbf16> to vector<256x4xbf16>
    %c1_35 = arith.constant 1 : index
    %c0_36 = arith.constant 0 : index
    %c0_37 = arith.constant 0 : index
    %c0_38 = arith.constant 0 : index
    %26 = vector.load %arg2[%c1_35, %c0_36, %c0_37, %c0_38] : memref<3x3x4x4xbf16, #tpu.memory_space<vmem>>, vector<1x1x4x4xbf16>
    %27 = vector.shape_cast %26 : vector<1x1x4x4xbf16> to vector<4x4xbf16>
    %cst_39 = arith.constant dense<0.000000e+00> : vector<256x4xf32>
    %28 = tpu.matmul %25, %27, %cst_39 {dimension_numbers = #tpu.dot_dimension_numbers<[1], [0], [0], [1], [0, 0, 1, 1], [], []>} : vector<256x4xbf16>, vector<4x4xbf16>, vector<256x4xf32> -> vector<256x4xf32>
    %29 = arith.addf %23, %28 : vector<256x4xf32>
    %c1_40 = arith.constant 1 : index
    %c1_41 = arith.constant 1 : index
    %c0_42 = arith.constant 0 : index
    %30 = vector.load %arg9[%c1_40, %c1_41, %c0_42] : memref<18x18x4xbf16, #tpu.memory_space<vmem>>, vector<16x16x4xbf16>
    %31 = vector.shape_cast %30 : vector<16x16x4xbf16> to vector<256x4xbf16>
    %c1_43 = arith.constant 1 : index
    %c1_44 = arith.constant 1 : index
    %c0_45 = arith.constant 0 : index
    %c0_46 = arith.constant 0 : index
    %32 = vector.load %arg2[%c1_43, %c1_44, %c0_45, %c0_46] : memref<3x3x4x4xbf16, #tpu.memory_space<vmem>>, vector<1x1x4x4xbf16>
    %33 = vector.shape_cast %32 : vector<1x1x4x4xbf16> to vector<4x4xbf16>
    %cst_47 = arith.constant dense<0.000000e+00> : vector<256x4xf32>
    %34 = tpu.matmul %31, %33, %cst_47 {dimension_numbers = #tpu.dot_dimension_numbers<[1], [0], [0], [1], [0, 0, 1, 1], [], []>} : vector<256x4xbf16>, vector<4x4xbf16>, vector<256x4xf32> -> vector<256x4xf32>
    %35 = arith.addf %29, %34 : vector<256x4xf32>
    %c1_48 = arith.constant 1 : index
    %c2_49 = arith.constant 2 : index
    %c0_50 = arith.constant 0 : index
    %36 = vector.load %arg9[%c1_48, %c2_49, %c0_50] : memref<18x18x4xbf16, #tpu.memory_space<vmem>>, vector<16x16x4xbf16>
    %37 = vector.shape_cast %36 : vector<16x16x4xbf16> to vector<256x4xbf16>
    %c1_51 = arith.constant 1 : index
    %c2_52 = arith.constant 2 : index
    %c0_53 = arith.constant 0 : index
    %c0_54 = arith.constant 0 : index
    %38 = vector.load %arg2[%c1_51, %c2_52, %c0_53, %c0_54] : memref<3x3x4x4xbf16, #tpu.memory_space<vmem>>, vector<1x1x4x4xbf16>
    %39 = vector.shape_cast %38 : vector<1x1x4x4xbf16> to vector<4x4xbf16>
    %cst_55 = arith.constant dense<0.000000e+00> : vector<256x4xf32>
    %40 = tpu.matmul %37, %39, %cst_55 {dimension_numbers = #tpu.dot_dimension_numbers<[1], [0], [0], [1], [0, 0, 1, 1], [], []>} : vector<256x4xbf16>, vector<4x4xbf16>, vector<256x4xf32> -> vector<256x4xf32>
    %41 = arith.addf %35, %40 : vector<256x4xf32>
    %c2_56 = arith.constant 2 : index
    %c0_57 = arith.constant 0 : index
    %c0_58 = arith.constant 0 : index
    %42 = vector.load %arg9[%c2_56, %c0_57, %c0_58] : memref<18x18x4xbf16, #tpu.memory_space<vmem>>, vector<16x16x4xbf16>
    %43 = vector.shape_cast %42 : vector<16x16x4xbf16> to vector<256x4xbf16>
    %c2_59 = arith.constant 2 : index
    %c0_60 = arith.constant 0 : index
    %c0_61 = arith.constant 0 : index
    %c0_62 = arith.constant 0 : index
    %44 = vector.load %arg2[%c2_59, %c0_60, %c0_61, %c0_62] : memref<3x3x4x4xbf16, #tpu.memory_space<vmem>>, vector<1x1x4x4xbf16>
    %45 = vector.shape_cast %44 : vector<1x1x4x4xbf16> to vector<4x4xbf16>
    %cst_63 = arith.constant dense<0.000000e+00> : vector<256x4xf32>
    %46 = tpu.matmul %43, %45, %cst_63 {dimension_numbers = #tpu.dot_dimension_numbers<[1], [0], [0], [1], [0, 0, 1, 1], [], []>} : vector<256x4xbf16>, vector<4x4xbf16>, vector<256x4xf32> -> vector<256x4xf32>
    %47 = arith.addf %41, %46 : vector<256x4xf32>
    %c2_64 = arith.constant 2 : index
    %c1_65 = arith.constant 1 : index
    %c0_66 = arith.constant 0 : index
    %48 = vector.load %arg9[%c2_64, %c1_65, %c0_66] : memref<18x18x4xbf16, #tpu.memory_space<vmem>>, vector<16x16x4xbf16>
    %49 = vector.shape_cast %48 : vector<16x16x4xbf16> to vector<256x4xbf16>
    %c2_67 = arith.constant 2 : index
    %c1_68 = arith.constant 1 : index
    %c0_69 = arith.constant 0 : index
    %c0_70 = arith.constant 0 : index
    %50 = vector.load %arg2[%c2_67, %c1_68, %c0_69, %c0_70] : memref<3x3x4x4xbf16, #tpu.memory_space<vmem>>, vector<1x1x4x4xbf16>
    %51 = vector.shape_cast %50 : vector<1x1x4x4xbf16> to vector<4x4xbf16>
    %cst_71 = arith.constant dense<0.000000e+00> : vector<256x4xf32>
    %52 = tpu.matmul %49, %51, %cst_71 {dimension_numbers = #tpu.dot_dimension_numbers<[1], [0], [0], [1], [0, 0, 1, 1], [], []>} : vector<256x4xbf16>, vector<4x4xbf16>, vector<256x4xf32> -> vector<256x4xf32>
    %53 = arith.addf %47, %52 : vector<256x4xf32>
    %c2_72 = arith.constant 2 : index
    %c2_73 = arith.constant 2 : index
    %c0_74 = arith.constant 0 : index
    %54 = vector.load %arg9[%c2_72, %c2_73, %c0_74] : memref<18x18x4xbf16, #tpu.memory_space<vmem>>, vector<16x16x4xbf16>
    %55 = vector.shape_cast %54 : vector<16x16x4xbf16> to vector<256x4xbf16>
    %c2_75 = arith.constant 2 : index
    %c2_76 = arith.constant 2 : index
    %c0_77 = arith.constant 0 : index
    %c0_78 = arith.constant 0 : index
    %56 = vector.load %arg2[%c2_75, %c2_76, %c0_77, %c0_78] : memref<3x3x4x4xbf16, #tpu.memory_space<vmem>>, vector<1x1x4x4xbf16>
    %57 = vector.shape_cast %56 : vector<1x1x4x4xbf16> to vector<4x4xbf16>
    %cst_79 = arith.constant dense<0.000000e+00> : vector<256x4xf32>
    %58 = tpu.matmul %55, %57, %cst_79 {dimension_numbers = #tpu.dot_dimension_numbers<[1], [0], [0], [1], [0, 0, 1, 1], [], []>} : vector<256x4xbf16>, vector<4x4xbf16>, vector<256x4xf32> -> vector<256x4xf32>
    %59 = arith.addf %53, %58 : vector<256x4xf32>
    %c0_80 = arith.constant 0 : index
    %c0_81 = arith.constant 0 : index
    %60 = vector.load %arg3[%c0_80, %c0_81] : memref<1x4xf32, #tpu.memory_space<vmem>>, vector<1x4xf32>
    %61 = vector.broadcast %60 : vector<1x4xf32> to vector<256x4xf32>
    %62 = arith.mulf %59, %61 : vector<256x4xf32>
    %c0_82 = arith.constant 0 : index
    %c0_83 = arith.constant 0 : index
    %63 = vector.load %arg4[%c0_82, %c0_83] : memref<1x4xf32, #tpu.memory_space<vmem>>, vector<1x4xf32>
    %64 = vector.broadcast %63 : vector<1x4xf32> to vector<256x4xf32>
    %65 = arith.addf %62, %64 : vector<256x4xf32>
    %cst_84 = arith.constant 0.000000e+00 : f32
    %66 = vector.broadcast %cst_84 : f32 to vector<256x4xf32>
    %67 = arith.maximumf %65, %66 : vector<256x4xf32>
    %68 = vector.shape_cast %67 : vector<256x4xf32> to vector<16x16x4xf32>
    %69 = arith.truncf %68 : vector<16x16x4xf32> to vector<16x16x4xbf16>
    %c1_85 = arith.constant 1 : index
    %c1_86 = arith.constant 1 : index
    %c0_87 = arith.constant 0 : index
    %70 = vector.load %arg9[%c1_85, %c1_86, %c0_87] : memref<18x18x4xbf16, #tpu.memory_space<vmem>>, vector<16x16x4xbf16>
    tpu.vector_store %arg9[%c1_85, %c1_86, %c0_87], %69 {strides = array<i32>} : memref<18x18x4xbf16, #tpu.memory_space<vmem>>, vector<16x16x4xbf16>,
    %cst_88 = arith.constant 0.000000e+00 : f32
    %71 = vector.broadcast %cst_88 : f32 to vector<256x4xf32>
    %c0_89 = arith.constant 0 : index
    %c0_90 = arith.constant 0 : index
    %c0_91 = arith.constant 0 : index
    %72 = vector.load %arg9[%c0_89, %c0_90, %c0_91] : memref<18x18x4xbf16, #tpu.memory_space<vmem>>, vector<16x16x4xbf16>
    %73 = vector.shape_cast %72 : vector<16x16x4xbf16> to vector<256x4xbf16>
    %c0_92 = arith.constant 0 : index
    %c0_93 = arith.constant 0 : index
    %c0_94 = arith.constant 0 : index
    %c0_95 = arith.constant 0 : index
    %74 = vector.load %arg5[%c0_92, %c0_93, %c0_94, %c0_95] : memref<3x3x4x4xbf16, #tpu.memory_space<vmem>>, vector<1x1x4x4xbf16>
    %75 = vector.shape_cast %74 : vector<1x1x4x4xbf16> to vector<4x4xbf16>
    %cst_96 = arith.constant dense<0.000000e+00> : vector<256x4xf32>
    %76 = tpu.matmul %73, %75, %cst_96 {dimension_numbers = #tpu.dot_dimension_numbers<[1], [0], [0], [1], [0, 0, 1, 1], [], []>} : vector<256x4xbf16>, vector<4x4xbf16>, vector<256x4xf32> -> vector<256x4xf32>
    %77 = arith.addf %71, %76 : vector<256x4xf32>
    %c0_97 = arith.constant 0 : index
    %c1_98 = arith.constant 1 : index
    %c0_99 = arith.constant 0 : index
    %78 = vector.load %arg9[%c0_97, %c1_98, %c0_99] : memref<18x18x4xbf16, #tpu.memory_space<vmem>>, vector<16x16x4xbf16>
    %79 = vector.shape_cast %78 : vector<16x16x4xbf16> to vector<256x4xbf16>
    %c0_100 = arith.constant 0 : index
    %c1_101 = arith.constant 1 : index
    %c0_102 = arith.constant 0 : index
    %c0_103 = arith.constant 0 : index
    %80 = vector.load %arg5[%c0_100, %c1_101, %c0_102, %c0_103] : memref<3x3x4x4xbf16, #tpu.memory_space<vmem>>, vector<1x1x4x4xbf16>
    %81 = vector.shape_cast %80 : vector<1x1x4x4xbf16> to vector<4x4xbf16>
    %cst_104 = arith.constant dense<0.000000e+00> : vector<256x4xf32>
    %82 = tpu.matmul %79, %81, %cst_104 {dimension_numbers = #tpu.dot_dimension_numbers<[1], [0], [0], [1], [0, 0, 1, 1], [], []>} : vector<256x4xbf16>, vector<4x4xbf16>, vector<256x4xf32> -> vector<256x4xf32>
    %83 = arith.addf %77, %82 : vector<256x4xf32>
    %c0_105 = arith.constant 0 : index
    %c2_106 = arith.constant 2 : index
    %c0_107 = arith.constant 0 : index
    %84 = vector.load %arg9[%c0_105, %c2_106, %c0_107] : memref<18x18x4xbf16, #tpu.memory_space<vmem>>, vector<16x16x4xbf16>
    %85 = vector.shape_cast %84 : vector<16x16x4xbf16> to vector<256x4xbf16>
    %c0_108 = arith.constant 0 : index
    %c2_109 = arith.constant 2 : index
    %c0_110 = arith.constant 0 : index
    %c0_111 = arith.constant 0 : index
    %86 = vector.load %arg5[%c0_108, %c2_109, %c0_110, %c0_111] : memref<3x3x4x4xbf16, #tpu.memory_space<vmem>>, vector<1x1x4x4xbf16>
    %87 = vector.shape_cast %86 : vector<1x1x4x4xbf16> to vector<4x4xbf16>
    %cst_112 = arith.constant dense<0.000000e+00> : vector<256x4xf32>
    %88 = tpu.matmul %85, %87, %cst_112 {dimension_numbers = #tpu.dot_dimension_numbers<[1], [0], [0], [1], [0, 0, 1, 1], [], []>} : vector<256x4xbf16>, vector<4x4xbf16>, vector<256x4xf32> -> vector<256x4xf32>
    %89 = arith.addf %83, %88 : vector<256x4xf32>
    %c1_113 = arith.constant 1 : index
    %c0_114 = arith.constant 0 : index
    %c0_115 = arith.constant 0 : index
    %90 = vector.load %arg9[%c1_113, %c0_114, %c0_115] : memref<18x18x4xbf16, #tpu.memory_space<vmem>>, vector<16x16x4xbf16>
    %91 = vector.shape_cast %90 : vector<16x16x4xbf16> to vector<256x4xbf16>
    %c1_116 = arith.constant 1 : index
    %c0_117 = arith.constant 0 : index
    %c0_118 = arith.constant 0 : index
    %c0_119 = arith.constant 0 : index
    %92 = vector.load %arg5[%c1_116, %c0_117, %c0_118, %c0_119] : memref<3x3x4x4xbf16, #tpu.memory_space<vmem>>, vector<1x1x4x4xbf16>
    %93 = vector.shape_cast %92 : vector<1x1x4x4xbf16> to vector<4x4xbf16>
    %cst_120 = arith.constant dense<0.000000e+00> : vector<256x4xf32>
    %94 = tpu.matmul %91, %93, %cst_120 {dimension_numbers = #tpu.dot_dimension_numbers<[1], [0], [0], [1], [0, 0, 1, 1], [], []>} : vector<256x4xbf16>, vector<4x4xbf16>, vector<256x4xf32> -> vector<256x4xf32>
    %95 = arith.addf %89, %94 : vector<256x4xf32>
    %c1_121 = arith.constant 1 : index
    %c1_122 = arith.constant 1 : index
    %c0_123 = arith.constant 0 : index
    %96 = vector.load %arg9[%c1_121, %c1_122, %c0_123] : memref<18x18x4xbf16, #tpu.memory_space<vmem>>, vector<16x16x4xbf16>
    %97 = vector.shape_cast %96 : vector<16x16x4xbf16> to vector<256x4xbf16>
    %c1_124 = arith.constant 1 : index
    %c1_125 = arith.constant 1 : index
    %c0_126 = arith.constant 0 : index
    %c0_127 = arith.constant 0 : index
    %98 = vector.load %arg5[%c1_124, %c1_125, %c0_126, %c0_127] : memref<3x3x4x4xbf16, #tpu.memory_space<vmem>>, vector<1x1x4x4xbf16>
    %99 = vector.shape_cast %98 : vector<1x1x4x4xbf16> to vector<4x4xbf16>
    %cst_128 = arith.constant dense<0.000000e+00> : vector<256x4xf32>
    %100 = tpu.matmul %97, %99, %cst_128 {dimension_numbers = #tpu.dot_dimension_numbers<[1], [0], [0], [1], [0, 0, 1, 1], [], []>} : vector<256x4xbf16>, vector<4x4xbf16>, vector<256x4xf32> -> vector<256x4xf32>
    %101 = arith.addf %95, %100 : vector<256x4xf32>
    %c1_129 = arith.constant 1 : index
    %c2_130 = arith.constant 2 : index
    %c0_131 = arith.constant 0 : index
    %102 = vector.load %arg9[%c1_129, %c2_130, %c0_131] : memref<18x18x4xbf16, #tpu.memory_space<vmem>>, vector<16x16x4xbf16>
    %103 = vector.shape_cast %102 : vector<16x16x4xbf16> to vector<256x4xbf16>
    %c1_132 = arith.constant 1 : index
    %c2_133 = arith.constant 2 : index
    %c0_134 = arith.constant 0 : index
    %c0_135 = arith.constant 0 : index
    %104 = vector.load %arg5[%c1_132, %c2_133, %c0_134, %c0_135] : memref<3x3x4x4xbf16, #tpu.memory_space<vmem>>, vector<1x1x4x4xbf16>
    %105 = vector.shape_cast %104 : vector<1x1x4x4xbf16> to vector<4x4xbf16>
    %cst_136 = arith.constant dense<0.000000e+00> : vector<256x4xf32>
    %106 = tpu.matmul %103, %105, %cst_136 {dimension_numbers = #tpu.dot_dimension_numbers<[1], [0], [0], [1], [0, 0, 1, 1], [], []>} : vector<256x4xbf16>, vector<4x4xbf16>, vector<256x4xf32> -> vector<256x4xf32>
    %107 = arith.addf %101, %106 : vector<256x4xf32>
    %c2_137 = arith.constant 2 : index
    %c0_138 = arith.constant 0 : index
    %c0_139 = arith.constant 0 : index
    %108 = vector.load %arg9[%c2_137, %c0_138, %c0_139] : memref<18x18x4xbf16, #tpu.memory_space<vmem>>, vector<16x16x4xbf16>
    %109 = vector.shape_cast %108 : vector<16x16x4xbf16> to vector<256x4xbf16>
    %c2_140 = arith.constant 2 : index
    %c0_141 = arith.constant 0 : index
    %c0_142 = arith.constant 0 : index
    %c0_143 = arith.constant 0 : index
    %110 = vector.load %arg5[%c2_140, %c0_141, %c0_142, %c0_143] : memref<3x3x4x4xbf16, #tpu.memory_space<vmem>>, vector<1x1x4x4xbf16>
    %111 = vector.shape_cast %110 : vector<1x1x4x4xbf16> to vector<4x4xbf16>
    %cst_144 = arith.constant dense<0.000000e+00> : vector<256x4xf32>
    %112 = tpu.matmul %109, %111, %cst_144 {dimension_numbers = #tpu.dot_dimension_numbers<[1], [0], [0], [1], [0, 0, 1, 1], [], []>} : vector<256x4xbf16>, vector<4x4xbf16>, vector<256x4xf32> -> vector<256x4xf32>
    %113 = arith.addf %107, %112 : vector<256x4xf32>
    %c2_145 = arith.constant 2 : index
    %c1_146 = arith.constant 1 : index
    %c0_147 = arith.constant 0 : index
    %114 = vector.load %arg9[%c2_145, %c1_146, %c0_147] : memref<18x18x4xbf16, #tpu.memory_space<vmem>>, vector<16x16x4xbf16>
    %115 = vector.shape_cast %114 : vector<16x16x4xbf16> to vector<256x4xbf16>
    %c2_148 = arith.constant 2 : index
    %c1_149 = arith.constant 1 : index
    %c0_150 = arith.constant 0 : index
    %c0_151 = arith.constant 0 : index
    %116 = vector.load %arg5[%c2_148, %c1_149, %c0_150, %c0_151] : memref<3x3x4x4xbf16, #tpu.memory_space<vmem>>, vector<1x1x4x4xbf16>
    %117 = vector.shape_cast %116 : vector<1x1x4x4xbf16> to vector<4x4xbf16>
    %cst_152 = arith.constant dense<0.000000e+00> : vector<256x4xf32>
    %118 = tpu.matmul %115, %117, %cst_152 {dimension_numbers = #tpu.dot_dimension_numbers<[1], [0], [0], [1], [0, 0, 1, 1], [], []>} : vector<256x4xbf16>, vector<4x4xbf16>, vector<256x4xf32> -> vector<256x4xf32>
    %119 = arith.addf %113, %118 : vector<256x4xf32>
    %c2_153 = arith.constant 2 : index
    %c2_154 = arith.constant 2 : index
    %c0_155 = arith.constant 0 : index
    %120 = vector.load %arg9[%c2_153, %c2_154, %c0_155] : memref<18x18x4xbf16, #tpu.memory_space<vmem>>, vector<16x16x4xbf16>
    %121 = vector.shape_cast %120 : vector<16x16x4xbf16> to vector<256x4xbf16>
    %c2_156 = arith.constant 2 : index
    %c2_157 = arith.constant 2 : index
    %c0_158 = arith.constant 0 : index
    %c0_159 = arith.constant 0 : index
    %122 = vector.load %arg5[%c2_156, %c2_157, %c0_158, %c0_159] : memref<3x3x4x4xbf16, #tpu.memory_space<vmem>>, vector<1x1x4x4xbf16>
    %123 = vector.shape_cast %122 : vector<1x1x4x4xbf16> to vector<4x4xbf16>
    %cst_160 = arith.constant dense<0.000000e+00> : vector<256x4xf32>
    %124 = tpu.matmul %121, %123, %cst_160 {dimension_numbers = #tpu.dot_dimension_numbers<[1], [0], [0], [1], [0, 0, 1, 1], [], []>} : vector<256x4xbf16>, vector<4x4xbf16>, vector<256x4xf32> -> vector<256x4xf32>
    %125 = arith.addf %119, %124 : vector<256x4xf32>
    %c0_161 = arith.constant 0 : index
    %c0_162 = arith.constant 0 : index
    %126 = vector.load %arg6[%c0_161, %c0_162] : memref<1x4xf32, #tpu.memory_space<vmem>>, vector<1x4xf32>
    %127 = vector.broadcast %126 : vector<1x4xf32> to vector<256x4xf32>
    %128 = arith.mulf %125, %127 : vector<256x4xf32>
    %c0_163 = arith.constant 0 : index
    %c0_164 = arith.constant 0 : index
    %129 = vector.load %arg7[%c0_163, %c0_164] : memref<1x4xf32, #tpu.memory_space<vmem>>, vector<1x4xf32>
    %130 = vector.broadcast %129 : vector<1x4xf32> to vector<256x4xf32>
    %131 = arith.addf %128, %130 : vector<256x4xf32>
    %132 = vector.shape_cast %1 : vector<16x16x4xbf16> to vector<256x4xbf16>
    %133 = arith.extf %132 : vector<256x4xbf16> to vector<256x4xf32>
    %134 = arith.addf %131, %133 : vector<256x4xf32>
    %cst_165 = arith.constant 0.000000e+00 : f32
    %135 = vector.broadcast %cst_165 : f32 to vector<256x4xf32>
    %136 = arith.maximumf %134, %135 : vector<256x4xf32>
    %137 = vector.shape_cast %136 : vector<256x4xf32> to vector<1x16x16x4xf32>
    %c0_166 = arith.constant 0 : index
    %c0_167 = arith.constant 0 : index
    %c0_168 = arith.constant 0 : index
    %c0_169 = arith.constant 0 : index
    %138 = vector.load %arg8[%c0_166, %c0_167, %c0_168, %c0_169] : memref<1x16x16x4xf32, #tpu.memory_space<vmem>>, vector<1x16x16x4xf32>
    tpu.vector_store %arg8[%c0_166, %c0_167, %c0_168, %c0_169], %137 {strides = array<i32>} : memref<1x16x16x4xf32, #tpu.memory_space<vmem>>, vector<1x16x16x4xf32>,
    return
  }
  func.func @transform_0(%arg0: i32) -> (i32, i32, i32, i32) {
    %c0_i32 = arith.constant 0 : i32
    %c0_i32_0 = arith.constant 0 : i32
    %c0_i32_1 = arith.constant 0 : i32
    %c0_i32_2 = arith.constant 0 : i32
    return %arg0, %c0_i32, %c0_i32_0, %c0_i32_1 : i32, i32, i32, i32
  }
  func.func @transform_1(%arg0: i32) -> (i32, i32, i32, i32) {
    %c0_i32 = arith.constant 0 : i32
    %c0_i32_0 = arith.constant 0 : i32
    %c0_i32_1 = arith.constant 0 : i32
    %c0_i32_2 = arith.constant 0 : i32
    %c0_i32_3 = arith.constant 0 : i32
    return %c0_i32, %c0_i32_0, %c0_i32_1, %c0_i32_2 : i32, i32, i32, i32
  }
  func.func @transform_2(%arg0: i32) -> (i32, i32) {
    %c0_i32 = arith.constant 0 : i32
    %c0_i32_0 = arith.constant 0 : i32
    %c0_i32_1 = arith.constant 0 : i32
    return %c0_i32, %c0_i32_0 : i32, i32
  }
  func.func @transform_3(%arg0: i32) -> (i32, i32) {
    %c0_i32 = arith.constant 0 : i32
    %c0_i32_0 = arith.constant 0 : i32
    %c0_i32_1 = arith.constant 0 : i32
    return %c0_i32, %c0_i32_0 : i32, i32
  }
  func.func @transform_4(%arg0: i32) -> (i32, i32, i32, i32) {
    %c0_i32 = arith.constant 0 : i32
    %c0_i32_0 = arith.constant 0 : i32
    %c0_i32_1 = arith.constant 0 : i32
    %c0_i32_2 = arith.constant 0 : i32
    %c0_i32_3 = arith.constant 0 : i32
    return %c0_i32, %c0_i32_0, %c0_i32_1, %c0_i32_2 : i32, i32, i32, i32
  }
  func.func @transform_5(%arg0: i32) -> (i32, i32) {
    %c0_i32 = arith.constant 0 : i32
    %c0_i32_0 = arith.constant 0 : i32
    %c0_i32_1 = arith.constant 0 : i32
    return %c0_i32, %c0_i32_0 : i32, i32
  }
  func.func @transform_6(%arg0: i32) -> (i32, i32) {
    %c0_i32 = arith.constant 0 : i32
    %c0_i32_0 = arith.constant 0 : i32
    %c0_i32_1 = arith.constant 0 : i32
    return %c0_i32, %c0_i32_0 : i32, i32
  }
  func.func @transform_7(%arg0: i32) -> (i32, i32, i32, i32) {
    %c0_i32 = arith.constant 0 : i32
    %c0_i32_0 = arith.constant 0 : i32
    %c0_i32_1 = arith.constant 0 : i32
    %c0_i32_2 = arith.constant 0 : i32
    return %arg0, %c0_i32, %c0_i32_0, %c0_i32_1 : i32, i32, i32, i32
  }
}

</mosaic_0001>

<llo_original>
// kernel: tpu_custom_call.1
$region0: #{tpu_custom_call.1}
  #allocation0 [shape = 'u32[]', space=smem, size = 0x4, offset = 0x4, fixed_abs, tag = 'smem constant byte address 0x4 - core index']
  #allocation1 [shape = 'u32[72,128]{1,0:T(1,128)}', space=vmem, size = 0x9000, scoped, tag = 'internal scratch']
  #allocation2 [shape = 'bf16[18,18,4]{2,1,0:T(8,128)(2,1)}', space=vmem, size = 0x1b000, scoped, tag = 'scratch operand']
  %s0 = inlined_call_operand.vmem [shape: bf16[2,16,16,4], index: 0, kind: input, shape index: {}]
  %s1 = inlined_call_operand.vmem [shape: bf16[3,3,4,4], index: 1, kind: input, shape index: {}]
  %s2 = inlined_call_operand.vmem [shape: f32[1,4], index: 2, kind: input, shape index: {}]
  %s3 = inlined_call_operand.vmem [shape: f32[1,4], index: 3, kind: input, shape index: {}]
  %s4 = inlined_call_operand.vmem [shape: bf16[3,3,4,4], index: 4, kind: input, shape index: {}]
  %s5 = inlined_call_operand.vmem [shape: f32[1,4], index: 5, kind: input, shape index: {}]
  %s6 = inlined_call_operand.vmem [shape: f32[1,4], index: 6, kind: input, shape index: {}]
  %s7 = inlined_call_operand.vmem [shape: f32[2,16,16,4], index: 7, kind: output, shape index: {}]
  %s8 = sld [smem:[#allocation0]]
  $region61: #{tpu_custom_call.1} parent=0
    _
  %s10 = ssub.s32 1, %s8
  %s11 = scalar_select 0, %s10, %s8
  loop: start=0, step=1, limit=4
  $region2: #{tpu_custom_call.1} parent=0 // loop_pre_header
    _
  $region3: #{tpu_custom_call.1} parent=0 // loop_header
    %s13 = sphi 0, %s17
    %p14 = scmp.ge.s32.totalorder %s13, 4
    %s23 = sphi 0, %s25
    %s26 = sphi 0, %s23
    %s27 = sphi 0, %s26
    %s43 = sphi 0, %s27
    %s47 = sphi 0, %s47
    %s49 = sphi 0, %s47
    %s50 = sphi 0, %s49
    %s64 = sphi 0, %s50
    %s68 = sphi 0, %s68
    %s70 = sphi 0, %s68
    %s71 = sphi 0, %s70
    %s85 = sphi 0, %s71
    %s89 = sphi 0, %s89
    %s91 = sphi 0, %s89
    %s92 = sphi 0, %s91
    %s106 = sphi 0, %s92
    %s110 = sphi 0, %s110
    %s112 = sphi 0, %s110
    %s113 = sphi 0, %s112
    %s127 = sphi 0, %s113
    %s131 = sphi 0, %s131
    %s133 = sphi 0, %s131
    %s134 = sphi 0, %s133
    %s148 = sphi 0, %s134
    %s152 = sphi 0, %s152
    %s154 = sphi 0, %s152
    %s155 = sphi 0, %s154
    %s169 = sphi 0, %s155
    %s175 = sphi 0, %s177
    %s178 = sphi 0, %s175
    %s179 = sphi 0, %s178
    %s195 = sphi 0, %s179
  $region4: #{tpu_custom_call.1} parent=0 // loop_header_branch
    %16 = sbr.rel (%p14) target = $region8
  $region5: #{tpu_custom_call.1} parent=0 // loop_body
    %s18 = ssub.s32 %s13, 1
    %s19 = ssub.s32 %s13, 2
    %s20 = sadd.s32 %s13, 1
    %s21 = ssub.s32 %s13, %s20
    %p22 = scmp.eq.s32.totalorder %s21, 0
    %s24 = sadd.s32 %s23, 1
    %s25 = scalar_select %p22, %s23, %s24
    %p28 = pneg %p22
    %p29 = scmp.eq.s32.totalorder %s13, 1
    %p30 = por %p28, %p29
    %p31 = scmp.ne.s32.totalorder %s23, %s26
    %p32 = scmp.eq.s32.totalorder %s13, 0
    %p33 = por %p31, %p32
    %p34 = scmp.ne.s32.totalorder %s23, %s26
    %p35 = scmp.eq.s32.totalorder %s18, 1
    %p36 = por %p34, %p35
    %p37 = scmp.ne.s32.totalorder %s26, %s27
    %p38 = scmp.eq.s32.totalorder %s18, 0
    %p39 = por %p37, %p38
    %p40 = scmp.ne.s32.totalorder %s26, %s27
    %p41 = scmp.eq.s32.totalorder %s19, 1
    %p42 = por %p40, %p41
    %p44 = scmp.ne.s32.totalorder %s27, %s43
    %p45 = scmp.eq.s32.totalorder %s19, 0
    %p46 = por %p44, %p45
    %s48 = sadd.s32 %s47, 1
    %p51 = scmp.eq.s32.totalorder %s13, 1
    %p52 = scmp.ne.s32.totalorder %s47, %s49
    %p53 = scmp.eq.s32.totalorder %s13, 0
    %p54 = por %p52, %p53
    %p55 = scmp.ne.s32.totalorder %s47, %s49
    %p56 = scmp.eq.s32.totalorder %s18, 1
    %p57 = por %p55, %p56
    %p58 = scmp.ne.s32.totalorder %s49, %s50
    %p59 = scmp.eq.s32.totalorder %s18, 0
    %p60 = por %p58, %p59
    %p61 = scmp.ne.s32.totalorder %s49, %s50
    %p62 = scmp.eq.s32.totalorder %s19, 1
    %p63 = por %p61, %p62
    %p65 = scmp.ne.s32.totalorder %s50, %s64
    %p66 = scmp.eq.s32.totalorder %s19, 0
    %p67 = por %p65, %p66
    %s69 = sadd.s32 %s68, 1
    %p72 = scmp.eq.s32.totalorder %s13, 1
    %p73 = scmp.ne.s32.totalorder %s68, %s70
    %p74 = scmp.eq.s32.totalorder %s13, 0
    %p75 = por %p73, %p74
    %p76 = scmp.ne.s32.totalorder %s68, %s70
    %p77 = scmp.eq.s32.totalorder %s18, 1
    %p78 = por %p76, %p77
    %p79 = scmp.ne.s32.totalorder %s70, %s71
    %p80 = scmp.eq.s32.totalorder %s18, 0
    %p81 = por %p79, %p80
    %p82 = scmp.ne.s32.totalorder %s70, %s71
    %p83 = scmp.eq.s32.totalorder %s19, 1
    %p84 = por %p82, %p83
    %p86 = scmp.ne.s32.totalorder %s71, %s85
    %p87 = scmp.eq.s32.totalorder %s19, 0
    %p88 = por %p86, %p87
    %s90 = sadd.s32 %s89, 1
    %p93 = scmp.eq.s32.totalorder %s13, 1
    %p94 = scmp.ne.s32.totalorder %s89, %s91
    %p95 = scmp.eq.s32.totalorder %s13, 0
    %p96 = por %p94, %p95
    %p97 = scmp.ne.s32.totalorder %s89, %s91
    %p98 = scmp.eq.s32.totalorder %s18, 1
    %p99 = por %p97, %p98
    %p100 = scmp.ne.s32.totalorder %s91, %s92
    %p101 = scmp.eq.s32.totalorder %s18, 0
    %p102 = por %p100, %p101
    %p103 = scmp.ne.s32.totalorder %s91, %s92
    %p104 = scmp.eq.s32.totalorder %s19, 1
    %p105 = por %p103, %p104
    %p107 = scmp.ne.s32.totalorder %s92, %s106
    %p108 = scmp.eq.s32.totalorder %s19, 0
    %p109 = por %p107, %p108
    %s111 = sadd.s32 %s110, 1
    %p114 = scmp.eq.s32.totalorder %s13, 1
    %p115 = scmp.ne.s32.totalorder %s110, %s112
    %p116 = scmp.eq.s32.totalorder %s13, 0
    %p117 = por %p115, %p116
    %p118 = scmp.ne.s32.totalorder %s110, %s112
    %p119 = scmp.eq.s32.totalorder %s18, 1
    %p120 = por %p118, %p119
    %p121 = scmp.ne.s32.totalorder %s112, %s113
    %p122 = scmp.eq.s32.totalorder %s18, 0
    %p123 = por %p121, %p122
    %p124 = scmp.ne.s32.totalorder %s112, %s113
    %p125 = scmp.eq.s32.totalorder %s19, 1
    %p126 = por %p124, %p125
    %p128 = scmp.ne.s32.totalorder %s113, %s127
    %p129 = scmp.eq.s32.totalorder %s19, 0
    %p130 = por %p128, %p129
    %s132 = sadd.s32 %s131, 1
    %p135 = scmp.eq.s32.totalorder %s13, 1
    %p136 = scmp.ne.s32.totalorder %s131, %s133
    %p137 = scmp.eq.s32.totalorder %s13, 0
    %p138 = por %p136, %p137
    %p139 = scmp.ne.s32.totalorder %s131, %s133
    %p140 = scmp.eq.s32.totalorder %s18, 1
    %p141 = por %p139, %p140
    %p142 = scmp.ne.s32.totalorder %s133, %s134
    %p143 = scmp.eq.s32.totalorder %s18, 0
    %p144 = por %p142, %p143
    %p145 = scmp.ne.s32.totalorder %s133, %s134
    %p146 = scmp.eq.s32.totalorder %s19, 1
    %p147 = por %p145, %p146
    %p149 = scmp.ne.s32.totalorder %s134, %s148
    %p150 = scmp.eq.s32.totalorder %s19, 0
    %p151 = por %p149, %p150
    %s153 = sadd.s32 %s152, 1
    %p156 = scmp.eq.s32.totalorder %s13, 1
    %p157 = scmp.ne.s32.totalorder %s152, %s154
    %p158 = scmp.eq.s32.totalorder %s13, 0
    %p159 = por %p157, %p158
    %p160 = scmp.ne.s32.totalorder %s152, %s154
    %p161 = scmp.eq.s32.totalorder %s18, 1
    %p162 = por %p160, %p161
    %p163 = scmp.ne.s32.totalorder %s154, %s155
    %p164 = scmp.eq.s32.totalorder %s18, 0
    %p165 = por %p163, %p164
    %p166 = scmp.ne.s32.totalorder %s154, %s155
    %p167 = scmp.eq.s32.totalorder %s19, 1
    %p168 = por %p166, %p167
    %p170 = scmp.ne.s32.totalorder %s155, %s169
    %p171 = scmp.eq.s32.totalorder %s19, 0
    %p172 = por %p170, %p171
    %s173 = ssub.s32 %s13, %s20
    %p174 = scmp.eq.s32.totalorder %s173, 0
    %s176 = sadd.s32 %s175, 1
    %s177 = scalar_select %p174, %s175, %s176
    %p180 = pneg %p174
    %p181 = scmp.eq.s32.totalorder %s13, 1
    %p182 = por %p180, %p181
    %p183 = scmp.ne.s32.totalorder %s175, %s178
    %p184 = scmp.eq.s32.totalorder %s13, 0
    %p185 = por %p183, %p184
    %p186 = scmp.ne.s32.totalorder %s175, %s178
    %p187 = scmp.eq.s32.totalorder %s18, 1
    %p188 = por %p186, %p187
    %p189 = scmp.ne.s32.totalorder %s178, %s179
    %p190 = scmp.eq.s32.totalorder %s18, 0
    %p191 = por %p189, %p190
    %p192 = scmp.ne.s32.totalorder %s178, %s179
    %p193 = scmp.eq.s32.totalorder %s19, 1
    %p194 = por %p192, %p193
    %p196 = scmp.ne.s32.totalorder %s179, %s195
    %p197 = scmp.eq.s32.totalorder %s19, 0
    %p198 = por %p196, %p197
    %p199 = scmp.le.s32.totalorder 1, %s13
    %p200 = scmp.lt.s32.totalorder %s13, 3
    %p201 = pnand %p199, %p200
    %p202 = pneg %p201
    // Predicated region
    $region9: #{tpu_custom_call.1} parent=5 // pred_check
      _
    $region10: #{tpu_custom_call.1} parent=5 // pred_check_branch
      %204 = sbr.rel (%p201) target = $region12
    $region11: #{tpu_custom_call.1} parent=5 // pred_region
      %s205 = ssub.s32 %s13, 1
      // Predicated region
      $region13: #{tpu_custom_call.1} parent=11 // pred_check
        %p206 = pneg %p60
      $region14: #{tpu_custom_call.1} parent=11 // pred_check_branch
        %208 = sbr.rel (%p206) target = $region16
      $region15: #{tpu_custom_call.1} parent=11 // pred_region
        _
      $region16: #{tpu_custom_call.1} parent=11 // pred_fallthru
        _
      // Predicated region
      $region17: #{tpu_custom_call.1} parent=11 // pred_check
        %p209 = pneg %p81
      $region18: #{tpu_custom_call.1} parent=11 // pred_check_branch
        %211 = sbr.rel (%p209) target = $region20
      $region19: #{tpu_custom_call.1} parent=11 // pred_region
        _
      $region20: #{tpu_custom_call.1} parent=11 // pred_fallthru
        _
      // Predicated region
      $region21: #{tpu_custom_call.1} parent=11 // pred_check
        %p212 = pneg %p102
      $region22: #{tpu_custom_call.1} parent=11 // pred_check_branch
        %214 = sbr.rel (%p212) target = $region24
      $region23: #{tpu_custom_call.1} parent=11 // pred_region
        _
      $region24: #{tpu_custom_call.1} parent=11 // pred_fallthru
        _
      // Predicated region
      $region25: #{tpu_custom_call.1} parent=11 // pred_check
        %p215 = pneg %p123
      $region26: #{tpu_custom_call.1} parent=11 // pred_check_branch
        %217 = sbr.rel (%p215) target = $region28
      $region27: #{tpu_custom_call.1} parent=11 // pred_region
        _
      $region28: #{tpu_custom_call.1} parent=11 // pred_fallthru
        _
      // Predicated region
      $region29: #{tpu_custom_call.1} parent=11 // pred_check
        %p218 = pneg %p144
      $region30: #{tpu_custom_call.1} parent=11 // pred_check_branch
        %220 = sbr.rel (%p218) target = $region32
      $region31: #{tpu_custom_call.1} parent=11 // pred_region
        _
      $region32: #{tpu_custom_call.1} parent=11 // pred_fallthru
        _
      // Predicated region
      $region33: #{tpu_custom_call.1} parent=11 // pred_check
        %p221 = pneg %p165
      $region34: #{tpu_custom_call.1} parent=11 // pred_check_branch
        %223 = sbr.rel (%p221) target = $region36
      $region35: #{tpu_custom_call.1} parent=11 // pred_region
        _
      $region36: #{tpu_custom_call.1} parent=11 // pred_fallthru
        _
    $region12: #{tpu_custom_call.1} parent=5 // pred_fallthru
      _
    %p224 = scmp.lt.s32.totalorder %s13, 2
    // Predicated region
    $region37: #{tpu_custom_call.1} parent=5 // pred_check
      %p225 = pneg %p224
    $region38: #{tpu_custom_call.1} parent=5 // pred_check_branch
      %227 = sbr.rel (%p225) target = $region40
    $region39: #{tpu_custom_call.1} parent=5 // pred_region
      // Predicated region
      $region41: #{tpu_custom_call.1} parent=39 // pred_check
        %p228 = pneg %p33
      $region42: #{tpu_custom_call.1} parent=39 // pred_check_branch
        %230 = sbr.rel (%p228) target = $region44
      $region43: #{tpu_custom_call.1} parent=39 // pred_region
        %p231 = scmp.lt.s32.totalorder %s13, 1
        %s232 = scalar_select %p231, %s13, 1
        %s233 = smul.addr %s232, 32
        %s234 = smul.addr %s233, 4
        %s235 = scalar_lea.vmem %s0, %s234
      $region44: #{tpu_custom_call.1} parent=39 // pred_fallthru
        _
    $region40: #{tpu_custom_call.1} parent=5 // pred_fallthru
      _
    %p236 = scmp.le.s32.totalorder 1, %s13
    %p237 = scmp.lt.s32.totalorder %s13, 3
    %p238 = pnand %p236, %p237
    %p239 = pneg %p238
    // Predicated region
    $region45: #{tpu_custom_call.1} parent=5 // pred_check
      _
    $region46: #{tpu_custom_call.1} parent=5 // pred_check_branch
      %241 = sbr.rel (%p238) target = $region48
    $region47: #{tpu_custom_call.1} parent=5 // pred_region
      %s242 = ssub.s32 %s13, 1
      %p243 = scmp.lt.s32.totalorder %s18, 1
      %s244 = scalar_select %p243, %s18, 1
      %s245 = smul.addr %s244, 32
      %s246 = smul.addr %s245, 4
      %s247 = scalar_lea.vmem %s0, %s246
      %p248 = pneg %p39
      %p249 = pneg %p36
      %p250 = pneg %p60
      %p251 = pneg %p57
      %p252 = pneg %p81
      %p253 = pneg %p78
      %p254 = pneg %p102
      %p255 = pneg %p99
      %p256 = pneg %p123
      %p257 = pneg %p120
      %p258 = pneg %p144
      %p259 = pneg %p141
      %p260 = pneg %p165
      %p261 = pneg %p162
      %p262 = pneg %p191
      %p263 = pneg %p188
      %p264 = scmp.lt.s32.totalorder %s18, 1
      %s265 = scalar_select %p264, %s18, 1
      %s266 = smul.addr %s265, 32
      %s267 = smul.addr %s266, 8
      %s268 = scalar_lea.vmem %s7, %s267
      %p269 = scmp.lt.s32.totalorder %s18, 1
      %s270 = scalar_select %p269, %s18, 1
      %s271 = smul.addr %s270, 32
      %s272 = smul.addr %s271, 4
      %s273 = scalar_lea.vmem %s0, %s272
      %p274 = scmp.lt.s32.totalorder %s18, 1
      %s275 = scalar_select %p274, %s18, 1
      %s276 = smul.addr %s275, 32
      %s277 = smul.addr %s276, 8
      %s278 = scalar_lea.vmem %s7, %s277
      %v280 = vld [vmem:[%s273] sm:$0xf]
      %v281 = vld [vmem:[%s273 + $0x4] sm:$0xf]
      %v282 = vld [vmem:[%s273 + $0x8] sm:$0xf]
      %v283 = vld [vmem:[%s273 + $0xc] sm:$0xf]
      %v284 = vld [vmem:[%s273 + $0x10] sm:$0xf]
      %v285 = vld [vmem:[%s273 + $0x14] sm:$0xf]
      %v286 = vld [vmem:[%s273 + $0x18] sm:$0xf]
      %v287 = vld [vmem:[%s273 + $0x1c] sm:$0xf]
      %v288 = vld [vmem:[%s273 + $0x20] sm:$0xf]
      %v289 = vld [vmem:[%s273 + $0x24] sm:$0xf]
      %v290 = vld [vmem:[%s273 + $0x28] sm:$0xf]
      %v291 = vld [vmem:[%s273 + $0x2c] sm:$0xf]
      %v292 = vld [vmem:[%s273 + $0x30] sm:$0xf]
      %v293 = vld [vmem:[%s273 + $0x34] sm:$0xf]
      %v294 = vld [vmem:[%s273 + $0x38] sm:$0xf]
      %v295 = vld [vmem:[%s273 + $0x3c] sm:$0xf]
      %v296 = vld [vmem:[%s273 + $0x40] sm:$0xf]
      %v297 = vld [vmem:[%s273 + $0x44] sm:$0xf]
      %v298 = vld [vmem:[%s273 + $0x48] sm:$0xf]
      %v299 = vld [vmem:[%s273 + $0x4c] sm:$0xf]
      %v300 = vld [vmem:[%s273 + $0x50] sm:$0xf]
      %v301 = vld [vmem:[%s273 + $0x54] sm:$0xf]
      %v302 = vld [vmem:[%s273 + $0x58] sm:$0xf]
      %v303 = vld [vmem:[%s273 + $0x5c] sm:$0xf]
      %v304 = vld [vmem:[%s273 + $0x60] sm:$0xf]
      %v305 = vld [vmem:[%s273 + $0x64] sm:$0xf]
      %v306 = vld [vmem:[%s273 + $0x68] sm:$0xf]
      %v307 = vld [vmem:[%s273 + $0x6c] sm:$0xf]
      %v308 = vld [vmem:[%s273 + $0x70] sm:$0xf]
      %v309 = vld [vmem:[%s273 + $0x74] sm:$0xf]
      %v310 = vld [vmem:[%s273 + $0x78] sm:$0xf]
      %v311 = vld [vmem:[%s273 + $0x7c] sm:$0xf]
      %vm312 = vcmask 27648
      %313 = vst.msk [vmem:[#allocation2] sm:$0xf] %vm312, 0
      %314 = vst.msk [vmem:[#allocation2 + $0x4] sm:$0xf] %vm312, 0
      %vm315 = vcmask 24576
      %316 = vst.msk [vmem:[#allocation2 + $0x8] sm:$0x1] %vm315, 0
      %317 = vst.msk [vmem:[#allocation2 + $0xc] sm:$0xf] %vm312, 0
      %318 = vst.msk [vmem:[#allocation2 + $0x10] sm:$0xf] %vm312, 0
      %319 = vst.msk [vmem:[#allocation2 + $0x14] sm:$0x1] %vm315, 0
      %320 = vst.msk [vmem:[#allocation2 + $0x18] sm:$0xf] %vm312, 0
      %321 = vst.msk [vmem:[#allocation2 + $0x1c] sm:$0xf] %vm312, 0
      %322 = vst.msk [vmem:[#allocation2 + $0x20] sm:$0x1] %vm315, 0
      %323 = vst.msk [vmem:[#allocation2 + $0x24] sm:$0xf] %vm312, 0
      %324 = vst.msk [vmem:[#allocation2 + $0x28] sm:$0xf] %vm312, 0
      %325 = vst.msk [vmem:[#allocation2 + $0x2c] sm:$0x1] %vm315, 0
      %326 = vst.msk [vmem:[#allocation2 + $0x30] sm:$0xf] %vm312, 0
      %327 = vst.msk [vmem:[#allocation2 + $0x34] sm:$0xf] %vm312, 0
      %328 = vst.msk [vmem:[#allocation2 + $0x38] sm:$0x1] %vm315, 0
      %329 = vst.msk [vmem:[#allocation2 + $0x3c] sm:$0xf] %vm312, 0
      %330 = vst.msk [vmem:[#allocation2 + $0x40] sm:$0xf] %vm312, 0
      %331 = vst.msk [vmem:[#allocation2 + $0x44] sm:$0x1] %vm315, 0
      %332 = vst.msk [vmem:[#allocation2 + $0x48] sm:$0xf] %vm312, 0
      %333 = vst.msk [vmem:[#allocation2 + $0x4c] sm:$0xf] %vm312, 0
      %334 = vst.msk [vmem:[#allocation2 + $0x50] sm:$0x1] %vm315, 0
      %335 = vst.msk [vmem:[#allocation2 + $0x54] sm:$0xf] %vm312, 0
      %336 = vst.msk [vmem:[#allocation2 + $0x58] sm:$0xf] %vm312, 0
      %337 = vst.msk [vmem:[#allocation2 + $0x5c] sm:$0x1] %vm315, 0
      %338 = vst.msk [vmem:[#allocation2 + $0x60] sm:$0xf] %vm312, 0
      %339 = vst.msk [vmem:[#allocation2 + $0x64] sm:$0xf] %vm312, 0
      %340 = vst.msk [vmem:[#allocation2 + $0x68] sm:$0x1] %vm315, 0
      %341 = vst.msk [vmem:[#allocation2 + $0x6c] sm:$0xf] %vm312, 0
      %342 = vst.msk [vmem:[#allocation2 + $0x70] sm:$0xf] %vm312, 0
      %343 = vst.msk [vmem:[#allocation2 + $0x74] sm:$0x1] %vm315, 0
      %344 = vst.msk [vmem:[#allocation2 + $0x78] sm:$0xf] %vm312, 0
      %345 = vst.msk [vmem:[#allocation2 + $0x7c] sm:$0xf] %vm312, 0
      %346 = vst.msk [vmem:[#allocation2 + $0x80] sm:$0x1] %vm315, 0
      %347 = vst.msk [vmem:[#allocation2 + $0x84] sm:$0xf] %vm312, 0
      %348 = vst.msk [vmem:[#allocation2 + $0x88] sm:$0xf] %vm312, 0
      %349 = vst.msk [vmem:[#allocation2 + $0x8c] sm:$0x1] %vm315, 0
      %350 = vst.msk [vmem:[#allocation2 + $0x90] sm:$0xf] %vm312, 0
      %351 = vst.msk [vmem:[#allocation2 + $0x94] sm:$0xf] %vm312, 0
      %352 = vst.msk [vmem:[#allocation2 + $0x98] sm:$0x1] %vm315, 0
      %353 = vst.msk [vmem:[#allocation2 + $0x9c] sm:$0xf] %vm312, 0
      %354 = vst.msk [vmem:[#allocation2 + $0xa0] sm:$0xf] %vm312, 0
      %355 = vst.msk [vmem:[#allocation2 + $0xa4] sm:$0x1] %vm315, 0
      %356 = vst.msk [vmem:[#allocation2 + $0xa8] sm:$0xf] %vm312, 0
      %357 = vst.msk [vmem:[#allocation2 + $0xac] sm:$0xf] %vm312, 0
      %358 = vst.msk [vmem:[#allocation2 + $0xb0] sm:$0x1] %vm315, 0
      %359 = vst.msk [vmem:[#allocation2 + $0xb4] sm:$0xf] %vm312, 0
      %360 = vst.msk [vmem:[#allocation2 + $0xb8] sm:$0xf] %vm312, 0
      %361 = vst.msk [vmem:[#allocation2 + $0xbc] sm:$0x1] %vm315, 0
      %362 = vst.msk [vmem:[#allocation2 + $0xc0] sm:$0xf] %vm312, 0
      %363 = vst.msk [vmem:[#allocation2 + $0xc4] sm:$0xf] %vm312, 0
      %364 = vst.msk [vmem:[#allocation2 + $0xc8] sm:$0x1] %vm315, 0
      %365 = vst.msk [vmem:[#allocation2 + $0xcc] sm:$0xf] %vm312, 0
      %366 = vst.msk [vmem:[#allocation2 + $0xd0] sm:$0xf] %vm312, 0
      %367 = vst.msk [vmem:[#allocation2 + $0xd4] sm:$0x1] %vm315, 0
      %vm368 = vsmask.f32 256
      %vm369 = vsmask.f32 4368
      %vm370 = vmor %vm368, %vm369
      %v372 = vshrl.u32 %v280, 16
      %v374 = vrot.slane %v372, 7
      %v375 = vshll.u32 %v280, 16
      %v377 = vor.u32 %v374, %v375
      %v378 = vrot.slane %v374, 4
      %v380 = vshrl.u32 %v281, 16
      %v382 = vrot.slane %v380, 7
      %v383 = vshll.u32 %v281, 16
      %v385 = vor.u32 %v382, %v383
      %v386 = vsel %vm370, %v378, %v385
      %v387 = vrot.slane %v382, 4
      %v389 = vshrl.u32 %v282, 16
      %v391 = vrot.slane %v389, 7
      %v392 = vshll.u32 %v282, 16
      %v394 = vor.u32 %v391, %v392
      %v395 = vrot.slane %v391, 4
      %v397 = vshrl.u32 %v283, 16
      %v399 = vrot.slane %v397, 7
      %v400 = vshll.u32 %v283, 16
      %v402 = vor.u32 %v399, %v400
      %v403 = vsel %vm370, %v395, %v402
      %v404 = vrot.slane %v399, 4
      %v406 = vshrl.u32 %v284, 16
      %v408 = vrot.slane %v406, 7
      %v409 = vshll.u32 %v284, 16
      %v411 = vor.u32 %v408, %v409
      %v412 = vrot.slane %v408, 4
      %v414 = vshrl.u32 %v285, 16
      %v416 = vrot.slane %v414, 7
      %v417 = vshll.u32 %v285, 16
      %v419 = vor.u32 %v416, %v417
      %v420 = vsel %vm370, %v412, %v419
      %v421 = vrot.slane %v416, 4
      %v423 = vshrl.u32 %v286, 16
      %v425 = vrot.slane %v423, 7
      %v426 = vshll.u32 %v286, 16
      %v428 = vor.u32 %v425, %v426
      %v429 = vrot.slane %v425, 4
      %v431 = vshrl.u32 %v287, 16
      %v433 = vrot.slane %v431, 7
      %v434 = vshll.u32 %v287, 16
      %v436 = vor.u32 %v433, %v434
      %v437 = vsel %vm370, %v429, %v436
      %v438 = vrot.slane %v433, 4
      %v440 = vshrl.u32 %v288, 16
      %v442 = vrot.slane %v440, 7
      %v443 = vshll.u32 %v288, 16
      %v445 = vor.u32 %v442, %v443
      %v446 = vrot.slane %v442, 4
      %v448 = vshrl.u32 %v289, 16
      %v450 = vrot.slane %v448, 7
      %v451 = vshll.u32 %v289, 16
      %v453 = vor.u32 %v450, %v451
      %v454 = vsel %vm370, %v446, %v453
      %v455 = vrot.slane %v450, 4
      %v457 = vshrl.u32 %v290, 16
      %v459 = vrot.slane %v457, 7
      %v460 = vshll.u32 %v290, 16
      %v462 = vor.u32 %v459, %v460
      %v463 = vrot.slane %v459, 4
      %v465 = vshrl.u32 %v291, 16
      %v467 = vrot.slane %v465, 7
      %v468 = vshll.u32 %v291, 16
      %v470 = vor.u32 %v467, %v468
      %v471 = vsel %vm370, %v463, %v470
      %v472 = vrot.slane %v467, 4
      %v474 = vshrl.u32 %v292, 16
      %v476 = vrot.slane %v474, 7
      %v477 = vshll.u32 %v292, 16
      %v479 = vor.u32 %v476, %v477
      %v480 = vrot.slane %v476, 4
      %v482 = vshrl.u32 %v293, 16
      %v484 = vrot.slane %v482, 7
      %v485 = vshll.u32 %v293, 16
      %v487 = vor.u32 %v484, %v485
      %v488 = vsel %vm370, %v480, %v487
      %v489 = vrot.slane %v484, 4
      %v491 = vshrl.u32 %v294, 16
      %v493 = vrot.slane %v491, 7
      %v494 = vshll.u32 %v294, 16
      %v496 = vor.u32 %v493, %v494
      %v497 = vrot.slane %v493, 4
      %v499 = vshrl.u32 %v295, 16
      %v501 = vrot.slane %v499, 7
      %v502 = vshll.u32 %v295, 16
      %v504 = vor.u32 %v501, %v502
      %v505 = vsel %vm370, %v497, %v504
      %v506 = vrot.slane %v501, 4
      %v508 = vshrl.u32 %v296, 16
      %v510 = vrot.slane %v508, 7
      %v511 = vshll.u32 %v296, 16
      %v513 = vor.u32 %v510, %v511
      %v514 = vrot.slane %v510, 4
      %v516 = vshrl.u32 %v297, 16
      %v518 = vrot.slane %v516, 7
      %v519 = vshll.u32 %v297, 16
      %v521 = vor.u32 %v518, %v519
      %v522 = vsel %vm370, %v514, %v521
      %v523 = vrot.slane %v518, 4
      %v525 = vshrl.u32 %v298, 16
      %v527 = vrot.slane %v525, 7
      %v528 = vshll.u32 %v298, 16
      %v530 = vor.u32 %v527, %v528
      %v531 = vrot.slane %v527, 4
      %v533 = vshrl.u32 %v299, 16
      %v535 = vrot.slane %v533, 7
      %v536 = vshll.u32 %v299, 16
      %v538 = vor.u32 %v535, %v536
      %v539 = vsel %vm370, %v531, %v538
      %v540 = vrot.slane %v535, 4
      %v542 = vshrl.u32 %v300, 16
      %v544 = vrot.slane %v542, 7
      %v545 = vshll.u32 %v300, 16
      %v547 = vor.u32 %v544, %v545
      %v548 = vrot.slane %v544, 4
      %v550 = vshrl.u32 %v301, 16
      %v552 = vrot.slane %v550, 7
      %v553 = vshll.u32 %v301, 16
      %v555 = vor.u32 %v552, %v553
      %v556 = vsel %vm370, %v548, %v555
      %v557 = vrot.slane %v552, 4
      %v559 = vshrl.u32 %v302, 16
      %v561 = vrot.slane %v559, 7
      %v562 = vshll.u32 %v302, 16
      %v564 = vor.u32 %v561, %v562
      %v565 = vrot.slane %v561, 4
      %v567 = vshrl.u32 %v303, 16
      %v569 = vrot.slane %v567, 7
      %v570 = vshll.u32 %v303, 16
      %v572 = vor.u32 %v569, %v570
      %v573 = vsel %vm370, %v565, %v572
      %v574 = vrot.slane %v569, 4
      %v576 = vshrl.u32 %v304, 16
      %v578 = vrot.slane %v576, 7
      %v579 = vshll.u32 %v304, 16
      %v581 = vor.u32 %v578, %v579
      %v582 = vrot.slane %v578, 4
      %v584 = vshrl.u32 %v305, 16
      %v586 = vrot.slane %v584, 7
      %v587 = vshll.u32 %v305, 16
      %v589 = vor.u32 %v586, %v587
      %v590 = vsel %vm370, %v582, %v589
      %v591 = vrot.slane %v586, 4
      %v593 = vshrl.u32 %v306, 16
      %v595 = vrot.slane %v593, 7
      %v596 = vshll.u32 %v306, 16
      %v598 = vor.u32 %v595, %v596
      %v599 = vrot.slane %v595, 4
      %v601 = vshrl.u32 %v307, 16
      %v603 = vrot.slane %v601, 7
      %v604 = vshll.u32 %v307, 16
      %v606 = vor.u32 %v603, %v604
      %v607 = vsel %vm370, %v599, %v606
      %v608 = vrot.slane %v603, 4
      %v610 = vshrl.u32 %v308, 16
      %v612 = vrot.slane %v610, 7
      %v613 = vshll.u32 %v308, 16
      %v615 = vor.u32 %v612, %v613
      %v616 = vrot.slane %v612, 4
      %v618 = vshrl.u32 %v309, 16
      %v620 = vrot.slane %v618, 7
      %v621 = vshll.u32 %v309, 16
      %v623 = vor.u32 %v620, %v621
      %v624 = vsel %vm370, %v616, %v623
      %v625 = vrot.slane %v620, 4
      %v627 = vshrl.u32 %v310, 16
      %v629 = vrot.slane %v627, 7
      %v630 = vshll.u32 %v310, 16
      %v632 = vor.u32 %v629, %v630
      %v633 = vrot.slane %v629, 4
      %v635 = vshrl.u32 %v311, 16
      %v637 = vrot.slane %v635, 7
      %v638 = vshll.u32 %v311, 16
      %v640 = vor.u32 %v637, %v638
      %v641 = vsel %vm370, %v633, %v640
      %v642 = vrot.slane %v637, 4
      %s691 = scalar_lea.vmem [#allocation2], 12
      %vm692 = vcmask 27648
      %vm693 = vsmask.f32 7938
      %vm694 = vmand %vm692, %vm693
      %v695 = vld [vmem:[%s691] sm:$0xf]
      %v696 = vsel %vm694, %v377, %v695
      %697 = vst [vmem:[%s691] sm:$0xf] %v696
      %698 = vst.msk [vmem:[%s691 + $0x4] sm:$0xf] %vm312, %v386
      %vm699 = vcmask 24576
      %vm700 = vmand %vm699, %vm368
      %v701 = vld [vmem:[%s691 + $0x8] sm:$0x1]
      %v702 = vsel %vm700, %v387, %v701
      %703 = vst [vmem:[%s691 + $0x8] sm:$0x1] %v702
      %v704 = vld [vmem:[%s691 + $0xc] sm:$0xf]
      %v705 = vsel %vm694, %v394, %v704
      %706 = vst [vmem:[%s691 + $0xc] sm:$0xf] %v705
      %707 = vst.msk [vmem:[%s691 + $0x10] sm:$0xf] %vm312, %v403
      %v708 = vld [vmem:[%s691 + $0x14] sm:$0x1]
      %v709 = vsel %vm700, %v404, %v708
      %710 = vst [vmem:[%s691 + $0x14] sm:$0x1] %v709
      %v711 = vld [vmem:[%s691 + $0x18] sm:$0xf]
      %v712 = vsel %vm694, %v411, %v711
      %713 = vst [vmem:[%s691 + $0x18] sm:$0xf] %v712
      %714 = vst.msk [vmem:[%s691 + $0x1c] sm:$0xf] %vm312, %v420
      %v715 = vld [vmem:[%s691 + $0x20] sm:$0x1]
      %v716 = vsel %vm700, %v421, %v715
      %717 = vst [vmem:[%s691 + $0x20] sm:$0x1] %v716
      %v718 = vld [vmem:[%s691 + $0x24] sm:$0xf]
      %v719 = vsel %vm694, %v428, %v718
      %720 = vst [vmem:[%s691 + $0x24] sm:$0xf] %v719
      %721 = vst.msk [vmem:[%s691 + $0x28] sm:$0xf] %vm312, %v437
      %v722 = vld [vmem:[%s691 + $0x2c] sm:$0x1]
      %v723 = vsel %vm700, %v438, %v722
      %724 = vst [vmem:[%s691 + $0x2c] sm:$0x1] %v723
      %v725 = vld [vmem:[%s691 + $0x30] sm:$0xf]
      %v726 = vsel %vm694, %v445, %v725
      %727 = vst [vmem:[%s691 + $0x30] sm:$0xf] %v726
      %728 = vst.msk [vmem:[%s691 + $0x34] sm:$0xf] %vm312, %v454
      %v729 = vld [vmem:[%s691 + $0x38] sm:$0x1]
      %v730 = vsel %vm700, %v455, %v729
      %731 = vst [vmem:[%s691 + $0x38] sm:$0x1] %v730
      %v732 = vld [vmem:[%s691 + $0x3c] sm:$0xf]
      %v733 = vsel %vm694, %v462, %v732
      %734 = vst [vmem:[%s691 + $0x3c] sm:$0xf] %v733
      %735 = vst.msk [vmem:[%s691 + $0x40] sm:$0xf] %vm312, %v471
      %v736 = vld [vmem:[%s691 + $0x44] sm:$0x1]
      %v737 = vsel %vm700, %v472, %v736
      %738 = vst [vmem:[%s691 + $0x44] sm:$0x1] %v737
      %v739 = vld [vmem:[%s691 + $0x48] sm:$0xf]
      %v740 = vsel %vm694, %v479, %v739
      %741 = vst [vmem:[%s691 + $0x48] sm:$0xf] %v740
      %742 = vst.msk [vmem:[%s691 + $0x4c] sm:$0xf] %vm312, %v488
      %v743 = vld [vmem:[%s691 + $0x50] sm:$0x1]
      %v744 = vsel %vm700, %v489, %v743
      %745 = vst [vmem:[%s691 + $0x50] sm:$0x1] %v744
      %v746 = vld [vmem:[%s691 + $0x54] sm:$0xf]
      %v747 = vsel %vm694, %v496, %v746
      %748 = vst [vmem:[%s691 + $0x54] sm:$0xf] %v747
      %749 = vst.msk [vmem:[%s691 + $0x58] sm:$0xf] %vm312, %v505
      %v750 = vld [vmem:[%s691 + $0x5c] sm:$0x1]
      %v751 = vsel %vm700, %v506, %v750
      %752 = vst [vmem:[%s691 + $0x5c] sm:$0x1] %v751
      %v753 = vld [vmem:[%s691 + $0x60] sm:$0xf]
      %v754 = vsel %vm694, %v513, %v753
      %755 = vst [vmem:[%s691 + $0x60] sm:$0xf] %v754
      %756 = vst.msk [vmem:[%s691 + $0x64] sm:$0xf] %vm312, %v522
      %v757 = vld [vmem:[%s691 + $0x68] sm:$0x1]
      %v758 = vsel %vm700, %v523, %v757
      %759 = vst [vmem:[%s691 + $0x68] sm:$0x1] %v758
      %v760 = vld [vmem:[%s691 + $0x6c] sm:$0xf]
      %v761 = vsel %vm694, %v530, %v760
      %762 = vst [vmem:[%s691 + $0x6c] sm:$0xf] %v761
      %763 = vst.msk [vmem:[%s691 + $0x70] sm:$0xf] %vm312, %v539
      %v764 = vld [vmem:[%s691 + $0x74] sm:$0x1]
      %v765 = vsel %vm700, %v540, %v764
      %766 = vst [vmem:[%s691 + $0x74] sm:$0x1] %v765
      %v767 = vld [vmem:[%s691 + $0x78] sm:$0xf]
      %v768 = vsel %vm694, %v547, %v767
      %769 = vst [vmem:[%s691 + $0x78] sm:$0xf] %v768
      %770 = vst.msk [vmem:[%s691 + $0x7c] sm:$0xf] %vm312, %v556
      %v771 = vld [vmem:[%s691 + $0x80] sm:$0x1]
      %v772 = vsel %vm700, %v557, %v771
      %773 = vst [vmem:[%s691 + $0x80] sm:$0x1] %v772
      %v774 = vld [vmem:[%s691 + $0x84] sm:$0xf]
      %v775 = vsel %vm694, %v564, %v774
      %776 = vst [vmem:[%s691 + $0x84] sm:$0xf] %v775
      %777 = vst.msk [vmem:[%s691 + $0x88] sm:$0xf] %vm312, %v573
      %v778 = vld [vmem:[%s691 + $0x8c] sm:$0x1]
      %v779 = vsel %vm700, %v574, %v778
      %780 = vst [vmem:[%s691 + $0x8c] sm:$0x1] %v779
      %v781 = vld [vmem:[%s691 + $0x90] sm:$0xf]
      %v782 = vsel %vm694, %v581, %v781
      %783 = vst [vmem:[%s691 + $0x90] sm:$0xf] %v782
      %784 = vst.msk [vmem:[%s691 + $0x94] sm:$0xf] %vm312, %v590
      %v785 = vld [vmem:[%s691 + $0x98] sm:$0x1]
      %v786 = vsel %vm700, %v591, %v785
      %787 = vst [vmem:[%s691 + $0x98] sm:$0x1] %v786
      %v788 = vld [vmem:[%s691 + $0x9c] sm:$0xf]
      %v789 = vsel %vm694, %v598, %v788
      %790 = vst [vmem:[%s691 + $0x9c] sm:$0xf] %v789
      %791 = vst.msk [vmem:[%s691 + $0xa0] sm:$0xf] %vm312, %v607
      %v792 = vld [vmem:[%s691 + $0xa4] sm:$0x1]
      %v793 = vsel %vm700, %v608, %v792
      %794 = vst [vmem:[%s691 + $0xa4] sm:$0x1] %v793
      %v795 = vld [vmem:[%s691 + $0xa8] sm:$0xf]
      %v796 = vsel %vm694, %v615, %v795
      %797 = vst [vmem:[%s691 + $0xa8] sm:$0xf] %v796
      %798 = vst.msk [vmem:[%s691 + $0xac] sm:$0xf] %vm312, %v624
      %v799 = vld [vmem:[%s691 + $0xb0] sm:$0x1]
      %v800 = vsel %vm700, %v625, %v799
      %801 = vst [vmem:[%s691 + $0xb0] sm:$0x1] %v800
      %v802 = vld [vmem:[%s691 + $0xb4] sm:$0xf]
      %v803 = vsel %vm694, %v632, %v802
      %804 = vst [vmem:[%s691 + $0xb4] sm:$0xf] %v803
      %805 = vst.msk [vmem:[%s691 + $0xb8] sm:$0xf] %vm312, %v641
      %v806 = vld [vmem:[%s691 + $0xbc] sm:$0x1]
      %v807 = vsel %vm700, %v642, %v806
      %808 = vst [vmem:[%s691 + $0xbc] sm:$0x1] %v807
      %v809 = vld [vmem:[#allocation2] sm:$0xf]
      %v810 = vld [vmem:[#allocation2 + $0x4] sm:$0xf]
      %v811 = vld [vmem:[#allocation2 + $0xc] sm:$0xf]
      %v812 = vld [vmem:[#allocation2 + $0x10] sm:$0xf]
      %v813 = vld [vmem:[#allocation2 + $0x18] sm:$0xf]
      %v814 = vld [vmem:[#allocation2 + $0x1c] sm:$0xf]
      %v815 = vld [vmem:[#allocation2 + $0x24] sm:$0xf]
      %v816 = vld [vmem:[#allocation2 + $0x28] sm:$0xf]
      %v817 = vld [vmem:[#allocation2 + $0x30] sm:$0xf]
      %v818 = vld [vmem:[#allocation2 + $0x34] sm:$0xf]
      %v819 = vld [vmem:[#allocation2 + $0x3c] sm:$0xf]
      %v820 = vld [vmem:[#allocation2 + $0x40] sm:$0xf]
      %v821 = vld [vmem:[#allocation2 + $0x48] sm:$0xf]
      %v822 = vld [vmem:[#allocation2 + $0x4c] sm:$0xf]
      %v823 = vld [vmem:[#allocation2 + $0x54] sm:$0xf]
      %v824 = vld [vmem:[#allocation2 + $0x58] sm:$0xf]
      %v825 = vld [vmem:[#allocation2 + $0x60] sm:$0xf]
      %v826 = vld [vmem:[#allocation2 + $0x64] sm:$0xf]
      %v827 = vld [vmem:[#allocation2 + $0x6c] sm:$0xf]
      %v828 = vld [vmem:[#allocation2 + $0x70] sm:$0xf]
      %v829 = vld [vmem:[#allocation2 + $0x78] sm:$0xf]
      %v830 = vld [vmem:[#allocation2 + $0x7c] sm:$0xf]
      %v831 = vld [vmem:[#allocation2 + $0x84] sm:$0xf]
      %v832 = vld [vmem:[#allocation2 + $0x88] sm:$0xf]
      %v833 = vld [vmem:[#allocation2 + $0x90] sm:$0xf]
      %v834 = vld [vmem:[#allocation2 + $0x94] sm:$0xf]
      %v835 = vld [vmem:[#allocation2 + $0x9c] sm:$0xf]
      %v836 = vld [vmem:[#allocation2 + $0xa0] sm:$0xf]
      %v837 = vld [vmem:[#allocation2 + $0xa8] sm:$0xf]
      %v838 = vld [vmem:[#allocation2 + $0xac] sm:$0xf]
      %v839 = vld [vmem:[#allocation2 + $0xb4] sm:$0xf]
      %v840 = vld [vmem:[#allocation2 + $0xb8] sm:$0xf]
      %v841 = vld [vmem:[%s1] sm:$0x3]
      %v842 = vld [vmem:[#allocation2 + $0x8] sm:$0x1]
      %v843 = vld [vmem:[#allocation2 + $0x14] sm:$0x1]
      %v844 = vld [vmem:[#allocation2 + $0x20] sm:$0x1]
      %v845 = vld [vmem:[#allocation2 + $0x2c] sm:$0x1]
      %v846 = vld [vmem:[#allocation2 + $0x38] sm:$0x1]
      %v847 = vld [vmem:[#allocation2 + $0x44] sm:$0x1]
      %v848 = vld [vmem:[#allocation2 + $0x50] sm:$0x1]
      %v849 = vld [vmem:[#allocation2 + $0x5c] sm:$0x1]
      %v850 = vld [vmem:[#allocation2 + $0x68] sm:$0x1]
      %v851 = vld [vmem:[#allocation2 + $0x74] sm:$0x1]
      %v852 = vld [vmem:[#allocation2 + $0x80] sm:$0x1]
      %v853 = vld [vmem:[#allocation2 + $0x8c] sm:$0x1]
      %v854 = vld [vmem:[#allocation2 + $0x98] sm:$0x1]
      %v855 = vld [vmem:[#allocation2 + $0xa4] sm:$0x1]
      %v856 = vld [vmem:[#allocation2 + $0xb0] sm:$0x1]
      %v857 = vld [vmem:[#allocation2 + $0xbc] sm:$0x1]
      %vm858 = vsmask.f32 3328
      %vm859 = vsmask.f32 7440
      %vm860 = vmor %vm858, %vm859
      %v862 = vshrl.u32 %v809, 16
      %v864 = vrot.slane %v862, 4
      %v865 = vshll.u32 %v809, 16
      %v867 = vrot.slane %v865, 5
      %v868 = vor.u32 %v864, %v867
      %v869 = vrot.slane %v868, 4
      %v871 = vshll.u32 %v810, 16
      %v873 = vrot.slane %v871, 5
      %v874 = vsel %vm860, %v869, %v873
      %v875 = vshrl.u32 %v810, 16
      %v877 = vrot.slane %v875, 4
      %v878 = vor.u32 %v877, %v873
      %v879 = vrot.slane %v878, 4
      %v881 = vshll.u32 %v842, 16
      %v883 = vrot.slane %v881, 5
      %v884 = vsel %vm860, %v879, %v883
      %v886 = vshrl.u32 %v811, 16
      %v888 = vrot.slane %v886, 4
      %v889 = vshll.u32 %v811, 16
      %v891 = vrot.slane %v889, 5
      %v892 = vor.u32 %v888, %v891
      %v893 = vrot.slane %v892, 4
      %v895 = vshll.u32 %v812, 16
      %v897 = vrot.slane %v895, 5
      %v898 = vsel %vm860, %v893, %v897
      %v899 = vshrl.u32 %v812, 16
      %v901 = vrot.slane %v899, 4
      %v902 = vor.u32 %v901, %v897
      %v903 = vrot.slane %v902, 4
      %v905 = vshll.u32 %v843, 16
      %v907 = vrot.slane %v905, 5
      %v908 = vsel %vm860, %v903, %v907
      %v910 = vshrl.u32 %v813, 16
      %v912 = vrot.slane %v910, 4
      %v913 = vshll.u32 %v813, 16
      %v915 = vrot.slane %v913, 5
      %v916 = vor.u32 %v912, %v915
      %v917 = vrot.slane %v916, 4
      %v919 = vshll.u32 %v814, 16
      %v921 = vrot.slane %v919, 5
      %v922 = vsel %vm860, %v917, %v921
      %v923 = vshrl.u32 %v814, 16
      %v925 = vrot.slane %v923, 4
      %v926 = vor.u32 %v925, %v921
      %v927 = vrot.slane %v926, 4
      %v929 = vshll.u32 %v844, 16
      %v931 = vrot.slane %v929, 5
      %v932 = vsel %vm860, %v927, %v931
      %v934 = vshrl.u32 %v815, 16
      %v936 = vrot.slane %v934, 4
      %v937 = vshll.u32 %v815, 16
      %v939 = vrot.slane %v937, 5
      %v940 = vor.u32 %v936, %v939
      %v941 = vrot.slane %v940, 4
      %v943 = vshll.u32 %v816, 16
      %v945 = vrot.slane %v943, 5
      %v946 = vsel %vm860, %v941, %v945
      %v947 = vshrl.u32 %v816, 16
      %v949 = vrot.slane %v947, 4
      %v950 = vor.u32 %v949, %v945
      %v951 = vrot.slane %v950, 4
      %v953 = vshll.u32 %v845, 16
      %v955 = vrot.slane %v953, 5
      %v956 = vsel %vm860, %v951, %v955
      %v958 = vshrl.u32 %v817, 16
      %v960 = vrot.slane %v958, 4
      %v961 = vshll.u32 %v817, 16
      %v963 = vrot.slane %v961, 5
      %v964 = vor.u32 %v960, %v963
      %v965 = vrot.slane %v964, 4
      %v967 = vshll.u32 %v818, 16
      %v969 = vrot.slane %v967, 5
      %v970 = vsel %vm860, %v965, %v969
      %v971 = vshrl.u32 %v818, 16
      %v973 = vrot.slane %v971, 4
      %v974 = vor.u32 %v973, %v969
      %v975 = vrot.slane %v974, 4
      %v977 = vshll.u32 %v846, 16
      %v979 = vrot.slane %v977, 5
      %v980 = vsel %vm860, %v975, %v979
      %v982 = vshrl.u32 %v819, 16
      %v984 = vrot.slane %v982, 4
      %v985 = vshll.u32 %v819, 16
      %v987 = vrot.slane %v985, 5
      %v988 = vor.u32 %v984, %v987
      %v989 = vrot.slane %v988, 4
      %v991 = vshll.u32 %v820, 16
      %v993 = vrot.slane %v991, 5
      %v994 = vsel %vm860, %v989, %v993
      %v995 = vshrl.u32 %v820, 16
      %v997 = vrot.slane %v995, 4
      %v998 = vor.u32 %v997, %v993
      %v999 = vrot.slane %v998, 4
      %v1001 = vshll.u32 %v847, 16
      %v1003 = vrot.slane %v1001, 5
      %v1004 = vsel %vm860, %v999, %v1003
      %v1006 = vshrl.u32 %v821, 16
      %v1008 = vrot.slane %v1006, 4
      %v1009 = vshll.u32 %v821, 16
      %v1011 = vrot.slane %v1009, 5
      %v1012 = vor.u32 %v1008, %v1011
      %v1013 = vrot.slane %v1012, 4
      %v1015 = vshll.u32 %v822, 16
      %v1017 = vrot.slane %v1015, 5
      %v1018 = vsel %vm860, %v1013, %v1017
      %v1019 = vshrl.u32 %v822, 16
      %v1021 = vrot.slane %v1019, 4
      %v1022 = vor.u32 %v1021, %v1017
      %v1023 = vrot.slane %v1022, 4
      %v1025 = vshll.u32 %v848, 16
      %v1027 = vrot.slane %v1025, 5
      %v1028 = vsel %vm860, %v1023, %v1027
      %v1030 = vshrl.u32 %v823, 16
      %v1032 = vrot.slane %v1030, 4
      %v1033 = vshll.u32 %v823, 16
      %v1035 = vrot.slane %v1033, 5
      %v1036 = vor.u32 %v1032, %v1035
      %v1037 = vrot.slane %v1036, 4
      %v1039 = vshll.u32 %v824, 16
      %v1041 = vrot.slane %v1039, 5
      %v1042 = vsel %vm860, %v1037, %v1041
      %v1043 = vshrl.u32 %v824, 16
      %v1045 = vrot.slane %v1043, 4
      %v1046 = vor.u32 %v1045, %v1041
      %v1047 = vrot.slane %v1046, 4
      %v1049 = vshll.u32 %v849, 16
      %v1051 = vrot.slane %v1049, 5
      %v1052 = vsel %vm860, %v1047, %v1051
      %v1054 = vshrl.u32 %v825, 16
      %v1056 = vrot.slane %v1054, 4
      %v1057 = vshll.u32 %v825, 16
      %v1059 = vrot.slane %v1057, 5
      %v1060 = vor.u32 %v1056, %v1059
      %v1061 = vrot.slane %v1060, 4
      %v1063 = vshll.u32 %v826, 16
      %v1065 = vrot.slane %v1063, 5
      %v1066 = vsel %vm860, %v1061, %v1065
      %v1067 = vshrl.u32 %v826, 16
      %v1069 = vrot.slane %v1067, 4
      %v1070 = vor.u32 %v1069, %v1065
      %v1071 = vrot.slane %v1070, 4
      %v1073 = vshll.u32 %v850, 16
      %v1075 = vrot.slane %v1073, 5
      %v1076 = vsel %vm860, %v1071, %v1075
      %v1078 = vshrl.u32 %v827, 16
      %v1080 = vrot.slane %v1078, 4
      %v1081 = vshll.u32 %v827, 16
      %v1083 = vrot.slane %v1081, 5
      %v1084 = vor.u32 %v1080, %v1083
      %v1085 = vrot.slane %v1084, 4
      %v1087 = vshll.u32 %v828, 16
      %v1089 = vrot.slane %v1087, 5
      %v1090 = vsel %vm860, %v1085, %v1089
      %v1091 = vshrl.u32 %v828, 16
      %v1093 = vrot.slane %v1091, 4
      %v1094 = vor.u32 %v1093, %v1089
      %v1095 = vrot.slane %v1094, 4
      %v1097 = vshll.u32 %v851, 16
      %v1099 = vrot.slane %v1097, 5
      %v1100 = vsel %vm860, %v1095, %v1099
      %v1102 = vshrl.u32 %v829, 16
      %v1104 = vrot.slane %v1102, 4
      %v1105 = vshll.u32 %v829, 16
      %v1107 = vrot.slane %v1105, 5
      %v1108 = vor.u32 %v1104, %v1107
      %v1109 = vrot.slane %v1108, 4
      %v1111 = vshll.u32 %v830, 16
      %v1113 = vrot.slane %v1111, 5
      %v1114 = vsel %vm860, %v1109, %v1113
      %v1115 = vshrl.u32 %v830, 16
      %v1117 = vrot.slane %v1115, 4
      %v1118 = vor.u32 %v1117, %v1113
      %v1119 = vrot.slane %v1118, 4
      %v1121 = vshll.u32 %v852, 16
      %v1123 = vrot.slane %v1121, 5
      %v1124 = vsel %vm860, %v1119, %v1123
      %v1126 = vshrl.u32 %v831, 16
      %v1128 = vrot.slane %v1126, 4
      %v1129 = vshll.u32 %v831, 16
      %v1131 = vrot.slane %v1129, 5
      %v1132 = vor.u32 %v1128, %v1131
      %v1133 = vrot.slane %v1132, 4
      %v1135 = vshll.u32 %v832, 16
      %v1137 = vrot.slane %v1135, 5
      %v1138 = vsel %vm860, %v1133, %v1137
      %v1139 = vshrl.u32 %v832, 16
      %v1141 = vrot.slane %v1139, 4
      %v1142 = vor.u32 %v1141, %v1137
      %v1143 = vrot.slane %v1142, 4
      %v1145 = vshll.u32 %v853, 16
      %v1147 = vrot.slane %v1145, 5
      %v1148 = vsel %vm860, %v1143, %v1147
      %v1150 = vshrl.u32 %v833, 16
      %v1152 = vrot.slane %v1150, 4
      %v1153 = vshll.u32 %v833, 16
      %v1155 = vrot.slane %v1153, 5
      %v1156 = vor.u32 %v1152, %v1155
      %v1157 = vrot.slane %v1156, 4
      %v1159 = vshll.u32 %v834, 16
      %v1161 = vrot.slane %v1159, 5
      %v1162 = vsel %vm860, %v1157, %v1161
      %v1163 = vshrl.u32 %v834, 16
      %v1165 = vrot.slane %v1163, 4
      %v1166 = vor.u32 %v1165, %v1161
      %v1167 = vrot.slane %v1166, 4
      %v1169 = vshll.u32 %v854, 16
      %v1171 = vrot.slane %v1169, 5
      %v1172 = vsel %vm860, %v1167, %v1171
      %v1174 = vshrl.u32 %v835, 16
      %v1176 = vrot.slane %v1174, 4
      %v1177 = vshll.u32 %v835, 16
      %v1179 = vrot.slane %v1177, 5
      %v1180 = vor.u32 %v1176, %v1179
      %v1181 = vrot.slane %v1180, 4
      %v1183 = vshll.u32 %v836, 16
      %v1185 = vrot.slane %v1183, 5
      %v1186 = vsel %vm860, %v1181, %v1185
      %v1187 = vshrl.u32 %v836, 16
      %v1189 = vrot.slane %v1187, 4
      %v1190 = vor.u32 %v1189, %v1185
      %v1191 = vrot.slane %v1190, 4
      %v1193 = vshll.u32 %v855, 16
      %v1195 = vrot.slane %v1193, 5
      %v1196 = vsel %vm860, %v1191, %v1195
      %v1198 = vshrl.u32 %v837, 16
      %v1200 = vrot.slane %v1198, 4
      %v1201 = vshll.u32 %v837, 16
      %v1203 = vrot.slane %v1201, 5
      %v1204 = vor.u32 %v1200, %v1203
      %v1205 = vrot.slane %v1204, 4
      %v1207 = vshll.u32 %v838, 16
      %v1209 = vrot.slane %v1207, 5
      %v1210 = vsel %vm860, %v1205, %v1209
      %v1211 = vshrl.u32 %v838, 16
      %v1213 = vrot.slane %v1211, 4
      %v1214 = vor.u32 %v1213, %v1209
      %v1215 = vrot.slane %v1214, 4
      %v1217 = vshll.u32 %v856, 16
      %v1219 = vrot.slane %v1217, 5
      %v1220 = vsel %vm860, %v1215, %v1219
      %v1222 = vshrl.u32 %v839, 16
      %v1224 = vrot.slane %v1222, 4
      %v1225 = vshll.u32 %v839, 16
      %v1227 = vrot.slane %v1225, 5
      %v1228 = vor.u32 %v1224, %v1227
      %v1229 = vrot.slane %v1228, 4
      %v1231 = vshll.u32 %v840, 16
      %v1233 = vrot.slane %v1231, 5
      %v1234 = vsel %vm860, %v1229, %v1233
      %v1235 = vshrl.u32 %v840, 16
      %v1237 = vrot.slane %v1235, 4
      %v1238 = vor.u32 %v1237, %v1233
      %v1239 = vrot.slane %v1238, 4
      %v1241 = vshll.u32 %v857, 16
      %v1243 = vrot.slane %v1241, 5
      %v1244 = vsel %vm860, %v1239, %v1243
      %s1245 = scalar_lea.vmem %s1, 2
      %v1246 = vld [vmem:[%s1245] sm:$0x3]
      %v1247 = vunpack.c.l.b16 %v874
      %v1248 = vunpack.c.l.b16 %v884
      %v1249 = vunpack.c.l.b16 %v898
      %v1250 = vunpack.c.l.b16 %v908
      %v1251 = vunpack.c.l.b16 %v922
      %v1252 = vunpack.c.l.b16 %v932
      %v1253 = vunpack.c.l.b16 %v946
      %v1254 = vunpack.c.l.b16 %v956
      %v1255 = vunpack.c.l.b16 %v970
      %v1256 = vunpack.c.l.b16 %v980
      %v1257 = vunpack.c.l.b16 %v994
      %v1258 = vunpack.c.l.b16 %v1004
      %v1259 = vunpack.c.l.b16 %v1018
      %v1260 = vunpack.c.l.b16 %v1028
      %v1261 = vunpack.c.l.b16 %v1042
      %v1262 = vunpack.c.l.b16 %v1052
      %v1263 = vunpack.c.l.b16 %v1066
      %v1264 = vunpack.c.l.b16 %v1076
      %v1265 = vunpack.c.l.b16 %v1090
      %v1266 = vunpack.c.l.b16 %v1100
      %v1267 = vunpack.c.l.b16 %v1114
      %v1268 = vunpack.c.l.b16 %v1124
      %v1269 = vunpack.c.l.b16 %v1138
      %v1270 = vunpack.c.l.b16 %v1148
      %v1271 = vunpack.c.l.b16 %v1162
      %v1272 = vunpack.c.l.b16 %v1172
      %v1273 = vunpack.c.l.b16 %v1186
      %v1274 = vunpack.c.l.b16 %v1196
      %v1275 = vunpack.c.l.b16 %v1210
      %v1276 = vunpack.c.l.b16 %v1220
      %v1277 = vunpack.c.l.b16 %v1234
      %v1278 = vunpack.c.l.b16 %v1244
      %v1279 = vpack.c.b16 %v1248, %v1247
      %v1280 = vpack.c.b16 %v1250, %v1249
      %v1281 = vpack.c.b16 %v1252, %v1251
      %v1282 = vpack.c.b16 %v1254, %v1253
      %v1283 = vpack.c.b16 %v1256, %v1255
      %v1284 = vpack.c.b16 %v1258, %v1257
      %v1285 = vpack.c.b16 %v1260, %v1259
      %v1286 = vpack.c.b16 %v1262, %v1261
      %v1287 = vpack.c.b16 %v1264, %v1263
      %v1288 = vpack.c.b16 %v1266, %v1265
      %v1289 = vpack.c.b16 %v1268, %v1267
      %v1290 = vpack.c.b16 %v1270, %v1269
      %v1291 = vpack.c.b16 %v1272, %v1271
      %v1292 = vpack.c.b16 %v1274, %v1273
      %v1293 = vpack.c.b16 %v1276, %v1275
      %v1294 = vpack.c.b16 %v1278, %v1277
      %vm1295 = vcmask 31744
      %v1297 = vsel %vm1295, %v1279, 0
      %v1300 = vsel %vm1295, %v1280, 0
      %v1303 = vsel %vm1295, %v1281, 0
      %v1306 = vsel %vm1295, %v1282, 0
      %v1309 = vsel %vm1295, %v1283, 0
      %v1312 = vsel %vm1295, %v1284, 0
      %v1315 = vsel %vm1295, %v1285, 0
      %v1318 = vsel %vm1295, %v1286, 0
      %v1321 = vsel %vm1295, %v1287, 0
      %v1324 = vsel %vm1295, %v1288, 0
      %v1327 = vsel %vm1295, %v1289, 0
      %v1330 = vsel %vm1295, %v1290, 0
      %v1333 = vsel %vm1295, %v1291, 0
      %v1336 = vsel %vm1295, %v1292, 0
      %v1339 = vsel %vm1295, %v1293, 0
      %v1342 = vsel %vm1295, %v1294, 0
      %vm1344 = vcmask 1041408
      %v1346 = vsel %vm1344, %v1246, 0
      %1348 = vmatpush.bf16.msra.mxu0 0
      %1349 = vmatpush.bf16.msra.mxu0 0
      %1350 = vmatpush.bf16.msra.mxu0 0
      %1351 = vmatpush.bf16.msra.mxu0 0
      %1352 = vmatpush.bf16.msra.mxu0 0
      %1353 = vmatpush.bf16.msra.mxu0 0
      %1354 = vmatpush.bf16.msra.mxu0 0
      %1355 = vmatpush.bf16.msra.mxu0 %v1346
      %1356 = vmatmul.bf16.gmra.mxu0 %v1297
      %v1357 = vpop.f32.mrf.mxu0
      %v1358 = vadd.f32 0.0, %v1357
      %v1359 = vpop.f32.mrf.mxu0
      %v1360 = vadd.f32 0.0, %v1359
      %1361 = vmatmul.bf16.gmra.mxu0 %v1300
      %v1362 = vpop.f32.mrf.mxu0
      %v1363 = vadd.f32 0.0, %v1362
      %v1364 = vpop.f32.mrf.mxu0
      %v1365 = vadd.f32 0.0, %v1364
      %1366 = vmatmul.bf16.gmra.mxu0 %v1303
      %v1367 = vpop.f32.mrf.mxu0
      %v1368 = vadd.f32 0.0, %v1367
      %v1369 = vpop.f32.mrf.mxu0
      %v1370 = vadd.f32 0.0, %v1369
      %1371 = vmatmul.bf16.gmra.mxu0 %v1306
      %v1372 = vpop.f32.mrf.mxu0
      %v1373 = vadd.f32 0.0, %v1372
      %v1374 = vpop.f32.mrf.mxu0
      %v1375 = vadd.f32 0.0, %v1374
      %1376 = vmatmul.bf16.gmra.mxu0 %v1309
      %v1377 = vpop.f32.mrf.mxu0
      %v1378 = vadd.f32 0.0, %v1377
      %v1379 = vpop.f32.mrf.mxu0
      %v1380 = vadd.f32 0.0, %v1379
      %1381 = vmatmul.bf16.gmra.mxu0 %v1312
      %v1382 = vpop.f32.mrf.mxu0
      %v1383 = vadd.f32 0.0, %v1382
      %v1384 = vpop.f32.mrf.mxu0
      %v1385 = vadd.f32 0.0, %v1384
      %1386 = vmatmul.bf16.gmra.mxu0 %v1315
      %v1387 = vpop.f32.mrf.mxu0
      %v1388 = vadd.f32 0.0, %v1387
      %v1389 = vpop.f32.mrf.mxu0
      %v1390 = vadd.f32 0.0, %v1389
      %1391 = vmatmul.bf16.gmra.mxu0 %v1318
      %v1392 = vpop.f32.mrf.mxu0
      %v1393 = vadd.f32 0.0, %v1392
      %v1394 = vpop.f32.mrf.mxu0
      %v1395 = vadd.f32 0.0, %v1394
      %1396 = vmatmul.bf16.gmra.mxu0 %v1321
      %v1397 = vpop.f32.mrf.mxu0
      %v1398 = vadd.f32 0.0, %v1397
      %v1399 = vpop.f32.mrf.mxu0
      %v1400 = vadd.f32 0.0, %v1399
      %1401 = vmatmul.bf16.gmra.mxu0 %v1324
      %v1402 = vpop.f32.mrf.mxu0
      %v1403 = vadd.f32 0.0, %v1402
      %v1404 = vpop.f32.mrf.mxu0
      %v1405 = vadd.f32 0.0, %v1404
      %1406 = vmatmul.bf16.gmra.mxu0 %v1327
      %v1407 = vpop.f32.mrf.mxu0
      %v1408 = vadd.f32 0.0, %v1407
      %v1409 = vpop.f32.mrf.mxu0
      %v1410 = vadd.f32 0.0, %v1409
      %1411 = vmatmul.bf16.gmra.mxu0 %v1330
      %v1412 = vpop.f32.mrf.mxu0
      %v1413 = vadd.f32 0.0, %v1412
      %v1414 = vpop.f32.mrf.mxu0
      %v1415 = vadd.f32 0.0, %v1414
      %1416 = vmatmul.bf16.gmra.mxu0 %v1333
      %v1417 = vpop.f32.mrf.mxu0
      %v1418 = vadd.f32 0.0, %v1417
      %v1419 = vpop.f32.mrf.mxu0
      %v1420 = vadd.f32 0.0, %v1419
      %1421 = vmatmul.bf16.gmra.mxu0 %v1336
      %v1422 = vpop.f32.mrf.mxu0
      %v1423 = vadd.f32 0.0, %v1422
      %v1424 = vpop.f32.mrf.mxu0
      %v1425 = vadd.f32 0.0, %v1424
      %1426 = vmatmul.bf16.gmra.mxu0 %v1339
      %v1427 = vpop.f32.mrf.mxu0
      %v1428 = vadd.f32 0.0, %v1427
      %v1429 = vpop.f32.mrf.mxu0
      %v1430 = vadd.f32 0.0, %v1429
      %1431 = vmatmul.bf16.gmra.mxu0 %v1342
      %v1432 = vpop.f32.mrf.mxu0
      %v1433 = vadd.f32 0.0, %v1432
      %v1434 = vpop.f32.mrf.mxu0
      %v1435 = vadd.f32 0.0, %v1434
      %1436 = vdwg.mxu0
      %v1469 = vunpack.c.l.b16 %v809
      %v1470 = vunpack.c.l.b16 %v810
      %v1471 = vunpack.c.l.b16 %v811
      %v1472 = vunpack.c.l.b16 %v812
      %v1473 = vunpack.c.l.b16 %v813
      %v1474 = vunpack.c.l.b16 %v814
      %v1475 = vunpack.c.l.b16 %v815
      %v1476 = vunpack.c.l.b16 %v816
      %v1477 = vunpack.c.l.b16 %v817
      %v1478 = vunpack.c.l.b16 %v818
      %v1479 = vunpack.c.l.b16 %v819
      %v1480 = vunpack.c.l.b16 %v820
      %v1481 = vunpack.c.l.b16 %v821
      %v1482 = vunpack.c.l.b16 %v822
      %v1483 = vunpack.c.l.b16 %v823
      %v1484 = vunpack.c.l.b16 %v824
      %v1485 = vunpack.c.l.b16 %v825
      %v1486 = vunpack.c.l.b16 %v826
      %v1487 = vunpack.c.l.b16 %v827
      %v1488 = vunpack.c.l.b16 %v828
      %v1489 = vunpack.c.l.b16 %v829
      %v1490 = vunpack.c.l.b16 %v830
      %v1491 = vunpack.c.l.b16 %v831
      %v1492 = vunpack.c.l.b16 %v832
      %v1493 = vunpack.c.l.b16 %v833
      %v1494 = vunpack.c.l.b16 %v834
      %v1495 = vunpack.c.l.b16 %v835
      %v1496 = vunpack.c.l.b16 %v836
      %v1497 = vunpack.c.l.b16 %v837
      %v1498 = vunpack.c.l.b16 %v838
      %v1499 = vunpack.c.l.b16 %v839
      %v1500 = vunpack.c.l.b16 %v840
      %v1501 = vpack.c.b16 %v1470, %v1469
      %v1502 = vpack.c.b16 %v1472, %v1471
      %v1503 = vpack.c.b16 %v1474, %v1473
      %v1504 = vpack.c.b16 %v1476, %v1475
      %v1505 = vpack.c.b16 %v1478, %v1477
      %v1506 = vpack.c.b16 %v1480, %v1479
      %v1507 = vpack.c.b16 %v1482, %v1481
      %v1508 = vpack.c.b16 %v1484, %v1483
      %v1509 = vpack.c.b16 %v1486, %v1485
      %v1510 = vpack.c.b16 %v1488, %v1487
      %v1511 = vpack.c.b16 %v1490, %v1489
      %v1512 = vpack.c.b16 %v1492, %v1491
      %v1513 = vpack.c.b16 %v1494, %v1493
      %v1514 = vpack.c.b16 %v1496, %v1495
      %v1515 = vpack.c.b16 %v1498, %v1497
      %v1516 = vpack.c.b16 %v1500, %v1499
      %v1518 = vsel %vm1295, %v1501, 0
      %v1521 = vsel %vm1295, %v1502, 0
      %v1524 = vsel %vm1295, %v1503, 0
      %v1527 = vsel %vm1295, %v1504, 0
      %v1530 = vsel %vm1295, %v1505, 0
      %v1533 = vsel %vm1295, %v1506, 0
      %v1536 = vsel %vm1295, %v1507, 0
      %v1539 = vsel %vm1295, %v1508, 0
      %v1542 = vsel %vm1295, %v1509, 0
      %v1545 = vsel %vm1295, %v1510, 0
      %v1548 = vsel %vm1295, %v1511, 0
      %v1551 = vsel %vm1295, %v1512, 0
      %v1554 = vsel %vm1295, %v1513, 0
      %v1557 = vsel %vm1295, %v1514, 0
      %v1560 = vsel %vm1295, %v1515, 0
      %v1563 = vsel %vm1295, %v1516, 0
      %v1566 = vsel %vm1344, %v841, 0
      %1568 = vmatpush.bf16.msra.mxu0 0
      %1569 = vmatpush.bf16.msra.mxu0 0
      %1570 = vmatpush.bf16.msra.mxu0 0
      %1571 = vmatpush.bf16.msra.mxu0 0
      %1572 = vmatpush.bf16.msra.mxu0 0
      %1573 = vmatpush.bf16.msra.mxu0 0
      %1574 = vmatpush.bf16.msra.mxu0 0
      %1575 = vmatpush.bf16.msra.mxu0 %v1566
      %1576 = vmatmul.bf16.gmra.mxu0 %v1518
      %v1577 = vpop.f32.mrf.mxu0
      %v1578 = vadd.f32 %v1358, %v1577
      %v1579 = vpop.f32.mrf.mxu0
      %v1580 = vadd.f32 %v1360, %v1579
      %1581 = vmatmul.bf16.gmra.mxu0 %v1521
      %v1582 = vpop.f32.mrf.mxu0
      %v1583 = vadd.f32 %v1363, %v1582
      %v1584 = vpop.f32.mrf.mxu0
      %v1585 = vadd.f32 %v1365, %v1584
      %1586 = vmatmul.bf16.gmra.mxu0 %v1524
      %v1587 = vpop.f32.mrf.mxu0
      %v1588 = vadd.f32 %v1368, %v1587
      %v1589 = vpop.f32.mrf.mxu0
      %v1590 = vadd.f32 %v1370, %v1589
      %1591 = vmatmul.bf16.gmra.mxu0 %v1527
      %v1592 = vpop.f32.mrf.mxu0
      %v1593 = vadd.f32 %v1373, %v1592
      %v1594 = vpop.f32.mrf.mxu0
      %v1595 = vadd.f32 %v1375, %v1594
      %1596 = vmatmul.bf16.gmra.mxu0 %v1530
      %v1597 = vpop.f32.mrf.mxu0
      %v1598 = vadd.f32 %v1378, %v1597
      %v1599 = vpop.f32.mrf.mxu0
      %v1600 = vadd.f32 %v1380, %v1599
      %1601 = vmatmul.bf16.gmra.mxu0 %v1533
      %v1602 = vpop.f32.mrf.mxu0
      %v1603 = vadd.f32 %v1383, %v1602
      %v1604 = vpop.f32.mrf.mxu0
      %v1605 = vadd.f32 %v1385, %v1604
      %1606 = vmatmul.bf16.gmra.mxu0 %v1536
      %v1607 = vpop.f32.mrf.mxu0
      %v1608 = vadd.f32 %v1388, %v1607
      %v1609 = vpop.f32.mrf.mxu0
      %v1610 = vadd.f32 %v1390, %v1609
      %1611 = vmatmul.bf16.gmra.mxu0 %v1539
      %v1612 = vpop.f32.mrf.mxu0
      %v1613 = vadd.f32 %v1393, %v1612
      %v1614 = vpop.f32.mrf.mxu0
      %v1615 = vadd.f32 %v1395, %v1614
      %1616 = vmatmul.bf16.gmra.mxu0 %v1542
      %v1617 = vpop.f32.mrf.mxu0
      %v1618 = vadd.f32 %v1398, %v1617
      %v1619 = vpop.f32.mrf.mxu0
      %v1620 = vadd.f32 %v1400, %v1619
      %1621 = vmatmul.bf16.gmra.mxu0 %v1545
      %v1622 = vpop.f32.mrf.mxu0
      %v1623 = vadd.f32 %v1403, %v1622
      %v1624 = vpop.f32.mrf.mxu0
      %v1625 = vadd.f32 %v1405, %v1624
      %1626 = vmatmul.bf16.gmra.mxu0 %v1548
      %v1627 = vpop.f32.mrf.mxu0
      %v1628 = vadd.f32 %v1408, %v1627
      %v1629 = vpop.f32.mrf.mxu0
      %v1630 = vadd.f32 %v1410, %v1629
      %1631 = vmatmul.bf16.gmra.mxu0 %v1551
      %v1632 = vpop.f32.mrf.mxu0
      %v1633 = vadd.f32 %v1413, %v1632
      %v1634 = vpop.f32.mrf.mxu0
      %v1635 = vadd.f32 %v1415, %v1634
      %1636 = vmatmul.bf16.gmra.mxu0 %v1554
      %v1637 = vpop.f32.mrf.mxu0
      %v1638 = vadd.f32 %v1418, %v1637
      %v1639 = vpop.f32.mrf.mxu0
      %v1640 = vadd.f32 %v1420, %v1639
      %1641 = vmatmul.bf16.gmra.mxu0 %v1557
      %v1642 = vpop.f32.mrf.mxu0
      %v1643 = vadd.f32 %v1423, %v1642
      %v1644 = vpop.f32.mrf.mxu0
      %v1645 = vadd.f32 %v1425, %v1644
      %1646 = vmatmul.bf16.gmra.mxu0 %v1560
      %v1647 = vpop.f32.mrf.mxu0
      %v1648 = vadd.f32 %v1428, %v1647
      %v1649 = vpop.f32.mrf.mxu0
      %v1650 = vadd.f32 %v1430, %v1649
      %1651 = vmatmul.bf16.gmra.mxu0 %v1563
      %v1652 = vpop.f32.mrf.mxu0
      %v1653 = vadd.f32 %v1433, %v1652
      %v1654 = vpop.f32.mrf.mxu0
      %v1655 = vadd.f32 %v1435, %v1654
      %1656 = vdwg.mxu0
      %v1657 = vld [vmem:[#allocation2] sm:$0xe]
      %v1658 = vld [vmem:[#allocation2 + $0xc] sm:$0xe]
      %v1659 = vld [vmem:[#allocation2 + $0x18] sm:$0xe]
      %v1660 = vld [vmem:[#allocation2 + $0x24] sm:$0xe]
      %v1661 = vld [vmem:[#allocation2 + $0x30] sm:$0xe]
      %v1662 = vld [vmem:[#allocation2 + $0x3c] sm:$0xe]
      %v1663 = vld [vmem:[#allocation2 + $0x48] sm:$0xe]
      %v1664 = vld [vmem:[#allocation2 + $0x54] sm:$0xe]
      %v1665 = vld [vmem:[#allocation2 + $0x60] sm:$0xe]
      %v1666 = vld [vmem:[#allocation2 + $0x6c] sm:$0xe]
      %v1667 = vld [vmem:[#allocation2 + $0x78] sm:$0xe]
      %v1668 = vld [vmem:[#allocation2 + $0x84] sm:$0xe]
      %v1669 = vld [vmem:[#allocation2 + $0x90] sm:$0xe]
      %v1670 = vld [vmem:[#allocation2 + $0x9c] sm:$0xe]
      %v1671 = vld [vmem:[#allocation2 + $0xa8] sm:$0xe]
      %v1672 = vld [vmem:[#allocation2 + $0xb4] sm:$0xe]
      %vm1705 = vcmask 1042432
      %vm1706 = vcmask 1046532
      %vm1707 = vmor %vm1705, %vm1706
      %v1708 = vrot.slane %v1657, 5
      %v1709 = vrot.slane %v1708, 4
      %v1710 = vrot.slane %v810, 5
      %v1711 = vsel %vm1707, %v1709, %v1710
      %v1712 = vrot.slane %v1710, 4
      %v1713 = vrot.slane %v842, 5
      %v1714 = vsel %vm1707, %v1712, %v1713
      %v1715 = vrot.slane %v1658, 5
      %v1716 = vrot.slane %v1715, 4
      %v1717 = vrot.slane %v812, 5
      %v1718 = vsel %vm1707, %v1716, %v1717
      %v1719 = vrot.slane %v1717, 4
      %v1720 = vrot.slane %v843, 5
      %v1721 = vsel %vm1707, %v1719, %v1720
      %v1722 = vrot.slane %v1659, 5
      %v1723 = vrot.slane %v1722, 4
      %v1724 = vrot.slane %v814, 5
      %v1725 = vsel %vm1707, %v1723, %v1724
      %v1726 = vrot.slane %v1724, 4
      %v1727 = vrot.slane %v844, 5
      %v1728 = vsel %vm1707, %v1726, %v1727
      %v1729 = vrot.slane %v1660, 5
      %v1730 = vrot.slane %v1729, 4
      %v1731 = vrot.slane %v816, 5
      %v1732 = vsel %vm1707, %v1730, %v1731
      %v1733 = vrot.slane %v1731, 4
      %v1734 = vrot.slane %v845, 5
      %v1735 = vsel %vm1707, %v1733, %v1734
      %v1736 = vrot.slane %v1661, 5
      %v1737 = vrot.slane %v1736, 4
      %v1738 = vrot.slane %v818, 5
      %v1739 = vsel %vm1707, %v1737, %v1738
      %v1740 = vrot.slane %v1738, 4
      %v1741 = vrot.slane %v846, 5
      %v1742 = vsel %vm1707, %v1740, %v1741
      %v1743 = vrot.slane %v1662, 5
      %v1744 = vrot.slane %v1743, 4
      %v1745 = vrot.slane %v820, 5
      %v1746 = vsel %vm1707, %v1744, %v1745
      %v1747 = vrot.slane %v1745, 4
      %v1748 = vrot.slane %v847, 5
      %v1749 = vsel %vm1707, %v1747, %v1748
      %v1750 = vrot.slane %v1663, 5
      %v1751 = vrot.slane %v1750, 4
      %v1752 = vrot.slane %v822, 5
      %v1753 = vsel %vm1707, %v1751, %v1752
      %v1754 = vrot.slane %v1752, 4
      %v1755 = vrot.slane %v848, 5
      %v1756 = vsel %vm1707, %v1754, %v1755
      %v1757 = vrot.slane %v1664, 5
      %v1758 = vrot.slane %v1757, 4
      %v1759 = vrot.slane %v824, 5
      %v1760 = vsel %vm1707, %v1758, %v1759
      %v1761 = vrot.slane %v1759, 4
      %v1762 = vrot.slane %v849, 5
      %v1763 = vsel %vm1707, %v1761, %v1762
      %v1764 = vrot.slane %v1665, 5
      %v1765 = vrot.slane %v1764, 4
      %v1766 = vrot.slane %v826, 5
      %v1767 = vsel %vm1707, %v1765, %v1766
      %v1768 = vrot.slane %v1766, 4
      %v1769 = vrot.slane %v850, 5
      %v1770 = vsel %vm1707, %v1768, %v1769
      %v1771 = vrot.slane %v1666, 5
      %v1772 = vrot.slane %v1771, 4
      %v1773 = vrot.slane %v828, 5
      %v1774 = vsel %vm1707, %v1772, %v1773
      %v1775 = vrot.slane %v1773, 4
      %v1776 = vrot.slane %v851, 5
      %v1777 = vsel %vm1707, %v1775, %v1776
      %v1778 = vrot.slane %v1667, 5
      %v1779 = vrot.slane %v1778, 4
      %v1780 = vrot.slane %v830, 5
      %v1781 = vsel %vm1707, %v1779, %v1780
      %v1782 = vrot.slane %v1780, 4
      %v1783 = vrot.slane %v852, 5
      %v1784 = vsel %vm1707, %v1782, %v1783
      %v1785 = vrot.slane %v1668, 5
      %v1786 = vrot.slane %v1785, 4
      %v1787 = vrot.slane %v832, 5
      %v1788 = vsel %vm1707, %v1786, %v1787
      %v1789 = vrot.slane %v1787, 4
      %v1790 = vrot.slane %v853, 5
      %v1791 = vsel %vm1707, %v1789, %v1790
      %v1792 = vrot.slane %v1669, 5
      %v1793 = vrot.slane %v1792, 4
      %v1794 = vrot.slane %v834, 5
      %v1795 = vsel %vm1707, %v1793, %v1794
      %v1796 = vrot.slane %v1794, 4
      %v1797 = vrot.slane %v854, 5
      %v1798 = vsel %vm1707, %v1796, %v1797
      %v1799 = vrot.slane %v1670, 5
      %v1800 = vrot.slane %v1799, 4
      %v1801 = vrot.slane %v836, 5
      %v1802 = vsel %vm1707, %v1800, %v1801
      %v1803 = vrot.slane %v1801, 4
      %v1804 = vrot.slane %v855, 5
      %v1805 = vsel %vm1707, %v1803, %v1804
      %v1806 = vrot.slane %v1671, 5
      %v1807 = vrot.slane %v1806, 4
      %v1808 = vrot.slane %v838, 5
      %v1809 = vsel %vm1707, %v1807, %v1808
      %v1810 = vrot.slane %v1808, 4
      %v1811 = vrot.slane %v856, 5
      %v1812 = vsel %vm1707, %v1810, %v1811
      %v1813 = vrot.slane %v1672, 5
      %v1814 = vrot.slane %v1813, 4
      %v1815 = vrot.slane %v840, 5
      %v1816 = vsel %vm1707, %v1814, %v1815
      %v1817 = vrot.slane %v1815, 4
      %v1818 = vrot.slane %v857, 5
      %v1819 = vsel %vm1707, %v1817, %v1818
      %s1820 = scalar_lea.vmem %s1, 4
      %v1821 = vld [vmem:[%s1820] sm:$0x3]
      %v1822 = vunpack.c.l.b16 %v1711
      %v1823 = vunpack.c.l.b16 %v1714
      %v1824 = vunpack.c.l.b16 %v1718
      %v1825 = vunpack.c.l.b16 %v1721
      %v1826 = vunpack.c.l.b16 %v1725
      %v1827 = vunpack.c.l.b16 %v1728
      %v1828 = vunpack.c.l.b16 %v1732
      %v1829 = vunpack.c.l.b16 %v1735
      %v1830 = vunpack.c.l.b16 %v1739
      %v1831 = vunpack.c.l.b16 %v1742
      %v1832 = vunpack.c.l.b16 %v1746
      %v1833 = vunpack.c.l.b16 %v1749
      %v1834 = vunpack.c.l.b16 %v1753
      %v1835 = vunpack.c.l.b16 %v1756
      %v1836 = vunpack.c.l.b16 %v1760
      %v1837 = vunpack.c.l.b16 %v1763
      %v1838 = vunpack.c.l.b16 %v1767
      %v1839 = vunpack.c.l.b16 %v1770
      %v1840 = vunpack.c.l.b16 %v1774
      %v1841 = vunpack.c.l.b16 %v1777
      %v1842 = vunpack.c.l.b16 %v1781
      %v1843 = vunpack.c.l.b16 %v1784
      %v1844 = vunpack.c.l.b16 %v1788
      %v1845 = vunpack.c.l.b16 %v1791
      %v1846 = vunpack.c.l.b16 %v1795
      %v1847 = vunpack.c.l.b16 %v1798
      %v1848 = vunpack.c.l.b16 %v1802
      %v1849 = vunpack.c.l.b16 %v1805
      %v1850 = vunpack.c.l.b16 %v1809
      %v1851 = vunpack.c.l.b16 %v1812
      %v1852 = vunpack.c.l.b16 %v1816
      %v1853 = vunpack.c.l.b16 %v1819
      %v1854 = vpack.c.b16 %v1823, %v1822
      %v1855 = vpack.c.b16 %v1825, %v1824
      %v1856 = vpack.c.b16 %v1827, %v1826
      %v1857 = vpack.c.b16 %v1829, %v1828
      %v1858 = vpack.c.b16 %v1831, %v1830
      %v1859 = vpack.c.b16 %v1833, %v1832
      %v1860 = vpack.c.b16 %v1835, %v1834
      %v1861 = vpack.c.b16 %v1837, %v1836
      %v1862 = vpack.c.b16 %v1839, %v1838
      %v1863 = vpack.c.b16 %v1841, %v1840
      %v1864 = vpack.c.b16 %v1843, %v1842
      %v1865 = vpack.c.b16 %v1845, %v1844
      %v1866 = vpack.c.b16 %v1847, %v1846
      %v1867 = vpack.c.b16 %v1849, %v1848
      %v1868 = vpack.c.b16 %v1851, %v1850
      %v1869 = vpack.c.b16 %v1853, %v1852
      %v1871 = vsel %vm1295, %v1854, 0
      %v1874 = vsel %vm1295, %v1855, 0
      %v1877 = vsel %vm1295, %v1856, 0
      %v1880 = vsel %vm1295, %v1857, 0
      %v1883 = vsel %vm1295, %v1858, 0
      %v1886 = vsel %vm1295, %v1859, 0
      %v1889 = vsel %vm1295, %v1860, 0
      %v1892 = vsel %vm1295, %v1861, 0
      %v1895 = vsel %vm1295, %v1862, 0
      %v1898 = vsel %vm1295, %v1863, 0
      %v1901 = vsel %vm1295, %v1864, 0
      %v1904 = vsel %vm1295, %v1865, 0
      %v1907 = vsel %vm1295, %v1866, 0
      %v1910 = vsel %vm1295, %v1867, 0
      %v1913 = vsel %vm1295, %v1868, 0
      %v1916 = vsel %vm1295, %v1869, 0
      %v1919 = vsel %vm1344, %v1821, 0
      %1921 = vmatpush.bf16.msra.mxu0 0
      %1922 = vmatpush.bf16.msra.mxu0 0
      %1923 = vmatpush.bf16.msra.mxu0 0
      %1924 = vmatpush.bf16.msra.mxu0 0
      %1925 = vmatpush.bf16.msra.mxu0 0
      %1926 = vmatpush.bf16.msra.mxu0 0
      %1927 = vmatpush.bf16.msra.mxu0 0
      %1928 = vmatpush.bf16.msra.mxu0 %v1919
      %1929 = vmatmul.bf16.gmra.mxu0 %v1871
      %v1930 = vpop.f32.mrf.mxu0
      %v1931 = vadd.f32 0.0, %v1930
      %v1932 = vpop.f32.mrf.mxu0
      %v1933 = vadd.f32 0.0, %v1932
      %1934 = vmatmul.bf16.gmra.mxu0 %v1874
      %v1935 = vpop.f32.mrf.mxu0
      %v1936 = vadd.f32 0.0, %v1935
      %v1937 = vpop.f32.mrf.mxu0
      %v1938 = vadd.f32 0.0, %v1937
      %1939 = vmatmul.bf16.gmra.mxu0 %v1877
      %v1940 = vpop.f32.mrf.mxu0
      %v1941 = vadd.f32 0.0, %v1940
      %v1942 = vpop.f32.mrf.mxu0
      %v1943 = vadd.f32 0.0, %v1942
      %1944 = vmatmul.bf16.gmra.mxu0 %v1880
      %v1945 = vpop.f32.mrf.mxu0
      %v1946 = vadd.f32 0.0, %v1945
      %v1947 = vpop.f32.mrf.mxu0
      %v1948 = vadd.f32 0.0, %v1947
      %1949 = vmatmul.bf16.gmra.mxu0 %v1883
      %v1950 = vpop.f32.mrf.mxu0
      %v1951 = vadd.f32 0.0, %v1950
      %v1952 = vpop.f32.mrf.mxu0
      %v1953 = vadd.f32 0.0, %v1952
      %1954 = vmatmul.bf16.gmra.mxu0 %v1886
      %v1955 = vpop.f32.mrf.mxu0
      %v1956 = vadd.f32 0.0, %v1955
      %v1957 = vpop.f32.mrf.mxu0
      %v1958 = vadd.f32 0.0, %v1957
      %1959 = vmatmul.bf16.gmra.mxu0 %v1889
      %v1960 = vpop.f32.mrf.mxu0
      %v1961 = vadd.f32 0.0, %v1960
      %v1962 = vpop.f32.mrf.mxu0
      %v1963 = vadd.f32 0.0, %v1962
      %1964 = vmatmul.bf16.gmra.mxu0 %v1892
      %v1965 = vpop.f32.mrf.mxu0
      %v1966 = vadd.f32 0.0, %v1965
      %v1967 = vpop.f32.mrf.mxu0
      %v1968 = vadd.f32 0.0, %v1967
      %1969 = vmatmul.bf16.gmra.mxu0 %v1895
      %v1970 = vpop.f32.mrf.mxu0
      %v1971 = vadd.f32 0.0, %v1970
      %v1972 = vpop.f32.mrf.mxu0
      %v1973 = vadd.f32 0.0, %v1972
      %1974 = vmatmul.bf16.gmra.mxu0 %v1898
      %v1975 = vpop.f32.mrf.mxu0
      %v1976 = vadd.f32 0.0, %v1975
      %v1977 = vpop.f32.mrf.mxu0
      %v1978 = vadd.f32 0.0, %v1977
      %1979 = vmatmul.bf16.gmra.mxu0 %v1901
      %v1980 = vpop.f32.mrf.mxu0
      %v1981 = vadd.f32 0.0, %v1980
      %v1982 = vpop.f32.mrf.mxu0
      %v1983 = vadd.f32 0.0, %v1982
      %1984 = vmatmul.bf16.gmra.mxu0 %v1904
      %v1985 = vpop.f32.mrf.mxu0
      %v1986 = vadd.f32 0.0, %v1985
      %v1987 = vpop.f32.mrf.mxu0
      %v1988 = vadd.f32 0.0, %v1987
      %1989 = vmatmul.bf16.gmra.mxu0 %v1907
      %v1990 = vpop.f32.mrf.mxu0
      %v1991 = vadd.f32 0.0, %v1990
      %v1992 = vpop.f32.mrf.mxu0
      %v1993 = vadd.f32 0.0, %v1992
      %1994 = vmatmul.bf16.gmra.mxu0 %v1910
      %v1995 = vpop.f32.mrf.mxu0
      %v1996 = vadd.f32 0.0, %v1995
      %v1997 = vpop.f32.mrf.mxu0
      %v1998 = vadd.f32 0.0, %v1997
      %1999 = vmatmul.bf16.gmra.mxu0 %v1913
      %v2000 = vpop.f32.mrf.mxu0
      %v2001 = vadd.f32 0.0, %v2000
      %v2002 = vpop.f32.mrf.mxu0
      %v2003 = vadd.f32 0.0, %v2002
      %2004 = vmatmul.bf16.gmra.mxu0 %v1916
      %v2005 = vpop.f32.mrf.mxu0
      %v2006 = vadd.f32 0.0, %v2005
      %v2007 = vpop.f32.mrf.mxu0
      %v2008 = vadd.f32 0.0, %v2007
      %2009 = vdwg.mxu0
      %v2010 = vadd.f32 %v1578, %v1931
      %v2011 = vadd.f32 %v1580, %v1933
      %v2012 = vadd.f32 %v1583, %v1936
      %v2013 = vadd.f32 %v1585, %v1938
      %v2014 = vadd.f32 %v1588, %v1941
      %v2015 = vadd.f32 %v1590, %v1943
      %v2016 = vadd.f32 %v1593, %v1946
      %v2017 = vadd.f32 %v1595, %v1948
      %v2018 = vadd.f32 %v1598, %v1951
      %v2019 = vadd.f32 %v1600, %v1953
      %v2020 = vadd.f32 %v1603, %v1956
      %v2021 = vadd.f32 %v1605, %v1958
      %v2022 = vadd.f32 %v1608, %v1961
      %v2023 = vadd.f32 %v1610, %v1963
      %v2024 = vadd.f32 %v1613, %v1966
      %v2025 = vadd.f32 %v1615, %v1968
      %v2026 = vadd.f32 %v1618, %v1971
      %v2027 = vadd.f32 %v1620, %v1973
      %v2028 = vadd.f32 %v1623, %v1976
      %v2029 = vadd.f32 %v1625, %v1978
      %v2030 = vadd.f32 %v1628, %v1981
      %v2031 = vadd.f32 %v1630, %v1983
      %v2032 = vadd.f32 %v1633, %v1986
      %v2033 = vadd.f32 %v1635, %v1988
      %v2034 = vadd.f32 %v1638, %v1991
      %v2035 = vadd.f32 %v1640, %v1993
      %v2036 = vadd.f32 %v1643, %v1996
      %v2037 = vadd.f32 %v1645, %v1998
      %v2038 = vadd.f32 %v1648, %v2001
      %v2039 = vadd.f32 %v1650, %v2003
      %v2040 = vadd.f32 %v1653, %v2006
      %v2041 = vadd.f32 %v1655, %v2008
      %v2042 = vld [vmem:[%s691] sm:$0xf]
      %v2043 = vld [vmem:[%s691 + $0x4] sm:$0xf]
      %v2044 = vld [vmem:[%s691 + $0xc] sm:$0xf]
      %v2045 = vld [vmem:[%s691 + $0x10] sm:$0xf]
      %v2046 = vld [vmem:[%s691 + $0x18] sm:$0xf]
      %v2047 = vld [vmem:[%s691 + $0x1c] sm:$0xf]
      %v2048 = vld [vmem:[%s691 + $0x24] sm:$0xf]
      %v2049 = vld [vmem:[%s691 + $0x28] sm:$0xf]
      %v2050 = vld [vmem:[%s691 + $0x30] sm:$0xf]
      %v2051 = vld [vmem:[%s691 + $0x34] sm:$0xf]
      %v2052 = vld [vmem:[%s691 + $0x3c] sm:$0xf]
      %v2053 = vld [vmem:[%s691 + $0x40] sm:$0xf]
      %v2054 = vld [vmem:[%s691 + $0x48] sm:$0xf]
      %v2055 = vld [vmem:[%s691 + $0x4c] sm:$0xf]
      %v2056 = vld [vmem:[%s691 + $0x54] sm:$0xf]
      %v2057 = vld [vmem:[%s691 + $0x58] sm:$0xf]
      %v2058 = vld [vmem:[%s691 + $0x60] sm:$0xf]
      %v2059 = vld [vmem:[%s691 + $0x64] sm:$0xf]
      %v2060 = vld [vmem:[%s691 + $0x6c] sm:$0xf]
      %v2061 = vld [vmem:[%s691 + $0x70] sm:$0xf]
      %v2062 = vld [vmem:[%s691 + $0x78] sm:$0xf]
      %v2063 = vld [vmem:[%s691 + $0x7c] sm:$0xf]
      %v2064 = vld [vmem:[%s691 + $0x84] sm:$0xf]
      %v2065 = vld [vmem:[%s691 + $0x88] sm:$0xf]
      %v2066 = vld [vmem:[%s691 + $0x90] sm:$0xf]
      %v2067 = vld [vmem:[%s691 + $0x94] sm:$0xf]
      %v2068 = vld [vmem:[%s691 + $0x9c] sm:$0xf]
      %v2069 = vld [vmem:[%s691 + $0xa0] sm:$0xf]
      %v2070 = vld [vmem:[%s691 + $0xa8] sm:$0xf]
      %v2071 = vld [vmem:[%s691 + $0xac] sm:$0xf]
      %v2072 = vld [vmem:[%s691 + $0xb4] sm:$0xf]
      %v2073 = vld [vmem:[%s691 + $0xb8] sm:$0xf]
      %s2074 = scalar_lea.vmem %s1, 6
      %v2075 = vld [vmem:[%s2074] sm:$0x3]
      %v2108 = vunpack.c.l.b16 %v2042
      %v2109 = vunpack.c.l.b16 %v2043
      %v2110 = vunpack.c.l.b16 %v2044
      %v2111 = vunpack.c.l.b16 %v2045
      %v2112 = vunpack.c.l.b16 %v2046
      %v2113 = vunpack.c.l.b16 %v2047
      %v2114 = vunpack.c.l.b16 %v2048
      %v2115 = vunpack.c.l.b16 %v2049
      %v2116 = vunpack.c.l.b16 %v2050
      %v2117 = vunpack.c.l.b16 %v2051
      %v2118 = vunpack.c.l.b16 %v2052
      %v2119 = vunpack.c.l.b16 %v2053
      %v2120 = vunpack.c.l.b16 %v2054
      %v2121 = vunpack.c.l.b16 %v2055
      %v2122 = vunpack.c.l.b16 %v2056
      %v2123 = vunpack.c.l.b16 %v2057
      %v2124 = vunpack.c.l.b16 %v2058
      %v2125 = vunpack.c.l.b16 %v2059
      %v2126 = vunpack.c.l.b16 %v2060
      %v2127 = vunpack.c.l.b16 %v2061
      %v2128 = vunpack.c.l.b16 %v2062
      %v2129 = vunpack.c.l.b16 %v2063
      %v2130 = vunpack.c.l.b16 %v2064
      %v2131 = vunpack.c.l.b16 %v2065
      %v2132 = vunpack.c.l.b16 %v2066
      %v2133 = vunpack.c.l.b16 %v2067
      %v2134 = vunpack.c.l.b16 %v2068
      %v2135 = vunpack.c.l.b16 %v2069
      %v2136 = vunpack.c.l.b16 %v2070
      %v2137 = vunpack.c.l.b16 %v2071
      %v2138 = vunpack.c.l.b16 %v2072
      %v2139 = vunpack.c.l.b16 %v2073
      %v2140 = vpack.c.b16 %v2109, %v2108
      %v2141 = vpack.c.b16 %v2111, %v2110
      %v2142 = vpack.c.b16 %v2113, %v2112
      %v2143 = vpack.c.b16 %v2115, %v2114
      %v2144 = vpack.c.b16 %v2117, %v2116
      %v2145 = vpack.c.b16 %v2119, %v2118
      %v2146 = vpack.c.b16 %v2121, %v2120
      %v2147 = vpack.c.b16 %v2123, %v2122
      %v2148 = vpack.c.b16 %v2125, %v2124
      %v2149 = vpack.c.b16 %v2127, %v2126
      %v2150 = vpack.c.b16 %v2129, %v2128
      %v2151 = vpack.c.b16 %v2131, %v2130
      %v2152 = vpack.c.b16 %v2133, %v2132
      %v2153 = vpack.c.b16 %v2135, %v2134
      %v2154 = vpack.c.b16 %v2137, %v2136
      %v2155 = vpack.c.b16 %v2139, %v2138
      %v2157 = vsel %vm1295, %v2140, 0
      %v2160 = vsel %vm1295, %v2141, 0
      %v2163 = vsel %vm1295, %v2142, 0
      %v2166 = vsel %vm1295, %v2143, 0
      %v2169 = vsel %vm1295, %v2144, 0
      %v2172 = vsel %vm1295, %v2145, 0
      %v2175 = vsel %vm1295, %v2146, 0
      %v2178 = vsel %vm1295, %v2147, 0
      %v2181 = vsel %vm1295, %v2148, 0
      %v2184 = vsel %vm1295, %v2149, 0
      %v2187 = vsel %vm1295, %v2150, 0
      %v2190 = vsel %vm1295, %v2151, 0
      %v2193 = vsel %vm1295, %v2152, 0
      %v2196 = vsel %vm1295, %v2153, 0
      %v2199 = vsel %vm1295, %v2154, 0
      %v2202 = vsel %vm1295, %v2155, 0
      %v2205 = vsel %vm1344, %v2075, 0
      %2207 = vmatpush.bf16.msra.mxu0 0
      %2208 = vmatpush.bf16.msra.mxu0 0
      %2209 = vmatpush.bf16.msra.mxu0 0
      %2210 = vmatpush.bf16.msra.mxu0 0
      %2211 = vmatpush.bf16.msra.mxu0 0
      %2212 = vmatpush.bf16.msra.mxu0 0
      %2213 = vmatpush.bf16.msra.mxu0 0
      %2214 = vmatpush.bf16.msra.mxu0 %v2205
      %2215 = vmatmul.bf16.gmra.mxu0 %v2157
      %v2216 = vpop.f32.mrf.mxu0
      %v2217 = vadd.f32 0.0, %v2216
      %v2218 = vpop.f32.mrf.mxu0
      %v2219 = vadd.f32 0.0, %v2218
      %2220 = vmatmul.bf16.gmra.mxu0 %v2160
      %v2221 = vpop.f32.mrf.mxu0
      %v2222 = vadd.f32 0.0, %v2221
      %v2223 = vpop.f32.mrf.mxu0
      %v2224 = vadd.f32 0.0, %v2223
      %2225 = vmatmul.bf16.gmra.mxu0 %v2163
      %v2226 = vpop.f32.mrf.mxu0
      %v2227 = vadd.f32 0.0, %v2226
      %v2228 = vpop.f32.mrf.mxu0
      %v2229 = vadd.f32 0.0, %v2228
      %2230 = vmatmul.bf16.gmra.mxu0 %v2166
      %v2231 = vpop.f32.mrf.mxu0
      %v2232 = vadd.f32 0.0, %v2231
      %v2233 = vpop.f32.mrf.mxu0
      %v2234 = vadd.f32 0.0, %v2233
      %2235 = vmatmul.bf16.gmra.mxu0 %v2169
      %v2236 = vpop.f32.mrf.mxu0
      %v2237 = vadd.f32 0.0, %v2236
      %v2238 = vpop.f32.mrf.mxu0
      %v2239 = vadd.f32 0.0, %v2238
      %2240 = vmatmul.bf16.gmra.mxu0 %v2172
      %v2241 = vpop.f32.mrf.mxu0
      %v2242 = vadd.f32 0.0, %v2241
      %v2243 = vpop.f32.mrf.mxu0
      %v2244 = vadd.f32 0.0, %v2243
      %2245 = vmatmul.bf16.gmra.mxu0 %v2175
      %v2246 = vpop.f32.mrf.mxu0
      %v2247 = vadd.f32 0.0, %v2246
      %v2248 = vpop.f32.mrf.mxu0
      %v2249 = vadd.f32 0.0, %v2248
      %2250 = vmatmul.bf16.gmra.mxu0 %v2178
      %v2251 = vpop.f32.mrf.mxu0
      %v2252 = vadd.f32 0.0, %v2251
      %v2253 = vpop.f32.mrf.mxu0
      %v2254 = vadd.f32 0.0, %v2253
      %2255 = vmatmul.bf16.gmra.mxu0 %v2181
      %v2256 = vpop.f32.mrf.mxu0
      %v2257 = vadd.f32 0.0, %v2256
      %v2258 = vpop.f32.mrf.mxu0
      %v2259 = vadd.f32 0.0, %v2258
      %2260 = vmatmul.bf16.gmra.mxu0 %v2184
      %v2261 = vpop.f32.mrf.mxu0
      %v2262 = vadd.f32 0.0, %v2261
      %v2263 = vpop.f32.mrf.mxu0
      %v2264 = vadd.f32 0.0, %v2263
      %2265 = vmatmul.bf16.gmra.mxu0 %v2187
      %v2266 = vpop.f32.mrf.mxu0
      %v2267 = vadd.f32 0.0, %v2266
      %v2268 = vpop.f32.mrf.mxu0
      %v2269 = vadd.f32 0.0, %v2268
      %2270 = vmatmul.bf16.gmra.mxu0 %v2190
      %v2271 = vpop.f32.mrf.mxu0
      %v2272 = vadd.f32 0.0, %v2271
      %v2273 = vpop.f32.mrf.mxu0
      %v2274 = vadd.f32 0.0, %v2273
      %2275 = vmatmul.bf16.gmra.mxu0 %v2193
      %v2276 = vpop.f32.mrf.mxu0
      %v2277 = vadd.f32 0.0, %v2276
      %v2278 = vpop.f32.mrf.mxu0
      %v2279 = vadd.f32 0.0, %v2278
      %2280 = vmatmul.bf16.gmra.mxu0 %v2196
      %v2281 = vpop.f32.mrf.mxu0
      %v2282 = vadd.f32 0.0, %v2281
      %v2283 = vpop.f32.mrf.mxu0
      %v2284 = vadd.f32 0.0, %v2283
      %2285 = vmatmul.bf16.gmra.mxu0 %v2199
      %v2286 = vpop.f32.mrf.mxu0
      %v2287 = vadd.f32 0.0, %v2286
      %v2288 = vpop.f32.mrf.mxu0
      %v2289 = vadd.f32 0.0, %v2288
      %2290 = vmatmul.bf16.gmra.mxu0 %v2202
      %v2291 = vpop.f32.mrf.mxu0
      %v2292 = vadd.f32 0.0, %v2291
      %v2293 = vpop.f32.mrf.mxu0
      %v2294 = vadd.f32 0.0, %v2293
      %2295 = vdwg.mxu0
      %v2296 = vadd.f32 %v2010, %v2217
      %v2297 = vadd.f32 %v2011, %v2219
      %v2298 = vadd.f32 %v2012, %v2222
      %v2299 = vadd.f32 %v2013, %v2224
      %v2300 = vadd.f32 %v2014, %v2227
      %v2301 = vadd.f32 %v2015, %v2229
      %v2302 = vadd.f32 %v2016, %v2232
      %v2303 = vadd.f32 %v2017, %v2234
      %v2304 = vadd.f32 %v2018, %v2237
      %v2305 = vadd.f32 %v2019, %v2239
      %v2306 = vadd.f32 %v2020, %v2242
      %v2307 = vadd.f32 %v2021, %v2244
      %v2308 = vadd.f32 %v2022, %v2247
      %v2309 = vadd.f32 %v2023, %v2249
      %v2310 = vadd.f32 %v2024, %v2252
      %v2311 = vadd.f32 %v2025, %v2254
      %v2312 = vadd.f32 %v2026, %v2257
      %v2313 = vadd.f32 %v2027, %v2259
      %v2314 = vadd.f32 %v2028, %v2262
      %v2315 = vadd.f32 %v2029, %v2264
      %v2316 = vadd.f32 %v2030, %v2267
      %v2317 = vadd.f32 %v2031, %v2269
      %v2318 = vadd.f32 %v2032, %v2272
      %v2319 = vadd.f32 %v2033, %v2274
      %v2320 = vadd.f32 %v2034, %v2277
      %v2321 = vadd.f32 %v2035, %v2279
      %v2322 = vadd.f32 %v2036, %v2282
      %v2323 = vadd.f32 %v2037, %v2284
      %v2324 = vadd.f32 %v2038, %v2287
      %v2325 = vadd.f32 %v2039, %v2289
      %v2326 = vadd.f32 %v2040, %v2292
      %v2327 = vadd.f32 %v2041, %v2294
      %v2328 = vld [vmem:[%s691] sm:$0xf]
      %v2329 = vld [vmem:[%s691 + $0x4] sm:$0xf]
      %v2330 = vld [vmem:[%s691 + $0x8] sm:$0x1]
      %v2331 = vld [vmem:[%s691 + $0xc] sm:$0xf]
      %v2332 = vld [vmem:[%s691 + $0x10] sm:$0xf]
      %v2333 = vld [vmem:[%s691 + $0x14] sm:$0x1]
      %v2334 = vld [vmem:[%s691 + $0x18] sm:$0xf]
      %v2335 = vld [vmem:[%s691 + $0x1c] sm:$0xf]
      %v2336 = vld [vmem:[%s691 + $0x20] sm:$0x1]
      %v2337 = vld [vmem:[%s691 + $0x24] sm:$0xf]
      %v2338 = vld [vmem:[%s691 + $0x28] sm:$0xf]
      %v2339 = vld [vmem:[%s691 + $0x2c] sm:$0x1]
      %v2340 = vld [vmem:[%s691 + $0x30] sm:$0xf]
      %v2341 = vld [vmem:[%s691 + $0x34] sm:$0xf]
      %v2342 = vld [vmem:[%s691 + $0x38] sm:$0x1]
      %v2343 = vld [vmem:[%s691 + $0x3c] sm:$0xf]
      %v2344 = vld [vmem:[%s691 + $0x40] sm:$0xf]
      %v2345 = vld [vmem:[%s691 + $0x44] sm:$0x1]
      %v2346 = vld [vmem:[%s691 + $0x48] sm:$0xf]
      %v2347 = vld [vmem:[%s691 + $0x4c] sm:$0xf]
      %v2348 = vld [vmem:[%s691 + $0x50] sm:$0x1]
      %v2349 = vld [vmem:[%s691 + $0x54] sm:$0xf]
      %v2350 = vld [vmem:[%s691 + $0x58] sm:$0xf]
      %v2351 = vld [vmem:[%s691 + $0x5c] sm:$0x1]
      %v2352 = vld [vmem:[%s691 + $0x60] sm:$0xf]
      %v2353 = vld [vmem:[%s691 + $0x64] sm:$0xf]
      %v2354 = vld [vmem:[%s691 + $0x68] sm:$0x1]
      %v2355 = vld [vmem:[%s691 + $0x6c] sm:$0xf]
      %v2356 = vld [vmem:[%s691 + $0x70] sm:$0xf]
      %v2357 = vld [vmem:[%s691 + $0x74] sm:$0x1]
      %v2358 = vld [vmem:[%s691 + $0x78] sm:$0xf]
      %v2359 = vld [vmem:[%s691 + $0x7c] sm:$0xf]
      %v2360 = vld [vmem:[%s691 + $0x80] sm:$0x1]
      %v2361 = vld [vmem:[%s691 + $0x84] sm:$0xf]
      %v2362 = vld [vmem:[%s691 + $0x88] sm:$0xf]
      %v2363 = vld [vmem:[%s691 + $0x8c] sm:$0x1]
      %v2364 = vld [vmem:[%s691 + $0x90] sm:$0xf]
      %v2365 = vld [vmem:[%s691 + $0x94] sm:$0xf]
      %v2366 = vld [vmem:[%s691 + $0x98] sm:$0x1]
      %v2367 = vld [vmem:[%s691 + $0x9c] sm:$0xf]
      %v2368 = vld [vmem:[%s691 + $0xa0] sm:$0xf]
      %v2369 = vld [vmem:[%s691 + $0xa4] sm:$0x1]
      %v2370 = vld [vmem:[%s691 + $0xa8] sm:$0xf]
      %v2371 = vld [vmem:[%s691 + $0xac] sm:$0xf]
      %v2372 = vld [vmem:[%s691 + $0xb0] sm:$0x1]
      %v2373 = vld [vmem:[%s691 + $0xb4] sm:$0xf]
      %v2374 = vld [vmem:[%s691 + $0xb8] sm:$0xf]
      %v2375 = vld [vmem:[%s691 + $0xbc] sm:$0x1]
      %v2377 = vshrl.u32 %v2328, 16
      %v2379 = vrot.slane %v2377, 4
      %v2380 = vshll.u32 %v2328, 16
      %v2382 = vrot.slane %v2380, 5
      %v2383 = vor.u32 %v2379, %v2382
      %v2384 = vrot.slane %v2383, 4
      %v2386 = vshll.u32 %v2329, 16
      %v2388 = vrot.slane %v2386, 5
      %v2389 = vsel %vm860, %v2384, %v2388
      %v2390 = vshrl.u32 %v2329, 16
      %v2392 = vrot.slane %v2390, 4
      %v2393 = vor.u32 %v2392, %v2388
      %v2394 = vrot.slane %v2393, 4
      %v2396 = vshll.u32 %v2330, 16
      %v2398 = vrot.slane %v2396, 5
      %v2399 = vsel %vm860, %v2394, %v2398
      %v2401 = vshrl.u32 %v2331, 16
      %v2403 = vrot.slane %v2401, 4
      %v2404 = vshll.u32 %v2331, 16
      %v2406 = vrot.slane %v2404, 5
      %v2407 = vor.u32 %v2403, %v2406
      %v2408 = vrot.slane %v2407, 4
      %v2410 = vshll.u32 %v2332, 16
      %v2412 = vrot.slane %v2410, 5
      %v2413 = vsel %vm860, %v2408, %v2412
      %v2414 = vshrl.u32 %v2332, 16
      %v2416 = vrot.slane %v2414, 4
      %v2417 = vor.u32 %v2416, %v2412
      %v2418 = vrot.slane %v2417, 4
      %v2420 = vshll.u32 %v2333, 16
      %v2422 = vrot.slane %v2420, 5
      %v2423 = vsel %vm860, %v2418, %v2422
      %v2425 = vshrl.u32 %v2334, 16
      %v2427 = vrot.slane %v2425, 4
      %v2428 = vshll.u32 %v2334, 16
      %v2430 = vrot.slane %v2428, 5
      %v2431 = vor.u32 %v2427, %v2430
      %v2432 = vrot.slane %v2431, 4
      %v2434 = vshll.u32 %v2335, 16
      %v2436 = vrot.slane %v2434, 5
      %v2437 = vsel %vm860, %v2432, %v2436
      %v2438 = vshrl.u32 %v2335, 16
      %v2440 = vrot.slane %v2438, 4
      %v2441 = vor.u32 %v2440, %v2436
      %v2442 = vrot.slane %v2441, 4
      %v2444 = vshll.u32 %v2336, 16
      %v2446 = vrot.slane %v2444, 5
      %v2447 = vsel %vm860, %v2442, %v2446
      %v2449 = vshrl.u32 %v2337, 16
      %v2451 = vrot.slane %v2449, 4
      %v2452 = vshll.u32 %v2337, 16
      %v2454 = vrot.slane %v2452, 5
      %v2455 = vor.u32 %v2451, %v2454
      %v2456 = vrot.slane %v2455, 4
      %v2458 = vshll.u32 %v2338, 16
      %v2460 = vrot.slane %v2458, 5
      %v2461 = vsel %vm860, %v2456, %v2460
      %v2462 = vshrl.u32 %v2338, 16
      %v2464 = vrot.slane %v2462, 4
      %v2465 = vor.u32 %v2464, %v2460
      %v2466 = vrot.slane %v2465, 4
      %v2468 = vshll.u32 %v2339, 16
      %v2470 = vrot.slane %v2468, 5
      %v2471 = vsel %vm860, %v2466, %v2470
      %v2473 = vshrl.u32 %v2340, 16
      %v2475 = vrot.slane %v2473, 4
      %v2476 = vshll.u32 %v2340, 16
      %v2478 = vrot.slane %v2476, 5
      %v2479 = vor.u32 %v2475, %v2478
      %v2480 = vrot.slane %v2479, 4
      %v2482 = vshll.u32 %v2341, 16
      %v2484 = vrot.slane %v2482, 5
      %v2485 = vsel %vm860, %v2480, %v2484
      %v2486 = vshrl.u32 %v2341, 16
      %v2488 = vrot.slane %v2486, 4
      %v2489 = vor.u32 %v2488, %v2484
      %v2490 = vrot.slane %v2489, 4
      %v2492 = vshll.u32 %v2342, 16
      %v2494 = vrot.slane %v2492, 5
      %v2495 = vsel %vm860, %v2490, %v2494
      %v2497 = vshrl.u32 %v2343, 16
      %v2499 = vrot.slane %v2497, 4
      %v2500 = vshll.u32 %v2343, 16
      %v2502 = vrot.slane %v2500, 5
      %v2503 = vor.u32 %v2499, %v2502
      %v2504 = vrot.slane %v2503, 4
      %v2506 = vshll.u32 %v2344, 16
      %v2508 = vrot.slane %v2506, 5
      %v2509 = vsel %vm860, %v2504, %v2508
      %v2510 = vshrl.u32 %v2344, 16
      %v2512 = vrot.slane %v2510, 4
      %v2513 = vor.u32 %v2512, %v2508
      %v2514 = vrot.slane %v2513, 4
      %v2516 = vshll.u32 %v2345, 16
      %v2518 = vrot.slane %v2516, 5
      %v2519 = vsel %vm860, %v2514, %v2518
      %v2521 = vshrl.u32 %v2346, 16
      %v2523 = vrot.slane %v2521, 4
      %v2524 = vshll.u32 %v2346, 16
      %v2526 = vrot.slane %v2524, 5
      %v2527 = vor.u32 %v2523, %v2526
      %v2528 = vrot.slane %v2527, 4
      %v2530 = vshll.u32 %v2347, 16
      %v2532 = vrot.slane %v2530, 5
      %v2533 = vsel %vm860, %v2528, %v2532
      %v2534 = vshrl.u32 %v2347, 16
      %v2536 = vrot.slane %v2534, 4
      %v2537 = vor.u32 %v2536, %v2532
      %v2538 = vrot.slane %v2537, 4
      %v2540 = vshll.u32 %v2348, 16
      %v2542 = vrot.slane %v2540, 5
      %v2543 = vsel %vm860, %v2538, %v2542
      %v2545 = vshrl.u32 %v2349, 16
      %v2547 = vrot.slane %v2545, 4
      %v2548 = vshll.u32 %v2349, 16
      %v2550 = vrot.slane %v2548, 5
      %v2551 = vor.u32 %v2547, %v2550
      %v2552 = vrot.slane %v2551, 4
      %v2554 = vshll.u32 %v2350, 16
      %v2556 = vrot.slane %v2554, 5
      %v2557 = vsel %vm860, %v2552, %v2556
      %v2558 = vshrl.u32 %v2350, 16
      %v2560 = vrot.slane %v2558, 4
      %v2561 = vor.u32 %v2560, %v2556
      %v2562 = vrot.slane %v2561, 4
      %v2564 = vshll.u32 %v2351, 16
      %v2566 = vrot.slane %v2564, 5
      %v2567 = vsel %vm860, %v2562, %v2566
      %v2569 = vshrl.u32 %v2352, 16
      %v2571 = vrot.slane %v2569, 4
      %v2572 = vshll.u32 %v2352, 16
      %v2574 = vrot.slane %v2572, 5
      %v2575 = vor.u32 %v2571, %v2574
      %v2576 = vrot.slane %v2575, 4
      %v2578 = vshll.u32 %v2353, 16
      %v2580 = vrot.slane %v2578, 5
      %v2581 = vsel %vm860, %v2576, %v2580
      %v2582 = vshrl.u32 %v2353, 16
      %v2584 = vrot.slane %v2582, 4
      %v2585 = vor.u32 %v2584, %v2580
      %v2586 = vrot.slane %v2585, 4
      %v2588 = vshll.u32 %v2354, 16
      %v2590 = vrot.slane %v2588, 5
      %v2591 = vsel %vm860, %v2586, %v2590
      %v2593 = vshrl.u32 %v2355, 16
      %v2595 = vrot.slane %v2593, 4
      %v2596 = vshll.u32 %v2355, 16
      %v2598 = vrot.slane %v2596, 5
      %v2599 = vor.u32 %v2595, %v2598
      %v2600 = vrot.slane %v2599, 4
      %v2602 = vshll.u32 %v2356, 16
      %v2604 = vrot.slane %v2602, 5
      %v2605 = vsel %vm860, %v2600, %v2604
      %v2606 = vshrl.u32 %v2356, 16
      %v2608 = vrot.slane %v2606, 4
      %v2609 = vor.u32 %v2608, %v2604
      %v2610 = vrot.slane %v2609, 4
      %v2612 = vshll.u32 %v2357, 16
      %v2614 = vrot.slane %v2612, 5
      %v2615 = vsel %vm860, %v2610, %v2614
      %v2617 = vshrl.u32 %v2358, 16
      %v2619 = vrot.slane %v2617, 4
      %v2620 = vshll.u32 %v2358, 16
      %v2622 = vrot.slane %v2620, 5
      %v2623 = vor.u32 %v2619, %v2622
      %v2624 = vrot.slane %v2623, 4
      %v2626 = vshll.u32 %v2359, 16
      %v2628 = vrot.slane %v2626, 5
      %v2629 = vsel %vm860, %v2624, %v2628
      %v2630 = vshrl.u32 %v2359, 16
      %v2632 = vrot.slane %v2630, 4
      %v2633 = vor.u32 %v2632, %v2628
      %v2634 = vrot.slane %v2633, 4
      %v2636 = vshll.u32 %v2360, 16
      %v2638 = vrot.slane %v2636, 5
      %v2639 = vsel %vm860, %v2634, %v2638
      %v2641 = vshrl.u32 %v2361, 16
      %v2643 = vrot.slane %v2641, 4
      %v2644 = vshll.u32 %v2361, 16
      %v2646 = vrot.slane %v2644, 5
      %v2647 = vor.u32 %v2643, %v2646
      %v2648 = vrot.slane %v2647, 4
      %v2650 = vshll.u32 %v2362, 16
      %v2652 = vrot.slane %v2650, 5
      %v2653 = vsel %vm860, %v2648, %v2652
      %v2654 = vshrl.u32 %v2362, 16
      %v2656 = vrot.slane %v2654, 4
      %v2657 = vor.u32 %v2656, %v2652
      %v2658 = vrot.slane %v2657, 4
      %v2660 = vshll.u32 %v2363, 16
      %v2662 = vrot.slane %v2660, 5
      %v2663 = vsel %vm860, %v2658, %v2662
      %v2665 = vshrl.u32 %v2364, 16
      %v2667 = vrot.slane %v2665, 4
      %v2668 = vshll.u32 %v2364, 16
      %v2670 = vrot.slane %v2668, 5
      %v2671 = vor.u32 %v2667, %v2670
      %v2672 = vrot.slane %v2671, 4
      %v2674 = vshll.u32 %v2365, 16
      %v2676 = vrot.slane %v2674, 5
      %v2677 = vsel %vm860, %v2672, %v2676
      %v2678 = vshrl.u32 %v2365, 16
      %v2680 = vrot.slane %v2678, 4
      %v2681 = vor.u32 %v2680, %v2676
      %v2682 = vrot.slane %v2681, 4
      %v2684 = vshll.u32 %v2366, 16
      %v2686 = vrot.slane %v2684, 5
      %v2687 = vsel %vm860, %v2682, %v2686
      %v2689 = vshrl.u32 %v2367, 16
      %v2691 = vrot.slane %v2689, 4
      %v2692 = vshll.u32 %v2367, 16
      %v2694 = vrot.slane %v2692, 5
      %v2695 = vor.u32 %v2691, %v2694
      %v2696 = vrot.slane %v2695, 4
      %v2698 = vshll.u32 %v2368, 16
      %v2700 = vrot.slane %v2698, 5
      %v2701 = vsel %vm860, %v2696, %v2700
      %v2702 = vshrl.u32 %v2368, 16
      %v2704 = vrot.slane %v2702, 4
      %v2705 = vor.u32 %v2704, %v2700
      %v2706 = vrot.slane %v2705, 4
      %v2708 = vshll.u32 %v2369, 16
      %v2710 = vrot.slane %v2708, 5
      %v2711 = vsel %vm860, %v2706, %v2710
      %v2713 = vshrl.u32 %v2370, 16
      %v2715 = vrot.slane %v2713, 4
      %v2716 = vshll.u32 %v2370, 16
      %v2718 = vrot.slane %v2716, 5
      %v2719 = vor.u32 %v2715, %v2718
      %v2720 = vrot.slane %v2719, 4
      %v2722 = vshll.u32 %v2371, 16
      %v2724 = vrot.slane %v2722, 5
      %v2725 = vsel %vm860, %v2720, %v2724
      %v2726 = vshrl.u32 %v2371, 16
      %v2728 = vrot.slane %v2726, 4
      %v2729 = vor.u32 %v2728, %v2724
      %v2730 = vrot.slane %v2729, 4
      %v2732 = vshll.u32 %v2372, 16
      %v2734 = vrot.slane %v2732, 5
      %v2735 = vsel %vm860, %v2730, %v2734
      %v2737 = vshrl.u32 %v2373, 16
      %v2739 = vrot.slane %v2737, 4
      %v2740 = vshll.u32 %v2373, 16
      %v2742 = vrot.slane %v2740, 5
      %v2743 = vor.u32 %v2739, %v2742
      %v2744 = vrot.slane %v2743, 4
      %v2746 = vshll.u32 %v2374, 16
      %v2748 = vrot.slane %v2746, 5
      %v2749 = vsel %vm860, %v2744, %v2748
      %v2750 = vshrl.u32 %v2374, 16
      %v2752 = vrot.slane %v2750, 4
      %v2753 = vor.u32 %v2752, %v2748
      %v2754 = vrot.slane %v2753, 4
      %v2756 = vshll.u32 %v2375, 16
      %v2758 = vrot.slane %v2756, 5
      %v2759 = vsel %vm860, %v2754, %v2758
      %s2760 = scalar_lea.vmem %s1, 8
      %v2761 = vld [vmem:[%s2760] sm:$0x3]
      %v2762 = vunpack.c.l.b16 %v2389
      %v2763 = vunpack.c.l.b16 %v2399
      %v2764 = vunpack.c.l.b16 %v2413
      %v2765 = vunpack.c.l.b16 %v2423
      %v2766 = vunpack.c.l.b16 %v2437
      %v2767 = vunpack.c.l.b16 %v2447
      %v2768 = vunpack.c.l.b16 %v2461
      %v2769 = vunpack.c.l.b16 %v2471
      %v2770 = vunpack.c.l.b16 %v2485
      %v2771 = vunpack.c.l.b16 %v2495
      %v2772 = vunpack.c.l.b16 %v2509
      %v2773 = vunpack.c.l.b16 %v2519
      %v2774 = vunpack.c.l.b16 %v2533
      %v2775 = vunpack.c.l.b16 %v2543
      %v2776 = vunpack.c.l.b16 %v2557
      %v2777 = vunpack.c.l.b16 %v2567
      %v2778 = vunpack.c.l.b16 %v2581
      %v2779 = vunpack.c.l.b16 %v2591
      %v2780 = vunpack.c.l.b16 %v2605
      %v2781 = vunpack.c.l.b16 %v2615
      %v2782 = vunpack.c.l.b16 %v2629
      %v2783 = vunpack.c.l.b16 %v2639
      %v2784 = vunpack.c.l.b16 %v2653
      %v2785 = vunpack.c.l.b16 %v2663
      %v2786 = vunpack.c.l.b16 %v2677
      %v2787 = vunpack.c.l.b16 %v2687
      %v2788 = vunpack.c.l.b16 %v2701
      %v2789 = vunpack.c.l.b16 %v2711
      %v2790 = vunpack.c.l.b16 %v2725
      %v2791 = vunpack.c.l.b16 %v2735
      %v2792 = vunpack.c.l.b16 %v2749
      %v2793 = vunpack.c.l.b16 %v2759
      %v2794 = vpack.c.b16 %v2763, %v2762
      %v2795 = vpack.c.b16 %v2765, %v2764
      %v2796 = vpack.c.b16 %v2767, %v2766
      %v2797 = vpack.c.b16 %v2769, %v2768
      %v2798 = vpack.c.b16 %v2771, %v2770
      %v2799 = vpack.c.b16 %v2773, %v2772
      %v2800 = vpack.c.b16 %v2775, %v2774
      %v2801 = vpack.c.b16 %v2777, %v2776
      %v2802 = vpack.c.b16 %v2779, %v2778
      %v2803 = vpack.c.b16 %v2781, %v2780
      %v2804 = vpack.c.b16 %v2783, %v2782
      %v2805 = vpack.c.b16 %v2785, %v2784
      %v2806 = vpack.c.b16 %v2787, %v2786
      %v2807 = vpack.c.b16 %v2789, %v2788
      %v2808 = vpack.c.b16 %v2791, %v2790
      %v2809 = vpack.c.b16 %v2793, %v2792
      %v2811 = vsel %vm1295, %v2794, 0
      %v2814 = vsel %vm1295, %v2795, 0
      %v2817 = vsel %vm1295, %v2796, 0
      %v2820 = vsel %vm1295, %v2797, 0
      %v2823 = vsel %vm1295, %v2798, 0
      %v2826 = vsel %vm1295, %v2799, 0
      %v2829 = vsel %vm1295, %v2800, 0
      %v2832 = vsel %vm1295, %v2801, 0
      %v2835 = vsel %vm1295, %v2802, 0
      %v2838 = vsel %vm1295, %v2803, 0
      %v2841 = vsel %vm1295, %v2804, 0
      %v2844 = vsel %vm1295, %v2805, 0
      %v2847 = vsel %vm1295, %v2806, 0
      %v2850 = vsel %vm1295, %v2807, 0
      %v2853 = vsel %vm1295, %v2808, 0
      %v2856 = vsel %vm1295, %v2809, 0
      %v2859 = vsel %vm1344, %v2761, 0
      %2861 = vmatpush.bf16.msra.mxu0 0
      %2862 = vmatpush.bf16.msra.mxu0 0
      %2863 = vmatpush.bf16.msra.mxu0 0
      %2864 = vmatpush.bf16.msra.mxu0 0
      %2865 = vmatpush.bf16.msra.mxu0 0
      %2866 = vmatpush.bf16.msra.mxu0 0
      %2867 = vmatpush.bf16.msra.mxu0 0
      %2868 = vmatpush.bf16.msra.mxu0 %v2859
      %2869 = vmatmul.bf16.gmra.mxu0 %v2811
      %v2870 = vpop.f32.mrf.mxu0
      %v2871 = vadd.f32 0.0, %v2870
      %v2872 = vpop.f32.mrf.mxu0
      %v2873 = vadd.f32 0.0, %v2872
      %2874 = vmatmul.bf16.gmra.mxu0 %v2814
      %v2875 = vpop.f32.mrf.mxu0
      %v2876 = vadd.f32 0.0, %v2875
      %v2877 = vpop.f32.mrf.mxu0
      %v2878 = vadd.f32 0.0, %v2877
      %2879 = vmatmul.bf16.gmra.mxu0 %v2817
      %v2880 = vpop.f32.mrf.mxu0
      %v2881 = vadd.f32 0.0, %v2880
      %v2882 = vpop.f32.mrf.mxu0
      %v2883 = vadd.f32 0.0, %v2882
      %2884 = vmatmul.bf16.gmra.mxu0 %v2820
      %v2885 = vpop.f32.mrf.mxu0
      %v2886 = vadd.f32 0.0, %v2885
      %v2887 = vpop.f32.mrf.mxu0
      %v2888 = vadd.f32 0.0, %v2887
      %2889 = vmatmul.bf16.gmra.mxu0 %v2823
      %v2890 = vpop.f32.mrf.mxu0
      %v2891 = vadd.f32 0.0, %v2890
      %v2892 = vpop.f32.mrf.mxu0
      %v2893 = vadd.f32 0.0, %v2892
      %2894 = vmatmul.bf16.gmra.mxu0 %v2826
      %v2895 = vpop.f32.mrf.mxu0
      %v2896 = vadd.f32 0.0, %v2895
      %v2897 = vpop.f32.mrf.mxu0
      %v2898 = vadd.f32 0.0, %v2897
      %2899 = vmatmul.bf16.gmra.mxu0 %v2829
      %v2900 = vpop.f32.mrf.mxu0
      %v2901 = vadd.f32 0.0, %v2900
      %v2902 = vpop.f32.mrf.mxu0
      %v2903 = vadd.f32 0.0, %v2902
      %2904 = vmatmul.bf16.gmra.mxu0 %v2832
      %v2905 = vpop.f32.mrf.mxu0
      %v2906 = vadd.f32 0.0, %v2905
      %v2907 = vpop.f32.mrf.mxu0
      %v2908 = vadd.f32 0.0, %v2907
      %2909 = vmatmul.bf16.gmra.mxu0 %v2835
      %v2910 = vpop.f32.mrf.mxu0
      %v2911 = vadd.f32 0.0, %v2910
      %v2912 = vpop.f32.mrf.mxu0
      %v2913 = vadd.f32 0.0, %v2912
      %2914 = vmatmul.bf16.gmra.mxu0 %v2838
      %v2915 = vpop.f32.mrf.mxu0
      %v2916 = vadd.f32 0.0, %v2915
      %v2917 = vpop.f32.mrf.mxu0
      %v2918 = vadd.f32 0.0, %v2917
      %2919 = vmatmul.bf16.gmra.mxu0 %v2841
      %v2920 = vpop.f32.mrf.mxu0
      %v2921 = vadd.f32 0.0, %v2920
      %v2922 = vpop.f32.mrf.mxu0
      %v2923 = vadd.f32 0.0, %v2922
      %2924 = vmatmul.bf16.gmra.mxu0 %v2844
      %v2925 = vpop.f32.mrf.mxu0
      %v2926 = vadd.f32 0.0, %v2925
      %v2927 = vpop.f32.mrf.mxu0
      %v2928 = vadd.f32 0.0, %v2927
      %2929 = vmatmul.bf16.gmra.mxu0 %v2847
      %v2930 = vpop.f32.mrf.mxu0
      %v2931 = vadd.f32 0.0, %v2930
      %v2932 = vpop.f32.mrf.mxu0
      %v2933 = vadd.f32 0.0, %v2932
      %2934 = vmatmul.bf16.gmra.mxu0 %v2850
      %v2935 = vpop.f32.mrf.mxu0
      %v2936 = vadd.f32 0.0, %v2935
      %v2937 = vpop.f32.mrf.mxu0
      %v2938 = vadd.f32 0.0, %v2937
      %2939 = vmatmul.bf16.gmra.mxu0 %v2853
      %v2940 = vpop.f32.mrf.mxu0
      %v2941 = vadd.f32 0.0, %v2940
      %v2942 = vpop.f32.mrf.mxu0
      %v2943 = vadd.f32 0.0, %v2942
      %2944 = vmatmul.bf16.gmra.mxu0 %v2856
      %v2945 = vpop.f32.mrf.mxu0
      %v2946 = vadd.f32 0.0, %v2945
      %v2947 = vpop.f32.mrf.mxu0
      %v2948 = vadd.f32 0.0, %v2947
      %2949 = vdwg.mxu0
      %v2950 = vadd.f32 %v2296, %v2871
      %v2951 = vadd.f32 %v2297, %v2873
      %v2952 = vadd.f32 %v2298, %v2876
      %v2953 = vadd.f32 %v2299, %v2878
      %v2954 = vadd.f32 %v2300, %v2881
      %v2955 = vadd.f32 %v2301, %v2883
      %v2956 = vadd.f32 %v2302, %v2886
      %v2957 = vadd.f32 %v2303, %v2888
      %v2958 = vadd.f32 %v2304, %v2891
      %v2959 = vadd.f32 %v2305, %v2893
      %v2960 = vadd.f32 %v2306, %v2896
      %v2961 = vadd.f32 %v2307, %v2898
      %v2962 = vadd.f32 %v2308, %v2901
      %v2963 = vadd.f32 %v2309, %v2903
      %v2964 = vadd.f32 %v2310, %v2906
      %v2965 = vadd.f32 %v2311, %v2908
      %v2966 = vadd.f32 %v2312, %v2911
      %v2967 = vadd.f32 %v2313, %v2913
      %v2968 = vadd.f32 %v2314, %v2916
      %v2969 = vadd.f32 %v2315, %v2918
      %v2970 = vadd.f32 %v2316, %v2921
      %v2971 = vadd.f32 %v2317, %v2923
      %v2972 = vadd.f32 %v2318, %v2926
      %v2973 = vadd.f32 %v2319, %v2928
      %v2974 = vadd.f32 %v2320, %v2931
      %v2975 = vadd.f32 %v2321, %v2933
      %v2976 = vadd.f32 %v2322, %v2936
      %v2977 = vadd.f32 %v2323, %v2938
      %v2978 = vadd.f32 %v2324, %v2941
      %v2979 = vadd.f32 %v2325, %v2943
      %v2980 = vadd.f32 %v2326, %v2946
      %v2981 = vadd.f32 %v2327, %v2948
      %v2982 = vld [vmem:[%s691] sm:$0xe]
      %v2983 = vld [vmem:[%s691 + $0xc] sm:$0xe]
      %v2984 = vld [vmem:[%s691 + $0x18] sm:$0xe]
      %v2985 = vld [vmem:[%s691 + $0x24] sm:$0xe]
      %v2986 = vld [vmem:[%s691 + $0x30] sm:$0xe]
      %v2987 = vld [vmem:[%s691 + $0x3c] sm:$0xe]
      %v2988 = vld [vmem:[%s691 + $0x48] sm:$0xe]
      %v2989 = vld [vmem:[%s691 + $0x54] sm:$0xe]
      %v2990 = vld [vmem:[%s691 + $0x60] sm:$0xe]
      %v2991 = vld [vmem:[%s691 + $0x6c] sm:$0xe]
      %v2992 = vld [vmem:[%s691 + $0x78] sm:$0xe]
      %v2993 = vld [vmem:[%s691 + $0x84] sm:$0xe]
      %v2994 = vld [vmem:[%s691 + $0x90] sm:$0xe]
      %v2995 = vld [vmem:[%s691 + $0x9c] sm:$0xe]
      %v2996 = vld [vmem:[%s691 + $0xa8] sm:$0xe]
      %v2997 = vld [vmem:[%s691 + $0xb4] sm:$0xe]
      %v3046 = vrot.slane %v2982, 5
      %v3047 = vrot.slane %v3046, 4
      %v3048 = vrot.slane %v2329, 5
      %v3049 = vsel %vm1707, %v3047, %v3048
      %v3050 = vrot.slane %v3048, 4
      %v3051 = vrot.slane %v2330, 5
      %v3052 = vsel %vm1707, %v3050, %v3051
      %v3053 = vrot.slane %v2983, 5
      %v3054 = vrot.slane %v3053, 4
      %v3055 = vrot.slane %v2332, 5
      %v3056 = vsel %vm1707, %v3054, %v3055
      %v3057 = vrot.slane %v3055, 4
      %v3058 = vrot.slane %v2333, 5
      %v3059 = vsel %vm1707, %v3057, %v3058
      %v3060 = vrot.slane %v2984, 5
      %v3061 = vrot.slane %v3060, 4
      %v3062 = vrot.slane %v2335, 5
      %v3063 = vsel %vm1707, %v3061, %v3062
      %v3064 = vrot.slane %v3062, 4
      %v3065 = vrot.slane %v2336, 5
      %v3066 = vsel %vm1707, %v3064, %v3065
      %v3067 = vrot.slane %v2985, 5
      %v3068 = vrot.slane %v3067, 4
      %v3069 = vrot.slane %v2338, 5
      %v3070 = vsel %vm1707, %v3068, %v3069
      %v3071 = vrot.slane %v3069, 4
      %v3072 = vrot.slane %v2339, 5
      %v3073 = vsel %vm1707, %v3071, %v3072
      %v3074 = vrot.slane %v2986, 5
      %v3075 = vrot.slane %v3074, 4
      %v3076 = vrot.slane %v2341, 5
      %v3077 = vsel %vm1707, %v3075, %v3076
      %v3078 = vrot.slane %v3076, 4
      %v3079 = vrot.slane %v2342, 5
      %v3080 = vsel %vm1707, %v3078, %v3079
      %v3081 = vrot.slane %v2987, 5
      %v3082 = vrot.slane %v3081, 4
      %v3083 = vrot.slane %v2344, 5
      %v3084 = vsel %vm1707, %v3082, %v3083
      %v3085 = vrot.slane %v3083, 4
      %v3086 = vrot.slane %v2345, 5
      %v3087 = vsel %vm1707, %v3085, %v3086
      %v3088 = vrot.slane %v2988, 5
      %v3089 = vrot.slane %v3088, 4
      %v3090 = vrot.slane %v2347, 5
      %v3091 = vsel %vm1707, %v3089, %v3090
      %v3092 = vrot.slane %v3090, 4
      %v3093 = vrot.slane %v2348, 5
      %v3094 = vsel %vm1707, %v3092, %v3093
      %v3095 = vrot.slane %v2989, 5
      %v3096 = vrot.slane %v3095, 4
      %v3097 = vrot.slane %v2350, 5
      %v3098 = vsel %vm1707, %v3096, %v3097
      %v3099 = vrot.slane %v3097, 4
      %v3100 = vrot.slane %v2351, 5
      %v3101 = vsel %vm1707, %v3099, %v3100
      %v3102 = vrot.slane %v2990, 5
      %v3103 = vrot.slane %v3102, 4
      %v3104 = vrot.slane %v2353, 5
      %v3105 = vsel %vm1707, %v3103, %v3104
      %v3106 = vrot.slane %v3104, 4
      %v3107 = vrot.slane %v2354, 5
      %v3108 = vsel %vm1707, %v3106, %v3107
      %v3109 = vrot.slane %v2991, 5
      %v3110 = vrot.slane %v3109, 4
      %v3111 = vrot.slane %v2356, 5
      %v3112 = vsel %vm1707, %v3110, %v3111
      %v3113 = vrot.slane %v3111, 4
      %v3114 = vrot.slane %v2357, 5
      %v3115 = vsel %vm1707, %v3113, %v3114
      %v3116 = vrot.slane %v2992, 5
      %v3117 = vrot.slane %v3116, 4
      %v3118 = vrot.slane %v2359, 5
      %v3119 = vsel %vm1707, %v3117, %v3118
      %v3120 = vrot.slane %v3118, 4
      %v3121 = vrot.slane %v2360, 5
      %v3122 = vsel %vm1707, %v3120, %v3121
      %v3123 = vrot.slane %v2993, 5
      %v3124 = vrot.slane %v3123, 4
      %v3125 = vrot.slane %v2362, 5
      %v3126 = vsel %vm1707, %v3124, %v3125
      %v3127 = vrot.slane %v3125, 4
      %v3128 = vrot.slane %v2363, 5
      %v3129 = vsel %vm1707, %v3127, %v3128
      %v3130 = vrot.slane %v2994, 5
      %v3131 = vrot.slane %v3130, 4
      %v3132 = vrot.slane %v2365, 5
      %v3133 = vsel %vm1707, %v3131, %v3132
      %v3134 = vrot.slane %v3132, 4
      %v3135 = vrot.slane %v2366, 5
      %v3136 = vsel %vm1707, %v3134, %v3135
      %v3137 = vrot.slane %v2995, 5
      %v3138 = vrot.slane %v3137, 4
      %v3139 = vrot.slane %v2368, 5
      %v3140 = vsel %vm1707, %v3138, %v3139
      %v3141 = vrot.slane %v3139, 4
      %v3142 = vrot.slane %v2369, 5
      %v3143 = vsel %vm1707, %v3141, %v3142
      %v3144 = vrot.slane %v2996, 5
      %v3145 = vrot.slane %v3144, 4
      %v3146 = vrot.slane %v2371, 5
      %v3147 = vsel %vm1707, %v3145, %v3146
      %v3148 = vrot.slane %v3146, 4
      %v3149 = vrot.slane %v2372, 5
      %v3150 = vsel %vm1707, %v3148, %v3149
      %v3151 = vrot.slane %v2997, 5
      %v3152 = vrot.slane %v3151, 4
      %v3153 = vrot.slane %v2374, 5
      %v3154 = vsel %vm1707, %v3152, %v3153
      %v3155 = vrot.slane %v3153, 4
      %v3156 = vrot.slane %v2375, 5
      %v3157 = vsel %vm1707, %v3155, %v3156
      %s3158 = scalar_lea.vmem %s1, 10
      %v3159 = vld [vmem:[%s3158] sm:$0x3]
      %v3160 = vunpack.c.l.b16 %v3049
      %v3161 = vunpack.c.l.b16 %v3052
      %v3162 = vunpack.c.l.b16 %v3056
      %v3163 = vunpack.c.l.b16 %v3059
      %v3164 = vunpack.c.l.b16 %v3063
      %v3165 = vunpack.c.l.b16 %v3066
      %v3166 = vunpack.c.l.b16 %v3070
      %v3167 = vunpack.c.l.b16 %v3073
      %v3168 = vunpack.c.l.b16 %v3077
      %v3169 = vunpack.c.l.b16 %v3080
      %v3170 = vunpack.c.l.b16 %v3084
      %v3171 = vunpack.c.l.b16 %v3087
      %v3172 = vunpack.c.l.b16 %v3091
      %v3173 = vunpack.c.l.b16 %v3094
      %v3174 = vunpack.c.l.b16 %v3098
      %v3175 = vunpack.c.l.b16 %v3101
      %v3176 = vunpack.c.l.b16 %v3105
      %v3177 = vunpack.c.l.b16 %v3108
      %v3178 = vunpack.c.l.b16 %v3112
      %v3179 = vunpack.c.l.b16 %v3115
      %v3180 = vunpack.c.l.b16 %v3119
      %v3181 = vunpack.c.l.b16 %v3122
      %v3182 = vunpack.c.l.b16 %v3126
      %v3183 = vunpack.c.l.b16 %v3129
      %v3184 = vunpack.c.l.b16 %v3133
      %v3185 = vunpack.c.l.b16 %v3136
      %v3186 = vunpack.c.l.b16 %v3140
      %v3187 = vunpack.c.l.b16 %v3143
      %v3188 = vunpack.c.l.b16 %v3147
      %v3189 = vunpack.c.l.b16 %v3150
      %v3190 = vunpack.c.l.b16 %v3154
      %v3191 = vunpack.c.l.b16 %v3157
      %v3192 = vpack.c.b16 %v3161, %v3160
      %v3193 = vpack.c.b16 %v3163, %v3162
      %v3194 = vpack.c.b16 %v3165, %v3164
      %v3195 = vpack.c.b16 %v3167, %v3166
      %v3196 = vpack.c.b16 %v3169, %v3168
      %v3197 = vpack.c.b16 %v3171, %v3170
      %v3198 = vpack.c.b16 %v3173, %v3172
      %v3199 = vpack.c.b16 %v3175, %v3174
      %v3200 = vpack.c.b16 %v3177, %v3176
      %v3201 = vpack.c.b16 %v3179, %v3178
      %v3202 = vpack.c.b16 %v3181, %v3180
      %v3203 = vpack.c.b16 %v3183, %v3182
      %v3204 = vpack.c.b16 %v3185, %v3184
      %v3205 = vpack.c.b16 %v3187, %v3186
      %v3206 = vpack.c.b16 %v3189, %v3188
      %v3207 = vpack.c.b16 %v3191, %v3190
      %v3209 = vsel %vm1295, %v3192, 0
      %v3212 = vsel %vm1295, %v3193, 0
      %v3215 = vsel %vm1295, %v3194, 0
      %v3218 = vsel %vm1295, %v3195, 0
      %v3221 = vsel %vm1295, %v3196, 0
      %v3224 = vsel %vm1295, %v3197, 0
      %v3227 = vsel %vm1295, %v3198, 0
      %v3230 = vsel %vm1295, %v3199, 0
      %v3233 = vsel %vm1295, %v3200, 0
      %v3236 = vsel %vm1295, %v3201, 0
      %v3239 = vsel %vm1295, %v3202, 0
      %v3242 = vsel %vm1295, %v3203, 0
      %v3245 = vsel %vm1295, %v3204, 0
      %v3248 = vsel %vm1295, %v3205, 0
      %v3251 = vsel %vm1295, %v3206, 0
      %v3254 = vsel %vm1295, %v3207, 0
      %v3257 = vsel %vm1344, %v3159, 0
      %3259 = vmatpush.bf16.msra.mxu0 0
      %3260 = vmatpush.bf16.msra.mxu0 0
      %3261 = vmatpush.bf16.msra.mxu0 0
      %3262 = vmatpush.bf16.msra.mxu0 0
      %3263 = vmatpush.bf16.msra.mxu0 0
      %3264 = vmatpush.bf16.msra.mxu0 0
      %3265 = vmatpush.bf16.msra.mxu0 0
      %3266 = vmatpush.bf16.msra.mxu0 %v3257
      %3267 = vmatmul.bf16.gmra.mxu0 %v3209
      %v3268 = vpop.f32.mrf.mxu0
      %v3269 = vadd.f32 0.0, %v3268
      %v3270 = vpop.f32.mrf.mxu0
      %v3271 = vadd.f32 0.0, %v3270
      %3272 = vmatmul.bf16.gmra.mxu0 %v3212
      %v3273 = vpop.f32.mrf.mxu0
      %v3274 = vadd.f32 0.0, %v3273
      %v3275 = vpop.f32.mrf.mxu0
      %v3276 = vadd.f32 0.0, %v3275
      %3277 = vmatmul.bf16.gmra.mxu0 %v3215
      %v3278 = vpop.f32.mrf.mxu0
      %v3279 = vadd.f32 0.0, %v3278
      %v3280 = vpop.f32.mrf.mxu0
      %v3281 = vadd.f32 0.0, %v3280
      %3282 = vmatmul.bf16.gmra.mxu0 %v3218
      %v3283 = vpop.f32.mrf.mxu0
      %v3284 = vadd.f32 0.0, %v3283
      %v3285 = vpop.f32.mrf.mxu0
      %v3286 = vadd.f32 0.0, %v3285
      %3287 = vmatmul.bf16.gmra.mxu0 %v3221
      %v3288 = vpop.f32.mrf.mxu0
      %v3289 = vadd.f32 0.0, %v3288
      %v3290 = vpop.f32.mrf.mxu0
      %v3291 = vadd.f32 0.0, %v3290
      %3292 = vmatmul.bf16.gmra.mxu0 %v3224
      %v3293 = vpop.f32.mrf.mxu0
      %v3294 = vadd.f32 0.0, %v3293
      %v3295 = vpop.f32.mrf.mxu0
      %v3296 = vadd.f32 0.0, %v3295
      %3297 = vmatmul.bf16.gmra.mxu0 %v3227
      %v3298 = vpop.f32.mrf.mxu0
      %v3299 = vadd.f32 0.0, %v3298
      %v3300 = vpop.f32.mrf.mxu0
      %v3301 = vadd.f32 0.0, %v3300
      %3302 = vmatmul.bf16.gmra.mxu0 %v3230
      %v3303 = vpop.f32.mrf.mxu0
      %v3304 = vadd.f32 0.0, %v3303
      %v3305 = vpop.f32.mrf.mxu0
      %v3306 = vadd.f32 0.0, %v3305
      %3307 = vmatmul.bf16.gmra.mxu0 %v3233
      %v3308 = vpop.f32.mrf.mxu0
      %v3309 = vadd.f32 0.0, %v3308
      %v3310 = vpop.f32.mrf.mxu0
      %v3311 = vadd.f32 0.0, %v3310
      %3312 = vmatmul.bf16.gmra.mxu0 %v3236
      %v3313 = vpop.f32.mrf.mxu0
      %v3314 = vadd.f32 0.0, %v3313
      %v3315 = vpop.f32.mrf.mxu0
      %v3316 = vadd.f32 0.0, %v3315
      %3317 = vmatmul.bf16.gmra.mxu0 %v3239
      %v3318 = vpop.f32.mrf.mxu0
      %v3319 = vadd.f32 0.0, %v3318
      %v3320 = vpop.f32.mrf.mxu0
      %v3321 = vadd.f32 0.0, %v3320
      %3322 = vmatmul.bf16.gmra.mxu0 %v3242
      %v3323 = vpop.f32.mrf.mxu0
      %v3324 = vadd.f32 0.0, %v3323
      %v3325 = vpop.f32.mrf.mxu0
      %v3326 = vadd.f32 0.0, %v3325
      %3327 = vmatmul.bf16.gmra.mxu0 %v3245
      %v3328 = vpop.f32.mrf.mxu0
      %v3329 = vadd.f32 0.0, %v3328
      %v3330 = vpop.f32.mrf.mxu0
      %v3331 = vadd.f32 0.0, %v3330
      %3332 = vmatmul.bf16.gmra.mxu0 %v3248
      %v3333 = vpop.f32.mrf.mxu0
      %v3334 = vadd.f32 0.0, %v3333
      %v3335 = vpop.f32.mrf.mxu0
      %v3336 = vadd.f32 0.0, %v3335
      %3337 = vmatmul.bf16.gmra.mxu0 %v3251
      %v3338 = vpop.f32.mrf.mxu0
      %v3339 = vadd.f32 0.0, %v3338
      %v3340 = vpop.f32.mrf.mxu0
      %v3341 = vadd.f32 0.0, %v3340
      %3342 = vmatmul.bf16.gmra.mxu0 %v3254
      %v3343 = vpop.f32.mrf.mxu0
      %v3344 = vadd.f32 0.0, %v3343
      %v3345 = vpop.f32.mrf.mxu0
      %v3346 = vadd.f32 0.0, %v3345
      %3347 = vdwg.mxu0
      %v3348 = vadd.f32 %v2950, %v3269
      %v3349 = vadd.f32 %v2951, %v3271
      %v3350 = vadd.f32 %v2952, %v3274
      %v3351 = vadd.f32 %v2953, %v3276
      %v3352 = vadd.f32 %v2954, %v3279
      %v3353 = vadd.f32 %v2955, %v3281
      %v3354 = vadd.f32 %v2956, %v3284
      %v3355 = vadd.f32 %v2957, %v3286
      %v3356 = vadd.f32 %v2958, %v3289
      %v3357 = vadd.f32 %v2959, %v3291
      %v3358 = vadd.f32 %v2960, %v3294
      %v3359 = vadd.f32 %v2961, %v3296
      %v3360 = vadd.f32 %v2962, %v3299
      %v3361 = vadd.f32 %v2963, %v3301
      %v3362 = vadd.f32 %v2964, %v3304
      %v3363 = vadd.f32 %v2965, %v3306
      %v3364 = vadd.f32 %v2966, %v3309
      %v3365 = vadd.f32 %v2967, %v3311
      %v3366 = vadd.f32 %v2968, %v3314
      %v3367 = vadd.f32 %v2969, %v3316
      %v3368 = vadd.f32 %v2970, %v3319
      %v3369 = vadd.f32 %v2971, %v3321
      %v3370 = vadd.f32 %v2972, %v3324
      %v3371 = vadd.f32 %v2973, %v3326
      %v3372 = vadd.f32 %v2974, %v3329
      %v3373 = vadd.f32 %v2975, %v3331
      %v3374 = vadd.f32 %v2976, %v3334
      %v3375 = vadd.f32 %v2977, %v3336
      %v3376 = vadd.f32 %v2978, %v3339
      %v3377 = vadd.f32 %v2979, %v3341
      %v3378 = vadd.f32 %v2980, %v3344
      %v3379 = vadd.f32 %v2981, %v3346
      %s3380 = scalar_lea.vmem [#allocation2], 24
      %v3381 = vld [vmem:[%s3380] sm:$0xf]
      %v3382 = vld [vmem:[%s3380 + $0x4] sm:$0xf]
      %v3383 = vld [vmem:[%s3380 + $0xc] sm:$0xf]
      %v3384 = vld [vmem:[%s3380 + $0x10] sm:$0xf]
      %v3385 = vld [vmem:[%s3380 + $0x18] sm:$0xf]
      %v3386 = vld [vmem:[%s3380 + $0x1c] sm:$0xf]
      %v3387 = vld [vmem:[%s3380 + $0x24] sm:$0xf]
      %v3388 = vld [vmem:[%s3380 + $0x28] sm:$0xf]
      %v3389 = vld [vmem:[%s3380 + $0x30] sm:$0xf]
      %v3390 = vld [vmem:[%s3380 + $0x34] sm:$0xf]
      %v3391 = vld [vmem:[%s3380 + $0x3c] sm:$0xf]
      %v3392 = vld [vmem:[%s3380 + $0x40] sm:$0xf]
      %v3393 = vld [vmem:[%s3380 + $0x48] sm:$0xf]
      %v3394 = vld [vmem:[%s3380 + $0x4c] sm:$0xf]
      %v3395 = vld [vmem:[%s3380 + $0x54] sm:$0xf]
      %v3396 = vld [vmem:[%s3380 + $0x58] sm:$0xf]
      %v3397 = vld [vmem:[%s3380 + $0x60] sm:$0xf]
      %v3398 = vld [vmem:[%s3380 + $0x64] sm:$0xf]
      %v3399 = vld [vmem:[%s3380 + $0x6c] sm:$0xf]
      %v3400 = vld [vmem:[%s3380 + $0x70] sm:$0xf]
      %v3401 = vld [vmem:[%s3380 + $0x78] sm:$0xf]
      %v3402 = vld [vmem:[%s3380 + $0x7c] sm:$0xf]
      %v3403 = vld [vmem:[%s3380 + $0x84] sm:$0xf]
      %v3404 = vld [vmem:[%s3380 + $0x88] sm:$0xf]
      %v3405 = vld [vmem:[%s3380 + $0x90] sm:$0xf]
      %v3406 = vld [vmem:[%s3380 + $0x94] sm:$0xf]
      %v3407 = vld [vmem:[%s3380 + $0x9c] sm:$0xf]
      %v3408 = vld [vmem:[%s3380 + $0xa0] sm:$0xf]
      %v3409 = vld [vmem:[%s3380 + $0xa8] sm:$0xf]
      %v3410 = vld [vmem:[%s3380 + $0xac] sm:$0xf]
      %v3411 = vld [vmem:[%s3380 + $0xb4] sm:$0xf]
      %v3412 = vld [vmem:[%s3380 + $0xb8] sm:$0xf]
      %s3413 = scalar_lea.vmem %s1, 12
      %v3414 = vld [vmem:[%s3413] sm:$0x3]
      %v3447 = vunpack.c.l.b16 %v3381
      %v3448 = vunpack.c.l.b16 %v3382
      %v3449 = vunpack.c.l.b16 %v3383
      %v3450 = vunpack.c.l.b16 %v3384
      %v3451 = vunpack.c.l.b16 %v3385
      %v3452 = vunpack.c.l.b16 %v3386
      %v3453 = vunpack.c.l.b16 %v3387
      %v3454 = vunpack.c.l.b16 %v3388
      %v3455 = vunpack.c.l.b16 %v3389
      %v3456 = vunpack.c.l.b16 %v3390
      %v3457 = vunpack.c.l.b16 %v3391
      %v3458 = vunpack.c.l.b16 %v3392
      %v3459 = vunpack.c.l.b16 %v3393
      %v3460 = vunpack.c.l.b16 %v3394
      %v3461 = vunpack.c.l.b16 %v3395
      %v3462 = vunpack.c.l.b16 %v3396
      %v3463 = vunpack.c.l.b16 %v3397
      %v3464 = vunpack.c.l.b16 %v3398
      %v3465 = vunpack.c.l.b16 %v3399
      %v3466 = vunpack.c.l.b16 %v3400
      %v3467 = vunpack.c.l.b16 %v3401
      %v3468 = vunpack.c.l.b16 %v3402
      %v3469 = vunpack.c.l.b16 %v3403
      %v3470 = vunpack.c.l.b16 %v3404
      %v3471 = vunpack.c.l.b16 %v3405
      %v3472 = vunpack.c.l.b16 %v3406
      %v3473 = vunpack.c.l.b16 %v3407
      %v3474 = vunpack.c.l.b16 %v3408
      %v3475 = vunpack.c.l.b16 %v3409
      %v3476 = vunpack.c.l.b16 %v3410
      %v3477 = vunpack.c.l.b16 %v3411
      %v3478 = vunpack.c.l.b16 %v3412
      %v3479 = vpack.c.b16 %v3448, %v3447
      %v3480 = vpack.c.b16 %v3450, %v3449
      %v3481 = vpack.c.b16 %v3452, %v3451
      %v3482 = vpack.c.b16 %v3454, %v3453
      %v3483 = vpack.c.b16 %v3456, %v3455
      %v3484 = vpack.c.b16 %v3458, %v3457
      %v3485 = vpack.c.b16 %v3460, %v3459
      %v3486 = vpack.c.b16 %v3462, %v3461
      %v3487 = vpack.c.b16 %v3464, %v3463
      %v3488 = vpack.c.b16 %v3466, %v3465
      %v3489 = vpack.c.b16 %v3468, %v3467
      %v3490 = vpack.c.b16 %v3470, %v3469
      %v3491 = vpack.c.b16 %v3472, %v3471
      %v3492 = vpack.c.b16 %v3474, %v3473
      %v3493 = vpack.c.b16 %v3476, %v3475
      %v3494 = vpack.c.b16 %v3478, %v3477
      %v3496 = vsel %vm1295, %v3479, 0
      %v3499 = vsel %vm1295, %v3480, 0
      %v3502 = vsel %vm1295, %v3481, 0
      %v3505 = vsel %vm1295, %v3482, 0
      %v3508 = vsel %vm1295, %v3483, 0
      %v3511 = vsel %vm1295, %v3484, 0
      %v3514 = vsel %vm1295, %v3485, 0
      %v3517 = vsel %vm1295, %v3486, 0
      %v3520 = vsel %vm1295, %v3487, 0
      %v3523 = vsel %vm1295, %v3488, 0
      %v3526 = vsel %vm1295, %v3489, 0
      %v3529 = vsel %vm1295, %v3490, 0
      %v3532 = vsel %vm1295, %v3491, 0
      %v3535 = vsel %vm1295, %v3492, 0
      %v3538 = vsel %vm1295, %v3493, 0
      %v3541 = vsel %vm1295, %v3494, 0
      %v3544 = vsel %vm1344, %v3414, 0
      %3546 = vmatpush.bf16.msra.mxu0 0
      %3547 = vmatpush.bf16.msra.mxu0 0
      %3548 = vmatpush.bf16.msra.mxu0 0
      %3549 = vmatpush.bf16.msra.mxu0 0
      %3550 = vmatpush.bf16.msra.mxu0 0
      %3551 = vmatpush.bf16.msra.mxu0 0
      %3552 = vmatpush.bf16.msra.mxu0 0
      %3553 = vmatpush.bf16.msra.mxu0 %v3544
      %3554 = vmatmul.bf16.gmra.mxu0 %v3496
      %v3555 = vpop.f32.mrf.mxu0
      %v3556 = vadd.f32 0.0, %v3555
      %v3557 = vpop.f32.mrf.mxu0
      %v3558 = vadd.f32 0.0, %v3557
      %3559 = vmatmul.bf16.gmra.mxu0 %v3499
      %v3560 = vpop.f32.mrf.mxu0
      %v3561 = vadd.f32 0.0, %v3560
      %v3562 = vpop.f32.mrf.mxu0
      %v3563 = vadd.f32 0.0, %v3562
      %3564 = vmatmul.bf16.gmra.mxu0 %v3502
      %v3565 = vpop.f32.mrf.mxu0
      %v3566 = vadd.f32 0.0, %v3565
      %v3567 = vpop.f32.mrf.mxu0
      %v3568 = vadd.f32 0.0, %v3567
      %3569 = vmatmul.bf16.gmra.mxu0 %v3505
      %v3570 = vpop.f32.mrf.mxu0
      %v3571 = vadd.f32 0.0, %v3570
      %v3572 = vpop.f32.mrf.mxu0
      %v3573 = vadd.f32 0.0, %v3572
      %3574 = vmatmul.bf16.gmra.mxu0 %v3508
      %v3575 = vpop.f32.mrf.mxu0
      %v3576 = vadd.f32 0.0, %v3575
      %v3577 = vpop.f32.mrf.mxu0
      %v3578 = vadd.f32 0.0, %v3577
      %3579 = vmatmul.bf16.gmra.mxu0 %v3511
      %v3580 = vpop.f32.mrf.mxu0
      %v3581 = vadd.f32 0.0, %v3580
      %v3582 = vpop.f32.mrf.mxu0
      %v3583 = vadd.f32 0.0, %v3582
      %3584 = vmatmul.bf16.gmra.mxu0 %v3514
      %v3585 = vpop.f32.mrf.mxu0
      %v3586 = vadd.f32 0.0, %v3585
      %v3587 = vpop.f32.mrf.mxu0
      %v3588 = vadd.f32 0.0, %v3587
      %3589 = vmatmul.bf16.gmra.mxu0 %v3517
      %v3590 = vpop.f32.mrf.mxu0
      %v3591 = vadd.f32 0.0, %v3590
      %v3592 = vpop.f32.mrf.mxu0
      %v3593 = vadd.f32 0.0, %v3592
      %3594 = vmatmul.bf16.gmra.mxu0 %v3520
      %v3595 = vpop.f32.mrf.mxu0
      %v3596 = vadd.f32 0.0, %v3595
      %v3597 = vpop.f32.mrf.mxu0
      %v3598 = vadd.f32 0.0, %v3597
      %3599 = vmatmul.bf16.gmra.mxu0 %v3523
      %v3600 = vpop.f32.mrf.mxu0
      %v3601 = vadd.f32 0.0, %v3600
      %v3602 = vpop.f32.mrf.mxu0
      %v3603 = vadd.f32 0.0, %v3602
      %3604 = vmatmul.bf16.gmra.mxu0 %v3526
      %v3605 = vpop.f32.mrf.mxu0
      %v3606 = vadd.f32 0.0, %v3605
      %v3607 = vpop.f32.mrf.mxu0
      %v3608 = vadd.f32 0.0, %v3607
      %3609 = vmatmul.bf16.gmra.mxu0 %v3529
      %v3610 = vpop.f32.mrf.mxu0
      %v3611 = vadd.f32 0.0, %v3610
      %v3612 = vpop.f32.mrf.mxu0
      %v3613 = vadd.f32 0.0, %v3612
      %3614 = vmatmul.bf16.gmra.mxu0 %v3532
      %v3615 = vpop.f32.mrf.mxu0
      %v3616 = vadd.f32 0.0, %v3615
      %v3617 = vpop.f32.mrf.mxu0
      %v3618 = vadd.f32 0.0, %v3617
      %3619 = vmatmul.bf16.gmra.mxu0 %v3535
      %v3620 = vpop.f32.mrf.mxu0
      %v3621 = vadd.f32 0.0, %v3620
      %v3622 = vpop.f32.mrf.mxu0
      %v3623 = vadd.f32 0.0, %v3622
      %3624 = vmatmul.bf16.gmra.mxu0 %v3538
      %v3625 = vpop.f32.mrf.mxu0
      %v3626 = vadd.f32 0.0, %v3625
      %v3627 = vpop.f32.mrf.mxu0
      %v3628 = vadd.f32 0.0, %v3627
      %3629 = vmatmul.bf16.gmra.mxu0 %v3541
      %v3630 = vpop.f32.mrf.mxu0
      %v3631 = vadd.f32 0.0, %v3630
      %v3632 = vpop.f32.mrf.mxu0
      %v3633 = vadd.f32 0.0, %v3632
      %3634 = vdwg.mxu0
      %v3635 = vadd.f32 %v3348, %v3556
      %v3636 = vadd.f32 %v3349, %v3558
      %v3637 = vadd.f32 %v3350, %v3561
      %v3638 = vadd.f32 %v3351, %v3563
      %v3639 = vadd.f32 %v3352, %v3566
      %v3640 = vadd.f32 %v3353, %v3568
      %v3641 = vadd.f32 %v3354, %v3571
      %v3642 = vadd.f32 %v3355, %v3573
      %v3643 = vadd.f32 %v3356, %v3576
      %v3644 = vadd.f32 %v3357, %v3578
      %v3645 = vadd.f32 %v3358, %v3581
      %v3646 = vadd.f32 %v3359, %v3583
      %v3647 = vadd.f32 %v3360, %v3586
      %v3648 = vadd.f32 %v3361, %v3588
      %v3649 = vadd.f32 %v3362, %v3591
      %v3650 = vadd.f32 %v3363, %v3593
      %v3651 = vadd.f32 %v3364, %v3596
      %v3652 = vadd.f32 %v3365, %v3598
      %v3653 = vadd.f32 %v3366, %v3601
      %v3654 = vadd.f32 %v3367, %v3603
      %v3655 = vadd.f32 %v3368, %v3606
      %v3656 = vadd.f32 %v3369, %v3608
      %v3657 = vadd.f32 %v3370, %v3611
      %v3658 = vadd.f32 %v3371, %v3613
      %v3659 = vadd.f32 %v3372, %v3616
      %v3660 = vadd.f32 %v3373, %v3618
      %v3661 = vadd.f32 %v3374, %v3621
      %v3662 = vadd.f32 %v3375, %v3623
      %v3663 = vadd.f32 %v3376, %v3626
      %v3664 = vadd.f32 %v3377, %v3628
      %v3665 = vadd.f32 %v3378, %v3631
      %v3666 = vadd.f32 %v3379, %v3633
      %v3667 = vld [vmem:[%s3380] sm:$0xf]
      %v3668 = vld [vmem:[%s3380 + $0x4] sm:$0xf]
      %v3669 = vld [vmem:[%s3380 + $0x8] sm:$0x1]
      %v3670 = vld [vmem:[%s3380 + $0xc] sm:$0xf]
      %v3671 = vld [vmem:[%s3380 + $0x10] sm:$0xf]
      %v3672 = vld [vmem:[%s3380 + $0x14] sm:$0x1]
      %v3673 = vld [vmem:[%s3380 + $0x18] sm:$0xf]
      %v3674 = vld [vmem:[%s3380 + $0x1c] sm:$0xf]
      %v3675 = vld [vmem:[%s3380 + $0x20] sm:$0x1]
      %v3676 = vld [vmem:[%s3380 + $0x24] sm:$0xf]
      %v3677 = vld [vmem:[%s3380 + $0x28] sm:$0xf]
      %v3678 = vld [vmem:[%s3380 + $0x2c] sm:$0x1]
      %v3679 = vld [vmem:[%s3380 + $0x30] sm:$0xf]
      %v3680 = vld [vmem:[%s3380 + $0x34] sm:$0xf]
      %v3681 = vld [vmem:[%s3380 + $0x38] sm:$0x1]
      %v3682 = vld [vmem:[%s3380 + $0x3c] sm:$0xf]
      %v3683 = vld [vmem:[%s3380 + $0x40] sm:$0xf]
      %v3684 = vld [vmem:[%s3380 + $0x44] sm:$0x1]
      %v3685 = vld [vmem:[%s3380 + $0x48] sm:$0xf]
      %v3686 = vld [vmem:[%s3380 + $0x4c] sm:$0xf]
      %v3687 = vld [vmem:[%s3380 + $0x50] sm:$0x1]
      %v3688 = vld [vmem:[%s3380 + $0x54] sm:$0xf]
      %v3689 = vld [vmem:[%s3380 + $0x58] sm:$0xf]
      %v3690 = vld [vmem:[%s3380 + $0x5c] sm:$0x1]
      %v3691 = vld [vmem:[%s3380 + $0x60] sm:$0xf]
      %v3692 = vld [vmem:[%s3380 + $0x64] sm:$0xf]
      %v3693 = vld [vmem:[%s3380 + $0x68] sm:$0x1]
      %v3694 = vld [vmem:[%s3380 + $0x6c] sm:$0xf]
      %v3695 = vld [vmem:[%s3380 + $0x70] sm:$0xf]
      %v3696 = vld [vmem:[%s3380 + $0x74] sm:$0x1]
      %v3697 = vld [vmem:[%s3380 + $0x78] sm:$0xf]
      %v3698 = vld [vmem:[%s3380 + $0x7c] sm:$0xf]
      %v3699 = vld [vmem:[%s3380 + $0x80] sm:$0x1]
      %v3700 = vld [vmem:[%s3380 + $0x84] sm:$0xf]
      %v3701 = vld [vmem:[%s3380 + $0x88] sm:$0xf]
      %v3702 = vld [vmem:[%s3380 + $0x8c] sm:$0x1]
      %v3703 = vld [vmem:[%s3380 + $0x90] sm:$0xf]
      %v3704 = vld [vmem:[%s3380 + $0x94] sm:$0xf]
      %v3705 = vld [vmem:[%s3380 + $0x98] sm:$0x1]
      %v3706 = vld [vmem:[%s3380 + $0x9c] sm:$0xf]
      %v3707 = vld [vmem:[%s3380 + $0xa0] sm:$0xf]
      %v3708 = vld [vmem:[%s3380 + $0xa4] sm:$0x1]
      %v3709 = vld [vmem:[%s3380 + $0xa8] sm:$0xf]
      %v3710 = vld [vmem:[%s3380 + $0xac] sm:$0xf]
      %v3711 = vld [vmem:[%s3380 + $0xb0] sm:$0x1]
      %v3712 = vld [vmem:[%s3380 + $0xb4] sm:$0xf]
      %v3713 = vld [vmem:[%s3380 + $0xb8] sm:$0xf]
      %v3714 = vld [vmem:[%s3380 + $0xbc] sm:$0x1]
      %v3716 = vshrl.u32 %v3667, 16
      %v3718 = vrot.slane %v3716, 4
      %v3719 = vshll.u32 %v3667, 16
      %v3721 = vrot.slane %v3719, 5
      %v3722 = vor.u32 %v3718, %v3721
      %v3723 = vrot.slane %v3722, 4
      %v3725 = vshll.u32 %v3668, 16
      %v3727 = vrot.slane %v3725, 5
      %v3728 = vsel %vm860, %v3723, %v3727
      %v3729 = vshrl.u32 %v3668, 16
      %v3731 = vrot.slane %v3729, 4
      %v3732 = vor.u32 %v3731, %v3727
      %v3733 = vrot.slane %v3732, 4
      %v3735 = vshll.u32 %v3669, 16
      %v3737 = vrot.slane %v3735, 5
      %v3738 = vsel %vm860, %v3733, %v3737
      %v3740 = vshrl.u32 %v3670, 16
      %v3742 = vrot.slane %v3740, 4
      %v3743 = vshll.u32 %v3670, 16
      %v3745 = vrot.slane %v3743, 5
      %v3746 = vor.u32 %v3742, %v3745
      %v3747 = vrot.slane %v3746, 4
      %v3749 = vshll.u32 %v3671, 16
      %v3751 = vrot.slane %v3749, 5
      %v3752 = vsel %vm860, %v3747, %v3751
      %v3753 = vshrl.u32 %v3671, 16
      %v3755 = vrot.slane %v3753, 4
      %v3756 = vor.u32 %v3755, %v3751
      %v3757 = vrot.slane %v3756, 4
      %v3759 = vshll.u32 %v3672, 16
      %v3761 = vrot.slane %v3759, 5
      %v3762 = vsel %vm860, %v3757, %v3761
      %v3764 = vshrl.u32 %v3673, 16
      %v3766 = vrot.slane %v3764, 4
      %v3767 = vshll.u32 %v3673, 16
      %v3769 = vrot.slane %v3767, 5
      %v3770 = vor.u32 %v3766, %v3769
      %v3771 = vrot.slane %v3770, 4
      %v3773 = vshll.u32 %v3674, 16
      %v3775 = vrot.slane %v3773, 5
      %v3776 = vsel %vm860, %v3771, %v3775
      %v3777 = vshrl.u32 %v3674, 16
      %v3779 = vrot.slane %v3777, 4
      %v3780 = vor.u32 %v3779, %v3775
      %v3781 = vrot.slane %v3780, 4
      %v3783 = vshll.u32 %v3675, 16
      %v3785 = vrot.slane %v3783, 5
      %v3786 = vsel %vm860, %v3781, %v3785
      %v3788 = vshrl.u32 %v3676, 16
      %v3790 = vrot.slane %v3788, 4
      %v3791 = vshll.u32 %v3676, 16
      %v3793 = vrot.slane %v3791, 5
      %v3794 = vor.u32 %v3790, %v3793
      %v3795 = vrot.slane %v3794, 4
      %v3797 = vshll.u32 %v3677, 16
      %v3799 = vrot.slane %v3797, 5
      %v3800 = vsel %vm860, %v3795, %v3799
      %v3801 = vshrl.u32 %v3677, 16
      %v3803 = vrot.slane %v3801, 4
      %v3804 = vor.u32 %v3803, %v3799
      %v3805 = vrot.slane %v3804, 4
      %v3807 = vshll.u32 %v3678, 16
      %v3809 = vrot.slane %v3807, 5
      %v3810 = vsel %vm860, %v3805, %v3809
      %v3812 = vshrl.u32 %v3679, 16
      %v3814 = vrot.slane %v3812, 4
      %v3815 = vshll.u32 %v3679, 16
      %v3817 = vrot.slane %v3815, 5
      %v3818 = vor.u32 %v3814, %v3817
      %v3819 = vrot.slane %v3818, 4
      %v3821 = vshll.u32 %v3680, 16
      %v3823 = vrot.slane %v3821, 5
      %v3824 = vsel %vm860, %v3819, %v3823
      %v3825 = vshrl.u32 %v3680, 16
      %v3827 = vrot.slane %v3825, 4
      %v3828 = vor.u32 %v3827, %v3823
      %v3829 = vrot.slane %v3828, 4
      %v3831 = vshll.u32 %v3681, 16
      %v3833 = vrot.slane %v3831, 5
      %v3834 = vsel %vm860, %v3829, %v3833
      %v3836 = vshrl.u32 %v3682, 16
      %v3838 = vrot.slane %v3836, 4
      %v3839 = vshll.u32 %v3682, 16
      %v3841 = vrot.slane %v3839, 5
      %v3842 = vor.u32 %v3838, %v3841
      %v3843 = vrot.slane %v3842, 4
      %v3845 = vshll.u32 %v3683, 16
      %v3847 = vrot.slane %v3845, 5
      %v3848 = vsel %vm860, %v3843, %v3847
      %v3849 = vshrl.u32 %v3683, 16
      %v3851 = vrot.slane %v3849, 4
      %v3852 = vor.u32 %v3851, %v3847
      %v3853 = vrot.slane %v3852, 4
      %v3855 = vshll.u32 %v3684, 16
      %v3857 = vrot.slane %v3855, 5
      %v3858 = vsel %vm860, %v3853, %v3857
      %v3860 = vshrl.u32 %v3685, 16
      %v3862 = vrot.slane %v3860, 4
      %v3863 = vshll.u32 %v3685, 16
      %v3865 = vrot.slane %v3863, 5
      %v3866 = vor.u32 %v3862, %v3865
      %v3867 = vrot.slane %v3866, 4
      %v3869 = vshll.u32 %v3686, 16
      %v3871 = vrot.slane %v3869, 5
      %v3872 = vsel %vm860, %v3867, %v3871
      %v3873 = vshrl.u32 %v3686, 16
      %v3875 = vrot.slane %v3873, 4
      %v3876 = vor.u32 %v3875, %v3871
      %v3877 = vrot.slane %v3876, 4
      %v3879 = vshll.u32 %v3687, 16
      %v3881 = vrot.slane %v3879, 5
      %v3882 = vsel %vm860, %v3877, %v3881
      %v3884 = vshrl.u32 %v3688, 16
      %v3886 = vrot.slane %v3884, 4
      %v3887 = vshll.u32 %v3688, 16
      %v3889 = vrot.slane %v3887, 5
      %v3890 = vor.u32 %v3886, %v3889
      %v3891 = vrot.slane %v3890, 4
      %v3893 = vshll.u32 %v3689, 16
      %v3895 = vrot.slane %v3893, 5
      %v3896 = vsel %vm860, %v3891, %v3895
      %v3897 = vshrl.u32 %v3689, 16
      %v3899 = vrot.slane %v3897, 4
      %v3900 = vor.u32 %v3899, %v3895
      %v3901 = vrot.slane %v3900, 4
      %v3903 = vshll.u32 %v3690, 16
      %v3905 = vrot.slane %v3903, 5
      %v3906 = vsel %vm860, %v3901, %v3905
      %v3908 = vshrl.u32 %v3691, 16
      %v3910 = vrot.slane %v3908, 4
      %v3911 = vshll.u32 %v3691, 16
      %v3913 = vrot.slane %v3911, 5
      %v3914 = vor.u32 %v3910, %v3913
      %v3915 = vrot.slane %v3914, 4
      %v3917 = vshll.u32 %v3692, 16
      %v3919 = vrot.slane %v3917, 5
      %v3920 = vsel %vm860, %v3915, %v3919
      %v3921 = vshrl.u32 %v3692, 16
      %v3923 = vrot.slane %v3921, 4
      %v3924 = vor.u32 %v3923, %v3919
      %v3925 = vrot.slane %v3924, 4
      %v3927 = vshll.u32 %v3693, 16
      %v3929 = vrot.slane %v3927, 5
      %v3930 = vsel %vm860, %v3925, %v3929
      %v3932 = vshrl.u32 %v3694, 16
      %v3934 = vrot.slane %v3932, 4
      %v3935 = vshll.u32 %v3694, 16
      %v3937 = vrot.slane %v3935, 5
      %v3938 = vor.u32 %v3934, %v3937
      %v3939 = vrot.slane %v3938, 4
      %v3941 = vshll.u32 %v3695, 16
      %v3943 = vrot.slane %v3941, 5
      %v3944 = vsel %vm860, %v3939, %v3943
      %v3945 = vshrl.u32 %v3695, 16
      %v3947 = vrot.slane %v3945, 4
      %v3948 = vor.u32 %v3947, %v3943
      %v3949 = vrot.slane %v3948, 4
      %v3951 = vshll.u32 %v3696, 16
      %v3953 = vrot.slane %v3951, 5
      %v3954 = vsel %vm860, %v3949, %v3953
      %v3956 = vshrl.u32 %v3697, 16
      %v3958 = vrot.slane %v3956, 4
      %v3959 = vshll.u32 %v3697, 16
      %v3961 = vrot.slane %v3959, 5
      %v3962 = vor.u32 %v3958, %v3961
      %v3963 = vrot.slane %v3962, 4
      %v3965 = vshll.u32 %v3698, 16
      %v3967 = vrot.slane %v3965, 5
      %v3968 = vsel %vm860, %v3963, %v3967
      %v3969 = vshrl.u32 %v3698, 16
      %v3971 = vrot.slane %v3969, 4
      %v3972 = vor.u32 %v3971, %v3967
      %v3973 = vrot.slane %v3972, 4
      %v3975 = vshll.u32 %v3699, 16
      %v3977 = vrot.slane %v3975, 5
      %v3978 = vsel %vm860, %v3973, %v3977
      %v3980 = vshrl.u32 %v3700, 16
      %v3982 = vrot.slane %v3980, 4
      %v3983 = vshll.u32 %v3700, 16
      %v3985 = vrot.slane %v3983, 5
      %v3986 = vor.u32 %v3982, %v3985
      %v3987 = vrot.slane %v3986, 4
      %v3989 = vshll.u32 %v3701, 16
      %v3991 = vrot.slane %v3989, 5
      %v3992 = vsel %vm860, %v3987, %v3991
      %v3993 = vshrl.u32 %v3701, 16
      %v3995 = vrot.slane %v3993, 4
      %v3996 = vor.u32 %v3995, %v3991
      %v3997 = vrot.slane %v3996, 4
      %v3999 = vshll.u32 %v3702, 16
      %v4001 = vrot.slane %v3999, 5
      %v4002 = vsel %vm860, %v3997, %v4001
      %v4004 = vshrl.u32 %v3703, 16
      %v4006 = vrot.slane %v4004, 4
      %v4007 = vshll.u32 %v3703, 16
      %v4009 = vrot.slane %v4007, 5
      %v4010 = vor.u32 %v4006, %v4009
      %v4011 = vrot.slane %v4010, 4
      %v4013 = vshll.u32 %v3704, 16
      %v4015 = vrot.slane %v4013, 5
      %v4016 = vsel %vm860, %v4011, %v4015
      %v4017 = vshrl.u32 %v3704, 16
      %v4019 = vrot.slane %v4017, 4
      %v4020 = vor.u32 %v4019, %v4015
      %v4021 = vrot.slane %v4020, 4
      %v4023 = vshll.u32 %v3705, 16
      %v4025 = vrot.slane %v4023, 5
      %v4026 = vsel %vm860, %v4021, %v4025
      %v4028 = vshrl.u32 %v3706, 16
      %v4030 = vrot.slane %v4028, 4
      %v4031 = vshll.u32 %v3706, 16
      %v4033 = vrot.slane %v4031, 5
      %v4034 = vor.u32 %v4030, %v4033
      %v4035 = vrot.slane %v4034, 4
      %v4037 = vshll.u32 %v3707, 16
      %v4039 = vrot.slane %v4037, 5
      %v4040 = vsel %vm860, %v4035, %v4039
      %v4041 = vshrl.u32 %v3707, 16
      %v4043 = vrot.slane %v4041, 4
      %v4044 = vor.u32 %v4043, %v4039
      %v4045 = vrot.slane %v4044, 4
      %v4047 = vshll.u32 %v3708, 16
      %v4049 = vrot.slane %v4047, 5
      %v4050 = vsel %vm860, %v4045, %v4049
      %v4052 = vshrl.u32 %v3709, 16
      %v4054 = vrot.slane %v4052, 4
      %v4055 = vshll.u32 %v3709, 16
      %v4057 = vrot.slane %v4055, 5
      %v4058 = vor.u32 %v4054, %v4057
      %v4059 = vrot.slane %v4058, 4
      %v4061 = vshll.u32 %v3710, 16
      %v4063 = vrot.slane %v4061, 5
      %v4064 = vsel %vm860, %v4059, %v4063
      %v4065 = vshrl.u32 %v3710, 16
      %v4067 = vrot.slane %v4065, 4
      %v4068 = vor.u32 %v4067, %v4063
      %v4069 = vrot.slane %v4068, 4
      %v4071 = vshll.u32 %v3711, 16
      %v4073 = vrot.slane %v4071, 5
      %v4074 = vsel %vm860, %v4069, %v4073
      %v4076 = vshrl.u32 %v3712, 16
      %v4078 = vrot.slane %v4076, 4
      %v4079 = vshll.u32 %v3712, 16
      %v4081 = vrot.slane %v4079, 5
      %v4082 = vor.u32 %v4078, %v4081
      %v4083 = vrot.slane %v4082, 4
      %v4085 = vshll.u32 %v3713, 16
      %v4087 = vrot.slane %v4085, 5
      %v4088 = vsel %vm860, %v4083, %v4087
      %v4089 = vshrl.u32 %v3713, 16
      %v4091 = vrot.slane %v4089, 4
      %v4092 = vor.u32 %v4091, %v4087
      %v4093 = vrot.slane %v4092, 4
      %v4095 = vshll.u32 %v3714, 16
      %v4097 = vrot.slane %v4095, 5
      %v4098 = vsel %vm860, %v4093, %v4097
      %s4099 = scalar_lea.vmem %s1, 14
      %v4100 = vld [vmem:[%s4099] sm:$0x3]
      %v4101 = vunpack.c.l.b16 %v3728
      %v4102 = vunpack.c.l.b16 %v3738
      %v4103 = vunpack.c.l.b16 %v3752
      %v4104 = vunpack.c.l.b16 %v3762
      %v4105 = vunpack.c.l.b16 %v3776
      %v4106 = vunpack.c.l.b16 %v3786
      %v4107 = vunpack.c.l.b16 %v3800
      %v4108 = vunpack.c.l.b16 %v3810
      %v4109 = vunpack.c.l.b16 %v3824
      %v4110 = vunpack.c.l.b16 %v3834
      %v4111 = vunpack.c.l.b16 %v3848
      %v4112 = vunpack.c.l.b16 %v3858
      %v4113 = vunpack.c.l.b16 %v3872
      %v4114 = vunpack.c.l.b16 %v3882
      %v4115 = vunpack.c.l.b16 %v3896
      %v4116 = vunpack.c.l.b16 %v3906
      %v4117 = vunpack.c.l.b16 %v3920
      %v4118 = vunpack.c.l.b16 %v3930
      %v4119 = vunpack.c.l.b16 %v3944
      %v4120 = vunpack.c.l.b16 %v3954
      %v4121 = vunpack.c.l.b16 %v3968
      %v4122 = vunpack.c.l.b16 %v3978
      %v4123 = vunpack.c.l.b16 %v3992
      %v4124 = vunpack.c.l.b16 %v4002
      %v4125 = vunpack.c.l.b16 %v4016
      %v4126 = vunpack.c.l.b16 %v4026
      %v4127 = vunpack.c.l.b16 %v4040
      %v4128 = vunpack.c.l.b16 %v4050
      %v4129 = vunpack.c.l.b16 %v4064
      %v4130 = vunpack.c.l.b16 %v4074
      %v4131 = vunpack.c.l.b16 %v4088
      %v4132 = vunpack.c.l.b16 %v4098
      %v4133 = vpack.c.b16 %v4102, %v4101
      %v4134 = vpack.c.b16 %v4104, %v4103
      %v4135 = vpack.c.b16 %v4106, %v4105
      %v4136 = vpack.c.b16 %v4108, %v4107
      %v4137 = vpack.c.b16 %v4110, %v4109
      %v4138 = vpack.c.b16 %v4112, %v4111
      %v4139 = vpack.c.b16 %v4114, %v4113
      %v4140 = vpack.c.b16 %v4116, %v4115
      %v4141 = vpack.c.b16 %v4118, %v4117
      %v4142 = vpack.c.b16 %v4120, %v4119
      %v4143 = vpack.c.b16 %v4122, %v4121
      %v4144 = vpack.c.b16 %v4124, %v4123
      %v4145 = vpack.c.b16 %v4126, %v4125
      %v4146 = vpack.c.b16 %v4128, %v4127
      %v4147 = vpack.c.b16 %v4130, %v4129
      %v4148 = vpack.c.b16 %v4132, %v4131
      %v4150 = vsel %vm1295, %v4133, 0
      %v4153 = vsel %vm1295, %v4134, 0
      %v4156 = vsel %vm1295, %v4135, 0
      %v4159 = vsel %vm1295, %v4136, 0
      %v4162 = vsel %vm1295, %v4137, 0
      %v4165 = vsel %vm1295, %v4138, 0
      %v4168 = vsel %vm1295, %v4139, 0
      %v4171 = vsel %vm1295, %v4140, 0
      %v4174 = vsel %vm1295, %v4141, 0
      %v4177 = vsel %vm1295, %v4142, 0
      %v4180 = vsel %vm1295, %v4143, 0
      %v4183 = vsel %vm1295, %v4144, 0
      %v4186 = vsel %vm1295, %v4145, 0
      %v4189 = vsel %vm1295, %v4146, 0
      %v4192 = vsel %vm1295, %v4147, 0
      %v4195 = vsel %vm1295, %v4148, 0
      %v4198 = vsel %vm1344, %v4100, 0
      %4200 = vmatpush.bf16.msra.mxu0 0
      %4201 = vmatpush.bf16.msra.mxu0 0
      %4202 = vmatpush.bf16.msra.mxu0 0
      %4203 = vmatpush.bf16.msra.mxu0 0
      %4204 = vmatpush.bf16.msra.mxu0 0
      %4205 = vmatpush.bf16.msra.mxu0 0
      %4206 = vmatpush.bf16.msra.mxu0 0
      %4207 = vmatpush.bf16.msra.mxu0 %v4198
      %4208 = vmatmul.bf16.gmra.mxu0 %v4150
      %v4209 = vpop.f32.mrf.mxu0
      %v4210 = vadd.f32 0.0, %v4209
      %v4211 = vpop.f32.mrf.mxu0
      %v4212 = vadd.f32 0.0, %v4211
      %4213 = vmatmul.bf16.gmra.mxu0 %v4153
      %v4214 = vpop.f32.mrf.mxu0
      %v4215 = vadd.f32 0.0, %v4214
      %v4216 = vpop.f32.mrf.mxu0
      %v4217 = vadd.f32 0.0, %v4216
      %4218 = vmatmul.bf16.gmra.mxu0 %v4156
      %v4219 = vpop.f32.mrf.mxu0
      %v4220 = vadd.f32 0.0, %v4219
      %v4221 = vpop.f32.mrf.mxu0
      %v4222 = vadd.f32 0.0, %v4221
      %4223 = vmatmul.bf16.gmra.mxu0 %v4159
      %v4224 = vpop.f32.mrf.mxu0
      %v4225 = vadd.f32 0.0, %v4224
      %v4226 = vpop.f32.mrf.mxu0
      %v4227 = vadd.f32 0.0, %v4226
      %4228 = vmatmul.bf16.gmra.mxu0 %v4162
      %v4229 = vpop.f32.mrf.mxu0
      %v4230 = vadd.f32 0.0, %v4229
      %v4231 = vpop.f32.mrf.mxu0
      %v4232 = vadd.f32 0.0, %v4231
      %4233 = vmatmul.bf16.gmra.mxu0 %v4165
      %v4234 = vpop.f32.mrf.mxu0
      %v4235 = vadd.f32 0.0, %v4234
      %v4236 = vpop.f32.mrf.mxu0
      %v4237 = vadd.f32 0.0, %v4236
      %4238 = vmatmul.bf16.gmra.mxu0 %v4168
      %v4239 = vpop.f32.mrf.mxu0
      %v4240 = vadd.f32 0.0, %v4239
      %v4241 = vpop.f32.mrf.mxu0
      %v4242 = vadd.f32 0.0, %v4241
      %4243 = vmatmul.bf16.gmra.mxu0 %v4171
      %v4244 = vpop.f32.mrf.mxu0
      %v4245 = vadd.f32 0.0, %v4244
      %v4246 = vpop.f32.mrf.mxu0
      %v4247 = vadd.f32 0.0, %v4246
      %4248 = vmatmul.bf16.gmra.mxu0 %v4174
      %v4249 = vpop.f32.mrf.mxu0
      %v4250 = vadd.f32 0.0, %v4249
      %v4251 = vpop.f32.mrf.mxu0
      %v4252 = vadd.f32 0.0, %v4251
      %4253 = vmatmul.bf16.gmra.mxu0 %v4177
      %v4254 = vpop.f32.mrf.mxu0
      %v4255 = vadd.f32 0.0, %v4254
      %v4256 = vpop.f32.mrf.mxu0
      %v4257 = vadd.f32 0.0, %v4256
      %4258 = vmatmul.bf16.gmra.mxu0 %v4180
      %v4259 = vpop.f32.mrf.mxu0
      %v4260 = vadd.f32 0.0, %v4259
      %v4261 = vpop.f32.mrf.mxu0
      %v4262 = vadd.f32 0.0, %v4261
      %4263 = vmatmul.bf16.gmra.mxu0 %v4183
      %v4264 = vpop.f32.mrf.mxu0
      %v4265 = vadd.f32 0.0, %v4264
      %v4266 = vpop.f32.mrf.mxu0
      %v4267 = vadd.f32 0.0, %v4266
      %4268 = vmatmul.bf16.gmra.mxu0 %v4186
      %v4269 = vpop.f32.mrf.mxu0
      %v4270 = vadd.f32 0.0, %v4269
      %v4271 = vpop.f32.mrf.mxu0
      %v4272 = vadd.f32 0.0, %v4271
      %4273 = vmatmul.bf16.gmra.mxu0 %v4189
      %v4274 = vpop.f32.mrf.mxu0
      %v4275 = vadd.f32 0.0, %v4274
      %v4276 = vpop.f32.mrf.mxu0
      %v4277 = vadd.f32 0.0, %v4276
      %4278 = vmatmul.bf16.gmra.mxu0 %v4192
      %v4279 = vpop.f32.mrf.mxu0
      %v4280 = vadd.f32 0.0, %v4279
      %v4281 = vpop.f32.mrf.mxu0
      %v4282 = vadd.f32 0.0, %v4281
      %4283 = vmatmul.bf16.gmra.mxu0 %v4195
      %v4284 = vpop.f32.mrf.mxu0
      %v4285 = vadd.f32 0.0, %v4284
      %v4286 = vpop.f32.mrf.mxu0
      %v4287 = vadd.f32 0.0, %v4286
      %4288 = vdwg.mxu0
      %v4289 = vadd.f32 %v3635, %v4210
      %v4290 = vadd.f32 %v3636, %v4212
      %v4291 = vadd.f32 %v3637, %v4215
      %v4292 = vadd.f32 %v3638, %v4217
      %v4293 = vadd.f32 %v3639, %v4220
      %v4294 = vadd.f32 %v3640, %v4222
      %v4295 = vadd.f32 %v3641, %v4225
      %v4296 = vadd.f32 %v3642, %v4227
      %v4297 = vadd.f32 %v3643, %v4230
      %v4298 = vadd.f32 %v3644, %v4232
      %v4299 = vadd.f32 %v3645, %v4235
      %v4300 = vadd.f32 %v3646, %v4237
      %v4301 = vadd.f32 %v3647, %v4240
      %v4302 = vadd.f32 %v3648, %v4242
      %v4303 = vadd.f32 %v3649, %v4245
      %v4304 = vadd.f32 %v3650, %v4247
      %v4305 = vadd.f32 %v3651, %v4250
      %v4306 = vadd.f32 %v3652, %v4252
      %v4307 = vadd.f32 %v3653, %v4255
      %v4308 = vadd.f32 %v3654, %v4257
      %v4309 = vadd.f32 %v3655, %v4260
      %v4310 = vadd.f32 %v3656, %v4262
      %v4311 = vadd.f32 %v3657, %v4265
      %v4312 = vadd.f32 %v3658, %v4267
      %v4313 = vadd.f32 %v3659, %v4270
      %v4314 = vadd.f32 %v3660, %v4272
      %v4315 = vadd.f32 %v3661, %v4275
      %v4316 = vadd.f32 %v3662, %v4277
      %v4317 = vadd.f32 %v3663, %v4280
      %v4318 = vadd.f32 %v3664, %v4282
      %v4319 = vadd.f32 %v3665, %v4285
      %v4320 = vadd.f32 %v3666, %v4287
      %v4321 = vld [vmem:[%s3380] sm:$0xe]
      %v4322 = vld [vmem:[%s3380 + $0xc] sm:$0xe]
      %v4323 = vld [vmem:[%s3380 + $0x18] sm:$0xe]
      %v4324 = vld [vmem:[%s3380 + $0x24] sm:$0xe]
      %v4325 = vld [vmem:[%s3380 + $0x30] sm:$0xe]
      %v4326 = vld [vmem:[%s3380 + $0x3c] sm:$0xe]
      %v4327 = vld [vmem:[%s3380 + $0x48] sm:$0xe]
      %v4328 = vld [vmem:[%s3380 + $0x54] sm:$0xe]
      %v4329 = vld [vmem:[%s3380 + $0x60] sm:$0xe]
      %v4330 = vld [vmem:[%s3380 + $0x6c] sm:$0xe]
      %v4331 = vld [vmem:[%s3380 + $0x78] sm:$0xe]
      %v4332 = vld [vmem:[%s3380 + $0x84] sm:$0xe]
      %v4333 = vld [vmem:[%s3380 + $0x90] sm:$0xe]
      %v4334 = vld [vmem:[%s3380 + $0x9c] sm:$0xe]
      %v4335 = vld [vmem:[%s3380 + $0xa8] sm:$0xe]
      %v4336 = vld [vmem:[%s3380 + $0xb4] sm:$0xe]
      %v4385 = vrot.slane %v4321, 5
      %v4386 = vrot.slane %v4385, 4
      %v4387 = vrot.slane %v3668, 5
      %v4388 = vsel %vm1707, %v4386, %v4387
      %v4389 = vrot.slane %v4387, 4
      %v4390 = vrot.slane %v3669, 5
      %v4391 = vsel %vm1707, %v4389, %v4390
      %v4392 = vrot.slane %v4322, 5
      %v4393 = vrot.slane %v4392, 4
      %v4394 = vrot.slane %v3671, 5
      %v4395 = vsel %vm1707, %v4393, %v4394
      %v4396 = vrot.slane %v4394, 4
      %v4397 = vrot.slane %v3672, 5
      %v4398 = vsel %vm1707, %v4396, %v4397
      %v4399 = vrot.slane %v4323, 5
      %v4400 = vrot.slane %v4399, 4
      %v4401 = vrot.slane %v3674, 5
      %v4402 = vsel %vm1707, %v4400, %v4401
      %v4403 = vrot.slane %v4401, 4
      %v4404 = vrot.slane %v3675, 5
      %v4405 = vsel %vm1707, %v4403, %v4404
      %v4406 = vrot.slane %v4324, 5
      %v4407 = vrot.slane %v4406, 4
      %v4408 = vrot.slane %v3677, 5
      %v4409 = vsel %vm1707, %v4407, %v4408
      %v4410 = vrot.slane %v4408, 4
      %v4411 = vrot.slane %v3678, 5
      %v4412 = vsel %vm1707, %v4410, %v4411
      %v4413 = vrot.slane %v4325, 5
      %v4414 = vrot.slane %v4413, 4
      %v4415 = vrot.slane %v3680, 5
      %v4416 = vsel %vm1707, %v4414, %v4415
      %v4417 = vrot.slane %v4415, 4
      %v4418 = vrot.slane %v3681, 5
      %v4419 = vsel %vm1707, %v4417, %v4418
      %v4420 = vrot.slane %v4326, 5
      %v4421 = vrot.slane %v4420, 4
      %v4422 = vrot.slane %v3683, 5
      %v4423 = vsel %vm1707, %v4421, %v4422
      %v4424 = vrot.slane %v4422, 4
      %v4425 = vrot.slane %v3684, 5
      %v4426 = vsel %vm1707, %v4424, %v4425
      %v4427 = vrot.slane %v4327, 5
      %v4428 = vrot.slane %v4427, 4
      %v4429 = vrot.slane %v3686, 5
      %v4430 = vsel %vm1707, %v4428, %v4429
      %v4431 = vrot.slane %v4429, 4
      %v4432 = vrot.slane %v3687, 5
      %v4433 = vsel %vm1707, %v4431, %v4432
      %v4434 = vrot.slane %v4328, 5
      %v4435 = vrot.slane %v4434, 4
      %v4436 = vrot.slane %v3689, 5
      %v4437 = vsel %vm1707, %v4435, %v4436
      %v4438 = vrot.slane %v4436, 4
      %v4439 = vrot.slane %v3690, 5
      %v4440 = vsel %vm1707, %v4438, %v4439
      %v4441 = vrot.slane %v4329, 5
      %v4442 = vrot.slane %v4441, 4
      %v4443 = vrot.slane %v3692, 5
      %v4444 = vsel %vm1707, %v4442, %v4443
      %v4445 = vrot.slane %v4443, 4
      %v4446 = vrot.slane %v3693, 5
      %v4447 = vsel %vm1707, %v4445, %v4446
      %v4448 = vrot.slane %v4330, 5
      %v4449 = vrot.slane %v4448, 4
      %v4450 = vrot.slane %v3695, 5
      %v4451 = vsel %vm1707, %v4449, %v4450
      %v4452 = vrot.slane %v4450, 4
      %v4453 = vrot.slane %v3696, 5
      %v4454 = vsel %vm1707, %v4452, %v4453
      %v4455 = vrot.slane %v4331, 5
      %v4456 = vrot.slane %v4455, 4
      %v4457 = vrot.slane %v3698, 5
      %v4458 = vsel %vm1707, %v4456, %v4457
      %v4459 = vrot.slane %v4457, 4
      %v4460 = vrot.slane %v3699, 5
      %v4461 = vsel %vm1707, %v4459, %v4460
      %v4462 = vrot.slane %v4332, 5
      %v4463 = vrot.slane %v4462, 4
      %v4464 = vrot.slane %v3701, 5
      %v4465 = vsel %vm1707, %v4463, %v4464
      %v4466 = vrot.slane %v4464, 4
      %v4467 = vrot.slane %v3702, 5
      %v4468 = vsel %vm1707, %v4466, %v4467
      %v4469 = vrot.slane %v4333, 5
      %v4470 = vrot.slane %v4469, 4
      %v4471 = vrot.slane %v3704, 5
      %v4472 = vsel %vm1707, %v4470, %v4471
      %v4473 = vrot.slane %v4471, 4
      %v4474 = vrot.slane %v3705, 5
      %v4475 = vsel %vm1707, %v4473, %v4474
      %v4476 = vrot.slane %v4334, 5
      %v4477 = vrot.slane %v4476, 4
      %v4478 = vrot.slane %v3707, 5
      %v4479 = vsel %vm1707, %v4477, %v4478
      %v4480 = vrot.slane %v4478, 4
      %v4481 = vrot.slane %v3708, 5
      %v4482 = vsel %vm1707, %v4480, %v4481
      %v4483 = vrot.slane %v4335, 5
      %v4484 = vrot.slane %v4483, 4
      %v4485 = vrot.slane %v3710, 5
      %v4486 = vsel %vm1707, %v4484, %v4485
      %v4487 = vrot.slane %v4485, 4
      %v4488 = vrot.slane %v3711, 5
      %v4489 = vsel %vm1707, %v4487, %v4488
      %v4490 = vrot.slane %v4336, 5
      %v4491 = vrot.slane %v4490, 4
      %v4492 = vrot.slane %v3713, 5
      %v4493 = vsel %vm1707, %v4491, %v4492
      %v4494 = vrot.slane %v4492, 4
      %v4495 = vrot.slane %v3714, 5
      %v4496 = vsel %vm1707, %v4494, %v4495
      %s4497 = scalar_lea.vmem %s1, 16
      %v4498 = vld [vmem:[%s4497] sm:$0x3]
      %v4499 = vunpack.c.l.b16 %v4388
      %v4500 = vunpack.c.l.b16 %v4391
      %v4501 = vunpack.c.l.b16 %v4395
      %v4502 = vunpack.c.l.b16 %v4398
      %v4503 = vunpack.c.l.b16 %v4402
      %v4504 = vunpack.c.l.b16 %v4405
      %v4505 = vunpack.c.l.b16 %v4409
      %v4506 = vunpack.c.l.b16 %v4412
      %v4507 = vunpack.c.l.b16 %v4416
      %v4508 = vunpack.c.l.b16 %v4419
      %v4509 = vunpack.c.l.b16 %v4423
      %v4510 = vunpack.c.l.b16 %v4426
      %v4511 = vunpack.c.l.b16 %v4430
      %v4512 = vunpack.c.l.b16 %v4433
      %v4513 = vunpack.c.l.b16 %v4437
      %v4514 = vunpack.c.l.b16 %v4440
      %v4515 = vunpack.c.l.b16 %v4444
      %v4516 = vunpack.c.l.b16 %v4447
      %v4517 = vunpack.c.l.b16 %v4451
      %v4518 = vunpack.c.l.b16 %v4454
      %v4519 = vunpack.c.l.b16 %v4458
      %v4520 = vunpack.c.l.b16 %v4461
      %v4521 = vunpack.c.l.b16 %v4465
      %v4522 = vunpack.c.l.b16 %v4468
      %v4523 = vunpack.c.l.b16 %v4472
      %v4524 = vunpack.c.l.b16 %v4475
      %v4525 = vunpack.c.l.b16 %v4479
      %v4526 = vunpack.c.l.b16 %v4482
      %v4527 = vunpack.c.l.b16 %v4486
      %v4528 = vunpack.c.l.b16 %v4489
      %v4529 = vunpack.c.l.b16 %v4493
      %v4530 = vunpack.c.l.b16 %v4496
      %v4531 = vpack.c.b16 %v4500, %v4499
      %v4532 = vpack.c.b16 %v4502, %v4501
      %v4533 = vpack.c.b16 %v4504, %v4503
      %v4534 = vpack.c.b16 %v4506, %v4505
      %v4535 = vpack.c.b16 %v4508, %v4507
      %v4536 = vpack.c.b16 %v4510, %v4509
      %v4537 = vpack.c.b16 %v4512, %v4511
      %v4538 = vpack.c.b16 %v4514, %v4513
      %v4539 = vpack.c.b16 %v4516, %v4515
      %v4540 = vpack.c.b16 %v4518, %v4517
      %v4541 = vpack.c.b16 %v4520, %v4519
      %v4542 = vpack.c.b16 %v4522, %v4521
      %v4543 = vpack.c.b16 %v4524, %v4523
      %v4544 = vpack.c.b16 %v4526, %v4525
      %v4545 = vpack.c.b16 %v4528, %v4527
      %v4546 = vpack.c.b16 %v4530, %v4529
      %v4548 = vsel %vm1295, %v4531, 0
      %v4551 = vsel %vm1295, %v4532, 0
      %v4554 = vsel %vm1295, %v4533, 0
      %v4557 = vsel %vm1295, %v4534, 0
      %v4560 = vsel %vm1295, %v4535, 0
      %v4563 = vsel %vm1295, %v4536, 0
      %v4566 = vsel %vm1295, %v4537, 0
      %v4569 = vsel %vm1295, %v4538, 0
      %v4572 = vsel %vm1295, %v4539, 0
      %v4575 = vsel %vm1295, %v4540, 0
      %v4578 = vsel %vm1295, %v4541, 0
      %v4581 = vsel %vm1295, %v4542, 0
      %v4584 = vsel %vm1295, %v4543, 0
      %v4587 = vsel %vm1295, %v4544, 0
      %v4590 = vsel %vm1295, %v4545, 0
      %v4593 = vsel %vm1295, %v4546, 0
      %v4596 = vsel %vm1344, %v4498, 0
      %4598 = vmatpush.bf16.msra.mxu0 0
      %4599 = vmatpush.bf16.msra.mxu0 0
      %4600 = vmatpush.bf16.msra.mxu0 0
      %4601 = vmatpush.bf16.msra.mxu0 0
      %4602 = vmatpush.bf16.msra.mxu0 0
      %4603 = vmatpush.bf16.msra.mxu0 0
      %4604 = vmatpush.bf16.msra.mxu0 0
      %4605 = vmatpush.bf16.msra.mxu0 %v4596
      %4606 = vmatmul.bf16.gmra.mxu0 %v4548
      %v4607 = vpop.f32.mrf.mxu0
      %v4608 = vadd.f32 0.0, %v4607
      %v4609 = vpop.f32.mrf.mxu0
      %v4610 = vadd.f32 0.0, %v4609
      %4611 = vmatmul.bf16.gmra.mxu0 %v4551
      %v4612 = vpop.f32.mrf.mxu0
      %v4613 = vadd.f32 0.0, %v4612
      %v4614 = vpop.f32.mrf.mxu0
      %v4615 = vadd.f32 0.0, %v4614
      %4616 = vmatmul.bf16.gmra.mxu0 %v4554
      %v4617 = vpop.f32.mrf.mxu0
      %v4618 = vadd.f32 0.0, %v4617
      %v4619 = vpop.f32.mrf.mxu0
      %v4620 = vadd.f32 0.0, %v4619
      %4621 = vmatmul.bf16.gmra.mxu0 %v4557
      %v4622 = vpop.f32.mrf.mxu0
      %v4623 = vadd.f32 0.0, %v4622
      %v4624 = vpop.f32.mrf.mxu0
      %v4625 = vadd.f32 0.0, %v4624
      %4626 = vmatmul.bf16.gmra.mxu0 %v4560
      %v4627 = vpop.f32.mrf.mxu0
      %v4628 = vadd.f32 0.0, %v4627
      %v4629 = vpop.f32.mrf.mxu0
      %v4630 = vadd.f32 0.0, %v4629
      %4631 = vmatmul.bf16.gmra.mxu0 %v4563
      %v4632 = vpop.f32.mrf.mxu0
      %v4633 = vadd.f32 0.0, %v4632
      %v4634 = vpop.f32.mrf.mxu0
      %v4635 = vadd.f32 0.0, %v4634
      %4636 = vmatmul.bf16.gmra.mxu0 %v4566
      %v4637 = vpop.f32.mrf.mxu0
      %v4638 = vadd.f32 0.0, %v4637
      %v4639 = vpop.f32.mrf.mxu0
      %v4640 = vadd.f32 0.0, %v4639
      %4641 = vmatmul.bf16.gmra.mxu0 %v4569
      %v4642 = vpop.f32.mrf.mxu0
      %v4643 = vadd.f32 0.0, %v4642
      %v4644 = vpop.f32.mrf.mxu0
      %v4645 = vadd.f32 0.0, %v4644
      %4646 = vmatmul.bf16.gmra.mxu0 %v4572
      %v4647 = vpop.f32.mrf.mxu0
      %v4648 = vadd.f32 0.0, %v4647
      %v4649 = vpop.f32.mrf.mxu0
      %v4650 = vadd.f32 0.0, %v4649
      %4651 = vmatmul.bf16.gmra.mxu0 %v4575
      %v4652 = vpop.f32.mrf.mxu0
      %v4653 = vadd.f32 0.0, %v4652
      %v4654 = vpop.f32.mrf.mxu0
      %v4655 = vadd.f32 0.0, %v4654
      %4656 = vmatmul.bf16.gmra.mxu0 %v4578
      %v4657 = vpop.f32.mrf.mxu0
      %v4658 = vadd.f32 0.0, %v4657
      %v4659 = vpop.f32.mrf.mxu0
      %v4660 = vadd.f32 0.0, %v4659
      %4661 = vmatmul.bf16.gmra.mxu0 %v4581
      %v4662 = vpop.f32.mrf.mxu0
      %v4663 = vadd.f32 0.0, %v4662
      %v4664 = vpop.f32.mrf.mxu0
      %v4665 = vadd.f32 0.0, %v4664
      %4666 = vmatmul.bf16.gmra.mxu0 %v4584
      %v4667 = vpop.f32.mrf.mxu0
      %v4668 = vadd.f32 0.0, %v4667
      %v4669 = vpop.f32.mrf.mxu0
      %v4670 = vadd.f32 0.0, %v4669
      %4671 = vmatmul.bf16.gmra.mxu0 %v4587
      %v4672 = vpop.f32.mrf.mxu0
      %v4673 = vadd.f32 0.0, %v4672
      %v4674 = vpop.f32.mrf.mxu0
      %v4675 = vadd.f32 0.0, %v4674
      %4676 = vmatmul.bf16.gmra.mxu0 %v4590
      %v4677 = vpop.f32.mrf.mxu0
      %v4678 = vadd.f32 0.0, %v4677
      %v4679 = vpop.f32.mrf.mxu0
      %v4680 = vadd.f32 0.0, %v4679
      %4681 = vmatmul.bf16.gmra.mxu0 %v4593
      %v4682 = vpop.f32.mrf.mxu0
      %v4683 = vadd.f32 0.0, %v4682
      %v4684 = vpop.f32.mrf.mxu0
      %v4685 = vadd.f32 0.0, %v4684
      %4686 = vdwg.mxu0
      %v4687 = vadd.f32 %v4289, %v4608
      %v4688 = vadd.f32 %v4290, %v4610
      %v4689 = vadd.f32 %v4291, %v4613
      %v4690 = vadd.f32 %v4292, %v4615
      %v4691 = vadd.f32 %v4293, %v4618
      %v4692 = vadd.f32 %v4294, %v4620
      %v4693 = vadd.f32 %v4295, %v4623
      %v4694 = vadd.f32 %v4296, %v4625
      %v4695 = vadd.f32 %v4297, %v4628
      %v4696 = vadd.f32 %v4298, %v4630
      %v4697 = vadd.f32 %v4299, %v4633
      %v4698 = vadd.f32 %v4300, %v4635
      %v4699 = vadd.f32 %v4301, %v4638
      %v4700 = vadd.f32 %v4302, %v4640
      %v4701 = vadd.f32 %v4303, %v4643
      %v4702 = vadd.f32 %v4304, %v4645
      %v4703 = vadd.f32 %v4305, %v4648
      %v4704 = vadd.f32 %v4306, %v4650
      %v4705 = vadd.f32 %v4307, %v4653
      %v4706 = vadd.f32 %v4308, %v4655
      %v4707 = vadd.f32 %v4309, %v4658
      %v4708 = vadd.f32 %v4310, %v4660
      %v4709 = vadd.f32 %v4311, %v4663
      %v4710 = vadd.f32 %v4312, %v4665
      %v4711 = vadd.f32 %v4313, %v4668
      %v4712 = vadd.f32 %v4314, %v4670
      %v4713 = vadd.f32 %v4315, %v4673
      %v4714 = vadd.f32 %v4316, %v4675
      %v4715 = vadd.f32 %v4317, %v4678
      %v4716 = vadd.f32 %v4318, %v4680
      %v4717 = vadd.f32 %v4319, %v4683
      %v4718 = vadd.f32 %v4320, %v4685
      %v4719 = vld [vmem:[%s2] sm:$0x1]
      %v4721 = vperm.slane %v4719, 0
      %v4723 = vmul.f32 %v4687, %v4721
      %v4724 = vmul.f32 %v4688, %v4721
      %v4725 = vmul.f32 %v4689, %v4721
      %v4726 = vmul.f32 %v4690, %v4721
      %v4727 = vmul.f32 %v4691, %v4721
      %v4728 = vmul.f32 %v4692, %v4721
      %v4729 = vmul.f32 %v4693, %v4721
      %v4730 = vmul.f32 %v4694, %v4721
      %v4731 = vmul.f32 %v4695, %v4721
      %v4732 = vmul.f32 %v4696, %v4721
      %v4733 = vmul.f32 %v4697, %v4721
      %v4734 = vmul.f32 %v4698, %v4721
      %v4735 = vmul.f32 %v4699, %v4721
      %v4736 = vmul.f32 %v4700, %v4721
      %v4737 = vmul.f32 %v4701, %v4721
      %v4738 = vmul.f32 %v4702, %v4721
      %v4739 = vmul.f32 %v4703, %v4721
      %v4740 = vmul.f32 %v4704, %v4721
      %v4741 = vmul.f32 %v4705, %v4721
      %v4742 = vmul.f32 %v4706, %v4721
      %v4743 = vmul.f32 %v4707, %v4721
      %v4744 = vmul.f32 %v4708, %v4721
      %v4745 = vmul.f32 %v4709, %v4721
      %v4746 = vmul.f32 %v4710, %v4721
      %v4747 = vmul.f32 %v4711, %v4721
      %v4748 = vmul.f32 %v4712, %v4721
      %v4749 = vmul.f32 %v4713, %v4721
      %v4750 = vmul.f32 %v4714, %v4721
      %v4751 = vmul.f32 %v4715, %v4721
      %v4752 = vmul.f32 %v4716, %v4721
      %v4753 = vmul.f32 %v4717, %v4721
      %v4754 = vmul.f32 %v4718, %v4721
      %v4755 = vld [vmem:[%s3] sm:$0x1]
      %v4757 = vperm.slane %v4755, 0
      %v4759 = vadd.f32 %v4723, %v4757
      %v4760 = vadd.f32 %v4724, %v4757
      %v4761 = vadd.f32 %v4725, %v4757
      %v4762 = vadd.f32 %v4726, %v4757
      %v4763 = vadd.f32 %v4727, %v4757
      %v4764 = vadd.f32 %v4728, %v4757
      %v4765 = vadd.f32 %v4729, %v4757
      %v4766 = vadd.f32 %v4730, %v4757
      %v4767 = vadd.f32 %v4731, %v4757
      %v4768 = vadd.f32 %v4732, %v4757
      %v4769 = vadd.f32 %v4733, %v4757
      %v4770 = vadd.f32 %v4734, %v4757
      %v4771 = vadd.f32 %v4735, %v4757
      %v4772 = vadd.f32 %v4736, %v4757
      %v4773 = vadd.f32 %v4737, %v4757
      %v4774 = vadd.f32 %v4738, %v4757
      %v4775 = vadd.f32 %v4739, %v4757
      %v4776 = vadd.f32 %v4740, %v4757
      %v4777 = vadd.f32 %v4741, %v4757
      %v4778 = vadd.f32 %v4742, %v4757
      %v4779 = vadd.f32 %v4743, %v4757
      %v4780 = vadd.f32 %v4744, %v4757
      %v4781 = vadd.f32 %v4745, %v4757
      %v4782 = vadd.f32 %v4746, %v4757
      %v4783 = vadd.f32 %v4747, %v4757
      %v4784 = vadd.f32 %v4748, %v4757
      %v4785 = vadd.f32 %v4749, %v4757
      %v4786 = vadd.f32 %v4750, %v4757
      %v4787 = vadd.f32 %v4751, %v4757
      %v4788 = vadd.f32 %v4752, %v4757
      %v4789 = vadd.f32 %v4753, %v4757
      %v4790 = vadd.f32 %v4754, %v4757
      %v4791 = vmax.f32 %v4759, 0.0
      %v4792 = vmax.f32 %v4760, 0.0
      %v4793 = vmax.f32 %v4761, 0.0
      %v4794 = vmax.f32 %v4762, 0.0
      %v4795 = vmax.f32 %v4763, 0.0
      %v4796 = vmax.f32 %v4764, 0.0
      %v4797 = vmax.f32 %v4765, 0.0
      %v4798 = vmax.f32 %v4766, 0.0
      %v4799 = vmax.f32 %v4767, 0.0
      %v4800 = vmax.f32 %v4768, 0.0
      %v4801 = vmax.f32 %v4769, 0.0
      %v4802 = vmax.f32 %v4770, 0.0
      %v4803 = vmax.f32 %v4771, 0.0
      %v4804 = vmax.f32 %v4772, 0.0
      %v4805 = vmax.f32 %v4773, 0.0
      %v4806 = vmax.f32 %v4774, 0.0
      %v4807 = vmax.f32 %v4775, 0.0
      %v4808 = vmax.f32 %v4776, 0.0
      %v4809 = vmax.f32 %v4777, 0.0
      %v4810 = vmax.f32 %v4778, 0.0
      %v4811 = vmax.f32 %v4779, 0.0
      %v4812 = vmax.f32 %v4780, 0.0
      %v4813 = vmax.f32 %v4781, 0.0
      %v4814 = vmax.f32 %v4782, 0.0
      %v4815 = vmax.f32 %v4783, 0.0
      %v4816 = vmax.f32 %v4784, 0.0
      %v4817 = vmax.f32 %v4785, 0.0
      %v4818 = vmax.f32 %v4786, 0.0
      %v4819 = vmax.f32 %v4787, 0.0
      %v4820 = vmax.f32 %v4788, 0.0
      %v4821 = vmax.f32 %v4789, 0.0
      %v4822 = vmax.f32 %v4790, 0.0
      %v4823 = vpack.c.bf16 %v4791, %v4791
      %v4824 = vpack.c.bf16 %v4792, %v4792
      %v4825 = vpack.c.bf16 %v4793, %v4793
      %v4826 = vpack.c.bf16 %v4794, %v4794
      %v4827 = vpack.c.bf16 %v4795, %v4795
      %v4828 = vpack.c.bf16 %v4796, %v4796
      %v4829 = vpack.c.bf16 %v4797, %v4797
      %v4830 = vpack.c.bf16 %v4798, %v4798
      %v4831 = vpack.c.bf16 %v4799, %v4799
      %v4832 = vpack.c.bf16 %v4800, %v4800
      %v4833 = vpack.c.bf16 %v4801, %v4801
      %v4834 = vpack.c.bf16 %v4802, %v4802
      %v4835 = vpack.c.bf16 %v4803, %v4803
      %v4836 = vpack.c.bf16 %v4804, %v4804
      %v4837 = vpack.c.bf16 %v4805, %v4805
      %v4838 = vpack.c.bf16 %v4806, %v4806
      %v4839 = vpack.c.bf16 %v4807, %v4807
      %v4840 = vpack.c.bf16 %v4808, %v4808
      %v4841 = vpack.c.bf16 %v4809, %v4809
      %v4842 = vpack.c.bf16 %v4810, %v4810
      %v4843 = vpack.c.bf16 %v4811, %v4811
      %v4844 = vpack.c.bf16 %v4812, %v4812
      %v4845 = vpack.c.bf16 %v4813, %v4813
      %v4846 = vpack.c.bf16 %v4814, %v4814
      %v4847 = vpack.c.bf16 %v4815, %v4815
      %v4848 = vpack.c.bf16 %v4816, %v4816
      %v4849 = vpack.c.bf16 %v4817, %v4817
      %v4850 = vpack.c.bf16 %v4818, %v4818
      %v4851 = vpack.c.bf16 %v4819, %v4819
      %v4852 = vpack.c.bf16 %v4820, %v4820
      %v4853 = vpack.c.bf16 %v4821, %v4821
      %v4854 = vpack.c.bf16 %v4822, %v4822
      %v4856 = vshrl.u32 %v4823, 16
      %v4858 = vrot.slane %v4856, 7
      %v4859 = vshll.u32 %v4823, 16
      %v4861 = vor.u32 %v4858, %v4859
      %v4862 = vrot.slane %v4858, 4
      %v4864 = vshrl.u32 %v4824, 16
      %v4866 = vrot.slane %v4864, 7
      %v4867 = vshll.u32 %v4824, 16
      %v4869 = vor.u32 %v4866, %v4867
      %v4870 = vsel %vm370, %v4862, %v4869
      %v4871 = vrot.slane %v4866, 4
      %v4873 = vshrl.u32 %v4825, 16
      %v4875 = vrot.slane %v4873, 7
      %v4876 = vshll.u32 %v4825, 16
      %v4878 = vor.u32 %v4875, %v4876
      %v4879 = vrot.slane %v4875, 4
      %v4881 = vshrl.u32 %v4826, 16
      %v4883 = vrot.slane %v4881, 7
      %v4884 = vshll.u32 %v4826, 16
      %v4886 = vor.u32 %v4883, %v4884
      %v4887 = vsel %vm370, %v4879, %v4886
      %v4888 = vrot.slane %v4883, 4
      %v4890 = vshrl.u32 %v4827, 16
      %v4892 = vrot.slane %v4890, 7
      %v4893 = vshll.u32 %v4827, 16
      %v4895 = vor.u32 %v4892, %v4893
      %v4896 = vrot.slane %v4892, 4
      %v4898 = vshrl.u32 %v4828, 16
      %v4900 = vrot.slane %v4898, 7
      %v4901 = vshll.u32 %v4828, 16
      %v4903 = vor.u32 %v4900, %v4901
      %v4904 = vsel %vm370, %v4896, %v4903
      %v4905 = vrot.slane %v4900, 4
      %v4907 = vshrl.u32 %v4829, 16
      %v4909 = vrot.slane %v4907, 7
      %v4910 = vshll.u32 %v4829, 16
      %v4912 = vor.u32 %v4909, %v4910
      %v4913 = vrot.slane %v4909, 4
      %v4915 = vshrl.u32 %v4830, 16
      %v4917 = vrot.slane %v4915, 7
      %v4918 = vshll.u32 %v4830, 16
      %v4920 = vor.u32 %v4917, %v4918
      %v4921 = vsel %vm370, %v4913, %v4920
      %v4922 = vrot.slane %v4917, 4
      %v4924 = vshrl.u32 %v4831, 16
      %v4926 = vrot.slane %v4924, 7
      %v4927 = vshll.u32 %v4831, 16
      %v4929 = vor.u32 %v4926, %v4927
      %v4930 = vrot.slane %v4926, 4
      %v4932 = vshrl.u32 %v4832, 16
      %v4934 = vrot.slane %v4932, 7
      %v4935 = vshll.u32 %v4832, 16
      %v4937 = vor.u32 %v4934, %v4935
      %v4938 = vsel %vm370, %v4930, %v4937
      %v4939 = vrot.slane %v4934, 4
      %v4941 = vshrl.u32 %v4833, 16
      %v4943 = vrot.slane %v4941, 7
      %v4944 = vshll.u32 %v4833, 16
      %v4946 = vor.u32 %v4943, %v4944
      %v4947 = vrot.slane %v4943, 4
      %v4949 = vshrl.u32 %v4834, 16
      %v4951 = vrot.slane %v4949, 7
      %v4952 = vshll.u32 %v4834, 16
      %v4954 = vor.u32 %v4951, %v4952
      %v4955 = vsel %vm370, %v4947, %v4954
      %v4956 = vrot.slane %v4951, 4
      %v4958 = vshrl.u32 %v4835, 16
      %v4960 = vrot.slane %v4958, 7
      %v4961 = vshll.u32 %v4835, 16
      %v4963 = vor.u32 %v4960, %v4961
      %v4964 = vrot.slane %v4960, 4
      %v4966 = vshrl.u32 %v4836, 16
      %v4968 = vrot.slane %v4966, 7
      %v4969 = vshll.u32 %v4836, 16
      %v4971 = vor.u32 %v4968, %v4969
      %v4972 = vsel %vm370, %v4964, %v4971
      %v4973 = vrot.slane %v4968, 4
      %v4975 = vshrl.u32 %v4837, 16
      %v4977 = vrot.slane %v4975, 7
      %v4978 = vshll.u32 %v4837, 16
      %v4980 = vor.u32 %v4977, %v4978
      %v4981 = vrot.slane %v4977, 4
      %v4983 = vshrl.u32 %v4838, 16
      %v4985 = vrot.slane %v4983, 7
      %v4986 = vshll.u32 %v4838, 16
      %v4988 = vor.u32 %v4985, %v4986
      %v4989 = vsel %vm370, %v4981, %v4988
      %v4990 = vrot.slane %v4985, 4
      %v4992 = vshrl.u32 %v4839, 16
      %v4994 = vrot.slane %v4992, 7
      %v4995 = vshll.u32 %v4839, 16
      %v4997 = vor.u32 %v4994, %v4995
      %v4998 = vrot.slane %v4994, 4
      %v5000 = vshrl.u32 %v4840, 16
      %v5002 = vrot.slane %v5000, 7
      %v5003 = vshll.u32 %v4840, 16
      %v5005 = vor.u32 %v5002, %v5003
      %v5006 = vsel %vm370, %v4998, %v5005
      %v5007 = vrot.slane %v5002, 4
      %v5009 = vshrl.u32 %v4841, 16
      %v5011 = vrot.slane %v5009, 7
      %v5012 = vshll.u32 %v4841, 16
      %v5014 = vor.u32 %v5011, %v5012
      %v5015 = vrot.slane %v5011, 4
      %v5017 = vshrl.u32 %v4842, 16
      %v5019 = vrot.slane %v5017, 7
      %v5020 = vshll.u32 %v4842, 16
      %v5022 = vor.u32 %v5019, %v5020
      %v5023 = vsel %vm370, %v5015, %v5022
      %v5024 = vrot.slane %v5019, 4
      %v5026 = vshrl.u32 %v4843, 16
      %v5028 = vrot.slane %v5026, 7
      %v5029 = vshll.u32 %v4843, 16
      %v5031 = vor.u32 %v5028, %v5029
      %v5032 = vrot.slane %v5028, 4
      %v5034 = vshrl.u32 %v4844, 16
      %v5036 = vrot.slane %v5034, 7
      %v5037 = vshll.u32 %v4844, 16
      %v5039 = vor.u32 %v5036, %v5037
      %v5040 = vsel %vm370, %v5032, %v5039
      %v5041 = vrot.slane %v5036, 4
      %v5043 = vshrl.u32 %v4845, 16
      %v5045 = vrot.slane %v5043, 7
      %v5046 = vshll.u32 %v4845, 16
      %v5048 = vor.u32 %v5045, %v5046
      %v5049 = vrot.slane %v5045, 4
      %v5051 = vshrl.u32 %v4846, 16
      %v5053 = vrot.slane %v5051, 7
      %v5054 = vshll.u32 %v4846, 16
      %v5056 = vor.u32 %v5053, %v5054
      %v5057 = vsel %vm370, %v5049, %v5056
      %v5058 = vrot.slane %v5053, 4
      %v5060 = vshrl.u32 %v4847, 16
      %v5062 = vrot.slane %v5060, 7
      %v5063 = vshll.u32 %v4847, 16
      %v5065 = vor.u32 %v5062, %v5063
      %v5066 = vrot.slane %v5062, 4
      %v5068 = vshrl.u32 %v4848, 16
      %v5070 = vrot.slane %v5068, 7
      %v5071 = vshll.u32 %v4848, 16
      %v5073 = vor.u32 %v5070, %v5071
      %v5074 = vsel %vm370, %v5066, %v5073
      %v5075 = vrot.slane %v5070, 4
      %v5077 = vshrl.u32 %v4849, 16
      %v5079 = vrot.slane %v5077, 7
      %v5080 = vshll.u32 %v4849, 16
      %v5082 = vor.u32 %v5079, %v5080
      %v5083 = vrot.slane %v5079, 4
      %v5085 = vshrl.u32 %v4850, 16
      %v5087 = vrot.slane %v5085, 7
      %v5088 = vshll.u32 %v4850, 16
      %v5090 = vor.u32 %v5087, %v5088
      %v5091 = vsel %vm370, %v5083, %v5090
      %v5092 = vrot.slane %v5087, 4
      %v5094 = vshrl.u32 %v4851, 16
      %v5096 = vrot.slane %v5094, 7
      %v5097 = vshll.u32 %v4851, 16
      %v5099 = vor.u32 %v5096, %v5097
      %v5100 = vrot.slane %v5096, 4
      %v5102 = vshrl.u32 %v4852, 16
      %v5104 = vrot.slane %v5102, 7
      %v5105 = vshll.u32 %v4852, 16
      %v5107 = vor.u32 %v5104, %v5105
      %v5108 = vsel %vm370, %v5100, %v5107
      %v5109 = vrot.slane %v5104, 4
      %v5111 = vshrl.u32 %v4853, 16
      %v5113 = vrot.slane %v5111, 7
      %v5114 = vshll.u32 %v4853, 16
      %v5116 = vor.u32 %v5113, %v5114
      %v5117 = vrot.slane %v5113, 4
      %v5119 = vshrl.u32 %v4854, 16
      %v5121 = vrot.slane %v5119, 7
      %v5122 = vshll.u32 %v4854, 16
      %v5124 = vor.u32 %v5121, %v5122
      %v5125 = vsel %vm370, %v5117, %v5124
      %v5126 = vrot.slane %v5121, 4
      %v5175 = vsel %vm694, %v4861, %v2328
      %5176 = vst [vmem:[%s691] sm:$0xf] %v5175
      %5177 = vst.msk [vmem:[%s691 + $0x4] sm:$0xf] %vm312, %v4870
      %v5178 = vld [vmem:[%s691 + $0x8] sm:$0x1]
      %v5179 = vsel %vm700, %v4871, %v5178
      %5180 = vst [vmem:[%s691 + $0x8] sm:$0x1] %v5179
      %v5181 = vld [vmem:[%s691 + $0xc] sm:$0xf]
      %v5182 = vsel %vm694, %v4878, %v5181
      %5183 = vst [vmem:[%s691 + $0xc] sm:$0xf] %v5182
      %5184 = vst.msk [vmem:[%s691 + $0x10] sm:$0xf] %vm312, %v4887
      %v5185 = vld [vmem:[%s691 + $0x14] sm:$0x1]
      %v5186 = vsel %vm700, %v4888, %v5185
      %5187 = vst [vmem:[%s691 + $0x14] sm:$0x1] %v5186
      %v5188 = vld [vmem:[%s691 + $0x18] sm:$0xf]
      %v5189 = vsel %vm694, %v4895, %v5188
      %5190 = vst [vmem:[%s691 + $0x18] sm:$0xf] %v5189
      %5191 = vst.msk [vmem:[%s691 + $0x1c] sm:$0xf] %vm312, %v4904
      %v5192 = vld [vmem:[%s691 + $0x20] sm:$0x1]
      %v5193 = vsel %vm700, %v4905, %v5192
      %5194 = vst [vmem:[%s691 + $0x20] sm:$0x1] %v5193
      %v5195 = vld [vmem:[%s691 + $0x24] sm:$0xf]
      %v5196 = vsel %vm694, %v4912, %v5195
      %5197 = vst [vmem:[%s691 + $0x24] sm:$0xf] %v5196
      %5198 = vst.msk [vmem:[%s691 + $0x28] sm:$0xf] %vm312, %v4921
      %v5199 = vld [vmem:[%s691 + $0x2c] sm:$0x1]
      %v5200 = vsel %vm700, %v4922, %v5199
      %5201 = vst [vmem:[%s691 + $0x2c] sm:$0x1] %v5200
      %v5202 = vld [vmem:[%s691 + $0x30] sm:$0xf]
      %v5203 = vsel %vm694, %v4929, %v5202
      %5204 = vst [vmem:[%s691 + $0x30] sm:$0xf] %v5203
      %5205 = vst.msk [vmem:[%s691 + $0x34] sm:$0xf] %vm312, %v4938
      %v5206 = vld [vmem:[%s691 + $0x38] sm:$0x1]
      %v5207 = vsel %vm700, %v4939, %v5206
      %5208 = vst [vmem:[%s691 + $0x38] sm:$0x1] %v5207
      %v5209 = vld [vmem:[%s691 + $0x3c] sm:$0xf]
      %v5210 = vsel %vm694, %v4946, %v5209
      %5211 = vst [vmem:[%s691 + $0x3c] sm:$0xf] %v5210
      %5212 = vst.msk [vmem:[%s691 + $0x40] sm:$0xf] %vm312, %v4955
      %v5213 = vld [vmem:[%s691 + $0x44] sm:$0x1]
      %v5214 = vsel %vm700, %v4956, %v5213
      %5215 = vst [vmem:[%s691 + $0x44] sm:$0x1] %v5214
      %v5216 = vld [vmem:[%s691 + $0x48] sm:$0xf]
      %v5217 = vsel %vm694, %v4963, %v5216
      %5218 = vst [vmem:[%s691 + $0x48] sm:$0xf] %v5217
      %5219 = vst.msk [vmem:[%s691 + $0x4c] sm:$0xf] %vm312, %v4972
      %v5220 = vld [vmem:[%s691 + $0x50] sm:$0x1]
      %v5221 = vsel %vm700, %v4973, %v5220
      %5222 = vst [vmem:[%s691 + $0x50] sm:$0x1] %v5221
      %v5223 = vld [vmem:[%s691 + $0x54] sm:$0xf]
      %v5224 = vsel %vm694, %v4980, %v5223
      %5225 = vst [vmem:[%s691 + $0x54] sm:$0xf] %v5224
      %5226 = vst.msk [vmem:[%s691 + $0x58] sm:$0xf] %vm312, %v4989
      %v5227 = vld [vmem:[%s691 + $0x5c] sm:$0x1]
      %v5228 = vsel %vm700, %v4990, %v5227
      %5229 = vst [vmem:[%s691 + $0x5c] sm:$0x1] %v5228
      %v5230 = vld [vmem:[%s691 + $0x60] sm:$0xf]
      %v5231 = vsel %vm694, %v4997, %v5230
      %5232 = vst [vmem:[%s691 + $0x60] sm:$0xf] %v5231
      %5233 = vst.msk [vmem:[%s691 + $0x64] sm:$0xf] %vm312, %v5006
      %v5234 = vld [vmem:[%s691 + $0x68] sm:$0x1]
      %v5235 = vsel %vm700, %v5007, %v5234
      %5236 = vst [vmem:[%s691 + $0x68] sm:$0x1] %v5235
      %v5237 = vld [vmem:[%s691 + $0x6c] sm:$0xf]
      %v5238 = vsel %vm694, %v5014, %v5237
      %5239 = vst [vmem:[%s691 + $0x6c] sm:$0xf] %v5238
      %5240 = vst.msk [vmem:[%s691 + $0x70] sm:$0xf] %vm312, %v5023
      %v5241 = vld [vmem:[%s691 + $0x74] sm:$0x1]
      %v5242 = vsel %vm700, %v5024, %v5241
      %5243 = vst [vmem:[%s691 + $0x74] sm:$0x1] %v5242
      %v5244 = vld [vmem:[%s691 + $0x78] sm:$0xf]
      %v5245 = vsel %vm694, %v5031, %v5244
      %5246 = vst [vmem:[%s691 + $0x78] sm:$0xf] %v5245
      %5247 = vst.msk [vmem:[%s691 + $0x7c] sm:$0xf] %vm312, %v5040
      %v5248 = vld [vmem:[%s691 + $0x80] sm:$0x1]
      %v5249 = vsel %vm700, %v5041, %v5248
      %5250 = vst [vmem:[%s691 + $0x80] sm:$0x1] %v5249
      %v5251 = vld [vmem:[%s691 + $0x84] sm:$0xf]
      %v5252 = vsel %vm694, %v5048, %v5251
      %5253 = vst [vmem:[%s691 + $0x84] sm:$0xf] %v5252
      %5254 = vst.msk [vmem:[%s691 + $0x88] sm:$0xf] %vm312, %v5057
      %v5255 = vld [vmem:[%s691 + $0x8c] sm:$0x1]
      %v5256 = vsel %vm700, %v5058, %v5255
      %5257 = vst [vmem:[%s691 + $0x8c] sm:$0x1] %v5256
      %v5258 = vld [vmem:[%s691 + $0x90] sm:$0xf]
      %v5259 = vsel %vm694, %v5065, %v5258
      %5260 = vst [vmem:[%s691 + $0x90] sm:$0xf] %v5259
      %5261 = vst.msk [vmem:[%s691 + $0x94] sm:$0xf] %vm312, %v5074
      %v5262 = vld [vmem:[%s691 + $0x98] sm:$0x1]
      %v5263 = vsel %vm700, %v5075, %v5262
      %5264 = vst [vmem:[%s691 + $0x98] sm:$0x1] %v5263
      %v5265 = vld [vmem:[%s691 + $0x9c] sm:$0xf]
      %v5266 = vsel %vm694, %v5082, %v5265
      %5267 = vst [vmem:[%s691 + $0x9c] sm:$0xf] %v5266
      %5268 = vst.msk [vmem:[%s691 + $0xa0] sm:$0xf] %vm312, %v5091
      %v5269 = vld [vmem:[%s691 + $0xa4] sm:$0x1]
      %v5270 = vsel %vm700, %v5092, %v5269
      %5271 = vst [vmem:[%s691 + $0xa4] sm:$0x1] %v5270
      %v5272 = vld [vmem:[%s691 + $0xa8] sm:$0xf]
      %v5273 = vsel %vm694, %v5099, %v5272
      %5274 = vst [vmem:[%s691 + $0xa8] sm:$0xf] %v5273
      %5275 = vst.msk [vmem:[%s691 + $0xac] sm:$0xf] %vm312, %v5108
      %v5276 = vld [vmem:[%s691 + $0xb0] sm:$0x1]
      %v5277 = vsel %vm700, %v5109, %v5276
      %5278 = vst [vmem:[%s691 + $0xb0] sm:$0x1] %v5277
      %v5279 = vld [vmem:[%s691 + $0xb4] sm:$0xf]
      %v5280 = vsel %vm694, %v5116, %v5279
      %5281 = vst [vmem:[%s691 + $0xb4] sm:$0xf] %v5280
      %5282 = vst.msk [vmem:[%s691 + $0xb8] sm:$0xf] %vm312, %v5125
      %v5283 = vld [vmem:[%s691 + $0xbc] sm:$0x1]
      %v5284 = vsel %vm700, %v5126, %v5283
      %5285 = vst [vmem:[%s691 + $0xbc] sm:$0x1] %v5284
      %v5286 = vld [vmem:[#allocation2] sm:$0xf]
      %v5287 = vld [vmem:[#allocation2 + $0x4] sm:$0xf]
      %v5288 = vld [vmem:[#allocation2 + $0xc] sm:$0xf]
      %v5289 = vld [vmem:[#allocation2 + $0x10] sm:$0xf]
      %v5290 = vld [vmem:[#allocation2 + $0x18] sm:$0xf]
      %v5291 = vld [vmem:[#allocation2 + $0x1c] sm:$0xf]
      %v5292 = vld [vmem:[#allocation2 + $0x24] sm:$0xf]
      %v5293 = vld [vmem:[#allocation2 + $0x28] sm:$0xf]
      %v5294 = vld [vmem:[#allocation2 + $0x30] sm:$0xf]
      %v5295 = vld [vmem:[#allocation2 + $0x34] sm:$0xf]
      %v5296 = vld [vmem:[#allocation2 + $0x3c] sm:$0xf]
      %v5297 = vld [vmem:[#allocation2 + $0x40] sm:$0xf]
      %v5298 = vld [vmem:[#allocation2 + $0x48] sm:$0xf]
      %v5299 = vld [vmem:[#allocation2 + $0x4c] sm:$0xf]
      %v5300 = vld [vmem:[#allocation2 + $0x54] sm:$0xf]
      %v5301 = vld [vmem:[#allocation2 + $0x58] sm:$0xf]
      %v5302 = vld [vmem:[#allocation2 + $0x60] sm:$0xf]
      %v5303 = vld [vmem:[#allocation2 + $0x64] sm:$0xf]
      %v5304 = vld [vmem:[#allocation2 + $0x6c] sm:$0xf]
      %v5305 = vld [vmem:[#allocation2 + $0x70] sm:$0xf]
      %v5306 = vld [vmem:[#allocation2 + $0x78] sm:$0xf]
      %v5307 = vld [vmem:[#allocation2 + $0x7c] sm:$0xf]
      %v5308 = vld [vmem:[#allocation2 + $0x84] sm:$0xf]
      %v5309 = vld [vmem:[#allocation2 + $0x88] sm:$0xf]
      %v5310 = vld [vmem:[#allocation2 + $0x90] sm:$0xf]
      %v5311 = vld [vmem:[#allocation2 + $0x94] sm:$0xf]
      %v5312 = vld [vmem:[#allocation2 + $0x9c] sm:$0xf]
      %v5313 = vld [vmem:[#allocation2 + $0xa0] sm:$0xf]
      %v5314 = vld [vmem:[#allocation2 + $0xa8] sm:$0xf]
      %v5315 = vld [vmem:[#allocation2 + $0xac] sm:$0xf]
      %v5316 = vld [vmem:[#allocation2 + $0xb4] sm:$0xf]
      %v5317 = vld [vmem:[#allocation2 + $0xb8] sm:$0xf]
      %v5318 = vld [vmem:[%s4] sm:$0x3]
      %v5319 = vld [vmem:[#allocation2 + $0x8] sm:$0x1]
      %v5320 = vld [vmem:[#allocation2 + $0x14] sm:$0x1]
      %v5321 = vld [vmem:[#allocation2 + $0x20] sm:$0x1]
      %v5322 = vld [vmem:[#allocation2 + $0x2c] sm:$0x1]
      %v5323 = vld [vmem:[#allocation2 + $0x38] sm:$0x1]
      %v5324 = vld [vmem:[#allocation2 + $0x44] sm:$0x1]
      %v5325 = vld [vmem:[#allocation2 + $0x50] sm:$0x1]
      %v5326 = vld [vmem:[#allocation2 + $0x5c] sm:$0x1]
      %v5327 = vld [vmem:[#allocation2 + $0x68] sm:$0x1]
      %v5328 = vld [vmem:[#allocation2 + $0x74] sm:$0x1]
      %v5329 = vld [vmem:[#allocation2 + $0x80] sm:$0x1]
      %v5330 = vld [vmem:[#allocation2 + $0x8c] sm:$0x1]
      %v5331 = vld [vmem:[#allocation2 + $0x98] sm:$0x1]
      %v5332 = vld [vmem:[#allocation2 + $0xa4] sm:$0x1]
      %v5333 = vld [vmem:[#allocation2 + $0xb0] sm:$0x1]
      %v5334 = vld [vmem:[#allocation2 + $0xbc] sm:$0x1]
      %v5336 = vshrl.u32 %v5286, 16
      %v5338 = vrot.slane %v5336, 4
      %v5339 = vshll.u32 %v5286, 16
      %v5341 = vrot.slane %v5339, 5
      %v5342 = vor.u32 %v5338, %v5341
      %v5343 = vrot.slane %v5342, 4
      %v5345 = vshll.u32 %v5287, 16
      %v5347 = vrot.slane %v5345, 5
      %v5348 = vsel %vm860, %v5343, %v5347
      %v5349 = vshrl.u32 %v5287, 16
      %v5351 = vrot.slane %v5349, 4
      %v5352 = vor.u32 %v5351, %v5347
      %v5353 = vrot.slane %v5352, 4
      %v5355 = vshll.u32 %v5319, 16
      %v5357 = vrot.slane %v5355, 5
      %v5358 = vsel %vm860, %v5353, %v5357
      %v5360 = vshrl.u32 %v5288, 16
      %v5362 = vrot.slane %v5360, 4
      %v5363 = vshll.u32 %v5288, 16
      %v5365 = vrot.slane %v5363, 5
      %v5366 = vor.u32 %v5362, %v5365
      %v5367 = vrot.slane %v5366, 4
      %v5369 = vshll.u32 %v5289, 16
      %v5371 = vrot.slane %v5369, 5
      %v5372 = vsel %vm860, %v5367, %v5371
      %v5373 = vshrl.u32 %v5289, 16
      %v5375 = vrot.slane %v5373, 4
      %v5376 = vor.u32 %v5375, %v5371
      %v5377 = vrot.slane %v5376, 4
      %v5379 = vshll.u32 %v5320, 16
      %v5381 = vrot.slane %v5379, 5
      %v5382 = vsel %vm860, %v5377, %v5381
      %v5384 = vshrl.u32 %v5290, 16
      %v5386 = vrot.slane %v5384, 4
      %v5387 = vshll.u32 %v5290, 16
      %v5389 = vrot.slane %v5387, 5
      %v5390 = vor.u32 %v5386, %v5389
      %v5391 = vrot.slane %v5390, 4
      %v5393 = vshll.u32 %v5291, 16
      %v5395 = vrot.slane %v5393, 5
      %v5396 = vsel %vm860, %v5391, %v5395
      %v5397 = vshrl.u32 %v5291, 16
      %v5399 = vrot.slane %v5397, 4
      %v5400 = vor.u32 %v5399, %v5395
      %v5401 = vrot.slane %v5400, 4
      %v5403 = vshll.u32 %v5321, 16
      %v5405 = vrot.slane %v5403, 5
      %v5406 = vsel %vm860, %v5401, %v5405
      %v5408 = vshrl.u32 %v5292, 16
      %v5410 = vrot.slane %v5408, 4
      %v5411 = vshll.u32 %v5292, 16
      %v5413 = vrot.slane %v5411, 5
      %v5414 = vor.u32 %v5410, %v5413
      %v5415 = vrot.slane %v5414, 4
      %v5417 = vshll.u32 %v5293, 16
      %v5419 = vrot.slane %v5417, 5
      %v5420 = vsel %vm860, %v5415, %v5419
      %v5421 = vshrl.u32 %v5293, 16
      %v5423 = vrot.slane %v5421, 4
      %v5424 = vor.u32 %v5423, %v5419
      %v5425 = vrot.slane %v5424, 4
      %v5427 = vshll.u32 %v5322, 16
      %v5429 = vrot.slane %v5427, 5
      %v5430 = vsel %vm860, %v5425, %v5429
      %v5432 = vshrl.u32 %v5294, 16
      %v5434 = vrot.slane %v5432, 4
      %v5435 = vshll.u32 %v5294, 16
      %v5437 = vrot.slane %v5435, 5
      %v5438 = vor.u32 %v5434, %v5437
      %v5439 = vrot.slane %v5438, 4
      %v5441 = vshll.u32 %v5295, 16
      %v5443 = vrot.slane %v5441, 5
      %v5444 = vsel %vm860, %v5439, %v5443
      %v5445 = vshrl.u32 %v5295, 16
      %v5447 = vrot.slane %v5445, 4
      %v5448 = vor.u32 %v5447, %v5443
      %v5449 = vrot.slane %v5448, 4
      %v5451 = vshll.u32 %v5323, 16
      %v5453 = vrot.slane %v5451, 5
      %v5454 = vsel %vm860, %v5449, %v5453
      %v5456 = vshrl.u32 %v5296, 16
      %v5458 = vrot.slane %v5456, 4
      %v5459 = vshll.u32 %v5296, 16
      %v5461 = vrot.slane %v5459, 5
      %v5462 = vor.u32 %v5458, %v5461
      %v5463 = vrot.slane %v5462, 4
      %v5465 = vshll.u32 %v5297, 16
      %v5467 = vrot.slane %v5465, 5
      %v5468 = vsel %vm860, %v5463, %v5467
      %v5469 = vshrl.u32 %v5297, 16
      %v5471 = vrot.slane %v5469, 4
      %v5472 = vor.u32 %v5471, %v5467
      %v5473 = vrot.slane %v5472, 4
      %v5475 = vshll.u32 %v5324, 16
      %v5477 = vrot.slane %v5475, 5
      %v5478 = vsel %vm860, %v5473, %v5477
      %v5480 = vshrl.u32 %v5298, 16
      %v5482 = vrot.slane %v5480, 4
      %v5483 = vshll.u32 %v5298, 16
      %v5485 = vrot.slane %v5483, 5
      %v5486 = vor.u32 %v5482, %v5485
      %v5487 = vrot.slane %v5486, 4
      %v5489 = vshll.u32 %v5299, 16
      %v5491 = vrot.slane %v5489, 5
      %v5492 = vsel %vm860, %v5487, %v5491
      %v5493 = vshrl.u32 %v5299, 16
      %v5495 = vrot.slane %v5493, 4
      %v5496 = vor.u32 %v5495, %v5491
      %v5497 = vrot.slane %v5496, 4
      %v5499 = vshll.u32 %v5325, 16
      %v5501 = vrot.slane %v5499, 5
      %v5502 = vsel %vm860, %v5497, %v5501
      %v5504 = vshrl.u32 %v5300, 16
      %v5506 = vrot.slane %v5504, 4
      %v5507 = vshll.u32 %v5300, 16
      %v5509 = vrot.slane %v5507, 5
      %v5510 = vor.u32 %v5506, %v5509
      %v5511 = vrot.slane %v5510, 4
      %v5513 = vshll.u32 %v5301, 16
      %v5515 = vrot.slane %v5513, 5
      %v5516 = vsel %vm860, %v5511, %v5515
      %v5517 = vshrl.u32 %v5301, 16
      %v5519 = vrot.slane %v5517, 4
      %v5520 = vor.u32 %v5519, %v5515
      %v5521 = vrot.slane %v5520, 4
      %v5523 = vshll.u32 %v5326, 16
      %v5525 = vrot.slane %v5523, 5
      %v5526 = vsel %vm860, %v5521, %v5525
      %v5528 = vshrl.u32 %v5302, 16
      %v5530 = vrot.slane %v5528, 4
      %v5531 = vshll.u32 %v5302, 16
      %v5533 = vrot.slane %v5531, 5
      %v5534 = vor.u32 %v5530, %v5533
      %v5535 = vrot.slane %v5534, 4
      %v5537 = vshll.u32 %v5303, 16
      %v5539 = vrot.slane %v5537, 5
      %v5540 = vsel %vm860, %v5535, %v5539
      %v5541 = vshrl.u32 %v5303, 16
      %v5543 = vrot.slane %v5541, 4
      %v5544 = vor.u32 %v5543, %v5539
      %v5545 = vrot.slane %v5544, 4
      %v5547 = vshll.u32 %v5327, 16
      %v5549 = vrot.slane %v5547, 5
      %v5550 = vsel %vm860, %v5545, %v5549
      %v5552 = vshrl.u32 %v5304, 16
      %v5554 = vrot.slane %v5552, 4
      %v5555 = vshll.u32 %v5304, 16
      %v5557 = vrot.slane %v5555, 5
      %v5558 = vor.u32 %v5554, %v5557
      %v5559 = vrot.slane %v5558, 4
      %v5561 = vshll.u32 %v5305, 16
      %v5563 = vrot.slane %v5561, 5
      %v5564 = vsel %vm860, %v5559, %v5563
      %v5565 = vshrl.u32 %v5305, 16
      %v5567 = vrot.slane %v5565, 4
      %v5568 = vor.u32 %v5567, %v5563
      %v5569 = vrot.slane %v5568, 4
      %v5571 = vshll.u32 %v5328, 16
      %v5573 = vrot.slane %v5571, 5
      %v5574 = vsel %vm860, %v5569, %v5573
      %v5576 = vshrl.u32 %v5306, 16
      %v5578 = vrot.slane %v5576, 4
      %v5579 = vshll.u32 %v5306, 16
      %v5581 = vrot.slane %v5579, 5
      %v5582 = vor.u32 %v5578, %v5581
      %v5583 = vrot.slane %v5582, 4
      %v5585 = vshll.u32 %v5307, 16
      %v5587 = vrot.slane %v5585, 5
      %v5588 = vsel %vm860, %v5583, %v5587
      %v5589 = vshrl.u32 %v5307, 16
      %v5591 = vrot.slane %v5589, 4
      %v5592 = vor.u32 %v5591, %v5587
      %v5593 = vrot.slane %v5592, 4
      %v5595 = vshll.u32 %v5329, 16
      %v5597 = vrot.slane %v5595, 5
      %v5598 = vsel %vm860, %v5593, %v5597
      %v5600 = vshrl.u32 %v5308, 16
      %v5602 = vrot.slane %v5600, 4
      %v5603 = vshll.u32 %v5308, 16
      %v5605 = vrot.slane %v5603, 5
      %v5606 = vor.u32 %v5602, %v5605
      %v5607 = vrot.slane %v5606, 4
      %v5609 = vshll.u32 %v5309, 16
      %v5611 = vrot.slane %v5609, 5
      %v5612 = vsel %vm860, %v5607, %v5611
      %v5613 = vshrl.u32 %v5309, 16
      %v5615 = vrot.slane %v5613, 4
      %v5616 = vor.u32 %v5615, %v5611
      %v5617 = vrot.slane %v5616, 4
      %v5619 = vshll.u32 %v5330, 16
      %v5621 = vrot.slane %v5619, 5
      %v5622 = vsel %vm860, %v5617, %v5621
      %v5624 = vshrl.u32 %v5310, 16
      %v5626 = vrot.slane %v5624, 4
      %v5627 = vshll.u32 %v5310, 16
      %v5629 = vrot.slane %v5627, 5
      %v5630 = vor.u32 %v5626, %v5629
      %v5631 = vrot.slane %v5630, 4
      %v5633 = vshll.u32 %v5311, 16
      %v5635 = vrot.slane %v5633, 5
      %v5636 = vsel %vm860, %v5631, %v5635
      %v5637 = vshrl.u32 %v5311, 16
      %v5639 = vrot.slane %v5637, 4
      %v5640 = vor.u32 %v5639, %v5635
      %v5641 = vrot.slane %v5640, 4
      %v5643 = vshll.u32 %v5331, 16
      %v5645 = vrot.slane %v5643, 5
      %v5646 = vsel %vm860, %v5641, %v5645
      %v5648 = vshrl.u32 %v5312, 16
      %v5650 = vrot.slane %v5648, 4
      %v5651 = vshll.u32 %v5312, 16
      %v5653 = vrot.slane %v5651, 5
      %v5654 = vor.u32 %v5650, %v5653
      %v5655 = vrot.slane %v5654, 4
      %v5657 = vshll.u32 %v5313, 16
      %v5659 = vrot.slane %v5657, 5
      %v5660 = vsel %vm860, %v5655, %v5659
      %v5661 = vshrl.u32 %v5313, 16
      %v5663 = vrot.slane %v5661, 4
      %v5664 = vor.u32 %v5663, %v5659
      %v5665 = vrot.slane %v5664, 4
      %v5667 = vshll.u32 %v5332, 16
      %v5669 = vrot.slane %v5667, 5
      %v5670 = vsel %vm860, %v5665, %v5669
      %v5672 = vshrl.u32 %v5314, 16
      %v5674 = vrot.slane %v5672, 4
      %v5675 = vshll.u32 %v5314, 16
      %v5677 = vrot.slane %v5675, 5
      %v5678 = vor.u32 %v5674, %v5677
      %v5679 = vrot.slane %v5678, 4
      %v5681 = vshll.u32 %v5315, 16
      %v5683 = vrot.slane %v5681, 5
      %v5684 = vsel %vm860, %v5679, %v5683
      %v5685 = vshrl.u32 %v5315, 16
      %v5687 = vrot.slane %v5685, 4
      %v5688 = vor.u32 %v5687, %v5683
      %v5689 = vrot.slane %v5688, 4
      %v5691 = vshll.u32 %v5333, 16
      %v5693 = vrot.slane %v5691, 5
      %v5694 = vsel %vm860, %v5689, %v5693
      %v5696 = vshrl.u32 %v5316, 16
      %v5698 = vrot.slane %v5696, 4
      %v5699 = vshll.u32 %v5316, 16
      %v5701 = vrot.slane %v5699, 5
      %v5702 = vor.u32 %v5698, %v5701
      %v5703 = vrot.slane %v5702, 4
      %v5705 = vshll.u32 %v5317, 16
      %v5707 = vrot.slane %v5705, 5
      %v5708 = vsel %vm860, %v5703, %v5707
      %v5709 = vshrl.u32 %v5317, 16
      %v5711 = vrot.slane %v5709, 4
      %v5712 = vor.u32 %v5711, %v5707
      %v5713 = vrot.slane %v5712, 4
      %v5715 = vshll.u32 %v5334, 16
      %v5717 = vrot.slane %v5715, 5
      %v5718 = vsel %vm860, %v5713, %v5717
      %s5719 = scalar_lea.vmem %s4, 2
      %v5720 = vld [vmem:[%s5719] sm:$0x3]
      %v5721 = vunpack.c.l.b16 %v5348
      %v5722 = vunpack.c.l.b16 %v5358
      %v5723 = vunpack.c.l.b16 %v5372
      %v5724 = vunpack.c.l.b16 %v5382
      %v5725 = vunpack.c.l.b16 %v5396
      %v5726 = vunpack.c.l.b16 %v5406
      %v5727 = vunpack.c.l.b16 %v5420
      %v5728 = vunpack.c.l.b16 %v5430
      %v5729 = vunpack.c.l.b16 %v5444
      %v5730 = vunpack.c.l.b16 %v5454
      %v5731 = vunpack.c.l.b16 %v5468
      %v5732 = vunpack.c.l.b16 %v5478
      %v5733 = vunpack.c.l.b16 %v5492
      %v5734 = vunpack.c.l.b16 %v5502
      %v5735 = vunpack.c.l.b16 %v5516
      %v5736 = vunpack.c.l.b16 %v5526
      %v5737 = vunpack.c.l.b16 %v5540
      %v5738 = vunpack.c.l.b16 %v5550
      %v5739 = vunpack.c.l.b16 %v5564
      %v5740 = vunpack.c.l.b16 %v5574
      %v5741 = vunpack.c.l.b16 %v5588
      %v5742 = vunpack.c.l.b16 %v5598
      %v5743 = vunpack.c.l.b16 %v5612
      %v5744 = vunpack.c.l.b16 %v5622
      %v5745 = vunpack.c.l.b16 %v5636
      %v5746 = vunpack.c.l.b16 %v5646
      %v5747 = vunpack.c.l.b16 %v5660
      %v5748 = vunpack.c.l.b16 %v5670
      %v5749 = vunpack.c.l.b16 %v5684
      %v5750 = vunpack.c.l.b16 %v5694
      %v5751 = vunpack.c.l.b16 %v5708
      %v5752 = vunpack.c.l.b16 %v5718
      %v5753 = vpack.c.b16 %v5722, %v5721
      %v5754 = vpack.c.b16 %v5724, %v5723
      %v5755 = vpack.c.b16 %v5726, %v5725
      %v5756 = vpack.c.b16 %v5728, %v5727
      %v5757 = vpack.c.b16 %v5730, %v5729
      %v5758 = vpack.c.b16 %v5732, %v5731
      %v5759 = vpack.c.b16 %v5734, %v5733
      %v5760 = vpack.c.b16 %v5736, %v5735
      %v5761 = vpack.c.b16 %v5738, %v5737
      %v5762 = vpack.c.b16 %v5740, %v5739
      %v5763 = vpack.c.b16 %v5742, %v5741
      %v5764 = vpack.c.b16 %v5744, %v5743
      %v5765 = vpack.c.b16 %v5746, %v5745
      %v5766 = vpack.c.b16 %v5748, %v5747
      %v5767 = vpack.c.b16 %v5750, %v5749
      %v5768 = vpack.c.b16 %v5752, %v5751
      %v5770 = vsel %vm1295, %v5753, 0
      %v5773 = vsel %vm1295, %v5754, 0
      %v5776 = vsel %vm1295, %v5755, 0
      %v5779 = vsel %vm1295, %v5756, 0
      %v5782 = vsel %vm1295, %v5757, 0
      %v5785 = vsel %vm1295, %v5758, 0
      %v5788 = vsel %vm1295, %v5759, 0
      %v5791 = vsel %vm1295, %v5760, 0
      %v5794 = vsel %vm1295, %v5761, 0
      %v5797 = vsel %vm1295, %v5762, 0
      %v5800 = vsel %vm1295, %v5763, 0
      %v5803 = vsel %vm1295, %v5764, 0
      %v5806 = vsel %vm1295, %v5765, 0
      %v5809 = vsel %vm1295, %v5766, 0
      %v5812 = vsel %vm1295, %v5767, 0
      %v5815 = vsel %vm1295, %v5768, 0
      %v5818 = vsel %vm1344, %v5720, 0
      %5820 = vmatpush.bf16.msra.mxu0 0
      %5821 = vmatpush.bf16.msra.mxu0 0
      %5822 = vmatpush.bf16.msra.mxu0 0
      %5823 = vmatpush.bf16.msra.mxu0 0
      %5824 = vmatpush.bf16.msra.mxu0 0
      %5825 = vmatpush.bf16.msra.mxu0 0
      %5826 = vmatpush.bf16.msra.mxu0 0
      %5827 = vmatpush.bf16.msra.mxu0 %v5818
      %5828 = vmatmul.bf16.gmra.mxu0 %v5770
      %v5829 = vpop.f32.mrf.mxu0
      %v5830 = vadd.f32 0.0, %v5829
      %v5831 = vpop.f32.mrf.mxu0
      %v5832 = vadd.f32 0.0, %v5831
      %5833 = vmatmul.bf16.gmra.mxu0 %v5773
      %v5834 = vpop.f32.mrf.mxu0
      %v5835 = vadd.f32 0.0, %v5834
      %v5836 = vpop.f32.mrf.mxu0
      %v5837 = vadd.f32 0.0, %v5836
      %5838 = vmatmul.bf16.gmra.mxu0 %v5776
      %v5839 = vpop.f32.mrf.mxu0
      %v5840 = vadd.f32 0.0, %v5839
      %v5841 = vpop.f32.mrf.mxu0
      %v5842 = vadd.f32 0.0, %v5841
      %5843 = vmatmul.bf16.gmra.mxu0 %v5779
      %v5844 = vpop.f32.mrf.mxu0
      %v5845 = vadd.f32 0.0, %v5844
      %v5846 = vpop.f32.mrf.mxu0
      %v5847 = vadd.f32 0.0, %v5846
      %5848 = vmatmul.bf16.gmra.mxu0 %v5782
      %v5849 = vpop.f32.mrf.mxu0
      %v5850 = vadd.f32 0.0, %v5849
      %v5851 = vpop.f32.mrf.mxu0
      %v5852 = vadd.f32 0.0, %v5851
      %5853 = vmatmul.bf16.gmra.mxu0 %v5785
      %v5854 = vpop.f32.mrf.mxu0
      %v5855 = vadd.f32 0.0, %v5854
      %v5856 = vpop.f32.mrf.mxu0
      %v5857 = vadd.f32 0.0, %v5856
      %5858 = vmatmul.bf16.gmra.mxu0 %v5788
      %v5859 = vpop.f32.mrf.mxu0
      %v5860 = vadd.f32 0.0, %v5859
      %v5861 = vpop.f32.mrf.mxu0
      %v5862 = vadd.f32 0.0, %v5861
      %5863 = vmatmul.bf16.gmra.mxu0 %v5791
      %v5864 = vpop.f32.mrf.mxu0
      %v5865 = vadd.f32 0.0, %v5864
      %v5866 = vpop.f32.mrf.mxu0
      %v5867 = vadd.f32 0.0, %v5866
      %5868 = vmatmul.bf16.gmra.mxu0 %v5794
      %v5869 = vpop.f32.mrf.mxu0
      %v5870 = vadd.f32 0.0, %v5869
      %v5871 = vpop.f32.mrf.mxu0
      %v5872 = vadd.f32 0.0, %v5871
      %5873 = vmatmul.bf16.gmra.mxu0 %v5797
      %v5874 = vpop.f32.mrf.mxu0
      %v5875 = vadd.f32 0.0, %v5874
      %v5876 = vpop.f32.mrf.mxu0
      %v5877 = vadd.f32 0.0, %v5876
      %5878 = vmatmul.bf16.gmra.mxu0 %v5800
      %v5879 = vpop.f32.mrf.mxu0
      %v5880 = vadd.f32 0.0, %v5879
      %v5881 = vpop.f32.mrf.mxu0
      %v5882 = vadd.f32 0.0, %v5881
      %5883 = vmatmul.bf16.gmra.mxu0 %v5803
      %v5884 = vpop.f32.mrf.mxu0
      %v5885 = vadd.f32 0.0, %v5884
      %v5886 = vpop.f32.mrf.mxu0
      %v5887 = vadd.f32 0.0, %v5886
      %5888 = vmatmul.bf16.gmra.mxu0 %v5806
      %v5889 = vpop.f32.mrf.mxu0
      %v5890 = vadd.f32 0.0, %v5889
      %v5891 = vpop.f32.mrf.mxu0
      %v5892 = vadd.f32 0.0, %v5891
      %5893 = vmatmul.bf16.gmra.mxu0 %v5809
      %v5894 = vpop.f32.mrf.mxu0
      %v5895 = vadd.f32 0.0, %v5894
      %v5896 = vpop.f32.mrf.mxu0
      %v5897 = vadd.f32 0.0, %v5896
      %5898 = vmatmul.bf16.gmra.mxu0 %v5812
      %v5899 = vpop.f32.mrf.mxu0
      %v5900 = vadd.f32 0.0, %v5899
      %v5901 = vpop.f32.mrf.mxu0
      %v5902 = vadd.f32 0.0, %v5901
      %5903 = vmatmul.bf16.gmra.mxu0 %v5815
      %v5904 = vpop.f32.mrf.mxu0
      %v5905 = vadd.f32 0.0, %v5904
      %v5906 = vpop.f32.mrf.mxu0
      %v5907 = vadd.f32 0.0, %v5906
      %5908 = vdwg.mxu0
      %v5941 = vunpack.c.l.b16 %v5286
      %v5942 = vunpack.c.l.b16 %v5287
      %v5943 = vunpack.c.l.b16 %v5288
      %v5944 = vunpack.c.l.b16 %v5289
      %v5945 = vunpack.c.l.b16 %v5290
      %v5946 = vunpack.c.l.b16 %v5291
      %v5947 = vunpack.c.l.b16 %v5292
      %v5948 = vunpack.c.l.b16 %v5293
      %v5949 = vunpack.c.l.b16 %v5294
      %v5950 = vunpack.c.l.b16 %v5295
      %v5951 = vunpack.c.l.b16 %v5296
      %v5952 = vunpack.c.l.b16 %v5297
      %v5953 = vunpack.c.l.b16 %v5298
      %v5954 = vunpack.c.l.b16 %v5299
      %v5955 = vunpack.c.l.b16 %v5300
      %v5956 = vunpack.c.l.b16 %v5301
      %v5957 = vunpack.c.l.b16 %v5302
      %v5958 = vunpack.c.l.b16 %v5303
      %v5959 = vunpack.c.l.b16 %v5304
      %v5960 = vunpack.c.l.b16 %v5305
      %v5961 = vunpack.c.l.b16 %v5306
      %v5962 = vunpack.c.l.b16 %v5307
      %v5963 = vunpack.c.l.b16 %v5308
      %v5964 = vunpack.c.l.b16 %v5309
      %v5965 = vunpack.c.l.b16 %v5310
      %v5966 = vunpack.c.l.b16 %v5311
      %v5967 = vunpack.c.l.b16 %v5312
      %v5968 = vunpack.c.l.b16 %v5313
      %v5969 = vunpack.c.l.b16 %v5314
      %v5970 = vunpack.c.l.b16 %v5315
      %v5971 = vunpack.c.l.b16 %v5316
      %v5972 = vunpack.c.l.b16 %v5317
      %v5973 = vpack.c.b16 %v5942, %v5941
      %v5974 = vpack.c.b16 %v5944, %v5943
      %v5975 = vpack.c.b16 %v5946, %v5945
      %v5976 = vpack.c.b16 %v5948, %v5947
      %v5977 = vpack.c.b16 %v5950, %v5949
      %v5978 = vpack.c.b16 %v5952, %v5951
      %v5979 = vpack.c.b16 %v5954, %v5953
      %v5980 = vpack.c.b16 %v5956, %v5955
      %v5981 = vpack.c.b16 %v5958, %v5957
      %v5982 = vpack.c.b16 %v5960, %v5959
      %v5983 = vpack.c.b16 %v5962, %v5961
      %v5984 = vpack.c.b16 %v5964, %v5963
      %v5985 = vpack.c.b16 %v5966, %v5965
      %v5986 = vpack.c.b16 %v5968, %v5967
      %v5987 = vpack.c.b16 %v5970, %v5969
      %v5988 = vpack.c.b16 %v5972, %v5971
      %v5990 = vsel %vm1295, %v5973, 0
      %v5993 = vsel %vm1295, %v5974, 0
      %v5996 = vsel %vm1295, %v5975, 0
      %v5999 = vsel %vm1295, %v5976, 0
      %v6002 = vsel %vm1295, %v5977, 0
      %v6005 = vsel %vm1295, %v5978, 0
      %v6008 = vsel %vm1295, %v5979, 0
      %v6011 = vsel %vm1295, %v5980, 0
      %v6014 = vsel %vm1295, %v5981, 0
      %v6017 = vsel %vm1295, %v5982, 0
      %v6020 = vsel %vm1295, %v5983, 0
      %v6023 = vsel %vm1295, %v5984, 0
      %v6026 = vsel %vm1295, %v5985, 0
      %v6029 = vsel %vm1295, %v5986, 0
      %v6032 = vsel %vm1295, %v5987, 0
      %v6035 = vsel %vm1295, %v5988, 0
      %v6038 = vsel %vm1344, %v5318, 0
      %6040 = vmatpush.bf16.msra.mxu0 0
      %6041 = vmatpush.bf16.msra.mxu0 0
      %6042 = vmatpush.bf16.msra.mxu0 0
      %6043 = vmatpush.bf16.msra.mxu0 0
      %6044 = vmatpush.bf16.msra.mxu0 0
      %6045 = vmatpush.bf16.msra.mxu0 0
      %6046 = vmatpush.bf16.msra.mxu0 0
      %6047 = vmatpush.bf16.msra.mxu0 %v6038
      %6048 = vmatmul.bf16.gmra.mxu0 %v5990
      %v6049 = vpop.f32.mrf.mxu0
      %v6050 = vadd.f32 %v5830, %v6049
      %v6051 = vpop.f32.mrf.mxu0
      %v6052 = vadd.f32 %v5832, %v6051
      %6053 = vmatmul.bf16.gmra.mxu0 %v5993
      %v6054 = vpop.f32.mrf.mxu0
      %v6055 = vadd.f32 %v5835, %v6054
      %v6056 = vpop.f32.mrf.mxu0
      %v6057 = vadd.f32 %v5837, %v6056
      %6058 = vmatmul.bf16.gmra.mxu0 %v5996
      %v6059 = vpop.f32.mrf.mxu0
      %v6060 = vadd.f32 %v5840, %v6059
      %v6061 = vpop.f32.mrf.mxu0
      %v6062 = vadd.f32 %v5842, %v6061
      %6063 = vmatmul.bf16.gmra.mxu0 %v5999
      %v6064 = vpop.f32.mrf.mxu0
      %v6065 = vadd.f32 %v5845, %v6064
      %v6066 = vpop.f32.mrf.mxu0
      %v6067 = vadd.f32 %v5847, %v6066
      %6068 = vmatmul.bf16.gmra.mxu0 %v6002
      %v6069 = vpop.f32.mrf.mxu0
      %v6070 = vadd.f32 %v5850, %v6069
      %v6071 = vpop.f32.mrf.mxu0
      %v6072 = vadd.f32 %v5852, %v6071
      %6073 = vmatmul.bf16.gmra.mxu0 %v6005
      %v6074 = vpop.f32.mrf.mxu0
      %v6075 = vadd.f32 %v5855, %v6074
      %v6076 = vpop.f32.mrf.mxu0
      %v6077 = vadd.f32 %v5857, %v6076
      %6078 = vmatmul.bf16.gmra.mxu0 %v6008
      %v6079 = vpop.f32.mrf.mxu0
      %v6080 = vadd.f32 %v5860, %v6079
      %v6081 = vpop.f32.mrf.mxu0
      %v6082 = vadd.f32 %v5862, %v6081
      %6083 = vmatmul.bf16.gmra.mxu0 %v6011
      %v6084 = vpop.f32.mrf.mxu0
      %v6085 = vadd.f32 %v5865, %v6084
      %v6086 = vpop.f32.mrf.mxu0
      %v6087 = vadd.f32 %v5867, %v6086
      %6088 = vmatmul.bf16.gmra.mxu0 %v6014
      %v6089 = vpop.f32.mrf.mxu0
      %v6090 = vadd.f32 %v5870, %v6089
      %v6091 = vpop.f32.mrf.mxu0
      %v6092 = vadd.f32 %v5872, %v6091
      %6093 = vmatmul.bf16.gmra.mxu0 %v6017
      %v6094 = vpop.f32.mrf.mxu0
      %v6095 = vadd.f32 %v5875, %v6094
      %v6096 = vpop.f32.mrf.mxu0
      %v6097 = vadd.f32 %v5877, %v6096
      %6098 = vmatmul.bf16.gmra.mxu0 %v6020
      %v6099 = vpop.f32.mrf.mxu0
      %v6100 = vadd.f32 %v5880, %v6099
      %v6101 = vpop.f32.mrf.mxu0
      %v6102 = vadd.f32 %v5882, %v6101
      %6103 = vmatmul.bf16.gmra.mxu0 %v6023
      %v6104 = vpop.f32.mrf.mxu0
      %v6105 = vadd.f32 %v5885, %v6104
      %v6106 = vpop.f32.mrf.mxu0
      %v6107 = vadd.f32 %v5887, %v6106
      %6108 = vmatmul.bf16.gmra.mxu0 %v6026
      %v6109 = vpop.f32.mrf.mxu0
      %v6110 = vadd.f32 %v5890, %v6109
      %v6111 = vpop.f32.mrf.mxu0
      %v6112 = vadd.f32 %v5892, %v6111
      %6113 = vmatmul.bf16.gmra.mxu0 %v6029
      %v6114 = vpop.f32.mrf.mxu0
      %v6115 = vadd.f32 %v5895, %v6114
      %v6116 = vpop.f32.mrf.mxu0
      %v6117 = vadd.f32 %v5897, %v6116
      %6118 = vmatmul.bf16.gmra.mxu0 %v6032
      %v6119 = vpop.f32.mrf.mxu0
      %v6120 = vadd.f32 %v5900, %v6119
      %v6121 = vpop.f32.mrf.mxu0
      %v6122 = vadd.f32 %v5902, %v6121
      %6123 = vmatmul.bf16.gmra.mxu0 %v6035
      %v6124 = vpop.f32.mrf.mxu0
      %v6125 = vadd.f32 %v5905, %v6124
      %v6126 = vpop.f32.mrf.mxu0
      %v6127 = vadd.f32 %v5907, %v6126
      %6128 = vdwg.mxu0
      %v6129 = vld [vmem:[#allocation2] sm:$0xe]
      %v6130 = vld [vmem:[#allocation2 + $0xc] sm:$0xe]
      %v6131 = vld [vmem:[#allocation2 + $0x18] sm:$0xe]
      %v6132 = vld [vmem:[#allocation2 + $0x24] sm:$0xe]
      %v6133 = vld [vmem:[#allocation2 + $0x30] sm:$0xe]
      %v6134 = vld [vmem:[#allocation2 + $0x3c] sm:$0xe]
      %v6135 = vld [vmem:[#allocation2 + $0x48] sm:$0xe]
      %v6136 = vld [vmem:[#allocation2 + $0x54] sm:$0xe]
      %v6137 = vld [vmem:[#allocation2 + $0x60] sm:$0xe]
      %v6138 = vld [vmem:[#allocation2 + $0x6c] sm:$0xe]
      %v6139 = vld [vmem:[#allocation2 + $0x78] sm:$0xe]
      %v6140 = vld [vmem:[#allocation2 + $0x84] sm:$0xe]
      %v6141 = vld [vmem:[#allocation2 + $0x90] sm:$0xe]
      %v6142 = vld [vmem:[#allocation2 + $0x9c] sm:$0xe]
      %v6143 = vld [vmem:[#allocation2 + $0xa8] sm:$0xe]
      %v6144 = vld [vmem:[#allocation2 + $0xb4] sm:$0xe]
      %v6177 = vrot.slane %v6129, 5
      %v6178 = vrot.slane %v6177, 4
      %v6179 = vrot.slane %v5287, 5
      %v6180 = vsel %vm1707, %v6178, %v6179
      %v6181 = vrot.slane %v6179, 4
      %v6182 = vrot.slane %v5319, 5
      %v6183 = vsel %vm1707, %v6181, %v6182
      %v6184 = vrot.slane %v6130, 5
      %v6185 = vrot.slane %v6184, 4
      %v6186 = vrot.slane %v5289, 5
      %v6187 = vsel %vm1707, %v6185, %v6186
      %v6188 = vrot.slane %v6186, 4
      %v6189 = vrot.slane %v5320, 5
      %v6190 = vsel %vm1707, %v6188, %v6189
      %v6191 = vrot.slane %v6131, 5
      %v6192 = vrot.slane %v6191, 4
      %v6193 = vrot.slane %v5291, 5
      %v6194 = vsel %vm1707, %v6192, %v6193
      %v6195 = vrot.slane %v6193, 4
      %v6196 = vrot.slane %v5321, 5
      %v6197 = vsel %vm1707, %v6195, %v6196
      %v6198 = vrot.slane %v6132, 5
      %v6199 = vrot.slane %v6198, 4
      %v6200 = vrot.slane %v5293, 5
      %v6201 = vsel %vm1707, %v6199, %v6200
      %v6202 = vrot.slane %v6200, 4
      %v6203 = vrot.slane %v5322, 5
      %v6204 = vsel %vm1707, %v6202, %v6203
      %v6205 = vrot.slane %v6133, 5
      %v6206 = vrot.slane %v6205, 4
      %v6207 = vrot.slane %v5295, 5
      %v6208 = vsel %vm1707, %v6206, %v6207
      %v6209 = vrot.slane %v6207, 4
      %v6210 = vrot.slane %v5323, 5
      %v6211 = vsel %vm1707, %v6209, %v6210
      %v6212 = vrot.slane %v6134, 5
      %v6213 = vrot.slane %v6212, 4
      %v6214 = vrot.slane %v5297, 5
      %v6215 = vsel %vm1707, %v6213, %v6214
      %v6216 = vrot.slane %v6214, 4
      %v6217 = vrot.slane %v5324, 5
      %v6218 = vsel %vm1707, %v6216, %v6217
      %v6219 = vrot.slane %v6135, 5
      %v6220 = vrot.slane %v6219, 4
      %v6221 = vrot.slane %v5299, 5
      %v6222 = vsel %vm1707, %v6220, %v6221
      %v6223 = vrot.slane %v6221, 4
      %v6224 = vrot.slane %v5325, 5
      %v6225 = vsel %vm1707, %v6223, %v6224
      %v6226 = vrot.slane %v6136, 5
      %v6227 = vrot.slane %v6226, 4
      %v6228 = vrot.slane %v5301, 5
      %v6229 = vsel %vm1707, %v6227, %v6228
      %v6230 = vrot.slane %v6228, 4
      %v6231 = vrot.slane %v5326, 5
      %v6232 = vsel %vm1707, %v6230, %v6231
      %v6233 = vrot.slane %v6137, 5
      %v6234 = vrot.slane %v6233, 4
      %v6235 = vrot.slane %v5303, 5
      %v6236 = vsel %vm1707, %v6234, %v6235
      %v6237 = vrot.slane %v6235, 4
      %v6238 = vrot.slane %v5327, 5
      %v6239 = vsel %vm1707, %v6237, %v6238
      %v6240 = vrot.slane %v6138, 5
      %v6241 = vrot.slane %v6240, 4
      %v6242 = vrot.slane %v5305, 5
      %v6243 = vsel %vm1707, %v6241, %v6242
      %v6244 = vrot.slane %v6242, 4
      %v6245 = vrot.slane %v5328, 5
      %v6246 = vsel %vm1707, %v6244, %v6245
      %v6247 = vrot.slane %v6139, 5
      %v6248 = vrot.slane %v6247, 4
      %v6249 = vrot.slane %v5307, 5
      %v6250 = vsel %vm1707, %v6248, %v6249
      %v6251 = vrot.slane %v6249, 4
      %v6252 = vrot.slane %v5329, 5
      %v6253 = vsel %vm1707, %v6251, %v6252
      %v6254 = vrot.slane %v6140, 5
      %v6255 = vrot.slane %v6254, 4
      %v6256 = vrot.slane %v5309, 5
      %v6257 = vsel %vm1707, %v6255, %v6256
      %v6258 = vrot.slane %v6256, 4
      %v6259 = vrot.slane %v5330, 5
      %v6260 = vsel %vm1707, %v6258, %v6259
      %v6261 = vrot.slane %v6141, 5
      %v6262 = vrot.slane %v6261, 4
      %v6263 = vrot.slane %v5311, 5
      %v6264 = vsel %vm1707, %v6262, %v6263
      %v6265 = vrot.slane %v6263, 4
      %v6266 = vrot.slane %v5331, 5
      %v6267 = vsel %vm1707, %v6265, %v6266
      %v6268 = vrot.slane %v6142, 5
      %v6269 = vrot.slane %v6268, 4
      %v6270 = vrot.slane %v5313, 5
      %v6271 = vsel %vm1707, %v6269, %v6270
      %v6272 = vrot.slane %v6270, 4
      %v6273 = vrot.slane %v5332, 5
      %v6274 = vsel %vm1707, %v6272, %v6273
      %v6275 = vrot.slane %v6143, 5
      %v6276 = vrot.slane %v6275, 4
      %v6277 = vrot.slane %v5315, 5
      %v6278 = vsel %vm1707, %v6276, %v6277
      %v6279 = vrot.slane %v6277, 4
      %v6280 = vrot.slane %v5333, 5
      %v6281 = vsel %vm1707, %v6279, %v6280
      %v6282 = vrot.slane %v6144, 5
      %v6283 = vrot.slane %v6282, 4
      %v6284 = vrot.slane %v5317, 5
      %v6285 = vsel %vm1707, %v6283, %v6284
      %v6286 = vrot.slane %v6284, 4
      %v6287 = vrot.slane %v5334, 5
      %v6288 = vsel %vm1707, %v6286, %v6287
      %s6289 = scalar_lea.vmem %s4, 4
      %v6290 = vld [vmem:[%s6289] sm:$0x3]
      %v6291 = vunpack.c.l.b16 %v6180
      %v6292 = vunpack.c.l.b16 %v6183
      %v6293 = vunpack.c.l.b16 %v6187
      %v6294 = vunpack.c.l.b16 %v6190
      %v6295 = vunpack.c.l.b16 %v6194
      %v6296 = vunpack.c.l.b16 %v6197
      %v6297 = vunpack.c.l.b16 %v6201
      %v6298 = vunpack.c.l.b16 %v6204
      %v6299 = vunpack.c.l.b16 %v6208
      %v6300 = vunpack.c.l.b16 %v6211
      %v6301 = vunpack.c.l.b16 %v6215
      %v6302 = vunpack.c.l.b16 %v6218
      %v6303 = vunpack.c.l.b16 %v6222
      %v6304 = vunpack.c.l.b16 %v6225
      %v6305 = vunpack.c.l.b16 %v6229
      %v6306 = vunpack.c.l.b16 %v6232
      %v6307 = vunpack.c.l.b16 %v6236
      %v6308 = vunpack.c.l.b16 %v6239
      %v6309 = vunpack.c.l.b16 %v6243
      %v6310 = vunpack.c.l.b16 %v6246
      %v6311 = vunpack.c.l.b16 %v6250
      %v6312 = vunpack.c.l.b16 %v6253
      %v6313 = vunpack.c.l.b16 %v6257
      %v6314 = vunpack.c.l.b16 %v6260
      %v6315 = vunpack.c.l.b16 %v6264
      %v6316 = vunpack.c.l.b16 %v6267
      %v6317 = vunpack.c.l.b16 %v6271
      %v6318 = vunpack.c.l.b16 %v6274
      %v6319 = vunpack.c.l.b16 %v6278
      %v6320 = vunpack.c.l.b16 %v6281
      %v6321 = vunpack.c.l.b16 %v6285
      %v6322 = vunpack.c.l.b16 %v6288
      %v6323 = vpack.c.b16 %v6292, %v6291
      %v6324 = vpack.c.b16 %v6294, %v6293
      %v6325 = vpack.c.b16 %v6296, %v6295
      %v6326 = vpack.c.b16 %v6298, %v6297
      %v6327 = vpack.c.b16 %v6300, %v6299
      %v6328 = vpack.c.b16 %v6302, %v6301
      %v6329 = vpack.c.b16 %v6304, %v6303
      %v6330 = vpack.c.b16 %v6306, %v6305
      %v6331 = vpack.c.b16 %v6308, %v6307
      %v6332 = vpack.c.b16 %v6310, %v6309
      %v6333 = vpack.c.b16 %v6312, %v6311
      %v6334 = vpack.c.b16 %v6314, %v6313
      %v6335 = vpack.c.b16 %v6316, %v6315
      %v6336 = vpack.c.b16 %v6318, %v6317
      %v6337 = vpack.c.b16 %v6320, %v6319
      %v6338 = vpack.c.b16 %v6322, %v6321
      %v6340 = vsel %vm1295, %v6323, 0
      %v6343 = vsel %vm1295, %v6324, 0
      %v6346 = vsel %vm1295, %v6325, 0
      %v6349 = vsel %vm1295, %v6326, 0
      %v6352 = vsel %vm1295, %v6327, 0
      %v6355 = vsel %vm1295, %v6328, 0
      %v6358 = vsel %vm1295, %v6329, 0
      %v6361 = vsel %vm1295, %v6330, 0
      %v6364 = vsel %vm1295, %v6331, 0
      %v6367 = vsel %vm1295, %v6332, 0
      %v6370 = vsel %vm1295, %v6333, 0
      %v6373 = vsel %vm1295, %v6334, 0
      %v6376 = vsel %vm1295, %v6335, 0
      %v6379 = vsel %vm1295, %v6336, 0
      %v6382 = vsel %vm1295, %v6337, 0
      %v6385 = vsel %vm1295, %v6338, 0
      %v6388 = vsel %vm1344, %v6290, 0
      %6390 = vmatpush.bf16.msra.mxu0 0
      %6391 = vmatpush.bf16.msra.mxu0 0
      %6392 = vmatpush.bf16.msra.mxu0 0
      %6393 = vmatpush.bf16.msra.mxu0 0
      %6394 = vmatpush.bf16.msra.mxu0 0
      %6395 = vmatpush.bf16.msra.mxu0 0
      %6396 = vmatpush.bf16.msra.mxu0 0
      %6397 = vmatpush.bf16.msra.mxu0 %v6388
      %6398 = vmatmul.bf16.gmra.mxu0 %v6340
      %v6399 = vpop.f32.mrf.mxu0
      %v6400 = vadd.f32 0.0, %v6399
      %v6401 = vpop.f32.mrf.mxu0
      %v6402 = vadd.f32 0.0, %v6401
      %6403 = vmatmul.bf16.gmra.mxu0 %v6343
      %v6404 = vpop.f32.mrf.mxu0
      %v6405 = vadd.f32 0.0, %v6404
      %v6406 = vpop.f32.mrf.mxu0
      %v6407 = vadd.f32 0.0, %v6406
      %6408 = vmatmul.bf16.gmra.mxu0 %v6346
      %v6409 = vpop.f32.mrf.mxu0
      %v6410 = vadd.f32 0.0, %v6409
      %v6411 = vpop.f32.mrf.mxu0
      %v6412 = vadd.f32 0.0, %v6411
      %6413 = vmatmul.bf16.gmra.mxu0 %v6349
      %v6414 = vpop.f32.mrf.mxu0
      %v6415 = vadd.f32 0.0, %v6414
      %v6416 = vpop.f32.mrf.mxu0
      %v6417 = vadd.f32 0.0, %v6416
      %6418 = vmatmul.bf16.gmra.mxu0 %v6352
      %v6419 = vpop.f32.mrf.mxu0
      %v6420 = vadd.f32 0.0, %v6419
      %v6421 = vpop.f32.mrf.mxu0
      %v6422 = vadd.f32 0.0, %v6421
      %6423 = vmatmul.bf16.gmra.mxu0 %v6355
      %v6424 = vpop.f32.mrf.mxu0
      %v6425 = vadd.f32 0.0, %v6424
      %v6426 = vpop.f32.mrf.mxu0
      %v6427 = vadd.f32 0.0, %v6426
      %6428 = vmatmul.bf16.gmra.mxu0 %v6358
      %v6429 = vpop.f32.mrf.mxu0
      %v6430 = vadd.f32 0.0, %v6429
      %v6431 = vpop.f32.mrf.mxu0
      %v6432 = vadd.f32 0.0, %v6431
      %6433 = vmatmul.bf16.gmra.mxu0 %v6361
      %v6434 = vpop.f32.mrf.mxu0
      %v6435 = vadd.f32 0.0, %v6434
      %v6436 = vpop.f32.mrf.mxu0
      %v6437 = vadd.f32 0.0, %v6436
      %6438 = vmatmul.bf16.gmra.mxu0 %v6364
      %v6439 = vpop.f32.mrf.mxu0
      %v6440 = vadd.f32 0.0, %v6439
      %v6441 = vpop.f32.mrf.mxu0
      %v6442 = vadd.f32 0.0, %v6441
      %6443 = vmatmul.bf16.gmra.mxu0 %v6367
      %v6444 = vpop.f32.mrf.mxu0
      %v6445 = vadd.f32 0.0, %v6444
      %v6446 = vpop.f32.mrf.mxu0
      %v6447 = vadd.f32 0.0, %v6446
      %6448 = vmatmul.bf16.gmra.mxu0 %v6370
      %v6449 = vpop.f32.mrf.mxu0
      %v6450 = vadd.f32 0.0, %v6449
      %v6451 = vpop.f32.mrf.mxu0
      %v6452 = vadd.f32 0.0, %v6451
      %6453 = vmatmul.bf16.gmra.mxu0 %v6373
      %v6454 = vpop.f32.mrf.mxu0
      %v6455 = vadd.f32 0.0, %v6454
      %v6456 = vpop.f32.mrf.mxu0
      %v6457 = vadd.f32 0.0, %v6456
      %6458 = vmatmul.bf16.gmra.mxu0 %v6376
      %v6459 = vpop.f32.mrf.mxu0
      %v6460 = vadd.f32 0.0, %v6459
      %v6461 = vpop.f32.mrf.mxu0
      %v6462 = vadd.f32 0.0, %v6461
      %6463 = vmatmul.bf16.gmra.mxu0 %v6379
      %v6464 = vpop.f32.mrf.mxu0
      %v6465 = vadd.f32 0.0, %v6464
      %v6466 = vpop.f32.mrf.mxu0
      %v6467 = vadd.f32 0.0, %v6466
      %6468 = vmatmul.bf16.gmra.mxu0 %v6382
      %v6469 = vpop.f32.mrf.mxu0
      %v6470 = vadd.f32 0.0, %v6469
      %v6471 = vpop.f32.mrf.mxu0
      %v6472 = vadd.f32 0.0, %v6471
      %6473 = vmatmul.bf16.gmra.mxu0 %v6385
      %v6474 = vpop.f32.mrf.mxu0
      %v6475 = vadd.f32 0.0, %v6474
      %v6476 = vpop.f32.mrf.mxu0
      %v6477 = vadd.f32 0.0, %v6476
      %6478 = vdwg.mxu0
      %v6479 = vadd.f32 %v6050, %v6400
      %v6480 = vadd.f32 %v6052, %v6402
      %v6481 = vadd.f32 %v6055, %v6405
      %v6482 = vadd.f32 %v6057, %v6407
      %v6483 = vadd.f32 %v6060, %v6410
      %v6484 = vadd.f32 %v6062, %v6412
      %v6485 = vadd.f32 %v6065, %v6415
      %v6486 = vadd.f32 %v6067, %v6417
      %v6487 = vadd.f32 %v6070, %v6420
      %v6488 = vadd.f32 %v6072, %v6422
      %v6489 = vadd.f32 %v6075, %v6425
      %v6490 = vadd.f32 %v6077, %v6427
      %v6491 = vadd.f32 %v6080, %v6430
      %v6492 = vadd.f32 %v6082, %v6432
      %v6493 = vadd.f32 %v6085, %v6435
      %v6494 = vadd.f32 %v6087, %v6437
      %v6495 = vadd.f32 %v6090, %v6440
      %v6496 = vadd.f32 %v6092, %v6442
      %v6497 = vadd.f32 %v6095, %v6445
      %v6498 = vadd.f32 %v6097, %v6447
      %v6499 = vadd.f32 %v6100, %v6450
      %v6500 = vadd.f32 %v6102, %v6452
      %v6501 = vadd.f32 %v6105, %v6455
      %v6502 = vadd.f32 %v6107, %v6457
      %v6503 = vadd.f32 %v6110, %v6460
      %v6504 = vadd.f32 %v6112, %v6462
      %v6505 = vadd.f32 %v6115, %v6465
      %v6506 = vadd.f32 %v6117, %v6467
      %v6507 = vadd.f32 %v6120, %v6470
      %v6508 = vadd.f32 %v6122, %v6472
      %v6509 = vadd.f32 %v6125, %v6475
      %v6510 = vadd.f32 %v6127, %v6477
      %v6511 = vld [vmem:[%s691] sm:$0xf]
      %v6512 = vld [vmem:[%s691 + $0x4] sm:$0xf]
      %v6513 = vld [vmem:[%s691 + $0xc] sm:$0xf]
      %v6514 = vld [vmem:[%s691 + $0x10] sm:$0xf]
      %v6515 = vld [vmem:[%s691 + $0x18] sm:$0xf]
      %v6516 = vld [vmem:[%s691 + $0x1c] sm:$0xf]
      %v6517 = vld [vmem:[%s691 + $0x24] sm:$0xf]
      %v6518 = vld [vmem:[%s691 + $0x28] sm:$0xf]
      %v6519 = vld [vmem:[%s691 + $0x30] sm:$0xf]
      %v6520 = vld [vmem:[%s691 + $0x34] sm:$0xf]
      %v6521 = vld [vmem:[%s691 + $0x3c] sm:$0xf]
      %v6522 = vld [vmem:[%s691 + $0x40] sm:$0xf]
      %v6523 = vld [vmem:[%s691 + $0x48] sm:$0xf]
      %v6524 = vld [vmem:[%s691 + $0x4c] sm:$0xf]
      %v6525 = vld [vmem:[%s691 + $0x54] sm:$0xf]
      %v6526 = vld [vmem:[%s691 + $0x58] sm:$0xf]
      %v6527 = vld [vmem:[%s691 + $0x60] sm:$0xf]
      %v6528 = vld [vmem:[%s691 + $0x64] sm:$0xf]
      %v6529 = vld [vmem:[%s691 + $0x6c] sm:$0xf]
      %v6530 = vld [vmem:[%s691 + $0x70] sm:$0xf]
      %v6531 = vld [vmem:[%s691 + $0x78] sm:$0xf]
      %v6532 = vld [vmem:[%s691 + $0x7c] sm:$0xf]
      %v6533 = vld [vmem:[%s691 + $0x84] sm:$0xf]
      %v6534 = vld [vmem:[%s691 + $0x88] sm:$0xf]
      %v6535 = vld [vmem:[%s691 + $0x90] sm:$0xf]
      %v6536 = vld [vmem:[%s691 + $0x94] sm:$0xf]
      %v6537 = vld [vmem:[%s691 + $0x9c] sm:$0xf]
      %v6538 = vld [vmem:[%s691 + $0xa0] sm:$0xf]
      %v6539 = vld [vmem:[%s691 + $0xa8] sm:$0xf]
      %v6540 = vld [vmem:[%s691 + $0xac] sm:$0xf]
      %v6541 = vld [vmem:[%s691 + $0xb4] sm:$0xf]
      %v6542 = vld [vmem:[%s691 + $0xb8] sm:$0xf]
      %s6543 = scalar_lea.vmem %s4, 6
      %v6544 = vld [vmem:[%s6543] sm:$0x3]
      %v6577 = vunpack.c.l.b16 %v6511
      %v6578 = vunpack.c.l.b16 %v6512
      %v6579 = vunpack.c.l.b16 %v6513
      %v6580 = vunpack.c.l.b16 %v6514
      %v6581 = vunpack.c.l.b16 %v6515
      %v6582 = vunpack.c.l.b16 %v6516
      %v6583 = vunpack.c.l.b16 %v6517
      %v6584 = vunpack.c.l.b16 %v6518
      %v6585 = vunpack.c.l.b16 %v6519
      %v6586 = vunpack.c.l.b16 %v6520
      %v6587 = vunpack.c.l.b16 %v6521
      %v6588 = vunpack.c.l.b16 %v6522
      %v6589 = vunpack.c.l.b16 %v6523
      %v6590 = vunpack.c.l.b16 %v6524
      %v6591 = vunpack.c.l.b16 %v6525
      %v6592 = vunpack.c.l.b16 %v6526
      %v6593 = vunpack.c.l.b16 %v6527
      %v6594 = vunpack.c.l.b16 %v6528
      %v6595 = vunpack.c.l.b16 %v6529
      %v6596 = vunpack.c.l.b16 %v6530
      %v6597 = vunpack.c.l.b16 %v6531
      %v6598 = vunpack.c.l.b16 %v6532
      %v6599 = vunpack.c.l.b16 %v6533
      %v6600 = vunpack.c.l.b16 %v6534
      %v6601 = vunpack.c.l.b16 %v6535
      %v6602 = vunpack.c.l.b16 %v6536
      %v6603 = vunpack.c.l.b16 %v6537
      %v6604 = vunpack.c.l.b16 %v6538
      %v6605 = vunpack.c.l.b16 %v6539
      %v6606 = vunpack.c.l.b16 %v6540
      %v6607 = vunpack.c.l.b16 %v6541
      %v6608 = vunpack.c.l.b16 %v6542
      %v6609 = vpack.c.b16 %v6578, %v6577
      %v6610 = vpack.c.b16 %v6580, %v6579
      %v6611 = vpack.c.b16 %v6582, %v6581
      %v6612 = vpack.c.b16 %v6584, %v6583
      %v6613 = vpack.c.b16 %v6586, %v6585
      %v6614 = vpack.c.b16 %v6588, %v6587
      %v6615 = vpack.c.b16 %v6590, %v6589
      %v6616 = vpack.c.b16 %v6592, %v6591
      %v6617 = vpack.c.b16 %v6594, %v6593
      %v6618 = vpack.c.b16 %v6596, %v6595
      %v6619 = vpack.c.b16 %v6598, %v6597
      %v6620 = vpack.c.b16 %v6600, %v6599
      %v6621 = vpack.c.b16 %v6602, %v6601
      %v6622 = vpack.c.b16 %v6604, %v6603
      %v6623 = vpack.c.b16 %v6606, %v6605
      %v6624 = vpack.c.b16 %v6608, %v6607
      %v6626 = vsel %vm1295, %v6609, 0
      %v6629 = vsel %vm1295, %v6610, 0
      %v6632 = vsel %vm1295, %v6611, 0
      %v6635 = vsel %vm1295, %v6612, 0
      %v6638 = vsel %vm1295, %v6613, 0
      %v6641 = vsel %vm1295, %v6614, 0
      %v6644 = vsel %vm1295, %v6615, 0
      %v6647 = vsel %vm1295, %v6616, 0
      %v6650 = vsel %vm1295, %v6617, 0
      %v6653 = vsel %vm1295, %v6618, 0
      %v6656 = vsel %vm1295, %v6619, 0
      %v6659 = vsel %vm1295, %v6620, 0
      %v6662 = vsel %vm1295, %v6621, 0
      %v6665 = vsel %vm1295, %v6622, 0
      %v6668 = vsel %vm1295, %v6623, 0
      %v6671 = vsel %vm1295, %v6624, 0
      %v6674 = vsel %vm1344, %v6544, 0
      %6676 = vmatpush.bf16.msra.mxu0 0
      %6677 = vmatpush.bf16.msra.mxu0 0
      %6678 = vmatpush.bf16.msra.mxu0 0
      %6679 = vmatpush.bf16.msra.mxu0 0
      %6680 = vmatpush.bf16.msra.mxu0 0
      %6681 = vmatpush.bf16.msra.mxu0 0
      %6682 = vmatpush.bf16.msra.mxu0 0
      %6683 = vmatpush.bf16.msra.mxu0 %v6674
      %6684 = vmatmul.bf16.gmra.mxu0 %v6626
      %v6685 = vpop.f32.mrf.mxu0
      %v6686 = vadd.f32 0.0, %v6685
      %v6687 = vpop.f32.mrf.mxu0
      %v6688 = vadd.f32 0.0, %v6687
      %6689 = vmatmul.bf16.gmra.mxu0 %v6629
      %v6690 = vpop.f32.mrf.mxu0
      %v6691 = vadd.f32 0.0, %v6690
      %v6692 = vpop.f32.mrf.mxu0
      %v6693 = vadd.f32 0.0, %v6692
      %6694 = vmatmul.bf16.gmra.mxu0 %v6632
      %v6695 = vpop.f32.mrf.mxu0
      %v6696 = vadd.f32 0.0, %v6695
      %v6697 = vpop.f32.mrf.mxu0
      %v6698 = vadd.f32 0.0, %v6697
      %6699 = vmatmul.bf16.gmra.mxu0 %v6635
      %v6700 = vpop.f32.mrf.mxu0
      %v6701 = vadd.f32 0.0, %v6700
      %v6702 = vpop.f32.mrf.mxu0
      %v6703 = vadd.f32 0.0, %v6702
      %6704 = vmatmul.bf16.gmra.mxu0 %v6638
      %v6705 = vpop.f32.mrf.mxu0
      %v6706 = vadd.f32 0.0, %v6705
      %v6707 = vpop.f32.mrf.mxu0
      %v6708 = vadd.f32 0.0, %v6707
      %6709 = vmatmul.bf16.gmra.mxu0 %v6641
      %v6710 = vpop.f32.mrf.mxu0
      %v6711 = vadd.f32 0.0, %v6710
      %v6712 = vpop.f32.mrf.mxu0
      %v6713 = vadd.f32 0.0, %v6712
      %6714 = vmatmul.bf16.gmra.mxu0 %v6644
      %v6715 = vpop.f32.mrf.mxu0
      %v6716 = vadd.f32 0.0, %v6715
      %v6717 = vpop.f32.mrf.mxu0
      %v6718 = vadd.f32 0.0, %v6717
      %6719 = vmatmul.bf16.gmra.mxu0 %v6647
      %v6720 = vpop.f32.mrf.mxu0
      %v6721 = vadd.f32 0.0, %v6720
      %v6722 = vpop.f32.mrf.mxu0
      %v6723 = vadd.f32 0.0, %v6722
      %6724 = vmatmul.bf16.gmra.mxu0 %v6650
      %v6725 = vpop.f32.mrf.mxu0
      %v6726 = vadd.f32 0.0, %v6725
      %v6727 = vpop.f32.mrf.mxu0
      %v6728 = vadd.f32 0.0, %v6727
      %6729 = vmatmul.bf16.gmra.mxu0 %v6653
      %v6730 = vpop.f32.mrf.mxu0
      %v6731 = vadd.f32 0.0, %v6730
      %v6732 = vpop.f32.mrf.mxu0
      %v6733 = vadd.f32 0.0, %v6732
      %6734 = vmatmul.bf16.gmra.mxu0 %v6656
      %v6735 = vpop.f32.mrf.mxu0
      %v6736 = vadd.f32 0.0, %v6735
      %v6737 = vpop.f32.mrf.mxu0
      %v6738 = vadd.f32 0.0, %v6737
      %6739 = vmatmul.bf16.gmra.mxu0 %v6659
      %v6740 = vpop.f32.mrf.mxu0
      %v6741 = vadd.f32 0.0, %v6740
      %v6742 = vpop.f32.mrf.mxu0
      %v6743 = vadd.f32 0.0, %v6742
      %6744 = vmatmul.bf16.gmra.mxu0 %v6662
      %v6745 = vpop.f32.mrf.mxu0
      %v6746 = vadd.f32 0.0, %v6745
      %v6747 = vpop.f32.mrf.mxu0
      %v6748 = vadd.f32 0.0, %v6747
      %6749 = vmatmul.bf16.gmra.mxu0 %v6665
      %v6750 = vpop.f32.mrf.mxu0
      %v6751 = vadd.f32 0.0, %v6750
      %v6752 = vpop.f32.mrf.mxu0
      %v6753 = vadd.f32 0.0, %v6752
      %6754 = vmatmul.bf16.gmra.mxu0 %v6668
      %v6755 = vpop.f32.mrf.mxu0
      %v6756 = vadd.f32 0.0, %v6755
      %v6757 = vpop.f32.mrf.mxu0
      %v6758 = vadd.f32 0.0, %v6757
      %6759 = vmatmul.bf16.gmra.mxu0 %v6671
      %v6760 = vpop.f32.mrf.mxu0
      %v6761 = vadd.f32 0.0, %v6760
      %v6762 = vpop.f32.mrf.mxu0
      %v6763 = vadd.f32 0.0, %v6762
      %6764 = vdwg.mxu0
      %v6765 = vadd.f32 %v6479, %v6686
      %v6766 = vadd.f32 %v6480, %v6688
      %v6767 = vadd.f32 %v6481, %v6691
      %v6768 = vadd.f32 %v6482, %v6693
      %v6769 = vadd.f32 %v6483, %v6696
      %v6770 = vadd.f32 %v6484, %v6698
      %v6771 = vadd.f32 %v6485, %v6701
      %v6772 = vadd.f32 %v6486, %v6703
      %v6773 = vadd.f32 %v6487, %v6706
      %v6774 = vadd.f32 %v6488, %v6708
      %v6775 = vadd.f32 %v6489, %v6711
      %v6776 = vadd.f32 %v6490, %v6713
      %v6777 = vadd.f32 %v6491, %v6716
      %v6778 = vadd.f32 %v6492, %v6718
      %v6779 = vadd.f32 %v6493, %v6721
      %v6780 = vadd.f32 %v6494, %v6723
      %v6781 = vadd.f32 %v6495, %v6726
      %v6782 = vadd.f32 %v6496, %v6728
      %v6783 = vadd.f32 %v6497, %v6731
      %v6784 = vadd.f32 %v6498, %v6733
      %v6785 = vadd.f32 %v6499, %v6736
      %v6786 = vadd.f32 %v6500, %v6738
      %v6787 = vadd.f32 %v6501, %v6741
      %v6788 = vadd.f32 %v6502, %v6743
      %v6789 = vadd.f32 %v6503, %v6746
      %v6790 = vadd.f32 %v6504, %v6748
      %v6791 = vadd.f32 %v6505, %v6751
      %v6792 = vadd.f32 %v6506, %v6753
      %v6793 = vadd.f32 %v6507, %v6756
      %v6794 = vadd.f32 %v6508, %v6758
      %v6795 = vadd.f32 %v6509, %v6761
      %v6796 = vadd.f32 %v6510, %v6763
      %v6797 = vld [vmem:[%s691] sm:$0xf]
      %v6798 = vld [vmem:[%s691 + $0x4] sm:$0xf]
      %v6799 = vld [vmem:[%s691 + $0x8] sm:$0x1]
      %v6800 = vld [vmem:[%s691 + $0xc] sm:$0xf]
      %v6801 = vld [vmem:[%s691 + $0x10] sm:$0xf]
      %v6802 = vld [vmem:[%s691 + $0x14] sm:$0x1]
      %v6803 = vld [vmem:[%s691 + $0x18] sm:$0xf]
      %v6804 = vld [vmem:[%s691 + $0x1c] sm:$0xf]
      %v6805 = vld [vmem:[%s691 + $0x20] sm:$0x1]
      %v6806 = vld [vmem:[%s691 + $0x24] sm:$0xf]
      %v6807 = vld [vmem:[%s691 + $0x28] sm:$0xf]
      %v6808 = vld [vmem:[%s691 + $0x2c] sm:$0x1]
      %v6809 = vld [vmem:[%s691 + $0x30] sm:$0xf]
      %v6810 = vld [vmem:[%s691 + $0x34] sm:$0xf]
      %v6811 = vld [vmem:[%s691 + $0x38] sm:$0x1]
      %v6812 = vld [vmem:[%s691 + $0x3c] sm:$0xf]
      %v6813 = vld [vmem:[%s691 + $0x40] sm:$0xf]
      %v6814 = vld [vmem:[%s691 + $0x44] sm:$0x1]
      %v6815 = vld [vmem:[%s691 + $0x48] sm:$0xf]
      %v6816 = vld [vmem:[%s691 + $0x4c] sm:$0xf]
      %v6817 = vld [vmem:[%s691 + $0x50] sm:$0x1]
      %v6818 = vld [vmem:[%s691 + $0x54] sm:$0xf]
      %v6819 = vld [vmem:[%s691 + $0x58] sm:$0xf]
      %v6820 = vld [vmem:[%s691 + $0x5c] sm:$0x1]
      %v6821 = vld [vmem:[%s691 + $0x60] sm:$0xf]
      %v6822 = vld [vmem:[%s691 + $0x64] sm:$0xf]
      %v6823 = vld [vmem:[%s691 + $0x68] sm:$0x1]
      %v6824 = vld [vmem:[%s691 + $0x6c] sm:$0xf]
      %v6825 = vld [vmem:[%s691 + $0x70] sm:$0xf]
      %v6826 = vld [vmem:[%s691 + $0x74] sm:$0x1]
      %v6827 = vld [vmem:[%s691 + $0x78] sm:$0xf]
      %v6828 = vld [vmem:[%s691 + $0x7c] sm:$0xf]
      %v6829 = vld [vmem:[%s691 + $0x80] sm:$0x1]
      %v6830 = vld [vmem:[%s691 + $0x84] sm:$0xf]
      %v6831 = vld [vmem:[%s691 + $0x88] sm:$0xf]
      %v6832 = vld [vmem:[%s691 + $0x8c] sm:$0x1]
      %v6833 = vld [vmem:[%s691 + $0x90] sm:$0xf]
      %v6834 = vld [vmem:[%s691 + $0x94] sm:$0xf]
      %v6835 = vld [vmem:[%s691 + $0x98] sm:$0x1]
      %v6836 = vld [vmem:[%s691 + $0x9c] sm:$0xf]
      %v6837 = vld [vmem:[%s691 + $0xa0] sm:$0xf]
      %v6838 = vld [vmem:[%s691 + $0xa4] sm:$0x1]
      %v6839 = vld [vmem:[%s691 + $0xa8] sm:$0xf]
      %v6840 = vld [vmem:[%s691 + $0xac] sm:$0xf]
      %v6841 = vld [vmem:[%s691 + $0xb0] sm:$0x1]
      %v6842 = vld [vmem:[%s691 + $0xb4] sm:$0xf]
      %v6843 = vld [vmem:[%s691 + $0xb8] sm:$0xf]
      %v6844 = vld [vmem:[%s691 + $0xbc] sm:$0x1]
      %v6846 = vshrl.u32 %v6797, 16
      %v6848 = vrot.slane %v6846, 4
      %v6849 = vshll.u32 %v6797, 16
      %v6851 = vrot.slane %v6849, 5
      %v6852 = vor.u32 %v6848, %v6851
      %v6853 = vrot.slane %v6852, 4
      %v6855 = vshll.u32 %v6798, 16
      %v6857 = vrot.slane %v6855, 5
      %v6858 = vsel %vm860, %v6853, %v6857
      %v6859 = vshrl.u32 %v6798, 16
      %v6861 = vrot.slane %v6859, 4
      %v6862 = vor.u32 %v6861, %v6857
      %v6863 = vrot.slane %v6862, 4
      %v6865 = vshll.u32 %v6799, 16
      %v6867 = vrot.slane %v6865, 5
      %v6868 = vsel %vm860, %v6863, %v6867
      %v6870 = vshrl.u32 %v6800, 16
      %v6872 = vrot.slane %v6870, 4
      %v6873 = vshll.u32 %v6800, 16
      %v6875 = vrot.slane %v6873, 5
      %v6876 = vor.u32 %v6872, %v6875
      %v6877 = vrot.slane %v6876, 4
      %v6879 = vshll.u32 %v6801, 16
      %v6881 = vrot.slane %v6879, 5
      %v6882 = vsel %vm860, %v6877, %v6881
      %v6883 = vshrl.u32 %v6801, 16
      %v6885 = vrot.slane %v6883, 4
      %v6886 = vor.u32 %v6885, %v6881
      %v6887 = vrot.slane %v6886, 4
      %v6889 = vshll.u32 %v6802, 16
      %v6891 = vrot.slane %v6889, 5
      %v6892 = vsel %vm860, %v6887, %v6891
      %v6894 = vshrl.u32 %v6803, 16
      %v6896 = vrot.slane %v6894, 4
      %v6897 = vshll.u32 %v6803, 16
      %v6899 = vrot.slane %v6897, 5
      %v6900 = vor.u32 %v6896, %v6899
      %v6901 = vrot.slane %v6900, 4
      %v6903 = vshll.u32 %v6804, 16
      %v6905 = vrot.slane %v6903, 5
      %v6906 = vsel %vm860, %v6901, %v6905
      %v6907 = vshrl.u32 %v6804, 16
      %v6909 = vrot.slane %v6907, 4
      %v6910 = vor.u32 %v6909, %v6905
      %v6911 = vrot.slane %v6910, 4
      %v6913 = vshll.u32 %v6805, 16
      %v6915 = vrot.slane %v6913, 5
      %v6916 = vsel %vm860, %v6911, %v6915
      %v6918 = vshrl.u32 %v6806, 16
      %v6920 = vrot.slane %v6918, 4
      %v6921 = vshll.u32 %v6806, 16
      %v6923 = vrot.slane %v6921, 5
      %v6924 = vor.u32 %v6920, %v6923
      %v6925 = vrot.slane %v6924, 4
      %v6927 = vshll.u32 %v6807, 16
      %v6929 = vrot.slane %v6927, 5
      %v6930 = vsel %vm860, %v6925, %v6929
      %v6931 = vshrl.u32 %v6807, 16
      %v6933 = vrot.slane %v6931, 4
      %v6934 = vor.u32 %v6933, %v6929
      %v6935 = vrot.slane %v6934, 4
      %v6937 = vshll.u32 %v6808, 16
      %v6939 = vrot.slane %v6937, 5
      %v6940 = vsel %vm860, %v6935, %v6939
      %v6942 = vshrl.u32 %v6809, 16
      %v6944 = vrot.slane %v6942, 4
      %v6945 = vshll.u32 %v6809, 16
      %v6947 = vrot.slane %v6945, 5
      %v6948 = vor.u32 %v6944, %v6947
      %v6949 = vrot.slane %v6948, 4
      %v6951 = vshll.u32 %v6810, 16
      %v6953 = vrot.slane %v6951, 5
      %v6954 = vsel %vm860, %v6949, %v6953
      %v6955 = vshrl.u32 %v6810, 16
      %v6957 = vrot.slane %v6955, 4
      %v6958 = vor.u32 %v6957, %v6953
      %v6959 = vrot.slane %v6958, 4
      %v6961 = vshll.u32 %v6811, 16
      %v6963 = vrot.slane %v6961, 5
      %v6964 = vsel %vm860, %v6959, %v6963
      %v6966 = vshrl.u32 %v6812, 16
      %v6968 = vrot.slane %v6966, 4
      %v6969 = vshll.u32 %v6812, 16
      %v6971 = vrot.slane %v6969, 5
      %v6972 = vor.u32 %v6968, %v6971
      %v6973 = vrot.slane %v6972, 4
      %v6975 = vshll.u32 %v6813, 16
      %v6977 = vrot.slane %v6975, 5
      %v6978 = vsel %vm860, %v6973, %v6977
      %v6979 = vshrl.u32 %v6813, 16
      %v6981 = vrot.slane %v6979, 4
      %v6982 = vor.u32 %v6981, %v6977
      %v6983 = vrot.slane %v6982, 4
      %v6985 = vshll.u32 %v6814, 16
      %v6987 = vrot.slane %v6985, 5
      %v6988 = vsel %vm860, %v6983, %v6987
      %v6990 = vshrl.u32 %v6815, 16
      %v6992 = vrot.slane %v6990, 4
      %v6993 = vshll.u32 %v6815, 16
      %v6995 = vrot.slane %v6993, 5
      %v6996 = vor.u32 %v6992, %v6995
      %v6997 = vrot.slane %v6996, 4
      %v6999 = vshll.u32 %v6816, 16
      %v7001 = vrot.slane %v6999, 5
      %v7002 = vsel %vm860, %v6997, %v7001
      %v7003 = vshrl.u32 %v6816, 16
      %v7005 = vrot.slane %v7003, 4
      %v7006 = vor.u32 %v7005, %v7001
      %v7007 = vrot.slane %v7006, 4
      %v7009 = vshll.u32 %v6817, 16
      %v7011 = vrot.slane %v7009, 5
      %v7012 = vsel %vm860, %v7007, %v7011
      %v7014 = vshrl.u32 %v6818, 16
      %v7016 = vrot.slane %v7014, 4
      %v7017 = vshll.u32 %v6818, 16
      %v7019 = vrot.slane %v7017, 5
      %v7020 = vor.u32 %v7016, %v7019
      %v7021 = vrot.slane %v7020, 4
      %v7023 = vshll.u32 %v6819, 16
      %v7025 = vrot.slane %v7023, 5
      %v7026 = vsel %vm860, %v7021, %v7025
      %v7027 = vshrl.u32 %v6819, 16
      %v7029 = vrot.slane %v7027, 4
      %v7030 = vor.u32 %v7029, %v7025
      %v7031 = vrot.slane %v7030, 4
      %v7033 = vshll.u32 %v6820, 16
      %v7035 = vrot.slane %v7033, 5
      %v7036 = vsel %vm860, %v7031, %v7035
      %v7038 = vshrl.u32 %v6821, 16
      %v7040 = vrot.slane %v7038, 4
      %v7041 = vshll.u32 %v6821, 16
      %v7043 = vrot.slane %v7041, 5
      %v7044 = vor.u32 %v7040, %v7043
      %v7045 = vrot.slane %v7044, 4
      %v7047 = vshll.u32 %v6822, 16
      %v7049 = vrot.slane %v7047, 5
      %v7050 = vsel %vm860, %v7045, %v7049
      %v7051 = vshrl.u32 %v6822, 16
      %v7053 = vrot.slane %v7051, 4
      %v7054 = vor.u32 %v7053, %v7049
      %v7055 = vrot.slane %v7054, 4
      %v7057 = vshll.u32 %v6823, 16
      %v7059 = vrot.slane %v7057, 5
      %v7060 = vsel %vm860, %v7055, %v7059
      %v7062 = vshrl.u32 %v6824, 16
      %v7064 = vrot.slane %v7062, 4
      %v7065 = vshll.u32 %v6824, 16
      %v7067 = vrot.slane %v7065, 5
      %v7068 = vor.u32 %v7064, %v7067
      %v7069 = vrot.slane %v7068, 4
      %v7071 = vshll.u32 %v6825, 16
      %v7073 = vrot.slane %v7071, 5
      %v7074 = vsel %vm860, %v7069, %v7073
      %v7075 = vshrl.u32 %v6825, 16
      %v7077 = vrot.slane %v7075, 4
      %v7078 = vor.u32 %v7077, %v7073
      %v7079 = vrot.slane %v7078, 4
      %v7081 = vshll.u32 %v6826, 16
      %v7083 = vrot.slane %v7081, 5
      %v7084 = vsel %vm860, %v7079, %v7083
      %v7086 = vshrl.u32 %v6827, 16
      %v7088 = vrot.slane %v7086, 4
      %v7089 = vshll.u32 %v6827, 16
      %v7091 = vrot.slane %v7089, 5
      %v7092 = vor.u32 %v7088, %v7091
      %v7093 = vrot.slane %v7092, 4
      %v7095 = vshll.u32 %v6828, 16
      %v7097 = vrot.slane %v7095, 5
      %v7098 = vsel %vm860, %v7093, %v7097
      %v7099 = vshrl.u32 %v6828, 16
      %v7101 = vrot.slane %v7099, 4
      %v7102 = vor.u32 %v7101, %v7097
      %v7103 = vrot.slane %v7102, 4
      %v7105 = vshll.u32 %v6829, 16
      %v7107 = vrot.slane %v7105, 5
      %v7108 = vsel %vm860, %v7103, %v7107
      %v7110 = vshrl.u32 %v6830, 16
      %v7112 = vrot.slane %v7110, 4
      %v7113 = vshll.u32 %v6830, 16
      %v7115 = vrot.slane %v7113, 5
      %v7116 = vor.u32 %v7112, %v7115
      %v7117 = vrot.slane %v7116, 4
      %v7119 = vshll.u32 %v6831, 16
      %v7121 = vrot.slane %v7119, 5
      %v7122 = vsel %vm860, %v7117, %v7121
      %v7123 = vshrl.u32 %v6831, 16
      %v7125 = vrot.slane %v7123, 4
      %v7126 = vor.u32 %v7125, %v7121
      %v7127 = vrot.slane %v7126, 4
      %v7129 = vshll.u32 %v6832, 16
      %v7131 = vrot.slane %v7129, 5
      %v7132 = vsel %vm860, %v7127, %v7131
      %v7134 = vshrl.u32 %v6833, 16
      %v7136 = vrot.slane %v7134, 4
      %v7137 = vshll.u32 %v6833, 16
      %v7139 = vrot.slane %v7137, 5
      %v7140 = vor.u32 %v7136, %v7139
      %v7141 = vrot.slane %v7140, 4
      %v7143 = vshll.u32 %v6834, 16
      %v7145 = vrot.slane %v7143, 5
      %v7146 = vsel %vm860, %v7141, %v7145
      %v7147 = vshrl.u32 %v6834, 16
      %v7149 = vrot.slane %v7147, 4
      %v7150 = vor.u32 %v7149, %v7145
      %v7151 = vrot.slane %v7150, 4
      %v7153 = vshll.u32 %v6835, 16
      %v7155 = vrot.slane %v7153, 5
      %v7156 = vsel %vm860, %v7151, %v7155
      %v7158 = vshrl.u32 %v6836, 16
      %v7160 = vrot.slane %v7158, 4
      %v7161 = vshll.u32 %v6836, 16
      %v7163 = vrot.slane %v7161, 5
      %v7164 = vor.u32 %v7160, %v7163
      %v7165 = vrot.slane %v7164, 4
      %v7167 = vshll.u32 %v6837, 16
      %v7169 = vrot.slane %v7167, 5
      %v7170 = vsel %vm860, %v7165, %v7169
      %v7171 = vshrl.u32 %v6837, 16
      %v7173 = vrot.slane %v7171, 4
      %v7174 = vor.u32 %v7173, %v7169
      %v7175 = vrot.slane %v7174, 4
      %v7177 = vshll.u32 %v6838, 16
      %v7179 = vrot.slane %v7177, 5
      %v7180 = vsel %vm860, %v7175, %v7179
      %v7182 = vshrl.u32 %v6839, 16
      %v7184 = vrot.slane %v7182, 4
      %v7185 = vshll.u32 %v6839, 16
      %v7187 = vrot.slane %v7185, 5
      %v7188 = vor.u32 %v7184, %v7187
      %v7189 = vrot.slane %v7188, 4
      %v7191 = vshll.u32 %v6840, 16
      %v7193 = vrot.slane %v7191, 5
      %v7194 = vsel %vm860, %v7189, %v7193
      %v7195 = vshrl.u32 %v6840, 16
      %v7197 = vrot.slane %v7195, 4
      %v7198 = vor.u32 %v7197, %v7193
      %v7199 = vrot.slane %v7198, 4
      %v7201 = vshll.u32 %v6841, 16
      %v7203 = vrot.slane %v7201, 5
      %v7204 = vsel %vm860, %v7199, %v7203
      %v7206 = vshrl.u32 %v6842, 16
      %v7208 = vrot.slane %v7206, 4
      %v7209 = vshll.u32 %v6842, 16
      %v7211 = vrot.slane %v7209, 5
      %v7212 = vor.u32 %v7208, %v7211
      %v7213 = vrot.slane %v7212, 4
      %v7215 = vshll.u32 %v6843, 16
      %v7217 = vrot.slane %v7215, 5
      %v7218 = vsel %vm860, %v7213, %v7217
      %v7219 = vshrl.u32 %v6843, 16
      %v7221 = vrot.slane %v7219, 4
      %v7222 = vor.u32 %v7221, %v7217
      %v7223 = vrot.slane %v7222, 4
      %v7225 = vshll.u32 %v6844, 16
      %v7227 = vrot.slane %v7225, 5
      %v7228 = vsel %vm860, %v7223, %v7227
      %s7229 = scalar_lea.vmem %s4, 8
      %v7230 = vld [vmem:[%s7229] sm:$0x3]
      %v7231 = vunpack.c.l.b16 %v6858
      %v7232 = vunpack.c.l.b16 %v6868
      %v7233 = vunpack.c.l.b16 %v6882
      %v7234 = vunpack.c.l.b16 %v6892
      %v7235 = vunpack.c.l.b16 %v6906
      %v7236 = vunpack.c.l.b16 %v6916
      %v7237 = vunpack.c.l.b16 %v6930
      %v7238 = vunpack.c.l.b16 %v6940
      %v7239 = vunpack.c.l.b16 %v6954
      %v7240 = vunpack.c.l.b16 %v6964
      %v7241 = vunpack.c.l.b16 %v6978
      %v7242 = vunpack.c.l.b16 %v6988
      %v7243 = vunpack.c.l.b16 %v7002
      %v7244 = vunpack.c.l.b16 %v7012
      %v7245 = vunpack.c.l.b16 %v7026
      %v7246 = vunpack.c.l.b16 %v7036
      %v7247 = vunpack.c.l.b16 %v7050
      %v7248 = vunpack.c.l.b16 %v7060
      %v7249 = vunpack.c.l.b16 %v7074
      %v7250 = vunpack.c.l.b16 %v7084
      %v7251 = vunpack.c.l.b16 %v7098
      %v7252 = vunpack.c.l.b16 %v7108
      %v7253 = vunpack.c.l.b16 %v7122
      %v7254 = vunpack.c.l.b16 %v7132
      %v7255 = vunpack.c.l.b16 %v7146
      %v7256 = vunpack.c.l.b16 %v7156
      %v7257 = vunpack.c.l.b16 %v7170
      %v7258 = vunpack.c.l.b16 %v7180
      %v7259 = vunpack.c.l.b16 %v7194
      %v7260 = vunpack.c.l.b16 %v7204
      %v7261 = vunpack.c.l.b16 %v7218
      %v7262 = vunpack.c.l.b16 %v7228
      %v7263 = vpack.c.b16 %v7232, %v7231
      %v7264 = vpack.c.b16 %v7234, %v7233
      %v7265 = vpack.c.b16 %v7236, %v7235
      %v7266 = vpack.c.b16 %v7238, %v7237
      %v7267 = vpack.c.b16 %v7240, %v7239
      %v7268 = vpack.c.b16 %v7242, %v7241
      %v7269 = vpack.c.b16 %v7244, %v7243
      %v7270 = vpack.c.b16 %v7246, %v7245
      %v7271 = vpack.c.b16 %v7248, %v7247
      %v7272 = vpack.c.b16 %v7250, %v7249
      %v7273 = vpack.c.b16 %v7252, %v7251
      %v7274 = vpack.c.b16 %v7254, %v7253
      %v7275 = vpack.c.b16 %v7256, %v7255
      %v7276 = vpack.c.b16 %v7258, %v7257
      %v7277 = vpack.c.b16 %v7260, %v7259
      %v7278 = vpack.c.b16 %v7262, %v7261
      %v7280 = vsel %vm1295, %v7263, 0
      %v7283 = vsel %vm1295, %v7264, 0
      %v7286 = vsel %vm1295, %v7265, 0
      %v7289 = vsel %vm1295, %v7266, 0
      %v7292 = vsel %vm1295, %v7267, 0
      %v7295 = vsel %vm1295, %v7268, 0
      %v7298 = vsel %vm1295, %v7269, 0
      %v7301 = vsel %vm1295, %v7270, 0
      %v7304 = vsel %vm1295, %v7271, 0
      %v7307 = vsel %vm1295, %v7272, 0
      %v7310 = vsel %vm1295, %v7273, 0
      %v7313 = vsel %vm1295, %v7274, 0
      %v7316 = vsel %vm1295, %v7275, 0
      %v7319 = vsel %vm1295, %v7276, 0
      %v7322 = vsel %vm1295, %v7277, 0
      %v7325 = vsel %vm1295, %v7278, 0
      %v7328 = vsel %vm1344, %v7230, 0
      %7330 = vmatpush.bf16.msra.mxu0 0
      %7331 = vmatpush.bf16.msra.mxu0 0
      %7332 = vmatpush.bf16.msra.mxu0 0
      %7333 = vmatpush.bf16.msra.mxu0 0
      %7334 = vmatpush.bf16.msra.mxu0 0
      %7335 = vmatpush.bf16.msra.mxu0 0
      %7336 = vmatpush.bf16.msra.mxu0 0
      %7337 = vmatpush.bf16.msra.mxu0 %v7328
      %7338 = vmatmul.bf16.gmra.mxu0 %v7280
      %v7339 = vpop.f32.mrf.mxu0
      %v7340 = vadd.f32 0.0, %v7339
      %v7341 = vpop.f32.mrf.mxu0
      %v7342 = vadd.f32 0.0, %v7341
      %7343 = vmatmul.bf16.gmra.mxu0 %v7283
      %v7344 = vpop.f32.mrf.mxu0
      %v7345 = vadd.f32 0.0, %v7344
      %v7346 = vpop.f32.mrf.mxu0
      %v7347 = vadd.f32 0.0, %v7346
      %7348 = vmatmul.bf16.gmra.mxu0 %v7286
      %v7349 = vpop.f32.mrf.mxu0
      %v7350 = vadd.f32 0.0, %v7349
      %v7351 = vpop.f32.mrf.mxu0
      %v7352 = vadd.f32 0.0, %v7351
      %7353 = vmatmul.bf16.gmra.mxu0 %v7289
      %v7354 = vpop.f32.mrf.mxu0
      %v7355 = vadd.f32 0.0, %v7354
      %v7356 = vpop.f32.mrf.mxu0
      %v7357 = vadd.f32 0.0, %v7356
      %7358 = vmatmul.bf16.gmra.mxu0 %v7292
      %v7359 = vpop.f32.mrf.mxu0
      %v7360 = vadd.f32 0.0, %v7359
      %v7361 = vpop.f32.mrf.mxu0
      %v7362 = vadd.f32 0.0, %v7361
      %7363 = vmatmul.bf16.gmra.mxu0 %v7295
      %v7364 = vpop.f32.mrf.mxu0
      %v7365 = vadd.f32 0.0, %v7364
      %v7366 = vpop.f32.mrf.mxu0
      %v7367 = vadd.f32 0.0, %v7366
      %7368 = vmatmul.bf16.gmra.mxu0 %v7298
      %v7369 = vpop.f32.mrf.mxu0
      %v7370 = vadd.f32 0.0, %v7369
      %v7371 = vpop.f32.mrf.mxu0
      %v7372 = vadd.f32 0.0, %v7371
      %7373 = vmatmul.bf16.gmra.mxu0 %v7301
      %v7374 = vpop.f32.mrf.mxu0
      %v7375 = vadd.f32 0.0, %v7374
      %v7376 = vpop.f32.mrf.mxu0
      %v7377 = vadd.f32 0.0, %v7376
      %7378 = vmatmul.bf16.gmra.mxu0 %v7304
      %v7379 = vpop.f32.mrf.mxu0
      %v7380 = vadd.f32 0.0, %v7379
      %v7381 = vpop.f32.mrf.mxu0
      %v7382 = vadd.f32 0.0, %v7381
      %7383 = vmatmul.bf16.gmra.mxu0 %v7307
      %v7384 = vpop.f32.mrf.mxu0
      %v7385 = vadd.f32 0.0, %v7384
      %v7386 = vpop.f32.mrf.mxu0
      %v7387 = vadd.f32 0.0, %v7386
      %7388 = vmatmul.bf16.gmra.mxu0 %v7310
      %v7389 = vpop.f32.mrf.mxu0
      %v7390 = vadd.f32 0.0, %v7389
      %v7391 = vpop.f32.mrf.mxu0
      %v7392 = vadd.f32 0.0, %v7391
      %7393 = vmatmul.bf16.gmra.mxu0 %v7313
      %v7394 = vpop.f32.mrf.mxu0
      %v7395 = vadd.f32 0.0, %v7394
      %v7396 = vpop.f32.mrf.mxu0
      %v7397 = vadd.f32 0.0, %v7396
      %7398 = vmatmul.bf16.gmra.mxu0 %v7316
      %v7399 = vpop.f32.mrf.mxu0
      %v7400 = vadd.f32 0.0, %v7399
      %v7401 = vpop.f32.mrf.mxu0
      %v7402 = vadd.f32 0.0, %v7401
      %7403 = vmatmul.bf16.gmra.mxu0 %v7319
      %v7404 = vpop.f32.mrf.mxu0
      %v7405 = vadd.f32 0.0, %v7404
      %v7406 = vpop.f32.mrf.mxu0
      %v7407 = vadd.f32 0.0, %v7406
      %7408 = vmatmul.bf16.gmra.mxu0 %v7322
      %v7409 = vpop.f32.mrf.mxu0
      %v7410 = vadd.f32 0.0, %v7409
      %v7411 = vpop.f32.mrf.mxu0
      %v7412 = vadd.f32 0.0, %v7411
      %7413 = vmatmul.bf16.gmra.mxu0 %v7325
      %v7414 = vpop.f32.mrf.mxu0
      %v7415 = vadd.f32 0.0, %v7414
      %v7416 = vpop.f32.mrf.mxu0
      %v7417 = vadd.f32 0.0, %v7416
      %7418 = vdwg.mxu0
      %v7419 = vadd.f32 %v6765, %v7340
      %v7420 = vadd.f32 %v6766, %v7342
      %v7421 = vadd.f32 %v6767, %v7345
      %v7422 = vadd.f32 %v6768, %v7347
      %v7423 = vadd.f32 %v6769, %v7350
      %v7424 = vadd.f32 %v6770, %v7352
      %v7425 = vadd.f32 %v6771, %v7355
      %v7426 = vadd.f32 %v6772, %v7357
      %v7427 = vadd.f32 %v6773, %v7360
      %v7428 = vadd.f32 %v6774, %v7362
      %v7429 = vadd.f32 %v6775, %v7365
      %v7430 = vadd.f32 %v6776, %v7367
      %v7431 = vadd.f32 %v6777, %v7370
      %v7432 = vadd.f32 %v6778, %v7372
      %v7433 = vadd.f32 %v6779, %v7375
      %v7434 = vadd.f32 %v6780, %v7377
      %v7435 = vadd.f32 %v6781, %v7380
      %v7436 = vadd.f32 %v6782, %v7382
      %v7437 = vadd.f32 %v6783, %v7385
      %v7438 = vadd.f32 %v6784, %v7387
      %v7439 = vadd.f32 %v6785, %v7390
      %v7440 = vadd.f32 %v6786, %v7392
      %v7441 = vadd.f32 %v6787, %v7395
      %v7442 = vadd.f32 %v6788, %v7397
      %v7443 = vadd.f32 %v6789, %v7400
      %v7444 = vadd.f32 %v6790, %v7402
      %v7445 = vadd.f32 %v6791, %v7405
      %v7446 = vadd.f32 %v6792, %v7407
      %v7447 = vadd.f32 %v6793, %v7410
      %v7448 = vadd.f32 %v6794, %v7412
      %v7449 = vadd.f32 %v6795, %v7415
      %v7450 = vadd.f32 %v6796, %v7417
      %v7451 = vld [vmem:[%s691] sm:$0xe]
      %v7452 = vld [vmem:[%s691 + $0xc] sm:$0xe]
      %v7453 = vld [vmem:[%s691 + $0x18] sm:$0xe]
      %v7454 = vld [vmem:[%s691 + $0x24] sm:$0xe]
      %v7455 = vld [vmem:[%s691 + $0x30] sm:$0xe]
      %v7456 = vld [vmem:[%s691 + $0x3c] sm:$0xe]
      %v7457 = vld [vmem:[%s691 + $0x48] sm:$0xe]
      %v7458 = vld [vmem:[%s691 + $0x54] sm:$0xe]
      %v7459 = vld [vmem:[%s691 + $0x60] sm:$0xe]
      %v7460 = vld [vmem:[%s691 + $0x6c] sm:$0xe]
      %v7461 = vld [vmem:[%s691 + $0x78] sm:$0xe]
      %v7462 = vld [vmem:[%s691 + $0x84] sm:$0xe]
      %v7463 = vld [vmem:[%s691 + $0x90] sm:$0xe]
      %v7464 = vld [vmem:[%s691 + $0x9c] sm:$0xe]
      %v7465 = vld [vmem:[%s691 + $0xa8] sm:$0xe]
      %v7466 = vld [vmem:[%s691 + $0xb4] sm:$0xe]
      %v7515 = vrot.slane %v7451, 5
      %v7516 = vrot.slane %v7515, 4
      %v7517 = vrot.slane %v6798, 5
      %v7518 = vsel %vm1707, %v7516, %v7517
      %v7519 = vrot.slane %v7517, 4
      %v7520 = vrot.slane %v6799, 5
      %v7521 = vsel %vm1707, %v7519, %v7520
      %v7522 = vrot.slane %v7452, 5
      %v7523 = vrot.slane %v7522, 4
      %v7524 = vrot.slane %v6801, 5
      %v7525 = vsel %vm1707, %v7523, %v7524
      %v7526 = vrot.slane %v7524, 4
      %v7527 = vrot.slane %v6802, 5
      %v7528 = vsel %vm1707, %v7526, %v7527
      %v7529 = vrot.slane %v7453, 5
      %v7530 = vrot.slane %v7529, 4
      %v7531 = vrot.slane %v6804, 5
      %v7532 = vsel %vm1707, %v7530, %v7531
      %v7533 = vrot.slane %v7531, 4
      %v7534 = vrot.slane %v6805, 5
      %v7535 = vsel %vm1707, %v7533, %v7534
      %v7536 = vrot.slane %v7454, 5
      %v7537 = vrot.slane %v7536, 4
      %v7538 = vrot.slane %v6807, 5
      %v7539 = vsel %vm1707, %v7537, %v7538
      %v7540 = vrot.slane %v7538, 4
      %v7541 = vrot.slane %v6808, 5
      %v7542 = vsel %vm1707, %v7540, %v7541
      %v7543 = vrot.slane %v7455, 5
      %v7544 = vrot.slane %v7543, 4
      %v7545 = vrot.slane %v6810, 5
      %v7546 = vsel %vm1707, %v7544, %v7545
      %v7547 = vrot.slane %v7545, 4
      %v7548 = vrot.slane %v6811, 5
      %v7549 = vsel %vm1707, %v7547, %v7548
      %v7550 = vrot.slane %v7456, 5
      %v7551 = vrot.slane %v7550, 4
      %v7552 = vrot.slane %v6813, 5
      %v7553 = vsel %vm1707, %v7551, %v7552
      %v7554 = vrot.slane %v7552, 4
      %v7555 = vrot.slane %v6814, 5
      %v7556 = vsel %vm1707, %v7554, %v7555
      %v7557 = vrot.slane %v7457, 5
      %v7558 = vrot.slane %v7557, 4
      %v7559 = vrot.slane %v6816, 5
      %v7560 = vsel %vm1707, %v7558, %v7559
      %v7561 = vrot.slane %v7559, 4
      %v7562 = vrot.slane %v6817, 5
      %v7563 = vsel %vm1707, %v7561, %v7562
      %v7564 = vrot.slane %v7458, 5
      %v7565 = vrot.slane %v7564, 4
      %v7566 = vrot.slane %v6819, 5
      %v7567 = vsel %vm1707, %v7565, %v7566
      %v7568 = vrot.slane %v7566, 4
      %v7569 = vrot.slane %v6820, 5
      %v7570 = vsel %vm1707, %v7568, %v7569
      %v7571 = vrot.slane %v7459, 5
      %v7572 = vrot.slane %v7571, 4
      %v7573 = vrot.slane %v6822, 5
      %v7574 = vsel %vm1707, %v7572, %v7573
      %v7575 = vrot.slane %v7573, 4
      %v7576 = vrot.slane %v6823, 5
      %v7577 = vsel %vm1707, %v7575, %v7576
      %v7578 = vrot.slane %v7460, 5
      %v7579 = vrot.slane %v7578, 4
      %v7580 = vrot.slane %v6825, 5
      %v7581 = vsel %vm1707, %v7579, %v7580
      %v7582 = vrot.slane %v7580, 4
      %v7583 = vrot.slane %v6826, 5
      %v7584 = vsel %vm1707, %v7582, %v7583
      %v7585 = vrot.slane %v7461, 5
      %v7586 = vrot.slane %v7585, 4
      %v7587 = vrot.slane %v6828, 5
      %v7588 = vsel %vm1707, %v7586, %v7587
      %v7589 = vrot.slane %v7587, 4
      %v7590 = vrot.slane %v6829, 5
      %v7591 = vsel %vm1707, %v7589, %v7590
      %v7592 = vrot.slane %v7462, 5
      %v7593 = vrot.slane %v7592, 4
      %v7594 = vrot.slane %v6831, 5
      %v7595 = vsel %vm1707, %v7593, %v7594
      %v7596 = vrot.slane %v7594, 4
      %v7597 = vrot.slane %v6832, 5
      %v7598 = vsel %vm1707, %v7596, %v7597
      %v7599 = vrot.slane %v7463, 5
      %v7600 = vrot.slane %v7599, 4
      %v7601 = vrot.slane %v6834, 5
      %v7602 = vsel %vm1707, %v7600, %v7601
      %v7603 = vrot.slane %v7601, 4
      %v7604 = vrot.slane %v6835, 5
      %v7605 = vsel %vm1707, %v7603, %v7604
      %v7606 = vrot.slane %v7464, 5
      %v7607 = vrot.slane %v7606, 4
      %v7608 = vrot.slane %v6837, 5
      %v7609 = vsel %vm1707, %v7607, %v7608
      %v7610 = vrot.slane %v7608, 4
      %v7611 = vrot.slane %v6838, 5
      %v7612 = vsel %vm1707, %v7610, %v7611
      %v7613 = vrot.slane %v7465, 5
      %v7614 = vrot.slane %v7613, 4
      %v7615 = vrot.slane %v6840, 5
      %v7616 = vsel %vm1707, %v7614, %v7615
      %v7617 = vrot.slane %v7615, 4
      %v7618 = vrot.slane %v6841, 5
      %v7619 = vsel %vm1707, %v7617, %v7618
      %v7620 = vrot.slane %v7466, 5
      %v7621 = vrot.slane %v7620, 4
      %v7622 = vrot.slane %v6843, 5
      %v7623 = vsel %vm1707, %v7621, %v7622
      %v7624 = vrot.slane %v7622, 4
      %v7625 = vrot.slane %v6844, 5
      %v7626 = vsel %vm1707, %v7624, %v7625
      %s7627 = scalar_lea.vmem %s4, 10
      %v7628 = vld [vmem:[%s7627] sm:$0x3]
      %v7629 = vunpack.c.l.b16 %v7518
      %v7630 = vunpack.c.l.b16 %v7521
      %v7631 = vunpack.c.l.b16 %v7525
      %v7632 = vunpack.c.l.b16 %v7528
      %v7633 = vunpack.c.l.b16 %v7532
      %v7634 = vunpack.c.l.b16 %v7535
      %v7635 = vunpack.c.l.b16 %v7539
      %v7636 = vunpack.c.l.b16 %v7542
      %v7637 = vunpack.c.l.b16 %v7546
      %v7638 = vunpack.c.l.b16 %v7549
      %v7639 = vunpack.c.l.b16 %v7553
      %v7640 = vunpack.c.l.b16 %v7556
      %v7641 = vunpack.c.l.b16 %v7560
      %v7642 = vunpack.c.l.b16 %v7563
      %v7643 = vunpack.c.l.b16 %v7567
      %v7644 = vunpack.c.l.b16 %v7570
      %v7645 = vunpack.c.l.b16 %v7574
      %v7646 = vunpack.c.l.b16 %v7577
      %v7647 = vunpack.c.l.b16 %v7581
      %v7648 = vunpack.c.l.b16 %v7584
      %v7649 = vunpack.c.l.b16 %v7588
      %v7650 = vunpack.c.l.b16 %v7591
      %v7651 = vunpack.c.l.b16 %v7595
      %v7652 = vunpack.c.l.b16 %v7598
      %v7653 = vunpack.c.l.b16 %v7602
      %v7654 = vunpack.c.l.b16 %v7605
      %v7655 = vunpack.c.l.b16 %v7609
      %v7656 = vunpack.c.l.b16 %v7612
      %v7657 = vunpack.c.l.b16 %v7616
      %v7658 = vunpack.c.l.b16 %v7619
      %v7659 = vunpack.c.l.b16 %v7623
      %v7660 = vunpack.c.l.b16 %v7626
      %v7661 = vpack.c.b16 %v7630, %v7629
      %v7662 = vpack.c.b16 %v7632, %v7631
      %v7663 = vpack.c.b16 %v7634, %v7633
      %v7664 = vpack.c.b16 %v7636, %v7635
      %v7665 = vpack.c.b16 %v7638, %v7637
      %v7666 = vpack.c.b16 %v7640, %v7639
      %v7667 = vpack.c.b16 %v7642, %v7641
      %v7668 = vpack.c.b16 %v7644, %v7643
      %v7669 = vpack.c.b16 %v7646, %v7645
      %v7670 = vpack.c.b16 %v7648, %v7647
      %v7671 = vpack.c.b16 %v7650, %v7649
      %v7672 = vpack.c.b16 %v7652, %v7651
      %v7673 = vpack.c.b16 %v7654, %v7653
      %v7674 = vpack.c.b16 %v7656, %v7655
      %v7675 = vpack.c.b16 %v7658, %v7657
      %v7676 = vpack.c.b16 %v7660, %v7659
      %v7678 = vsel %vm1295, %v7661, 0
      %v7681 = vsel %vm1295, %v7662, 0
      %v7684 = vsel %vm1295, %v7663, 0
      %v7687 = vsel %vm1295, %v7664, 0
      %v7690 = vsel %vm1295, %v7665, 0
      %v7693 = vsel %vm1295, %v7666, 0
      %v7696 = vsel %vm1295, %v7667, 0
      %v7699 = vsel %vm1295, %v7668, 0
      %v7702 = vsel %vm1295, %v7669, 0
      %v7705 = vsel %vm1295, %v7670, 0
      %v7708 = vsel %vm1295, %v7671, 0
      %v7711 = vsel %vm1295, %v7672, 0
      %v7714 = vsel %vm1295, %v7673, 0
      %v7717 = vsel %vm1295, %v7674, 0
      %v7720 = vsel %vm1295, %v7675, 0
      %v7723 = vsel %vm1295, %v7676, 0
      %v7726 = vsel %vm1344, %v7628, 0
      %7728 = vmatpush.bf16.msra.mxu0 0
      %7729 = vmatpush.bf16.msra.mxu0 0
      %7730 = vmatpush.bf16.msra.mxu0 0
      %7731 = vmatpush.bf16.msra.mxu0 0
      %7732 = vmatpush.bf16.msra.mxu0 0
      %7733 = vmatpush.bf16.msra.mxu0 0
      %7734 = vmatpush.bf16.msra.mxu0 0
      %7735 = vmatpush.bf16.msra.mxu0 %v7726
      %7736 = vmatmul.bf16.gmra.mxu0 %v7678
      %v7737 = vpop.f32.mrf.mxu0
      %v7738 = vadd.f32 0.0, %v7737
      %v7739 = vpop.f32.mrf.mxu0
      %v7740 = vadd.f32 0.0, %v7739
      %7741 = vmatmul.bf16.gmra.mxu0 %v7681
      %v7742 = vpop.f32.mrf.mxu0
      %v7743 = vadd.f32 0.0, %v7742
      %v7744 = vpop.f32.mrf.mxu0
      %v7745 = vadd.f32 0.0, %v7744
      %7746 = vmatmul.bf16.gmra.mxu0 %v7684
      %v7747 = vpop.f32.mrf.mxu0
      %v7748 = vadd.f32 0.0, %v7747
      %v7749 = vpop.f32.mrf.mxu0
      %v7750 = vadd.f32 0.0, %v7749
      %7751 = vmatmul.bf16.gmra.mxu0 %v7687
      %v7752 = vpop.f32.mrf.mxu0
      %v7753 = vadd.f32 0.0, %v7752
      %v7754 = vpop.f32.mrf.mxu0
      %v7755 = vadd.f32 0.0, %v7754
      %7756 = vmatmul.bf16.gmra.mxu0 %v7690
      %v7757 = vpop.f32.mrf.mxu0
      %v7758 = vadd.f32 0.0, %v7757
      %v7759 = vpop.f32.mrf.mxu0
      %v7760 = vadd.f32 0.0, %v7759
      %7761 = vmatmul.bf16.gmra.mxu0 %v7693
      %v7762 = vpop.f32.mrf.mxu0
      %v7763 = vadd.f32 0.0, %v7762
      %v7764 = vpop.f32.mrf.mxu0
      %v7765 = vadd.f32 0.0, %v7764
      %7766 = vmatmul.bf16.gmra.mxu0 %v7696
      %v7767 = vpop.f32.mrf.mxu0
      %v7768 = vadd.f32 0.0, %v7767
      %v7769 = vpop.f32.mrf.mxu0
      %v7770 = vadd.f32 0.0, %v7769
      %7771 = vmatmul.bf16.gmra.mxu0 %v7699
      %v7772 = vpop.f32.mrf.mxu0
      %v7773 = vadd.f32 0.0, %v7772
      %v7774 = vpop.f32.mrf.mxu0
      %v7775 = vadd.f32 0.0, %v7774
      %7776 = vmatmul.bf16.gmra.mxu0 %v7702
      %v7777 = vpop.f32.mrf.mxu0
      %v7778 = vadd.f32 0.0, %v7777
      %v7779 = vpop.f32.mrf.mxu0
      %v7780 = vadd.f32 0.0, %v7779
      %7781 = vmatmul.bf16.gmra.mxu0 %v7705
      %v7782 = vpop.f32.mrf.mxu0
      %v7783 = vadd.f32 0.0, %v7782
      %v7784 = vpop.f32.mrf.mxu0
      %v7785 = vadd.f32 0.0, %v7784
      %7786 = vmatmul.bf16.gmra.mxu0 %v7708
      %v7787 = vpop.f32.mrf.mxu0
      %v7788 = vadd.f32 0.0, %v7787
      %v7789 = vpop.f32.mrf.mxu0
      %v7790 = vadd.f32 0.0, %v7789
      %7791 = vmatmul.bf16.gmra.mxu0 %v7711
      %v7792 = vpop.f32.mrf.mxu0
      %v7793 = vadd.f32 0.0, %v7792
      %v7794 = vpop.f32.mrf.mxu0
      %v7795 = vadd.f32 0.0, %v7794
      %7796 = vmatmul.bf16.gmra.mxu0 %v7714
      %v7797 = vpop.f32.mrf.mxu0
      %v7798 = vadd.f32 0.0, %v7797
      %v7799 = vpop.f32.mrf.mxu0
      %v7800 = vadd.f32 0.0, %v7799
      %7801 = vmatmul.bf16.gmra.mxu0 %v7717
      %v7802 = vpop.f32.mrf.mxu0
      %v7803 = vadd.f32 0.0, %v7802
      %v7804 = vpop.f32.mrf.mxu0
      %v7805 = vadd.f32 0.0, %v7804
      %7806 = vmatmul.bf16.gmra.mxu0 %v7720
      %v7807 = vpop.f32.mrf.mxu0
      %v7808 = vadd.f32 0.0, %v7807
      %v7809 = vpop.f32.mrf.mxu0
      %v7810 = vadd.f32 0.0, %v7809
      %7811 = vmatmul.bf16.gmra.mxu0 %v7723
      %v7812 = vpop.f32.mrf.mxu0
      %v7813 = vadd.f32 0.0, %v7812
      %v7814 = vpop.f32.mrf.mxu0
      %v7815 = vadd.f32 0.0, %v7814
      %7816 = vdwg.mxu0
      %v7817 = vadd.f32 %v7419, %v7738
      %v7818 = vadd.f32 %v7420, %v7740
      %v7819 = vadd.f32 %v7421, %v7743
      %v7820 = vadd.f32 %v7422, %v7745
      %v7821 = vadd.f32 %v7423, %v7748
      %v7822 = vadd.f32 %v7424, %v7750
      %v7823 = vadd.f32 %v7425, %v7753
      %v7824 = vadd.f32 %v7426, %v7755
      %v7825 = vadd.f32 %v7427, %v7758
      %v7826 = vadd.f32 %v7428, %v7760
      %v7827 = vadd.f32 %v7429, %v7763
      %v7828 = vadd.f32 %v7430, %v7765
      %v7829 = vadd.f32 %v7431, %v7768
      %v7830 = vadd.f32 %v7432, %v7770
      %v7831 = vadd.f32 %v7433, %v7773
      %v7832 = vadd.f32 %v7434, %v7775
      %v7833 = vadd.f32 %v7435, %v7778
      %v7834 = vadd.f32 %v7436, %v7780
      %v7835 = vadd.f32 %v7437, %v7783
      %v7836 = vadd.f32 %v7438, %v7785
      %v7837 = vadd.f32 %v7439, %v7788
      %v7838 = vadd.f32 %v7440, %v7790
      %v7839 = vadd.f32 %v7441, %v7793
      %v7840 = vadd.f32 %v7442, %v7795
      %v7841 = vadd.f32 %v7443, %v7798
      %v7842 = vadd.f32 %v7444, %v7800
      %v7843 = vadd.f32 %v7445, %v7803
      %v7844 = vadd.f32 %v7446, %v7805
      %v7845 = vadd.f32 %v7447, %v7808
      %v7846 = vadd.f32 %v7448, %v7810
      %v7847 = vadd.f32 %v7449, %v7813
      %v7848 = vadd.f32 %v7450, %v7815
      %v7849 = vld [vmem:[%s3380] sm:$0xf]
      %v7850 = vld [vmem:[%s3380 + $0x4] sm:$0xf]
      %v7851 = vld [vmem:[%s3380 + $0xc] sm:$0xf]
      %v7852 = vld [vmem:[%s3380 + $0x10] sm:$0xf]
      %v7853 = vld [vmem:[%s3380 + $0x18] sm:$0xf]
      %v7854 = vld [vmem:[%s3380 + $0x1c] sm:$0xf]
      %v7855 = vld [vmem:[%s3380 + $0x24] sm:$0xf]
      %v7856 = vld [vmem:[%s3380 + $0x28] sm:$0xf]
      %v7857 = vld [vmem:[%s3380 + $0x30] sm:$0xf]
      %v7858 = vld [vmem:[%s3380 + $0x34] sm:$0xf]
      %v7859 = vld [vmem:[%s3380 + $0x3c] sm:$0xf]
      %v7860 = vld [vmem:[%s3380 + $0x40] sm:$0xf]
      %v7861 = vld [vmem:[%s3380 + $0x48] sm:$0xf]
      %v7862 = vld [vmem:[%s3380 + $0x4c] sm:$0xf]
      %v7863 = vld [vmem:[%s3380 + $0x54] sm:$0xf]
      %v7864 = vld [vmem:[%s3380 + $0x58] sm:$0xf]
      %v7865 = vld [vmem:[%s3380 + $0x60] sm:$0xf]
      %v7866 = vld [vmem:[%s3380 + $0x64] sm:$0xf]
      %v7867 = vld [vmem:[%s3380 + $0x6c] sm:$0xf]
      %v7868 = vld [vmem:[%s3380 + $0x70] sm:$0xf]
      %v7869 = vld [vmem:[%s3380 + $0x78] sm:$0xf]
      %v7870 = vld [vmem:[%s3380 + $0x7c] sm:$0xf]
      %v7871 = vld [vmem:[%s3380 + $0x84] sm:$0xf]
      %v7872 = vld [vmem:[%s3380 + $0x88] sm:$0xf]
      %v7873 = vld [vmem:[%s3380 + $0x90] sm:$0xf]
      %v7874 = vld [vmem:[%s3380 + $0x94] sm:$0xf]
      %v7875 = vld [vmem:[%s3380 + $0x9c] sm:$0xf]
      %v7876 = vld [vmem:[%s3380 + $0xa0] sm:$0xf]
      %v7877 = vld [vmem:[%s3380 + $0xa8] sm:$0xf]
      %v7878 = vld [vmem:[%s3380 + $0xac] sm:$0xf]
      %v7879 = vld [vmem:[%s3380 + $0xb4] sm:$0xf]
      %v7880 = vld [vmem:[%s3380 + $0xb8] sm:$0xf]
      %s7881 = scalar_lea.vmem %s4, 12
      %v7882 = vld [vmem:[%s7881] sm:$0x3]
      %v7915 = vunpack.c.l.b16 %v7849
      %v7916 = vunpack.c.l.b16 %v7850
      %v7917 = vunpack.c.l.b16 %v7851
      %v7918 = vunpack.c.l.b16 %v7852
      %v7919 = vunpack.c.l.b16 %v7853
      %v7920 = vunpack.c.l.b16 %v7854
      %v7921 = vunpack.c.l.b16 %v7855
      %v7922 = vunpack.c.l.b16 %v7856
      %v7923 = vunpack.c.l.b16 %v7857
      %v7924 = vunpack.c.l.b16 %v7858
      %v7925 = vunpack.c.l.b16 %v7859
      %v7926 = vunpack.c.l.b16 %v7860
      %v7927 = vunpack.c.l.b16 %v7861
      %v7928 = vunpack.c.l.b16 %v7862
      %v7929 = vunpack.c.l.b16 %v7863
      %v7930 = vunpack.c.l.b16 %v7864
      %v7931 = vunpack.c.l.b16 %v7865
      %v7932 = vunpack.c.l.b16 %v7866
      %v7933 = vunpack.c.l.b16 %v7867
      %v7934 = vunpack.c.l.b16 %v7868
      %v7935 = vunpack.c.l.b16 %v7869
      %v7936 = vunpack.c.l.b16 %v7870
      %v7937 = vunpack.c.l.b16 %v7871
      %v7938 = vunpack.c.l.b16 %v7872
      %v7939 = vunpack.c.l.b16 %v7873
      %v7940 = vunpack.c.l.b16 %v7874
      %v7941 = vunpack.c.l.b16 %v7875
      %v7942 = vunpack.c.l.b16 %v7876
      %v7943 = vunpack.c.l.b16 %v7877
      %v7944 = vunpack.c.l.b16 %v7878
      %v7945 = vunpack.c.l.b16 %v7879
      %v7946 = vunpack.c.l.b16 %v7880
      %v7947 = vpack.c.b16 %v7916, %v7915
      %v7948 = vpack.c.b16 %v7918, %v7917
      %v7949 = vpack.c.b16 %v7920, %v7919
      %v7950 = vpack.c.b16 %v7922, %v7921
      %v7951 = vpack.c.b16 %v7924, %v7923
      %v7952 = vpack.c.b16 %v7926, %v7925
      %v7953 = vpack.c.b16 %v7928, %v7927
      %v7954 = vpack.c.b16 %v7930, %v7929
      %v7955 = vpack.c.b16 %v7932, %v7931
      %v7956 = vpack.c.b16 %v7934, %v7933
      %v7957 = vpack.c.b16 %v7936, %v7935
      %v7958 = vpack.c.b16 %v7938, %v7937
      %v7959 = vpack.c.b16 %v7940, %v7939
      %v7960 = vpack.c.b16 %v7942, %v7941
      %v7961 = vpack.c.b16 %v7944, %v7943
      %v7962 = vpack.c.b16 %v7946, %v7945
      %v7964 = vsel %vm1295, %v7947, 0
      %v7967 = vsel %vm1295, %v7948, 0
      %v7970 = vsel %vm1295, %v7949, 0
      %v7973 = vsel %vm1295, %v7950, 0
      %v7976 = vsel %vm1295, %v7951, 0
      %v7979 = vsel %vm1295, %v7952, 0
      %v7982 = vsel %vm1295, %v7953, 0
      %v7985 = vsel %vm1295, %v7954, 0
      %v7988 = vsel %vm1295, %v7955, 0
      %v7991 = vsel %vm1295, %v7956, 0
      %v7994 = vsel %vm1295, %v7957, 0
      %v7997 = vsel %vm1295, %v7958, 0
      %v8000 = vsel %vm1295, %v7959, 0
      %v8003 = vsel %vm1295, %v7960, 0
      %v8006 = vsel %vm1295, %v7961, 0
      %v8009 = vsel %vm1295, %v7962, 0
      %v8012 = vsel %vm1344, %v7882, 0
      %8014 = vmatpush.bf16.msra.mxu0 0
      %8015 = vmatpush.bf16.msra.mxu0 0
      %8016 = vmatpush.bf16.msra.mxu0 0
      %8017 = vmatpush.bf16.msra.mxu0 0
      %8018 = vmatpush.bf16.msra.mxu0 0
      %8019 = vmatpush.bf16.msra.mxu0 0
      %8020 = vmatpush.bf16.msra.mxu0 0
      %8021 = vmatpush.bf16.msra.mxu0 %v8012
      %8022 = vmatmul.bf16.gmra.mxu0 %v7964
      %v8023 = vpop.f32.mrf.mxu0
      %v8024 = vadd.f32 0.0, %v8023
      %v8025 = vpop.f32.mrf.mxu0
      %v8026 = vadd.f32 0.0, %v8025
      %8027 = vmatmul.bf16.gmra.mxu0 %v7967
      %v8028 = vpop.f32.mrf.mxu0
      %v8029 = vadd.f32 0.0, %v8028
      %v8030 = vpop.f32.mrf.mxu0
      %v8031 = vadd.f32 0.0, %v8030
      %8032 = vmatmul.bf16.gmra.mxu0 %v7970
      %v8033 = vpop.f32.mrf.mxu0
      %v8034 = vadd.f32 0.0, %v8033
      %v8035 = vpop.f32.mrf.mxu0
      %v8036 = vadd.f32 0.0, %v8035
      %8037 = vmatmul.bf16.gmra.mxu0 %v7973
      %v8038 = vpop.f32.mrf.mxu0
      %v8039 = vadd.f32 0.0, %v8038
      %v8040 = vpop.f32.mrf.mxu0
      %v8041 = vadd.f32 0.0, %v8040
      %8042 = vmatmul.bf16.gmra.mxu0 %v7976
      %v8043 = vpop.f32.mrf.mxu0
      %v8044 = vadd.f32 0.0, %v8043
      %v8045 = vpop.f32.mrf.mxu0
      %v8046 = vadd.f32 0.0, %v8045
      %8047 = vmatmul.bf16.gmra.mxu0 %v7979
      %v8048 = vpop.f32.mrf.mxu0
      %v8049 = vadd.f32 0.0, %v8048
      %v8050 = vpop.f32.mrf.mxu0
      %v8051 = vadd.f32 0.0, %v8050
      %8052 = vmatmul.bf16.gmra.mxu0 %v7982
      %v8053 = vpop.f32.mrf.mxu0
      %v8054 = vadd.f32 0.0, %v8053
      %v8055 = vpop.f32.mrf.mxu0
      %v8056 = vadd.f32 0.0, %v8055
      %8057 = vmatmul.bf16.gmra.mxu0 %v7985
      %v8058 = vpop.f32.mrf.mxu0
      %v8059 = vadd.f32 0.0, %v8058
      %v8060 = vpop.f32.mrf.mxu0
      %v8061 = vadd.f32 0.0, %v8060
      %8062 = vmatmul.bf16.gmra.mxu0 %v7988
      %v8063 = vpop.f32.mrf.mxu0
      %v8064 = vadd.f32 0.0, %v8063
      %v8065 = vpop.f32.mrf.mxu0
      %v8066 = vadd.f32 0.0, %v8065
      %8067 = vmatmul.bf16.gmra.mxu0 %v7991
      %v8068 = vpop.f32.mrf.mxu0
      %v8069 = vadd.f32 0.0, %v8068
      %v8070 = vpop.f32.mrf.mxu0
      %v8071 = vadd.f32 0.0, %v8070
      %8072 = vmatmul.bf16.gmra.mxu0 %v7994
      %v8073 = vpop.f32.mrf.mxu0
      %v8074 = vadd.f32 0.0, %v8073
      %v8075 = vpop.f32.mrf.mxu0
      %v8076 = vadd.f32 0.0, %v8075
      %8077 = vmatmul.bf16.gmra.mxu0 %v7997
      %v8078 = vpop.f32.mrf.mxu0
      %v8079 = vadd.f32 0.0, %v8078
      %v8080 = vpop.f32.mrf.mxu0
      %v8081 = vadd.f32 0.0, %v8080
      %8082 = vmatmul.bf16.gmra.mxu0 %v8000
      %v8083 = vpop.f32.mrf.mxu0
      %v8084 = vadd.f32 0.0, %v8083
      %v8085 = vpop.f32.mrf.mxu0
      %v8086 = vadd.f32 0.0, %v8085
      %8087 = vmatmul.bf16.gmra.mxu0 %v8003
      %v8088 = vpop.f32.mrf.mxu0
      %v8089 = vadd.f32 0.0, %v8088
      %v8090 = vpop.f32.mrf.mxu0
      %v8091 = vadd.f32 0.0, %v8090
      %8092 = vmatmul.bf16.gmra.mxu0 %v8006
      %v8093 = vpop.f32.mrf.mxu0
      %v8094 = vadd.f32 0.0, %v8093
      %v8095 = vpop.f32.mrf.mxu0
      %v8096 = vadd.f32 0.0, %v8095
      %8097 = vmatmul.bf16.gmra.mxu0 %v8009
      %v8098 = vpop.f32.mrf.mxu0
      %v8099 = vadd.f32 0.0, %v8098
      %v8100 = vpop.f32.mrf.mxu0
      %v8101 = vadd.f32 0.0, %v8100
      %8102 = vdwg.mxu0
      %v8103 = vadd.f32 %v7817, %v8024
      %v8104 = vadd.f32 %v7818, %v8026
      %v8105 = vadd.f32 %v7819, %v8029
      %v8106 = vadd.f32 %v7820, %v8031
      %v8107 = vadd.f32 %v7821, %v8034
      %v8108 = vadd.f32 %v7822, %v8036
      %v8109 = vadd.f32 %v7823, %v8039
      %v8110 = vadd.f32 %v7824, %v8041
      %v8111 = vadd.f32 %v7825, %v8044
      %v8112 = vadd.f32 %v7826, %v8046
      %v8113 = vadd.f32 %v7827, %v8049
      %v8114 = vadd.f32 %v7828, %v8051
      %v8115 = vadd.f32 %v7829, %v8054
      %v8116 = vadd.f32 %v7830, %v8056
      %v8117 = vadd.f32 %v7831, %v8059
      %v8118 = vadd.f32 %v7832, %v8061
      %v8119 = vadd.f32 %v7833, %v8064
      %v8120 = vadd.f32 %v7834, %v8066
      %v8121 = vadd.f32 %v7835, %v8069
      %v8122 = vadd.f32 %v7836, %v8071
      %v8123 = vadd.f32 %v7837, %v8074
      %v8124 = vadd.f32 %v7838, %v8076
      %v8125 = vadd.f32 %v7839, %v8079
      %v8126 = vadd.f32 %v7840, %v8081
      %v8127 = vadd.f32 %v7841, %v8084
      %v8128 = vadd.f32 %v7842, %v8086
      %v8129 = vadd.f32 %v7843, %v8089
      %v8130 = vadd.f32 %v7844, %v8091
      %v8131 = vadd.f32 %v7845, %v8094
      %v8132 = vadd.f32 %v7846, %v8096
      %v8133 = vadd.f32 %v7847, %v8099
      %v8134 = vadd.f32 %v7848, %v8101
      %v8135 = vld [vmem:[%s3380] sm:$0xf]
      %v8136 = vld [vmem:[%s3380 + $0x4] sm:$0xf]
      %v8137 = vld [vmem:[%s3380 + $0x8] sm:$0x1]
      %v8138 = vld [vmem:[%s3380 + $0xc] sm:$0xf]
      %v8139 = vld [vmem:[%s3380 + $0x10] sm:$0xf]
      %v8140 = vld [vmem:[%s3380 + $0x14] sm:$0x1]
      %v8141 = vld [vmem:[%s3380 + $0x18] sm:$0xf]
      %v8142 = vld [vmem:[%s3380 + $0x1c] sm:$0xf]
      %v8143 = vld [vmem:[%s3380 + $0x20] sm:$0x1]
      %v8144 = vld [vmem:[%s3380 + $0x24] sm:$0xf]
      %v8145 = vld [vmem:[%s3380 + $0x28] sm:$0xf]
      %v8146 = vld [vmem:[%s3380 + $0x2c] sm:$0x1]
      %v8147 = vld [vmem:[%s3380 + $0x30] sm:$0xf]
      %v8148 = vld [vmem:[%s3380 + $0x34] sm:$0xf]
      %v8149 = vld [vmem:[%s3380 + $0x38] sm:$0x1]
      %v8150 = vld [vmem:[%s3380 + $0x3c] sm:$0xf]
      %v8151 = vld [vmem:[%s3380 + $0x40] sm:$0xf]
      %v8152 = vld [vmem:[%s3380 + $0x44] sm:$0x1]
      %v8153 = vld [vmem:[%s3380 + $0x48] sm:$0xf]
      %v8154 = vld [vmem:[%s3380 + $0x4c] sm:$0xf]
      %v8155 = vld [vmem:[%s3380 + $0x50] sm:$0x1]
      %v8156 = vld [vmem:[%s3380 + $0x54] sm:$0xf]
      %v8157 = vld [vmem:[%s3380 + $0x58] sm:$0xf]
      %v8158 = vld [vmem:[%s3380 + $0x5c] sm:$0x1]
      %v8159 = vld [vmem:[%s3380 + $0x60] sm:$0xf]
      %v8160 = vld [vmem:[%s3380 + $0x64] sm:$0xf]
      %v8161 = vld [vmem:[%s3380 + $0x68] sm:$0x1]
      %v8162 = vld [vmem:[%s3380 + $0x6c] sm:$0xf]
      %v8163 = vld [vmem:[%s3380 + $0x70] sm:$0xf]
      %v8164 = vld [vmem:[%s3380 + $0x74] sm:$0x1]
      %v8165 = vld [vmem:[%s3380 + $0x78] sm:$0xf]
      %v8166 = vld [vmem:[%s3380 + $0x7c] sm:$0xf]
      %v8167 = vld [vmem:[%s3380 + $0x80] sm:$0x1]
      %v8168 = vld [vmem:[%s3380 + $0x84] sm:$0xf]
      %v8169 = vld [vmem:[%s3380 + $0x88] sm:$0xf]
      %v8170 = vld [vmem:[%s3380 + $0x8c] sm:$0x1]
      %v8171 = vld [vmem:[%s3380 + $0x90] sm:$0xf]
      %v8172 = vld [vmem:[%s3380 + $0x94] sm:$0xf]
      %v8173 = vld [vmem:[%s3380 + $0x98] sm:$0x1]
      %v8174 = vld [vmem:[%s3380 + $0x9c] sm:$0xf]
      %v8175 = vld [vmem:[%s3380 + $0xa0] sm:$0xf]
      %v8176 = vld [vmem:[%s3380 + $0xa4] sm:$0x1]
      %v8177 = vld [vmem:[%s3380 + $0xa8] sm:$0xf]
      %v8178 = vld [vmem:[%s3380 + $0xac] sm:$0xf]
      %v8179 = vld [vmem:[%s3380 + $0xb0] sm:$0x1]
      %v8180 = vld [vmem:[%s3380 + $0xb4] sm:$0xf]
      %v8181 = vld [vmem:[%s3380 + $0xb8] sm:$0xf]
      %v8182 = vld [vmem:[%s3380 + $0xbc] sm:$0x1]
      %v8184 = vshrl.u32 %v8135, 16
      %v8186 = vrot.slane %v8184, 4
      %v8187 = vshll.u32 %v8135, 16
      %v8189 = vrot.slane %v8187, 5
      %v8190 = vor.u32 %v8186, %v8189
      %v8191 = vrot.slane %v8190, 4
      %v8193 = vshll.u32 %v8136, 16
      %v8195 = vrot.slane %v8193, 5
      %v8196 = vsel %vm860, %v8191, %v8195
      %v8197 = vshrl.u32 %v8136, 16
      %v8199 = vrot.slane %v8197, 4
      %v8200 = vor.u32 %v8199, %v8195
      %v8201 = vrot.slane %v8200, 4
      %v8203 = vshll.u32 %v8137, 16
      %v8205 = vrot.slane %v8203, 5
      %v8206 = vsel %vm860, %v8201, %v8205
      %v8208 = vshrl.u32 %v8138, 16
      %v8210 = vrot.slane %v8208, 4
      %v8211 = vshll.u32 %v8138, 16
      %v8213 = vrot.slane %v8211, 5
      %v8214 = vor.u32 %v8210, %v8213
      %v8215 = vrot.slane %v8214, 4
      %v8217 = vshll.u32 %v8139, 16
      %v8219 = vrot.slane %v8217, 5
      %v8220 = vsel %vm860, %v8215, %v8219
      %v8221 = vshrl.u32 %v8139, 16
      %v8223 = vrot.slane %v8221, 4
      %v8224 = vor.u32 %v8223, %v8219
      %v8225 = vrot.slane %v8224, 4
      %v8227 = vshll.u32 %v8140, 16
      %v8229 = vrot.slane %v8227, 5
      %v8230 = vsel %vm860, %v8225, %v8229
      %v8232 = vshrl.u32 %v8141, 16
      %v8234 = vrot.slane %v8232, 4
      %v8235 = vshll.u32 %v8141, 16
      %v8237 = vrot.slane %v8235, 5
      %v8238 = vor.u32 %v8234, %v8237
      %v8239 = vrot.slane %v8238, 4
      %v8241 = vshll.u32 %v8142, 16
      %v8243 = vrot.slane %v8241, 5
      %v8244 = vsel %vm860, %v8239, %v8243
      %v8245 = vshrl.u32 %v8142, 16
      %v8247 = vrot.slane %v8245, 4
      %v8248 = vor.u32 %v8247, %v8243
      %v8249 = vrot.slane %v8248, 4
      %v8251 = vshll.u32 %v8143, 16
      %v8253 = vrot.slane %v8251, 5
      %v8254 = vsel %vm860, %v8249, %v8253
      %v8256 = vshrl.u32 %v8144, 16
      %v8258 = vrot.slane %v8256, 4
      %v8259 = vshll.u32 %v8144, 16
      %v8261 = vrot.slane %v8259, 5
      %v8262 = vor.u32 %v8258, %v8261
      %v8263 = vrot.slane %v8262, 4
      %v8265 = vshll.u32 %v8145, 16
      %v8267 = vrot.slane %v8265, 5
      %v8268 = vsel %vm860, %v8263, %v8267
      %v8269 = vshrl.u32 %v8145, 16
      %v8271 = vrot.slane %v8269, 4
      %v8272 = vor.u32 %v8271, %v8267
      %v8273 = vrot.slane %v8272, 4
      %v8275 = vshll.u32 %v8146, 16
      %v8277 = vrot.slane %v8275, 5
      %v8278 = vsel %vm860, %v8273, %v8277
      %v8280 = vshrl.u32 %v8147, 16
      %v8282 = vrot.slane %v8280, 4
      %v8283 = vshll.u32 %v8147, 16
      %v8285 = vrot.slane %v8283, 5
      %v8286 = vor.u32 %v8282, %v8285
      %v8287 = vrot.slane %v8286, 4
      %v8289 = vshll.u32 %v8148, 16
      %v8291 = vrot.slane %v8289, 5
      %v8292 = vsel %vm860, %v8287, %v8291
      %v8293 = vshrl.u32 %v8148, 16
      %v8295 = vrot.slane %v8293, 4
      %v8296 = vor.u32 %v8295, %v8291
      %v8297 = vrot.slane %v8296, 4
      %v8299 = vshll.u32 %v8149, 16
      %v8301 = vrot.slane %v8299, 5
      %v8302 = vsel %vm860, %v8297, %v8301
      %v8304 = vshrl.u32 %v8150, 16
      %v8306 = vrot.slane %v8304, 4
      %v8307 = vshll.u32 %v8150, 16
      %v8309 = vrot.slane %v8307, 5
      %v8310 = vor.u32 %v8306, %v8309
      %v8311 = vrot.slane %v8310, 4
      %v8313 = vshll.u32 %v8151, 16
      %v8315 = vrot.slane %v8313, 5
      %v8316 = vsel %vm860, %v8311, %v8315
      %v8317 = vshrl.u32 %v8151, 16
      %v8319 = vrot.slane %v8317, 4
      %v8320 = vor.u32 %v8319, %v8315
      %v8321 = vrot.slane %v8320, 4
      %v8323 = vshll.u32 %v8152, 16
      %v8325 = vrot.slane %v8323, 5
      %v8326 = vsel %vm860, %v8321, %v8325
      %v8328 = vshrl.u32 %v8153, 16
      %v8330 = vrot.slane %v8328, 4
      %v8331 = vshll.u32 %v8153, 16
      %v8333 = vrot.slane %v8331, 5
      %v8334 = vor.u32 %v8330, %v8333
      %v8335 = vrot.slane %v8334, 4
      %v8337 = vshll.u32 %v8154, 16
      %v8339 = vrot.slane %v8337, 5
      %v8340 = vsel %vm860, %v8335, %v8339
      %v8341 = vshrl.u32 %v8154, 16
      %v8343 = vrot.slane %v8341, 4
      %v8344 = vor.u32 %v8343, %v8339
      %v8345 = vrot.slane %v8344, 4
      %v8347 = vshll.u32 %v8155, 16
      %v8349 = vrot.slane %v8347, 5
      %v8350 = vsel %vm860, %v8345, %v8349
      %v8352 = vshrl.u32 %v8156, 16
      %v8354 = vrot.slane %v8352, 4
      %v8355 = vshll.u32 %v8156, 16
      %v8357 = vrot.slane %v8355, 5
      %v8358 = vor.u32 %v8354, %v8357
      %v8359 = vrot.slane %v8358, 4
      %v8361 = vshll.u32 %v8157, 16
      %v8363 = vrot.slane %v8361, 5
      %v8364 = vsel %vm860, %v8359, %v8363
      %v8365 = vshrl.u32 %v8157, 16
      %v8367 = vrot.slane %v8365, 4
      %v8368 = vor.u32 %v8367, %v8363
      %v8369 = vrot.slane %v8368, 4
      %v8371 = vshll.u32 %v8158, 16
      %v8373 = vrot.slane %v8371, 5
      %v8374 = vsel %vm860, %v8369, %v8373
      %v8376 = vshrl.u32 %v8159, 16
      %v8378 = vrot.slane %v8376, 4
      %v8379 = vshll.u32 %v8159, 16
      %v8381 = vrot.slane %v8379, 5
      %v8382 = vor.u32 %v8378, %v8381
      %v8383 = vrot.slane %v8382, 4
      %v8385 = vshll.u32 %v8160, 16
      %v8387 = vrot.slane %v8385, 5
      %v8388 = vsel %vm860, %v8383, %v8387
      %v8389 = vshrl.u32 %v8160, 16
      %v8391 = vrot.slane %v8389, 4
      %v8392 = vor.u32 %v8391, %v8387
      %v8393 = vrot.slane %v8392, 4
      %v8395 = vshll.u32 %v8161, 16
      %v8397 = vrot.slane %v8395, 5
      %v8398 = vsel %vm860, %v8393, %v8397
      %v8400 = vshrl.u32 %v8162, 16
      %v8402 = vrot.slane %v8400, 4
      %v8403 = vshll.u32 %v8162, 16
      %v8405 = vrot.slane %v8403, 5
      %v8406 = vor.u32 %v8402, %v8405
      %v8407 = vrot.slane %v8406, 4
      %v8409 = vshll.u32 %v8163, 16
      %v8411 = vrot.slane %v8409, 5
      %v8412 = vsel %vm860, %v8407, %v8411
      %v8413 = vshrl.u32 %v8163, 16
      %v8415 = vrot.slane %v8413, 4
      %v8416 = vor.u32 %v8415, %v8411
      %v8417 = vrot.slane %v8416, 4
      %v8419 = vshll.u32 %v8164, 16
      %v8421 = vrot.slane %v8419, 5
      %v8422 = vsel %vm860, %v8417, %v8421
      %v8424 = vshrl.u32 %v8165, 16
      %v8426 = vrot.slane %v8424, 4
      %v8427 = vshll.u32 %v8165, 16
      %v8429 = vrot.slane %v8427, 5
      %v8430 = vor.u32 %v8426, %v8429
      %v8431 = vrot.slane %v8430, 4
      %v8433 = vshll.u32 %v8166, 16
      %v8435 = vrot.slane %v8433, 5
      %v8436 = vsel %vm860, %v8431, %v8435
      %v8437 = vshrl.u32 %v8166, 16
      %v8439 = vrot.slane %v8437, 4
      %v8440 = vor.u32 %v8439, %v8435
      %v8441 = vrot.slane %v8440, 4
      %v8443 = vshll.u32 %v8167, 16
      %v8445 = vrot.slane %v8443, 5
      %v8446 = vsel %vm860, %v8441, %v8445
      %v8448 = vshrl.u32 %v8168, 16
      %v8450 = vrot.slane %v8448, 4
      %v8451 = vshll.u32 %v8168, 16
      %v8453 = vrot.slane %v8451, 5
      %v8454 = vor.u32 %v8450, %v8453
      %v8455 = vrot.slane %v8454, 4
      %v8457 = vshll.u32 %v8169, 16
      %v8459 = vrot.slane %v8457, 5
      %v8460 = vsel %vm860, %v8455, %v8459
      %v8461 = vshrl.u32 %v8169, 16
      %v8463 = vrot.slane %v8461, 4
      %v8464 = vor.u32 %v8463, %v8459
      %v8465 = vrot.slane %v8464, 4
      %v8467 = vshll.u32 %v8170, 16
      %v8469 = vrot.slane %v8467, 5
      %v8470 = vsel %vm860, %v8465, %v8469
      %v8472 = vshrl.u32 %v8171, 16
      %v8474 = vrot.slane %v8472, 4
      %v8475 = vshll.u32 %v8171, 16
      %v8477 = vrot.slane %v8475, 5
      %v8478 = vor.u32 %v8474, %v8477
      %v8479 = vrot.slane %v8478, 4
      %v8481 = vshll.u32 %v8172, 16
      %v8483 = vrot.slane %v8481, 5
      %v8484 = vsel %vm860, %v8479, %v8483
      %v8485 = vshrl.u32 %v8172, 16
      %v8487 = vrot.slane %v8485, 4
      %v8488 = vor.u32 %v8487, %v8483
      %v8489 = vrot.slane %v8488, 4
      %v8491 = vshll.u32 %v8173, 16
      %v8493 = vrot.slane %v8491, 5
      %v8494 = vsel %vm860, %v8489, %v8493
      %v8496 = vshrl.u32 %v8174, 16
      %v8498 = vrot.slane %v8496, 4
      %v8499 = vshll.u32 %v8174, 16
      %v8501 = vrot.slane %v8499, 5
      %v8502 = vor.u32 %v8498, %v8501
      %v8503 = vrot.slane %v8502, 4
      %v8505 = vshll.u32 %v8175, 16
      %v8507 = vrot.slane %v8505, 5
      %v8508 = vsel %vm860, %v8503, %v8507
      %v8509 = vshrl.u32 %v8175, 16
      %v8511 = vrot.slane %v8509, 4
      %v8512 = vor.u32 %v8511, %v8507
      %v8513 = vrot.slane %v8512, 4
      %v8515 = vshll.u32 %v8176, 16
      %v8517 = vrot.slane %v8515, 5
      %v8518 = vsel %vm860, %v8513, %v8517
      %v8520 = vshrl.u32 %v8177, 16
      %v8522 = vrot.slane %v8520, 4
      %v8523 = vshll.u32 %v8177, 16
      %v8525 = vrot.slane %v8523, 5
      %v8526 = vor.u32 %v8522, %v8525
      %v8527 = vrot.slane %v8526, 4
      %v8529 = vshll.u32 %v8178, 16
      %v8531 = vrot.slane %v8529, 5
      %v8532 = vsel %vm860, %v8527, %v8531
      %v8533 = vshrl.u32 %v8178, 16
      %v8535 = vrot.slane %v8533, 4
      %v8536 = vor.u32 %v8535, %v8531
      %v8537 = vrot.slane %v8536, 4
      %v8539 = vshll.u32 %v8179, 16
      %v8541 = vrot.slane %v8539, 5
      %v8542 = vsel %vm860, %v8537, %v8541
      %v8544 = vshrl.u32 %v8180, 16
      %v8546 = vrot.slane %v8544, 4
      %v8547 = vshll.u32 %v8180, 16
      %v8549 = vrot.slane %v8547, 5
      %v8550 = vor.u32 %v8546, %v8549
      %v8551 = vrot.slane %v8550, 4
      %v8553 = vshll.u32 %v8181, 16
      %v8555 = vrot.slane %v8553, 5
      %v8556 = vsel %vm860, %v8551, %v8555
      %v8557 = vshrl.u32 %v8181, 16
      %v8559 = vrot.slane %v8557, 4
      %v8560 = vor.u32 %v8559, %v8555
      %v8561 = vrot.slane %v8560, 4
      %v8563 = vshll.u32 %v8182, 16
      %v8565 = vrot.slane %v8563, 5
      %v8566 = vsel %vm860, %v8561, %v8565
      %s8567 = scalar_lea.vmem %s4, 14
      %v8568 = vld [vmem:[%s8567] sm:$0x3]
      %v8569 = vunpack.c.l.b16 %v8196
      %v8570 = vunpack.c.l.b16 %v8206
      %v8571 = vunpack.c.l.b16 %v8220
      %v8572 = vunpack.c.l.b16 %v8230
      %v8573 = vunpack.c.l.b16 %v8244
      %v8574 = vunpack.c.l.b16 %v8254
      %v8575 = vunpack.c.l.b16 %v8268
      %v8576 = vunpack.c.l.b16 %v8278
      %v8577 = vunpack.c.l.b16 %v8292
      %v8578 = vunpack.c.l.b16 %v8302
      %v8579 = vunpack.c.l.b16 %v8316
      %v8580 = vunpack.c.l.b16 %v8326
      %v8581 = vunpack.c.l.b16 %v8340
      %v8582 = vunpack.c.l.b16 %v8350
      %v8583 = vunpack.c.l.b16 %v8364
      %v8584 = vunpack.c.l.b16 %v8374
      %v8585 = vunpack.c.l.b16 %v8388
      %v8586 = vunpack.c.l.b16 %v8398
      %v8587 = vunpack.c.l.b16 %v8412
      %v8588 = vunpack.c.l.b16 %v8422
      %v8589 = vunpack.c.l.b16 %v8436
      %v8590 = vunpack.c.l.b16 %v8446
      %v8591 = vunpack.c.l.b16 %v8460
      %v8592 = vunpack.c.l.b16 %v8470
      %v8593 = vunpack.c.l.b16 %v8484
      %v8594 = vunpack.c.l.b16 %v8494
      %v8595 = vunpack.c.l.b16 %v8508
      %v8596 = vunpack.c.l.b16 %v8518
      %v8597 = vunpack.c.l.b16 %v8532
      %v8598 = vunpack.c.l.b16 %v8542
      %v8599 = vunpack.c.l.b16 %v8556
      %v8600 = vunpack.c.l.b16 %v8566
      %v8601 = vpack.c.b16 %v8570, %v8569
      %v8602 = vpack.c.b16 %v8572, %v8571
      %v8603 = vpack.c.b16 %v8574, %v8573
      %v8604 = vpack.c.b16 %v8576, %v8575
      %v8605 = vpack.c.b16 %v8578, %v8577
      %v8606 = vpack.c.b16 %v8580, %v8579
      %v8607 = vpack.c.b16 %v8582, %v8581
      %v8608 = vpack.c.b16 %v8584, %v8583
      %v8609 = vpack.c.b16 %v8586, %v8585
      %v8610 = vpack.c.b16 %v8588, %v8587
      %v8611 = vpack.c.b16 %v8590, %v8589
      %v8612 = vpack.c.b16 %v8592, %v8591
      %v8613 = vpack.c.b16 %v8594, %v8593
      %v8614 = vpack.c.b16 %v8596, %v8595
      %v8615 = vpack.c.b16 %v8598, %v8597
      %v8616 = vpack.c.b16 %v8600, %v8599
      %v8618 = vsel %vm1295, %v8601, 0
      %v8621 = vsel %vm1295, %v8602, 0
      %v8624 = vsel %vm1295, %v8603, 0
      %v8627 = vsel %vm1295, %v8604, 0
      %v8630 = vsel %vm1295, %v8605, 0
      %v8633 = vsel %vm1295, %v8606, 0
      %v8636 = vsel %vm1295, %v8607, 0
      %v8639 = vsel %vm1295, %v8608, 0
      %v8642 = vsel %vm1295, %v8609, 0
      %v8645 = vsel %vm1295, %v8610, 0
      %v8648 = vsel %vm1295, %v8611, 0
      %v8651 = vsel %vm1295, %v8612, 0
      %v8654 = vsel %vm1295, %v8613, 0
      %v8657 = vsel %vm1295, %v8614, 0
      %v8660 = vsel %vm1295, %v8615, 0
      %v8663 = vsel %vm1295, %v8616, 0
      %v8666 = vsel %vm1344, %v8568, 0
      %8668 = vmatpush.bf16.msra.mxu0 0
      %8669 = vmatpush.bf16.msra.mxu0 0
      %8670 = vmatpush.bf16.msra.mxu0 0
      %8671 = vmatpush.bf16.msra.mxu0 0
      %8672 = vmatpush.bf16.msra.mxu0 0
      %8673 = vmatpush.bf16.msra.mxu0 0
      %8674 = vmatpush.bf16.msra.mxu0 0
      %8675 = vmatpush.bf16.msra.mxu0 %v8666
      %8676 = vmatmul.bf16.gmra.mxu0 %v8618
      %v8677 = vpop.f32.mrf.mxu0
      %v8678 = vadd.f32 0.0, %v8677
      %v8679 = vpop.f32.mrf.mxu0
      %v8680 = vadd.f32 0.0, %v8679
      %8681 = vmatmul.bf16.gmra.mxu0 %v8621
      %v8682 = vpop.f32.mrf.mxu0
      %v8683 = vadd.f32 0.0, %v8682
      %v8684 = vpop.f32.mrf.mxu0
      %v8685 = vadd.f32 0.0, %v8684
      %8686 = vmatmul.bf16.gmra.mxu0 %v8624
      %v8687 = vpop.f32.mrf.mxu0
      %v8688 = vadd.f32 0.0, %v8687
      %v8689 = vpop.f32.mrf.mxu0
      %v8690 = vadd.f32 0.0, %v8689
      %8691 = vmatmul.bf16.gmra.mxu0 %v8627
      %v8692 = vpop.f32.mrf.mxu0
      %v8693 = vadd.f32 0.0, %v8692
      %v8694 = vpop.f32.mrf.mxu0
      %v8695 = vadd.f32 0.0, %v8694
      %8696 = vmatmul.bf16.gmra.mxu0 %v8630
      %v8697 = vpop.f32.mrf.mxu0
      %v8698 = vadd.f32 0.0, %v8697
      %v8699 = vpop.f32.mrf.mxu0
      %v8700 = vadd.f32 0.0, %v8699
      %8701 = vmatmul.bf16.gmra.mxu0 %v8633
      %v8702 = vpop.f32.mrf.mxu0
      %v8703 = vadd.f32 0.0, %v8702
      %v8704 = vpop.f32.mrf.mxu0
      %v8705 = vadd.f32 0.0, %v8704
      %8706 = vmatmul.bf16.gmra.mxu0 %v8636
      %v8707 = vpop.f32.mrf.mxu0
      %v8708 = vadd.f32 0.0, %v8707
      %v8709 = vpop.f32.mrf.mxu0
      %v8710 = vadd.f32 0.0, %v8709
      %8711 = vmatmul.bf16.gmra.mxu0 %v8639
      %v8712 = vpop.f32.mrf.mxu0
      %v8713 = vadd.f32 0.0, %v8712
      %v8714 = vpop.f32.mrf.mxu0
      %v8715 = vadd.f32 0.0, %v8714
      %8716 = vmatmul.bf16.gmra.mxu0 %v8642
      %v8717 = vpop.f32.mrf.mxu0
      %v8718 = vadd.f32 0.0, %v8717
      %v8719 = vpop.f32.mrf.mxu0
      %v8720 = vadd.f32 0.0, %v8719
      %8721 = vmatmul.bf16.gmra.mxu0 %v8645
      %v8722 = vpop.f32.mrf.mxu0
      %v8723 = vadd.f32 0.0, %v8722
      %v8724 = vpop.f32.mrf.mxu0
      %v8725 = vadd.f32 0.0, %v8724
      %8726 = vmatmul.bf16.gmra.mxu0 %v8648
      %v8727 = vpop.f32.mrf.mxu0
      %v8728 = vadd.f32 0.0, %v8727
      %v8729 = vpop.f32.mrf.mxu0
      %v8730 = vadd.f32 0.0, %v8729
      %8731 = vmatmul.bf16.gmra.mxu0 %v8651
      %v8732 = vpop.f32.mrf.mxu0
      %v8733 = vadd.f32 0.0, %v8732
      %v8734 = vpop.f32.mrf.mxu0
      %v8735 = vadd.f32 0.0, %v8734
      %8736 = vmatmul.bf16.gmra.mxu0 %v8654
      %v8737 = vpop.f32.mrf.mxu0
      %v8738 = vadd.f32 0.0, %v8737
      %v8739 = vpop.f32.mrf.mxu0
      %v8740 = vadd.f32 0.0, %v8739
      %8741 = vmatmul.bf16.gmra.mxu0 %v8657
      %v8742 = vpop.f32.mrf.mxu0
      %v8743 = vadd.f32 0.0, %v8742
      %v8744 = vpop.f32.mrf.mxu0
      %v8745 = vadd.f32 0.0, %v8744
      %8746 = vmatmul.bf16.gmra.mxu0 %v8660
      %v8747 = vpop.f32.mrf.mxu0
      %v8748 = vadd.f32 0.0, %v8747
      %v8749 = vpop.f32.mrf.mxu0
      %v8750 = vadd.f32 0.0, %v8749
      %8751 = vmatmul.bf16.gmra.mxu0 %v8663
      %v8752 = vpop.f32.mrf.mxu0
      %v8753 = vadd.f32 0.0, %v8752
      %v8754 = vpop.f32.mrf.mxu0
      %v8755 = vadd.f32 0.0, %v8754
      %8756 = vdwg.mxu0
      %v8757 = vadd.f32 %v8103, %v8678
      %v8758 = vadd.f32 %v8104, %v8680
      %v8759 = vadd.f32 %v8105, %v8683
      %v8760 = vadd.f32 %v8106, %v8685
      %v8761 = vadd.f32 %v8107, %v8688
      %v8762 = vadd.f32 %v8108, %v8690
      %v8763 = vadd.f32 %v8109, %v8693
      %v8764 = vadd.f32 %v8110, %v8695
      %v8765 = vadd.f32 %v8111, %v8698
      %v8766 = vadd.f32 %v8112, %v8700
      %v8767 = vadd.f32 %v8113, %v8703
      %v8768 = vadd.f32 %v8114, %v8705
      %v8769 = vadd.f32 %v8115, %v8708
      %v8770 = vadd.f32 %v8116, %v8710
      %v8771 = vadd.f32 %v8117, %v8713
      %v8772 = vadd.f32 %v8118, %v8715
      %v8773 = vadd.f32 %v8119, %v8718
      %v8774 = vadd.f32 %v8120, %v8720
      %v8775 = vadd.f32 %v8121, %v8723
      %v8776 = vadd.f32 %v8122, %v8725
      %v8777 = vadd.f32 %v8123, %v8728
      %v8778 = vadd.f32 %v8124, %v8730
      %v8779 = vadd.f32 %v8125, %v8733
      %v8780 = vadd.f32 %v8126, %v8735
      %v8781 = vadd.f32 %v8127, %v8738
      %v8782 = vadd.f32 %v8128, %v8740
      %v8783 = vadd.f32 %v8129, %v8743
      %v8784 = vadd.f32 %v8130, %v8745
      %v8785 = vadd.f32 %v8131, %v8748
      %v8786 = vadd.f32 %v8132, %v8750
      %v8787 = vadd.f32 %v8133, %v8753
      %v8788 = vadd.f32 %v8134, %v8755
      %v8789 = vld [vmem:[%s3380] sm:$0xe]
      %v8790 = vld [vmem:[%s3380 + $0xc] sm:$0xe]
      %v8791 = vld [vmem:[%s3380 + $0x18] sm:$0xe]
      %v8792 = vld [vmem:[%s3380 + $0x24] sm:$0xe]
      %v8793 = vld [vmem:[%s3380 + $0x30] sm:$0xe]
      %v8794 = vld [vmem:[%s3380 + $0x3c] sm:$0xe]
      %v8795 = vld [vmem:[%s3380 + $0x48] sm:$0xe]
      %v8796 = vld [vmem:[%s3380 + $0x54] sm:$0xe]
      %v8797 = vld [vmem:[%s3380 + $0x60] sm:$0xe]
      %v8798 = vld [vmem:[%s3380 + $0x6c] sm:$0xe]
      %v8799 = vld [vmem:[%s3380 + $0x78] sm:$0xe]
      %v8800 = vld [vmem:[%s3380 + $0x84] sm:$0xe]
      %v8801 = vld [vmem:[%s3380 + $0x90] sm:$0xe]
      %v8802 = vld [vmem:[%s3380 + $0x9c] sm:$0xe]
      %v8803 = vld [vmem:[%s3380 + $0xa8] sm:$0xe]
      %v8804 = vld [vmem:[%s3380 + $0xb4] sm:$0xe]
      %v8853 = vrot.slane %v8789, 5
      %v8854 = vrot.slane %v8853, 4
      %v8855 = vrot.slane %v8136, 5
      %v8856 = vsel %vm1707, %v8854, %v8855
      %v8857 = vrot.slane %v8855, 4
      %v8858 = vrot.slane %v8137, 5
      %v8859 = vsel %vm1707, %v8857, %v8858
      %v8860 = vrot.slane %v8790, 5
      %v8861 = vrot.slane %v8860, 4
      %v8862 = vrot.slane %v8139, 5
      %v8863 = vsel %vm1707, %v8861, %v8862
      %v8864 = vrot.slane %v8862, 4
      %v8865 = vrot.slane %v8140, 5
      %v8866 = vsel %vm1707, %v8864, %v8865
      %v8867 = vrot.slane %v8791, 5
      %v8868 = vrot.slane %v8867, 4
      %v8869 = vrot.slane %v8142, 5
      %v8870 = vsel %vm1707, %v8868, %v8869
      %v8871 = vrot.slane %v8869, 4
      %v8872 = vrot.slane %v8143, 5
      %v8873 = vsel %vm1707, %v8871, %v8872
      %v8874 = vrot.slane %v8792, 5
      %v8875 = vrot.slane %v8874, 4
      %v8876 = vrot.slane %v8145, 5
      %v8877 = vsel %vm1707, %v8875, %v8876
      %v8878 = vrot.slane %v8876, 4
      %v8879 = vrot.slane %v8146, 5
      %v8880 = vsel %vm1707, %v8878, %v8879
      %v8881 = vrot.slane %v8793, 5
      %v8882 = vrot.slane %v8881, 4
      %v8883 = vrot.slane %v8148, 5
      %v8884 = vsel %vm1707, %v8882, %v8883
      %v8885 = vrot.slane %v8883, 4
      %v8886 = vrot.slane %v8149, 5
      %v8887 = vsel %vm1707, %v8885, %v8886
      %v8888 = vrot.slane %v8794, 5
      %v8889 = vrot.slane %v8888, 4
      %v8890 = vrot.slane %v8151, 5
      %v8891 = vsel %vm1707, %v8889, %v8890
      %v8892 = vrot.slane %v8890, 4
      %v8893 = vrot.slane %v8152, 5
      %v8894 = vsel %vm1707, %v8892, %v8893
      %v8895 = vrot.slane %v8795, 5
      %v8896 = vrot.slane %v8895, 4
      %v8897 = vrot.slane %v8154, 5
      %v8898 = vsel %vm1707, %v8896, %v8897
      %v8899 = vrot.slane %v8897, 4
      %v8900 = vrot.slane %v8155, 5
      %v8901 = vsel %vm1707, %v8899, %v8900
      %v8902 = vrot.slane %v8796, 5
      %v8903 = vrot.slane %v8902, 4
      %v8904 = vrot.slane %v8157, 5
      %v8905 = vsel %vm1707, %v8903, %v8904
      %v8906 = vrot.slane %v8904, 4
      %v8907 = vrot.slane %v8158, 5
      %v8908 = vsel %vm1707, %v8906, %v8907
      %v8909 = vrot.slane %v8797, 5
      %v8910 = vrot.slane %v8909, 4
      %v8911 = vrot.slane %v8160, 5
      %v8912 = vsel %vm1707, %v8910, %v8911
      %v8913 = vrot.slane %v8911, 4
      %v8914 = vrot.slane %v8161, 5
      %v8915 = vsel %vm1707, %v8913, %v8914
      %v8916 = vrot.slane %v8798, 5
      %v8917 = vrot.slane %v8916, 4
      %v8918 = vrot.slane %v8163, 5
      %v8919 = vsel %vm1707, %v8917, %v8918
      %v8920 = vrot.slane %v8918, 4
      %v8921 = vrot.slane %v8164, 5
      %v8922 = vsel %vm1707, %v8920, %v8921
      %v8923 = vrot.slane %v8799, 5
      %v8924 = vrot.slane %v8923, 4
      %v8925 = vrot.slane %v8166, 5
      %v8926 = vsel %vm1707, %v8924, %v8925
      %v8927 = vrot.slane %v8925, 4
      %v8928 = vrot.slane %v8167, 5
      %v8929 = vsel %vm1707, %v8927, %v8928
      %v8930 = vrot.slane %v8800, 5
      %v8931 = vrot.slane %v8930, 4
      %v8932 = vrot.slane %v8169, 5
      %v8933 = vsel %vm1707, %v8931, %v8932
      %v8934 = vrot.slane %v8932, 4
      %v8935 = vrot.slane %v8170, 5
      %v8936 = vsel %vm1707, %v8934, %v8935
      %v8937 = vrot.slane %v8801, 5
      %v8938 = vrot.slane %v8937, 4
      %v8939 = vrot.slane %v8172, 5
      %v8940 = vsel %vm1707, %v8938, %v8939
      %v8941 = vrot.slane %v8939, 4
      %v8942 = vrot.slane %v8173, 5
      %v8943 = vsel %vm1707, %v8941, %v8942
      %v8944 = vrot.slane %v8802, 5
      %v8945 = vrot.slane %v8944, 4
      %v8946 = vrot.slane %v8175, 5
      %v8947 = vsel %vm1707, %v8945, %v8946
      %v8948 = vrot.slane %v8946, 4
      %v8949 = vrot.slane %v8176, 5
      %v8950 = vsel %vm1707, %v8948, %v8949
      %v8951 = vrot.slane %v8803, 5
      %v8952 = vrot.slane %v8951, 4
      %v8953 = vrot.slane %v8178, 5
      %v8954 = vsel %vm1707, %v8952, %v8953
      %v8955 = vrot.slane %v8953, 4
      %v8956 = vrot.slane %v8179, 5
      %v8957 = vsel %vm1707, %v8955, %v8956
      %v8958 = vrot.slane %v8804, 5
      %v8959 = vrot.slane %v8958, 4
      %v8960 = vrot.slane %v8181, 5
      %v8961 = vsel %vm1707, %v8959, %v8960
      %v8962 = vrot.slane %v8960, 4
      %v8963 = vrot.slane %v8182, 5
      %v8964 = vsel %vm1707, %v8962, %v8963
      %s8965 = scalar_lea.vmem %s4, 16
      %v8966 = vld [vmem:[%s8965] sm:$0x3]
      %v8967 = vunpack.c.l.b16 %v8856
      %v8968 = vunpack.c.l.b16 %v8859
      %v8969 = vunpack.c.l.b16 %v8863
      %v8970 = vunpack.c.l.b16 %v8866
      %v8971 = vunpack.c.l.b16 %v8870
      %v8972 = vunpack.c.l.b16 %v8873
      %v8973 = vunpack.c.l.b16 %v8877
      %v8974 = vunpack.c.l.b16 %v8880
      %v8975 = vunpack.c.l.b16 %v8884
      %v8976 = vunpack.c.l.b16 %v8887
      %v8977 = vunpack.c.l.b16 %v8891
      %v8978 = vunpack.c.l.b16 %v8894
      %v8979 = vunpack.c.l.b16 %v8898
      %v8980 = vunpack.c.l.b16 %v8901
      %v8981 = vunpack.c.l.b16 %v8905
      %v8982 = vunpack.c.l.b16 %v8908
      %v8983 = vunpack.c.l.b16 %v8912
      %v8984 = vunpack.c.l.b16 %v8915
      %v8985 = vunpack.c.l.b16 %v8919
      %v8986 = vunpack.c.l.b16 %v8922
      %v8987 = vunpack.c.l.b16 %v8926
      %v8988 = vunpack.c.l.b16 %v8929
      %v8989 = vunpack.c.l.b16 %v8933
      %v8990 = vunpack.c.l.b16 %v8936
      %v8991 = vunpack.c.l.b16 %v8940
      %v8992 = vunpack.c.l.b16 %v8943
      %v8993 = vunpack.c.l.b16 %v8947
      %v8994 = vunpack.c.l.b16 %v8950
      %v8995 = vunpack.c.l.b16 %v8954
      %v8996 = vunpack.c.l.b16 %v8957
      %v8997 = vunpack.c.l.b16 %v8961
      %v8998 = vunpack.c.l.b16 %v8964
      %v8999 = vpack.c.b16 %v8968, %v8967
      %v9000 = vpack.c.b16 %v8970, %v8969
      %v9001 = vpack.c.b16 %v8972, %v8971
      %v9002 = vpack.c.b16 %v8974, %v8973
      %v9003 = vpack.c.b16 %v8976, %v8975
      %v9004 = vpack.c.b16 %v8978, %v8977
      %v9005 = vpack.c.b16 %v8980, %v8979
      %v9006 = vpack.c.b16 %v8982, %v8981
      %v9007 = vpack.c.b16 %v8984, %v8983
      %v9008 = vpack.c.b16 %v8986, %v8985
      %v9009 = vpack.c.b16 %v8988, %v8987
      %v9010 = vpack.c.b16 %v8990, %v8989
      %v9011 = vpack.c.b16 %v8992, %v8991
      %v9012 = vpack.c.b16 %v8994, %v8993
      %v9013 = vpack.c.b16 %v8996, %v8995
      %v9014 = vpack.c.b16 %v8998, %v8997
      %v9016 = vsel %vm1295, %v8999, 0
      %v9019 = vsel %vm1295, %v9000, 0
      %v9022 = vsel %vm1295, %v9001, 0
      %v9025 = vsel %vm1295, %v9002, 0
      %v9028 = vsel %vm1295, %v9003, 0
      %v9031 = vsel %vm1295, %v9004, 0
      %v9034 = vsel %vm1295, %v9005, 0
      %v9037 = vsel %vm1295, %v9006, 0
      %v9040 = vsel %vm1295, %v9007, 0
      %v9043 = vsel %vm1295, %v9008, 0
      %v9046 = vsel %vm1295, %v9009, 0
      %v9049 = vsel %vm1295, %v9010, 0
      %v9052 = vsel %vm1295, %v9011, 0
      %v9055 = vsel %vm1295, %v9012, 0
      %v9058 = vsel %vm1295, %v9013, 0
      %v9061 = vsel %vm1295, %v9014, 0
      %v9064 = vsel %vm1344, %v8966, 0
      %9066 = vmatpush.bf16.msra.mxu0 0
      %9067 = vmatpush.bf16.msra.mxu0 0
      %9068 = vmatpush.bf16.msra.mxu0 0
      %9069 = vmatpush.bf16.msra.mxu0 0
      %9070 = vmatpush.bf16.msra.mxu0 0
      %9071 = vmatpush.bf16.msra.mxu0 0
      %9072 = vmatpush.bf16.msra.mxu0 0
      %9073 = vmatpush.bf16.msra.mxu0 %v9064
      %9074 = vmatmul.bf16.gmra.mxu0 %v9016
      %v9075 = vpop.f32.mrf.mxu0
      %v9076 = vadd.f32 0.0, %v9075
      %v9077 = vpop.f32.mrf.mxu0
      %v9078 = vadd.f32 0.0, %v9077
      %9079 = vmatmul.bf16.gmra.mxu0 %v9019
      %v9080 = vpop.f32.mrf.mxu0
      %v9081 = vadd.f32 0.0, %v9080
      %v9082 = vpop.f32.mrf.mxu0
      %v9083 = vadd.f32 0.0, %v9082
      %9084 = vmatmul.bf16.gmra.mxu0 %v9022
      %v9085 = vpop.f32.mrf.mxu0
      %v9086 = vadd.f32 0.0, %v9085
      %v9087 = vpop.f32.mrf.mxu0
      %v9088 = vadd.f32 0.0, %v9087
      %9089 = vmatmul.bf16.gmra.mxu0 %v9025
      %v9090 = vpop.f32.mrf.mxu0
      %v9091 = vadd.f32 0.0, %v9090
      %v9092 = vpop.f32.mrf.mxu0
      %v9093 = vadd.f32 0.0, %v9092
      %9094 = vmatmul.bf16.gmra.mxu0 %v9028
      %v9095 = vpop.f32.mrf.mxu0
      %v9096 = vadd.f32 0.0, %v9095
      %v9097 = vpop.f32.mrf.mxu0
      %v9098 = vadd.f32 0.0, %v9097
      %9099 = vmatmul.bf16.gmra.mxu0 %v9031
      %v9100 = vpop.f32.mrf.mxu0
      %v9101 = vadd.f32 0.0, %v9100
      %v9102 = vpop.f32.mrf.mxu0
      %v9103 = vadd.f32 0.0, %v9102
      %9104 = vmatmul.bf16.gmra.mxu0 %v9034
      %v9105 = vpop.f32.mrf.mxu0
      %v9106 = vadd.f32 0.0, %v9105
      %v9107 = vpop.f32.mrf.mxu0
      %v9108 = vadd.f32 0.0, %v9107
      %9109 = vmatmul.bf16.gmra.mxu0 %v9037
      %v9110 = vpop.f32.mrf.mxu0
      %v9111 = vadd.f32 0.0, %v9110
      %v9112 = vpop.f32.mrf.mxu0
      %v9113 = vadd.f32 0.0, %v9112
      %9114 = vmatmul.bf16.gmra.mxu0 %v9040
      %v9115 = vpop.f32.mrf.mxu0
      %v9116 = vadd.f32 0.0, %v9115
      %v9117 = vpop.f32.mrf.mxu0
      %v9118 = vadd.f32 0.0, %v9117
      %9119 = vmatmul.bf16.gmra.mxu0 %v9043
      %v9120 = vpop.f32.mrf.mxu0
      %v9121 = vadd.f32 0.0, %v9120
      %v9122 = vpop.f32.mrf.mxu0
      %v9123 = vadd.f32 0.0, %v9122
      %9124 = vmatmul.bf16.gmra.mxu0 %v9046
      %v9125 = vpop.f32.mrf.mxu0
      %v9126 = vadd.f32 0.0, %v9125
      %v9127 = vpop.f32.mrf.mxu0
      %v9128 = vadd.f32 0.0, %v9127
      %9129 = vmatmul.bf16.gmra.mxu0 %v9049
      %v9130 = vpop.f32.mrf.mxu0
      %v9131 = vadd.f32 0.0, %v9130
      %v9132 = vpop.f32.mrf.mxu0
      %v9133 = vadd.f32 0.0, %v9132
      %9134 = vmatmul.bf16.gmra.mxu0 %v9052
      %v9135 = vpop.f32.mrf.mxu0
      %v9136 = vadd.f32 0.0, %v9135
      %v9137 = vpop.f32.mrf.mxu0
      %v9138 = vadd.f32 0.0, %v9137
      %9139 = vmatmul.bf16.gmra.mxu0 %v9055
      %v9140 = vpop.f32.mrf.mxu0
      %v9141 = vadd.f32 0.0, %v9140
      %v9142 = vpop.f32.mrf.mxu0
      %v9143 = vadd.f32 0.0, %v9142
      %9144 = vmatmul.bf16.gmra.mxu0 %v9058
      %v9145 = vpop.f32.mrf.mxu0
      %v9146 = vadd.f32 0.0, %v9145
      %v9147 = vpop.f32.mrf.mxu0
      %v9148 = vadd.f32 0.0, %v9147
      %9149 = vmatmul.bf16.gmra.mxu0 %v9061
      %v9150 = vpop.f32.mrf.mxu0
      %v9151 = vadd.f32 0.0, %v9150
      %v9152 = vpop.f32.mrf.mxu0
      %v9153 = vadd.f32 0.0, %v9152
      %9154 = vdwg.mxu0
      %v9155 = vadd.f32 %v8757, %v9076
      %v9156 = vadd.f32 %v8758, %v9078
      %v9157 = vadd.f32 %v8759, %v9081
      %v9158 = vadd.f32 %v8760, %v9083
      %v9159 = vadd.f32 %v8761, %v9086
      %v9160 = vadd.f32 %v8762, %v9088
      %v9161 = vadd.f32 %v8763, %v9091
      %v9162 = vadd.f32 %v8764, %v9093
      %v9163 = vadd.f32 %v8765, %v9096
      %v9164 = vadd.f32 %v8766, %v9098
      %v9165 = vadd.f32 %v8767, %v9101
      %v9166 = vadd.f32 %v8768, %v9103
      %v9167 = vadd.f32 %v8769, %v9106
      %v9168 = vadd.f32 %v8770, %v9108
      %v9169 = vadd.f32 %v8771, %v9111
      %v9170 = vadd.f32 %v8772, %v9113
      %v9171 = vadd.f32 %v8773, %v9116
      %v9172 = vadd.f32 %v8774, %v9118
      %v9173 = vadd.f32 %v8775, %v9121
      %v9174 = vadd.f32 %v8776, %v9123
      %v9175 = vadd.f32 %v8777, %v9126
      %v9176 = vadd.f32 %v8778, %v9128
      %v9177 = vadd.f32 %v8779, %v9131
      %v9178 = vadd.f32 %v8780, %v9133
      %v9179 = vadd.f32 %v8781, %v9136
      %v9180 = vadd.f32 %v8782, %v9138
      %v9181 = vadd.f32 %v8783, %v9141
      %v9182 = vadd.f32 %v8784, %v9143
      %v9183 = vadd.f32 %v8785, %v9146
      %v9184 = vadd.f32 %v8786, %v9148
      %v9185 = vadd.f32 %v8787, %v9151
      %v9186 = vadd.f32 %v8788, %v9153
      %v9187 = vld [vmem:[%s5] sm:$0x1]
      %v9189 = vperm.slane %v9187, 0
      %v9191 = vmul.f32 %v9155, %v9189
      %v9192 = vmul.f32 %v9156, %v9189
      %v9193 = vmul.f32 %v9157, %v9189
      %v9194 = vmul.f32 %v9158, %v9189
      %v9195 = vmul.f32 %v9159, %v9189
      %v9196 = vmul.f32 %v9160, %v9189
      %v9197 = vmul.f32 %v9161, %v9189
      %v9198 = vmul.f32 %v9162, %v9189
      %v9199 = vmul.f32 %v9163, %v9189
      %v9200 = vmul.f32 %v9164, %v9189
      %v9201 = vmul.f32 %v9165, %v9189
      %v9202 = vmul.f32 %v9166, %v9189
      %v9203 = vmul.f32 %v9167, %v9189
      %v9204 = vmul.f32 %v9168, %v9189
      %v9205 = vmul.f32 %v9169, %v9189
      %v9206 = vmul.f32 %v9170, %v9189
      %v9207 = vmul.f32 %v9171, %v9189
      %v9208 = vmul.f32 %v9172, %v9189
      %v9209 = vmul.f32 %v9173, %v9189
      %v9210 = vmul.f32 %v9174, %v9189
      %v9211 = vmul.f32 %v9175, %v9189
      %v9212 = vmul.f32 %v9176, %v9189
      %v9213 = vmul.f32 %v9177, %v9189
      %v9214 = vmul.f32 %v9178, %v9189
      %v9215 = vmul.f32 %v9179, %v9189
      %v9216 = vmul.f32 %v9180, %v9189
      %v9217 = vmul.f32 %v9181, %v9189
      %v9218 = vmul.f32 %v9182, %v9189
      %v9219 = vmul.f32 %v9183, %v9189
      %v9220 = vmul.f32 %v9184, %v9189
      %v9221 = vmul.f32 %v9185, %v9189
      %v9222 = vmul.f32 %v9186, %v9189
      %v9223 = vld [vmem:[%s6] sm:$0x1]
      %v9225 = vperm.slane %v9223, 0
      %v9227 = vadd.f32 %v9191, %v9225
      %v9228 = vadd.f32 %v9192, %v9225
      %v9229 = vadd.f32 %v9193, %v9225
      %v9230 = vadd.f32 %v9194, %v9225
      %v9231 = vadd.f32 %v9195, %v9225
      %v9232 = vadd.f32 %v9196, %v9225
      %v9233 = vadd.f32 %v9197, %v9225
      %v9234 = vadd.f32 %v9198, %v9225
      %v9235 = vadd.f32 %v9199, %v9225
      %v9236 = vadd.f32 %v9200, %v9225
      %v9237 = vadd.f32 %v9201, %v9225
      %v9238 = vadd.f32 %v9202, %v9225
      %v9239 = vadd.f32 %v9203, %v9225
      %v9240 = vadd.f32 %v9204, %v9225
      %v9241 = vadd.f32 %v9205, %v9225
      %v9242 = vadd.f32 %v9206, %v9225
      %v9243 = vadd.f32 %v9207, %v9225
      %v9244 = vadd.f32 %v9208, %v9225
      %v9245 = vadd.f32 %v9209, %v9225
      %v9246 = vadd.f32 %v9210, %v9225
      %v9247 = vadd.f32 %v9211, %v9225
      %v9248 = vadd.f32 %v9212, %v9225
      %v9249 = vadd.f32 %v9213, %v9225
      %v9250 = vadd.f32 %v9214, %v9225
      %v9251 = vadd.f32 %v9215, %v9225
      %v9252 = vadd.f32 %v9216, %v9225
      %v9253 = vadd.f32 %v9217, %v9225
      %v9254 = vadd.f32 %v9218, %v9225
      %v9255 = vadd.f32 %v9219, %v9225
      %v9256 = vadd.f32 %v9220, %v9225
      %v9257 = vadd.f32 %v9221, %v9225
      %v9258 = vadd.f32 %v9222, %v9225
      %v9259 = vunpack.c.l.bf16 %v280
      %v9260 = vunpack.c.l.bf16 %v281
      %v9261 = vunpack.c.l.bf16 %v282
      %v9262 = vunpack.c.l.bf16 %v283
      %v9263 = vunpack.c.l.bf16 %v284
      %v9264 = vunpack.c.l.bf16 %v285
      %v9265 = vunpack.c.l.bf16 %v286
      %v9266 = vunpack.c.l.bf16 %v287
      %v9267 = vunpack.c.l.bf16 %v288
      %v9268 = vunpack.c.l.bf16 %v289
      %v9269 = vunpack.c.l.bf16 %v290
      %v9270 = vunpack.c.l.bf16 %v291
      %v9271 = vunpack.c.l.bf16 %v292
      %v9272 = vunpack.c.l.bf16 %v293
      %v9273 = vunpack.c.l.bf16 %v294
      %v9274 = vunpack.c.l.bf16 %v295
      %v9275 = vunpack.c.l.bf16 %v296
      %v9276 = vunpack.c.l.bf16 %v297
      %v9277 = vunpack.c.l.bf16 %v298
      %v9278 = vunpack.c.l.bf16 %v299
      %v9279 = vunpack.c.l.bf16 %v300
      %v9280 = vunpack.c.l.bf16 %v301
      %v9281 = vunpack.c.l.bf16 %v302
      %v9282 = vunpack.c.l.bf16 %v303
      %v9283 = vunpack.c.l.bf16 %v304
      %v9284 = vunpack.c.l.bf16 %v305
      %v9285 = vunpack.c.l.bf16 %v306
      %v9286 = vunpack.c.l.bf16 %v307
      %v9287 = vunpack.c.l.bf16 %v308
      %v9288 = vunpack.c.l.bf16 %v309
      %v9289 = vunpack.c.l.bf16 %v310
      %v9290 = vunpack.c.l.bf16 %v311
      %v9291 = vadd.f32 %v9227, %v9259
      %v9292 = vadd.f32 %v9228, %v9260
      %v9293 = vadd.f32 %v9229, %v9261
      %v9294 = vadd.f32 %v9230, %v9262
      %v9295 = vadd.f32 %v9231, %v9263
      %v9296 = vadd.f32 %v9232, %v9264
      %v9297 = vadd.f32 %v9233, %v9265
      %v9298 = vadd.f32 %v9234, %v9266
      %v9299 = vadd.f32 %v9235, %v9267
      %v9300 = vadd.f32 %v9236, %v9268
      %v9301 = vadd.f32 %v9237, %v9269
      %v9302 = vadd.f32 %v9238, %v9270
      %v9303 = vadd.f32 %v9239, %v9271
      %v9304 = vadd.f32 %v9240, %v9272
      %v9305 = vadd.f32 %v9241, %v9273
      %v9306 = vadd.f32 %v9242, %v9274
      %v9307 = vadd.f32 %v9243, %v9275
      %v9308 = vadd.f32 %v9244, %v9276
      %v9309 = vadd.f32 %v9245, %v9277
      %v9310 = vadd.f32 %v9246, %v9278
      %v9311 = vadd.f32 %v9247, %v9279
      %v9312 = vadd.f32 %v9248, %v9280
      %v9313 = vadd.f32 %v9249, %v9281
      %v9314 = vadd.f32 %v9250, %v9282
      %v9315 = vadd.f32 %v9251, %v9283
      %v9316 = vadd.f32 %v9252, %v9284
      %v9317 = vadd.f32 %v9253, %v9285
      %v9318 = vadd.f32 %v9254, %v9286
      %v9319 = vadd.f32 %v9255, %v9287
      %v9320 = vadd.f32 %v9256, %v9288
      %v9321 = vadd.f32 %v9257, %v9289
      %v9322 = vadd.f32 %v9258, %v9290
      %v9323 = vmax.f32 %v9291, 0.0
      %v9324 = vmax.f32 %v9292, 0.0
      %v9325 = vmax.f32 %v9293, 0.0
      %v9326 = vmax.f32 %v9294, 0.0
      %v9327 = vmax.f32 %v9295, 0.0
      %v9328 = vmax.f32 %v9296, 0.0
      %v9329 = vmax.f32 %v9297, 0.0
      %v9330 = vmax.f32 %v9298, 0.0
      %v9331 = vmax.f32 %v9299, 0.0
      %v9332 = vmax.f32 %v9300, 0.0
      %v9333 = vmax.f32 %v9301, 0.0
      %v9334 = vmax.f32 %v9302, 0.0
      %v9335 = vmax.f32 %v9303, 0.0
      %v9336 = vmax.f32 %v9304, 0.0
      %v9337 = vmax.f32 %v9305, 0.0
      %v9338 = vmax.f32 %v9306, 0.0
      %v9339 = vmax.f32 %v9307, 0.0
      %v9340 = vmax.f32 %v9308, 0.0
      %v9341 = vmax.f32 %v9309, 0.0
      %v9342 = vmax.f32 %v9310, 0.0
      %v9343 = vmax.f32 %v9311, 0.0
      %v9344 = vmax.f32 %v9312, 0.0
      %v9345 = vmax.f32 %v9313, 0.0
      %v9346 = vmax.f32 %v9314, 0.0
      %v9347 = vmax.f32 %v9315, 0.0
      %v9348 = vmax.f32 %v9316, 0.0
      %v9349 = vmax.f32 %v9317, 0.0
      %v9350 = vmax.f32 %v9318, 0.0
      %v9351 = vmax.f32 %v9319, 0.0
      %v9352 = vmax.f32 %v9320, 0.0
      %v9353 = vmax.f32 %v9321, 0.0
      %v9354 = vmax.f32 %v9322, 0.0
      %9355 = vst.msk [vmem:[%s278] sm:$0xff] %vm1295, %v9323
      %9356 = vst.msk [vmem:[%s278 + $0x8] sm:$0xff] %vm1295, %v9324
      %9357 = vst.msk [vmem:[%s278 + $0x10] sm:$0xff] %vm1295, %v9325
      %9358 = vst.msk [vmem:[%s278 + $0x18] sm:$0xff] %vm1295, %v9326
      %9359 = vst.msk [vmem:[%s278 + $0x20] sm:$0xff] %vm1295, %v9327
      %9360 = vst.msk [vmem:[%s278 + $0x28] sm:$0xff] %vm1295, %v9328
      %9361 = vst.msk [vmem:[%s278 + $0x30] sm:$0xff] %vm1295, %v9329
      %9362 = vst.msk [vmem:[%s278 + $0x38] sm:$0xff] %vm1295, %v9330
      %9363 = vst.msk [vmem:[%s278 + $0x40] sm:$0xff] %vm1295, %v9331
      %9364 = vst.msk [vmem:[%s278 + $0x48] sm:$0xff] %vm1295, %v9332
      %9365 = vst.msk [vmem:[%s278 + $0x50] sm:$0xff] %vm1295, %v9333
      %9366 = vst.msk [vmem:[%s278 + $0x58] sm:$0xff] %vm1295, %v9334
      %9367 = vst.msk [vmem:[%s278 + $0x60] sm:$0xff] %vm1295, %v9335
      %9368 = vst.msk [vmem:[%s278 + $0x68] sm:$0xff] %vm1295, %v9336
      %9369 = vst.msk [vmem:[%s278 + $0x70] sm:$0xff] %vm1295, %v9337
      %9370 = vst.msk [vmem:[%s278 + $0x78] sm:$0xff] %vm1295, %v9338
      %9371 = vst.msk [vmem:[%s278 + $0x80] sm:$0xff] %vm1295, %v9339
      %9372 = vst.msk [vmem:[%s278 + $0x88] sm:$0xff] %vm1295, %v9340
      %9373 = vst.msk [vmem:[%s278 + $0x90] sm:$0xff] %vm1295, %v9341
      %9374 = vst.msk [vmem:[%s278 + $0x98] sm:$0xff] %vm1295, %v9342
      %9375 = vst.msk [vmem:[%s278 + $0xa0] sm:$0xff] %vm1295, %v9343
      %9376 = vst.msk [vmem:[%s278 + $0xa8] sm:$0xff] %vm1295, %v9344
      %9377 = vst.msk [vmem:[%s278 + $0xb0] sm:$0xff] %vm1295, %v9345
      %9378 = vst.msk [vmem:[%s278 + $0xb8] sm:$0xff] %vm1295, %v9346
      %9379 = vst.msk [vmem:[%s278 + $0xc0] sm:$0xff] %vm1295, %v9347
      %9380 = vst.msk [vmem:[%s278 + $0xc8] sm:$0xff] %vm1295, %v9348
      %9381 = vst.msk [vmem:[%s278 + $0xd0] sm:$0xff] %vm1295, %v9349
      %9382 = vst.msk [vmem:[%s278 + $0xd8] sm:$0xff] %vm1295, %v9350
      %9383 = vst.msk [vmem:[%s278 + $0xe0] sm:$0xff] %vm1295, %v9351
      %9384 = vst.msk [vmem:[%s278 + $0xe8] sm:$0xff] %vm1295, %v9352
      %9385 = vst.msk [vmem:[%s278 + $0xf0] sm:$0xff] %vm1295, %v9353
      %9386 = vst.msk [vmem:[%s278 + $0xf8] sm:$0xff] %vm1295, %v9354
      %p9387 = scmp.lt.s32.totalorder %s18, 1
      %s9388 = scalar_select %p9387, %s18, 1
      %s9389 = smul.addr %s9388, 32
      %s9390 = smul.addr %s9389, 8
      %s9391 = scalar_lea.vmem %s7, %s9390
      // Predicated region
      $region49: #{tpu_custom_call.1} parent=47 // pred_check
        %p9392 = pneg %p188
      $region50: #{tpu_custom_call.1} parent=47 // pred_check_branch
        %9394 = sbr.rel (%p9392) target = $region52
      $region51: #{tpu_custom_call.1} parent=47 // pred_region
        _
      $region52: #{tpu_custom_call.1} parent=47 // pred_fallthru
        _
    $region48: #{tpu_custom_call.1} parent=5 // pred_fallthru
      _
    %p9395 = scmp.le.s32.totalorder 2, %s13
    // Predicated region
    $region53: #{tpu_custom_call.1} parent=5 // pred_check
      %p9396 = pneg %p9395
    $region54: #{tpu_custom_call.1} parent=5 // pred_check_branch
      %9398 = sbr.rel (%p9396) target = $region56
    $region55: #{tpu_custom_call.1} parent=5 // pred_region
      %s9399 = ssub.s32 %s13, 2
      // Predicated region
      $region57: #{tpu_custom_call.1} parent=55 // pred_check
        %p9400 = pneg %p194
      $region58: #{tpu_custom_call.1} parent=55 // pred_check_branch
        %9402 = sbr.rel (%p9400) target = $region60
      $region59: #{tpu_custom_call.1} parent=55 // pred_region
        %p9403 = scmp.lt.s32.totalorder %s19, 1
        %s9404 = scalar_select %p9403, %s19, 1
        %s9405 = smul.addr %s9404, 32
        %s9406 = smul.addr %s9405, 8
        %s9407 = scalar_lea.vmem %s7, %s9406
      $region60: #{tpu_custom_call.1} parent=55 // pred_fallthru
        _
    $region56: #{tpu_custom_call.1} parent=5 // pred_fallthru
      _
  $region6: #{tpu_custom_call.1} parent=0 // loop_footer
    %s17 = sadd.s32 1, %s13
  $region7: #{tpu_custom_call.1} parent=0 // loop_footer_branch
    %12 = sbr.rel target = $region3
  $region8: #{tpu_custom_call.1} parent=0 // loop_exit
    _

</llo_original>
